<compile_context>
chip_gen: v7x
topology: tpu7x:2x2x1
jax: 0.10.0
libtpu: 0.0.40
codegen_flags: <defaults>
</compile_context>

<pallas_src>
import numpy as np
import jax
import jax.numpy as jnp
from jax import lax
from jax.experimental import pallas as pl
from jax.experimental.pallas import tpu as pltpu

START_TAG = '<START>'
STOP_TAG = '<STOP>'
NEG = -10000.0


def _full_spec(shape):
    """BlockSpec covering the entire array (scalar-prefetch-aware index map)."""
    n = len(shape)
    return pl.BlockSpec(shape, lambda *_, n=n: (0,) * n)


# ---------------------------------------------------------------------------
# Fused kernel: token-projection gather + batched BiLSTM + hidden2tag + Viterbi
# ---------------------------------------------------------------------------
def _make_kernel(T, BT, H, K, KV, TAGP):
    H2, H4, H6, H8 = 2 * H, 4 * H, 6 * H, 8 * H

    def kernel(sent_ref,                                    # SMEM (NB*T,) int32
               pf_ref, pb_ref, w_rec_ref, h0_ref, c0_ref,   # dense VMEM inputs
               wt_ref, bt_ref, trans_ref, stop_ref, fv0_ref,
               feats_ref, bp_ref, term_ref,                 # outputs (per tile)
               xi_ref, out_ref):                            # VMEM scratch
        g = pl.program_id(0)

        # ---- per-token fused input projections (full-lane row gathers) ----
        # xi[t*BT+b] = P_f[sent[b,t]] + P_b[sent[b,T-1-t]]   (bias folded in P_f)
        for t in range(T):
            for b in range(BT):
                base = (g * BT + b) * T
                tok_f = sent_ref[base + t]
                tok_b = sent_ref[base + (T - 1 - t)]
                r = t * BT + b
                xi_ref[r:r + 1, :] = (pf_ref[pl.ds(tok_f, 1), :]
                                      + pb_ref[pl.ds(tok_b, 1), :])

        # ---- bidirectional LSTM, batch on sublanes, one MXU op per step ----
        # gate lane layout along 8H: [i_f,i_b | f_f,f_b | g_f,g_b | o_f,o_b]
        w_rec = w_rec_ref[...]                      # (2H, 8H)
        h = h0_ref[...]                             # (BT, 2H) = [h_fwd | h_bwd]
        c = c0_ref[...]                             # (BT, 2H)
        for s in range(T):
            gates = xi_ref[s * BT:(s + 1) * BT, :] + jnp.dot(
                h, w_rec, preferred_element_type=jnp.float32)      # (BT, 8H)
            sg_if = jax.nn.sigmoid(gates[:, 0:H4])     # i, f gates (both dirs)
            tg = jnp.tanh(gates[:, H4:H6])             # g gate only
            sg_o = jax.nn.sigmoid(gates[:, H6:H8])     # o gates
            c = sg_if[:, H2:H4] * c + sg_if[:, 0:H2] * tg
            h = sg_o * jnp.tanh(c)
            out_ref[s * BT:(s + 1) * BT, 0:H] = h[:, 0:H]               # fwd @ t=s
            out_ref[(T - 1 - s) * BT:(T - s) * BT, H:H2] = h[:, H:H2]   # bwd @ t=T-1-s

        # ---- hidden2tag fused into the batched Viterbi recursion ----------
        wt = wt_ref[...]                                  # (2H, TAGP) lane-dense
        btb = jnp.broadcast_to(bt_ref[...], (BT, TAGP))   # hoisted broadcast
        trans = trans_ref[...]                            # (KV,KV) log_trans[next,prev]
        trans_rows = [trans[n:n + 1, :] for n in range(K)]
        lane_i = lax.broadcasted_iota(jnp.int32, (BT, KV), 1).astype(jnp.float32)
        lane1 = lax.broadcasted_iota(jnp.int32, (1, KV), 1)
        onehots = [(lane1 == n) for n in range(K)]
        fv = fv0_ref[...]                                 # (BT, KV), in registers
        bp_rows = []
        for t in range(T):
            feats_t = jnp.dot(out_ref[t * BT:(t + 1) * BT, :], wt,
                              preferred_element_type=jnp.float32) + btb  # (BT,TAGP)
            feats_ref[t * BT:(t + 1) * BT, :] = feats_t    # unmasked 128-lane store
            fv_new = feats_t[:, 0:KV]                      # padded lanes <= -1e4
            bptr = jnp.zeros((BT, KV), jnp.float32)
            for n in range(K):                             # real tags only
                s_n = fv + trans_rows[n]                   # (BT,KV): prev scores -> n
                m_n = jnp.max(s_n, axis=1, keepdims=True)  # (BT,1)
                a_n = jnp.min(jnp.where(s_n == m_n, lane_i, float(KV)),
                              axis=1, keepdims=True)       # first-max index
                fv_new = fv_new + jnp.where(onehots[n], m_n, 0.0)
                bptr = jnp.where(onehots[n], a_n, bptr)
            bp_rows.append(bptr)
            fv = fv_new
        # single wide store of all backpointers after the serial recursion
        bp_ref[...] = jnp.concatenate(bp_rows, axis=0).astype(jnp.int32)
        term_ref[...] = fv + stop_ref[...]                 # + transitions -> STOP

    return kernel


def bilstm_crf_forward(sent_ids, packed, *, batch_tile):
    """One fused pallas_call over a batch of sentences.

    Returns (feats_raw, bp_raw, term) with kernel-native layouts:
      feats_raw: (num_tiles*T*BT, TAGP)  rows ordered [tile, time, batch]
      bp_raw:    (num_tiles*T*BT, KV)    int32
      term:      (NB, KV)
    """
    NB, T = sent_ids.shape
    BT = batch_tile
    assert NB % BT == 0
    num_tiles = NB // BT
    H2, H8 = packed['w_rec'].shape
    H = H2 // 2
    TAGP = packed['wt_T'].shape[1]
    KV = packed['trans_np'].shape[0]
    K = packed['n_tags']

    dense = (packed['p_f'], packed['p_b'], packed['w_rec'],
             packed['h0c'], packed['c0c'], packed['wt_T'], packed['b_t'],
             packed['trans_np'], packed['stop_row'], packed['fv_init'])

    kernel = _make_kernel(T, BT, H, K, KV, TAGP)

    return pl.pallas_call(
        kernel,
        grid_spec=pltpu.PrefetchScalarGridSpec(
            num_scalar_prefetch=1,                 # all token ids -> SMEM once
            grid=(num_tiles,),                     # batch tiles, "parallel"
            in_specs=[_full_spec(a.shape) for a in dense],
            out_specs=(
                pl.BlockSpec((T * BT, TAGP), lambda g, *_: (g, 0)),
                pl.BlockSpec((T * BT, KV), lambda g, *_: (g, 0)),
                pl.BlockSpec((BT, KV), lambda g, *_: (g, 0)),
            ),
            scratch_shapes=[
                pltpu.VMEM((T * BT, H8), jnp.float32),   # fused input projections
                pltpu.VMEM((T * BT, H2), jnp.float32),   # [h_fwd[t] | h_bwd[t]]
            ],
        ),
        out_shape=(
            jax.ShapeDtypeStruct((num_tiles * T * BT, TAGP), jnp.float32),
            jax.ShapeDtypeStruct((num_tiles * T * BT, KV), jnp.int32),
            jax.ShapeDtypeStruct((NB, KV), jnp.float32),
        ),
        compiler_params=pltpu.CompilerParams(dimension_semantics=("parallel",)),
    )(sent_ids.reshape(-1).astype(jnp.int32), *dense)


# ---------------------------------------------------------------------------
# Pure numpy reference (same math as the PyTorch module's forward pass)
# ---------------------------------------------------------------------------
def reference_forward(x, wih_f, whh_f, b_f, wih_b, whh_b, b_b,
                      w_tag, b_tag, h0, c0, log_trans, start_idx, stop_idx):
    x = np.asarray(x, np.float32)
    T = x.shape[0]
    H = whh_f.shape[1]

    def sig(z):
        return 1.0 / (1.0 + np.exp(-z))

    def run_dir(wih, whh, b, h, c, order):
        out = np.zeros((T, H), np.float32)
        for t in order:
            g = x[t:t + 1] @ wih.T + b + h @ whh.T
            i = sig(g[:, :H]); f = sig(g[:, H:2 * H])
            gg = np.tanh(g[:, 2 * H:3 * H]); o = sig(g[:, 3 * H:4 * H])
            c = f * c + i * gg
            h = o * np.tanh(c)
            out[t] = h[0]
        return out

    of = run_dir(wih_f, whh_f, b_f[None, :], h0[0:1], c0[0:1], range(T))
    ob = run_dir(wih_b, whh_b, b_b[None, :], h0[1:2], c0[1:2], range(T - 1, -1, -1))
    feats = np.concatenate([of, ob], 1) @ w_tag.T + b_tag

    trans = np.asarray(log_trans)
    K = trans.shape[0]
    fv = np.full((K,), NEG, np.float32); fv[start_idx] = 0.0
    bps = []
    for t in range(T):
        scores = fv[None, :] + trans            # [next, prev]
        bps.append(scores.argmax(1))
        fv = scores.max(1) + feats[t]
    terminal = fv + trans[stop_idx]
    best = int(terminal.argmax()); score = float(terminal[best])
    path = [best]
    for bp in reversed(bps):
        best = int(bp[best]); path.append(best)
    assert path.pop() == start_idx
    path.reverse()
    return feats, score, path


if __name__ == "__main__":
    vocab_size, embedding_dim, hidden_dim = 20, 16, 32
    tag_to_ix = {'B': 0, 'I': 1, 'O': 2, START_TAG: 3, STOP_TAG: 4}
    T = 8          # sentence length
    NB = 16        # sentences per call (batched per perf feedback)
    BT = 8         # sentences per grid step (sublane batch tile; scales to 128)
    K = len(tag_to_ix)
    KV = 8         # Viterbi tag dim padded to a sublane tile
    TAGP = 128     # lane-dense tag dim for the hidden2tag matmul / feats store
    H = hidden_dim // 2
    E = embedding_dim

    key = jax.random.PRNGKey(0)
    ks = jax.random.split(key, 16)

    def rnd(k, shape, scale=0.1):
        return (scale * jax.random.normal(k, shape)).astype(jnp.float32)

    embed = rnd(ks[0], (vocab_size, E), 1.0)
    wih_f = rnd(ks[1], (4 * H, E)); whh_f = rnd(ks[2], (4 * H, H))
    bih_f = rnd(ks[3], (4 * H,));   bhh_f = rnd(ks[4], (4 * H,))
    wih_b = rnd(ks[5], (4 * H, E)); whh_b = rnd(ks[6], (4 * H, H))
    bih_b = rnd(ks[7], (4 * H,));   bhh_b = rnd(ks[8], (4 * H,))
    w_tag = rnd(ks[9], (K, hidden_dim)); b_tag = rnd(ks[10], (K,))

    log_trans = jax.random.normal(ks[11], (K, K)).astype(jnp.float32)
    log_trans = log_trans.at[tag_to_ix[START_TAG], :].set(NEG)
    log_trans = log_trans.at[:, tag_to_ix[STOP_TAG]].set(NEG)

    # init_hidden() uses randn in the module; here deterministic & shared.
    h0 = rnd(ks[12], (2, H), 1.0)
    c0 = rnd(ks[13], (2, H), 1.0)
    sentences = jax.random.randint(ks[14], (NB, T), 0, vocab_size, dtype=jnp.int32)

    # --- host-side packing (gate-interleaved 8H layout, precomputed tables) ---
    embed_np = np.asarray(embed)
    wih_f_np = np.asarray(wih_f); whh_f_np = np.asarray(whh_f)
    wih_b_np = np.asarray(wih_b); whh_b_np = np.asarray(whh_b)
    b_f = np.asarray(bih_f) + np.asarray(bhh_f)
    b_b = np.asarray(bih_b) + np.asarray(bhh_b)
    trans_full = np.asarray(log_trans)

    # Per-token projection tables: P_f = embed @ Wih_f^T (+bias), P_b likewise,
    # placed into the interleaved lane layout [i_f,i_b,f_f,f_b,g_f,g_b,o_f,o_b].
    p4_f = embed_np @ wih_f_np.T          # (V, 4H), PyTorch gate order [i,f,g,o]
    p4_b = embed_np @ wih_b_np.T
    p_f = np.zeros((vocab_size, 8 * H), np.float32)
    p_b = np.zeros((vocab_size, 8 * H), np.float32)
    w_rec = np.zeros((2 * H, 8 * H), np.float32)
    b_in = np.zeros((8 * H,), np.float32)
    for gi in range(4):
        src = slice(gi * H, (gi + 1) * H)
        df = slice((2 * gi) * H, (2 * gi + 1) * H)       # fwd slot of gate gi
        db = slice((2 * gi + 1) * H, (2 * gi + 2) * H)   # bwd slot of gate gi
        p_f[:, df] = p4_f[:, src]
        p_b[:, db] = p4_b[:, src]
        w_rec[0:H, df] = whh_f_np.T[:, src]
        w_rec[H:2 * H, db] = whh_b_np.T[:, src]
        b_in[df] = b_f[src]
        b_in[db] = b_b[src]
    p_f = p_f + b_in[None, :]             # fold combined bias into fwd table

    wt_T = np.zeros((2 * H, TAGP), np.float32)
    wt_T[:, :K] = np.asarray(w_tag).T
    b_t = np.full((1, TAGP), NEG, np.float32)      # padded tag lanes unreachable
    b_t[0, :K] = np.asarray(b_tag)

    trans_pad = np.full((KV, KV), NEG, np.float32)  # [next, prev], padded = -1e4
    trans_pad[:K, :K] = trans_full
    stop_row = np.full((1, KV), NEG, np.float32)
    stop_row[0, :K] = trans_full[tag_to_ix[STOP_TAG]]
    fv_init = np.full((BT, KV), NEG, np.float32)
    fv_init[:, tag_to_ix[START_TAG]] = 0.0

    h0c = np.broadcast_to(np.asarray(h0).reshape(1, 2 * H), (BT, 2 * H)).copy()
    c0c = np.broadcast_to(np.asarray(c0).reshape(1, 2 * H), (BT, 2 * H)).copy()

    packed = dict(
        p_f=jnp.asarray(p_f), p_b=jnp.asarray(p_b), w_rec=jnp.asarray(w_rec),
        h0c=jnp.asarray(h0c), c0c=jnp.asarray(c0c),
        wt_T=jnp.asarray(wt_T), b_t=jnp.asarray(b_t),
        trans_np=jnp.asarray(trans_pad), stop_row=jnp.asarray(stop_row),
        fv_init=jnp.asarray(fv_init), n_tags=K)

    # --- single fused, batched kernel call ---
    feats_raw, bp_raw, term = bilstm_crf_forward(sentences, packed, batch_tile=BT)
    jax.block_until_ready((feats_raw, bp_raw, term))

    # Re-layout kernel-native outputs to (sentence, time, tag) and strip padding.
    num_tiles = NB // BT
    feats = (np.asarray(feats_raw).reshape(num_tiles, T, BT, TAGP)
             .transpose(0, 2, 1, 3).reshape(NB, T, TAGP)[:, :, :K])
    bps = (np.asarray(bp_raw).reshape(num_tiles, T, BT, KV)
           .transpose(0, 2, 1, 3).reshape(NB, T, KV)[:, :, :K])
    terms = np.asarray(term)[:, :K]

    # TODO(synk): the final backpointer traversal is a data-dependent list walk
    # (as in the PyTorch module); it stays as host-side Python glue.
    sent_np = np.asarray(sentences)
    for b in range(NB):
        best = int(terms[b].argmax())
        score = float(terms[b, best])
        path = [best]
        for t in range(T - 1, -1, -1):
            best = int(bps[b, t, best])
            path.append(best)
        start = path.pop()
        assert start == tag_to_ix[START_TAG]
        path.reverse()

        # check against the numpy reference of the PyTorch forward semantics
        x_np = embed_np[sent_np[b]]
        ref_feats, ref_score, ref_path = reference_forward(
            x_np, wih_f_np, whh_f_np, b_f, wih_b_np, whh_b_np, b_b,
            np.asarray(w_tag), np.asarray(b_tag), np.asarray(h0), np.asarray(c0),
            trans_full, tag_to_ix[START_TAG], tag_to_ix[STOP_TAG])
        np.testing.assert_allclose(feats[b], ref_feats, rtol=2e-3, atol=2e-3)
        assert abs(score - ref_score) < 2e-3
        assert path == ref_path

    print("KERNEL_OK")
</pallas_src>

<mosaic_0001>
module attributes {stable_mosaic.version = 11 : i64} {
  func.func @kernel(%arg0: i32, %arg1: memref<128xi32, #tpu.memory_space<smem>>, %arg2: memref<20x128xf32, #tpu.memory_space<vmem>>, %arg3: memref<20x128xf32, #tpu.memory_space<vmem>>, %arg4: memref<32x128xf32, #tpu.memory_space<vmem>>, %arg5: memref<8x32xf32, #tpu.memory_space<vmem>>, %arg6: memref<8x32xf32, #tpu.memory_space<vmem>>, %arg7: memref<32x128xf32, #tpu.memory_space<vmem>>, %arg8: memref<1x128xf32, #tpu.memory_space<vmem>>, %arg9: memref<8x8xf32, #tpu.memory_space<vmem>>, %arg10: memref<1x8xf32, #tpu.memory_space<vmem>>, %arg11: memref<8x8xf32, #tpu.memory_space<vmem>>, %arg12: memref<64x128xf32, #tpu.memory_space<vmem>>, %arg13: memref<64x8xi32, #tpu.memory_space<vmem>>, %arg14: memref<8x8xf32, #tpu.memory_space<vmem>>, %arg15: memref<64x128xf32, #tpu.memory_space<vmem>>, %arg16: memref<64x32xf32, #tpu.memory_space<vmem>>) attributes {dimension_semantics = [#tpu.dimension_semantics<parallel>], iteration_bounds = array<i64: 2>, scalar_prefetch = 1 : i64, scratch_operands = 2 : i64, tpu.core_type = #tpu.core_type<tc>, window_params = [{pipeline_mode = #tpu.pipeline_mode<synchronous>, transform_indices = @transform_0, window_bounds = array<i64: 20, 128>}, {pipeline_mode = #tpu.pipeline_mode<synchronous>, transform_indices = @transform_1, window_bounds = array<i64: 20, 128>}, {pipeline_mode = #tpu.pipeline_mode<synchronous>, transform_indices = @transform_2, window_bounds = array<i64: 32, 128>}, {pipeline_mode = #tpu.pipeline_mode<synchronous>, transform_indices = @transform_3, window_bounds = array<i64: 8, 32>}, {pipeline_mode = #tpu.pipeline_mode<synchronous>, transform_indices = @transform_4, window_bounds = array<i64: 8, 32>}, {pipeline_mode = #tpu.pipeline_mode<synchronous>, transform_indices = @transform_5, window_bounds = array<i64: 32, 128>}, {pipeline_mode = #tpu.pipeline_mode<synchronous>, transform_indices = @transform_6, window_bounds = array<i64: 1, 128>}, {pipeline_mode = #tpu.pipeline_mode<synchronous>, transform_indices = @transform_7, window_bounds = array<i64: 8, 8>}, {pipeline_mode = #tpu.pipeline_mode<synchronous>, transform_indices = @transform_8, window_bounds = array<i64: 1, 8>}, {pipeline_mode = #tpu.pipeline_mode<synchronous>, transform_indices = @transform_9, window_bounds = array<i64: 8, 8>}, {transform_indices = @transform_10, window_bounds = array<i64: 64, 128>}, {transform_indices = @transform_11, window_bounds = array<i64: 64, 8>}, {transform_indices = @transform_12, window_bounds = array<i64: 8, 8>}]} {
    %c8_i32 = arith.constant 8 : i32
    %0 = arith.muli %arg0, %c8_i32 : i32
    %c0_i32 = arith.constant 0 : i32
    %1 = arith.addi %0, %c0_i32 : i32
    %c8_i32_0 = arith.constant 8 : i32
    %2 = arith.muli %1, %c8_i32_0 : i32
    %c0_i32_1 = arith.constant 0 : i32
    %3 = arith.addi %2, %c0_i32_1 : i32
    %4 = arith.index_cast %3 : i32 to index
    %5 = memref.load %arg1[%4] : memref<128xi32, #tpu.memory_space<smem>>
    %c7_i32 = arith.constant 7 : i32
    %6 = arith.addi %2, %c7_i32 : i32
    %7 = arith.index_cast %6 : i32 to index
    %8 = memref.load %arg1[%7] : memref<128xi32, #tpu.memory_space<smem>>
    %9 = arith.index_cast %5 : i32 to index
    %c0 = arith.constant 0 : index
    %10 = vector.load %arg2[%9, %c0] : memref<20x128xf32, #tpu.memory_space<vmem>>, vector<1x128xf32>
    %11 = arith.index_cast %8 : i32 to index
    %c0_2 = arith.constant 0 : index
    %12 = vector.load %arg3[%11, %c0_2] : memref<20x128xf32, #tpu.memory_space<vmem>>, vector<1x128xf32>
    %13 = arith.addf %10, %12 : vector<1x128xf32>
    %c0_3 = arith.constant 0 : index
    %c0_4 = arith.constant 0 : index
    %14 = vector.load %arg15[%c0_3, %c0_4] : memref<64x128xf32, #tpu.memory_space<vmem>>, vector<1x128xf32>
    tpu.vector_store %arg15[%c0_3, %c0_4], %13 {strides = array<i32>} : memref<64x128xf32, #tpu.memory_space<vmem>>, vector<1x128xf32>,
    %c8_i32_5 = arith.constant 8 : i32
    %15 = arith.muli %arg0, %c8_i32_5 : i32
    %c1_i32 = arith.constant 1 : i32
    %16 = arith.addi %15, %c1_i32 : i32
    %c8_i32_6 = arith.constant 8 : i32
    %17 = arith.muli %16, %c8_i32_6 : i32
    %c0_i32_7 = arith.constant 0 : i32
    %18 = arith.addi %17, %c0_i32_7 : i32
    %19 = arith.index_cast %18 : i32 to index
    %20 = memref.load %arg1[%19] : memref<128xi32, #tpu.memory_space<smem>>
    %c7_i32_8 = arith.constant 7 : i32
    %21 = arith.addi %17, %c7_i32_8 : i32
    %22 = arith.index_cast %21 : i32 to index
    %23 = memref.load %arg1[%22] : memref<128xi32, #tpu.memory_space<smem>>
    %24 = arith.index_cast %20 : i32 to index
    %c0_9 = arith.constant 0 : index
    %25 = vector.load %arg2[%24, %c0_9] : memref<20x128xf32, #tpu.memory_space<vmem>>, vector<1x128xf32>
    %26 = arith.index_cast %23 : i32 to index
    %c0_10 = arith.constant 0 : index
    %27 = vector.load %arg3[%26, %c0_10] : memref<20x128xf32, #tpu.memory_space<vmem>>, vector<1x128xf32>
    %28 = arith.addf %25, %27 : vector<1x128xf32>
    %c1 = arith.constant 1 : index
    %c0_11 = arith.constant 0 : index
    %29 = vector.load %arg15[%c1, %c0_11] : memref<64x128xf32, #tpu.memory_space<vmem>>, vector<1x128xf32>
    tpu.vector_store %arg15[%c1, %c0_11], %28 {strides = array<i32>} : memref<64x128xf32, #tpu.memory_space<vmem>>, vector<1x128xf32>,
    %c8_i32_12 = arith.constant 8 : i32
    %30 = arith.muli %arg0, %c8_i32_12 : i32
    %c2_i32 = arith.constant 2 : i32
    %31 = arith.addi %30, %c2_i32 : i32
    %c8_i32_13 = arith.constant 8 : i32
    %32 = arith.muli %31, %c8_i32_13 : i32
    %c0_i32_14 = arith.constant 0 : i32
    %33 = arith.addi %32, %c0_i32_14 : i32
    %34 = arith.index_cast %33 : i32 to index
    %35 = memref.load %arg1[%34] : memref<128xi32, #tpu.memory_space<smem>>
    %c7_i32_15 = arith.constant 7 : i32
    %36 = arith.addi %32, %c7_i32_15 : i32
    %37 = arith.index_cast %36 : i32 to index
    %38 = memref.load %arg1[%37] : memref<128xi32, #tpu.memory_space<smem>>
    %39 = arith.index_cast %35 : i32 to index
    %c0_16 = arith.constant 0 : index
    %40 = vector.load %arg2[%39, %c0_16] : memref<20x128xf32, #tpu.memory_space<vmem>>, vector<1x128xf32>
    %41 = arith.index_cast %38 : i32 to index
    %c0_17 = arith.constant 0 : index
    %42 = vector.load %arg3[%41, %c0_17] : memref<20x128xf32, #tpu.memory_space<vmem>>, vector<1x128xf32>
    %43 = arith.addf %40, %42 : vector<1x128xf32>
    %c2 = arith.constant 2 : index
    %c0_18 = arith.constant 0 : index
    %44 = vector.load %arg15[%c2, %c0_18] : memref<64x128xf32, #tpu.memory_space<vmem>>, vector<1x128xf32>
    tpu.vector_store %arg15[%c2, %c0_18], %43 {strides = array<i32>} : memref<64x128xf32, #tpu.memory_space<vmem>>, vector<1x128xf32>,
    %c8_i32_19 = arith.constant 8 : i32
    %45 = arith.muli %arg0, %c8_i32_19 : i32
    %c3_i32 = arith.constant 3 : i32
    %46 = arith.addi %45, %c3_i32 : i32
    %c8_i32_20 = arith.constant 8 : i32
    %47 = arith.muli %46, %c8_i32_20 : i32
    %c0_i32_21 = arith.constant 0 : i32
    %48 = arith.addi %47, %c0_i32_21 : i32
    %49 = arith.index_cast %48 : i32 to index
    %50 = memref.load %arg1[%49] : memref<128xi32, #tpu.memory_space<smem>>
    %c7_i32_22 = arith.constant 7 : i32
    %51 = arith.addi %47, %c7_i32_22 : i32
    %52 = arith.index_cast %51 : i32 to index
    %53 = memref.load %arg1[%52] : memref<128xi32, #tpu.memory_space<smem>>
    %54 = arith.index_cast %50 : i32 to index
    %c0_23 = arith.constant 0 : index
    %55 = vector.load %arg2[%54, %c0_23] : memref<20x128xf32, #tpu.memory_space<vmem>>, vector<1x128xf32>
    %56 = arith.index_cast %53 : i32 to index
    %c0_24 = arith.constant 0 : index
    %57 = vector.load %arg3[%56, %c0_24] : memref<20x128xf32, #tpu.memory_space<vmem>>, vector<1x128xf32>
    %58 = arith.addf %55, %57 : vector<1x128xf32>
    %c3 = arith.constant 3 : index
    %c0_25 = arith.constant 0 : index
    %59 = vector.load %arg15[%c3, %c0_25] : memref<64x128xf32, #tpu.memory_space<vmem>>, vector<1x128xf32>
    tpu.vector_store %arg15[%c3, %c0_25], %58 {strides = array<i32>} : memref<64x128xf32, #tpu.memory_space<vmem>>, vector<1x128xf32>,
    %c8_i32_26 = arith.constant 8 : i32
    %60 = arith.muli %arg0, %c8_i32_26 : i32
    %c4_i32 = arith.constant 4 : i32
    %61 = arith.addi %60, %c4_i32 : i32
    %c8_i32_27 = arith.constant 8 : i32
    %62 = arith.muli %61, %c8_i32_27 : i32
    %c0_i32_28 = arith.constant 0 : i32
    %63 = arith.addi %62, %c0_i32_28 : i32
    %64 = arith.index_cast %63 : i32 to index
    %65 = memref.load %arg1[%64] : memref<128xi32, #tpu.memory_space<smem>>
    %c7_i32_29 = arith.constant 7 : i32
    %66 = arith.addi %62, %c7_i32_29 : i32
    %67 = arith.index_cast %66 : i32 to index
    %68 = memref.load %arg1[%67] : memref<128xi32, #tpu.memory_space<smem>>
    %69 = arith.index_cast %65 : i32 to index
    %c0_30 = arith.constant 0 : index
    %70 = vector.load %arg2[%69, %c0_30] : memref<20x128xf32, #tpu.memory_space<vmem>>, vector<1x128xf32>
    %71 = arith.index_cast %68 : i32 to index
    %c0_31 = arith.constant 0 : index
    %72 = vector.load %arg3[%71, %c0_31] : memref<20x128xf32, #tpu.memory_space<vmem>>, vector<1x128xf32>
    %73 = arith.addf %70, %72 : vector<1x128xf32>
    %c4 = arith.constant 4 : index
    %c0_32 = arith.constant 0 : index
    %74 = vector.load %arg15[%c4, %c0_32] : memref<64x128xf32, #tpu.memory_space<vmem>>, vector<1x128xf32>
    tpu.vector_store %arg15[%c4, %c0_32], %73 {strides = array<i32>} : memref<64x128xf32, #tpu.memory_space<vmem>>, vector<1x128xf32>,
    %c8_i32_33 = arith.constant 8 : i32
    %75 = arith.muli %arg0, %c8_i32_33 : i32
    %c5_i32 = arith.constant 5 : i32
    %76 = arith.addi %75, %c5_i32 : i32
    %c8_i32_34 = arith.constant 8 : i32
    %77 = arith.muli %76, %c8_i32_34 : i32
    %c0_i32_35 = arith.constant 0 : i32
    %78 = arith.addi %77, %c0_i32_35 : i32
    %79 = arith.index_cast %78 : i32 to index
    %80 = memref.load %arg1[%79] : memref<128xi32, #tpu.memory_space<smem>>
    %c7_i32_36 = arith.constant 7 : i32
    %81 = arith.addi %77, %c7_i32_36 : i32
    %82 = arith.index_cast %81 : i32 to index
    %83 = memref.load %arg1[%82] : memref<128xi32, #tpu.memory_space<smem>>
    %84 = arith.index_cast %80 : i32 to index
    %c0_37 = arith.constant 0 : index
    %85 = vector.load %arg2[%84, %c0_37] : memref<20x128xf32, #tpu.memory_space<vmem>>, vector<1x128xf32>
    %86 = arith.index_cast %83 : i32 to index
    %c0_38 = arith.constant 0 : index
    %87 = vector.load %arg3[%86, %c0_38] : memref<20x128xf32, #tpu.memory_space<vmem>>, vector<1x128xf32>
    %88 = arith.addf %85, %87 : vector<1x128xf32>
    %c5 = arith.constant 5 : index
    %c0_39 = arith.constant 0 : index
    %89 = vector.load %arg15[%c5, %c0_39] : memref<64x128xf32, #tpu.memory_space<vmem>>, vector<1x128xf32>
    tpu.vector_store %arg15[%c5, %c0_39], %88 {strides = array<i32>} : memref<64x128xf32, #tpu.memory_space<vmem>>, vector<1x128xf32>,
    %c8_i32_40 = arith.constant 8 : i32
    %90 = arith.muli %arg0, %c8_i32_40 : i32
    %c6_i32 = arith.constant 6 : i32
    %91 = arith.addi %90, %c6_i32 : i32
    %c8_i32_41 = arith.constant 8 : i32
    %92 = arith.muli %91, %c8_i32_41 : i32
    %c0_i32_42 = arith.constant 0 : i32
    %93 = arith.addi %92, %c0_i32_42 : i32
    %94 = arith.index_cast %93 : i32 to index
    %95 = memref.load %arg1[%94] : memref<128xi32, #tpu.memory_space<smem>>
    %c7_i32_43 = arith.constant 7 : i32
    %96 = arith.addi %92, %c7_i32_43 : i32
    %97 = arith.index_cast %96 : i32 to index
    %98 = memref.load %arg1[%97] : memref<128xi32, #tpu.memory_space<smem>>
    %99 = arith.index_cast %95 : i32 to index
    %c0_44 = arith.constant 0 : index
    %100 = vector.load %arg2[%99, %c0_44] : memref<20x128xf32, #tpu.memory_space<vmem>>, vector<1x128xf32>
    %101 = arith.index_cast %98 : i32 to index
    %c0_45 = arith.constant 0 : index
    %102 = vector.load %arg3[%101, %c0_45] : memref<20x128xf32, #tpu.memory_space<vmem>>, vector<1x128xf32>
    %103 = arith.addf %100, %102 : vector<1x128xf32>
    %c6 = arith.constant 6 : index
    %c0_46 = arith.constant 0 : index
    %104 = vector.load %arg15[%c6, %c0_46] : memref<64x128xf32, #tpu.memory_space<vmem>>, vector<1x128xf32>
    tpu.vector_store %arg15[%c6, %c0_46], %103 {strides = array<i32>} : memref<64x128xf32, #tpu.memory_space<vmem>>, vector<1x128xf32>,
    %c8_i32_47 = arith.constant 8 : i32
    %105 = arith.muli %arg0, %c8_i32_47 : i32
    %c7_i32_48 = arith.constant 7 : i32
    %106 = arith.addi %105, %c7_i32_48 : i32
    %c8_i32_49 = arith.constant 8 : i32
    %107 = arith.muli %106, %c8_i32_49 : i32
    %c0_i32_50 = arith.constant 0 : i32
    %108 = arith.addi %107, %c0_i32_50 : i32
    %109 = arith.index_cast %108 : i32 to index
    %110 = memref.load %arg1[%109] : memref<128xi32, #tpu.memory_space<smem>>
    %c7_i32_51 = arith.constant 7 : i32
    %111 = arith.addi %107, %c7_i32_51 : i32
    %112 = arith.index_cast %111 : i32 to index
    %113 = memref.load %arg1[%112] : memref<128xi32, #tpu.memory_space<smem>>
    %114 = arith.index_cast %110 : i32 to index
    %c0_52 = arith.constant 0 : index
    %115 = vector.load %arg2[%114, %c0_52] : memref<20x128xf32, #tpu.memory_space<vmem>>, vector<1x128xf32>
    %116 = arith.index_cast %113 : i32 to index
    %c0_53 = arith.constant 0 : index
    %117 = vector.load %arg3[%116, %c0_53] : memref<20x128xf32, #tpu.memory_space<vmem>>, vector<1x128xf32>
    %118 = arith.addf %115, %117 : vector<1x128xf32>
    %c7 = arith.constant 7 : index
    %c0_54 = arith.constant 0 : index
    %119 = vector.load %arg15[%c7, %c0_54] : memref<64x128xf32, #tpu.memory_space<vmem>>, vector<1x128xf32>
    tpu.vector_store %arg15[%c7, %c0_54], %118 {strides = array<i32>} : memref<64x128xf32, #tpu.memory_space<vmem>>, vector<1x128xf32>,
    %c8_i32_55 = arith.constant 8 : i32
    %120 = arith.muli %arg0, %c8_i32_55 : i32
    %c0_i32_56 = arith.constant 0 : i32
    %121 = arith.addi %120, %c0_i32_56 : i32
    %c8_i32_57 = arith.constant 8 : i32
    %122 = arith.muli %121, %c8_i32_57 : i32
    %c1_i32_58 = arith.constant 1 : i32
    %123 = arith.addi %122, %c1_i32_58 : i32
    %124 = arith.index_cast %123 : i32 to index
    %125 = memref.load %arg1[%124] : memref<128xi32, #tpu.memory_space<smem>>
    %c6_i32_59 = arith.constant 6 : i32
    %126 = arith.addi %122, %c6_i32_59 : i32
    %127 = arith.index_cast %126 : i32 to index
    %128 = memref.load %arg1[%127] : memref<128xi32, #tpu.memory_space<smem>>
    %129 = arith.index_cast %125 : i32 to index
    %c0_60 = arith.constant 0 : index
    %130 = vector.load %arg2[%129, %c0_60] : memref<20x128xf32, #tpu.memory_space<vmem>>, vector<1x128xf32>
    %131 = arith.index_cast %128 : i32 to index
    %c0_61 = arith.constant 0 : index
    %132 = vector.load %arg3[%131, %c0_61] : memref<20x128xf32, #tpu.memory_space<vmem>>, vector<1x128xf32>
    %133 = arith.addf %130, %132 : vector<1x128xf32>
    %c8 = arith.constant 8 : index
    %c0_62 = arith.constant 0 : index
    %134 = vector.load %arg15[%c8, %c0_62] : memref<64x128xf32, #tpu.memory_space<vmem>>, vector<1x128xf32>
    tpu.vector_store %arg15[%c8, %c0_62], %133 {strides = array<i32>} : memref<64x128xf32, #tpu.memory_space<vmem>>, vector<1x128xf32>,
    %c8_i32_63 = arith.constant 8 : i32
    %135 = arith.muli %arg0, %c8_i32_63 : i32
    %c1_i32_64 = arith.constant 1 : i32
    %136 = arith.addi %135, %c1_i32_64 : i32
    %c8_i32_65 = arith.constant 8 : i32
    %137 = arith.muli %136, %c8_i32_65 : i32
    %c1_i32_66 = arith.constant 1 : i32
    %138 = arith.addi %137, %c1_i32_66 : i32
    %139 = arith.index_cast %138 : i32 to index
    %140 = memref.load %arg1[%139] : memref<128xi32, #tpu.memory_space<smem>>
    %c6_i32_67 = arith.constant 6 : i32
    %141 = arith.addi %137, %c6_i32_67 : i32
    %142 = arith.index_cast %141 : i32 to index
    %143 = memref.load %arg1[%142] : memref<128xi32, #tpu.memory_space<smem>>
    %144 = arith.index_cast %140 : i32 to index
    %c0_68 = arith.constant 0 : index
    %145 = vector.load %arg2[%144, %c0_68] : memref<20x128xf32, #tpu.memory_space<vmem>>, vector<1x128xf32>
    %146 = arith.index_cast %143 : i32 to index
    %c0_69 = arith.constant 0 : index
    %147 = vector.load %arg3[%146, %c0_69] : memref<20x128xf32, #tpu.memory_space<vmem>>, vector<1x128xf32>
    %148 = arith.addf %145, %147 : vector<1x128xf32>
    %c9 = arith.constant 9 : index
    %c0_70 = arith.constant 0 : index
    %149 = vector.load %arg15[%c9, %c0_70] : memref<64x128xf32, #tpu.memory_space<vmem>>, vector<1x128xf32>
    tpu.vector_store %arg15[%c9, %c0_70], %148 {strides = array<i32>} : memref<64x128xf32, #tpu.memory_space<vmem>>, vector<1x128xf32>,
    %c8_i32_71 = arith.constant 8 : i32
    %150 = arith.muli %arg0, %c8_i32_71 : i32
    %c2_i32_72 = arith.constant 2 : i32
    %151 = arith.addi %150, %c2_i32_72 : i32
    %c8_i32_73 = arith.constant 8 : i32
    %152 = arith.muli %151, %c8_i32_73 : i32
    %c1_i32_74 = arith.constant 1 : i32
    %153 = arith.addi %152, %c1_i32_74 : i32
    %154 = arith.index_cast %153 : i32 to index
    %155 = memref.load %arg1[%154] : memref<128xi32, #tpu.memory_space<smem>>
    %c6_i32_75 = arith.constant 6 : i32
    %156 = arith.addi %152, %c6_i32_75 : i32
    %157 = arith.index_cast %156 : i32 to index
    %158 = memref.load %arg1[%157] : memref<128xi32, #tpu.memory_space<smem>>
    %159 = arith.index_cast %155 : i32 to index
    %c0_76 = arith.constant 0 : index
    %160 = vector.load %arg2[%159, %c0_76] : memref<20x128xf32, #tpu.memory_space<vmem>>, vector<1x128xf32>
    %161 = arith.index_cast %158 : i32 to index
    %c0_77 = arith.constant 0 : index
    %162 = vector.load %arg3[%161, %c0_77] : memref<20x128xf32, #tpu.memory_space<vmem>>, vector<1x128xf32>
    %163 = arith.addf %160, %162 : vector<1x128xf32>
    %c10 = arith.constant 10 : index
    %c0_78 = arith.constant 0 : index
    %164 = vector.load %arg15[%c10, %c0_78] : memref<64x128xf32, #tpu.memory_space<vmem>>, vector<1x128xf32>
    tpu.vector_store %arg15[%c10, %c0_78], %163 {strides = array<i32>} : memref<64x128xf32, #tpu.memory_space<vmem>>, vector<1x128xf32>,
    %c8_i32_79 = arith.constant 8 : i32
    %165 = arith.muli %arg0, %c8_i32_79 : i32
    %c3_i32_80 = arith.constant 3 : i32
    %166 = arith.addi %165, %c3_i32_80 : i32
    %c8_i32_81 = arith.constant 8 : i32
    %167 = arith.muli %166, %c8_i32_81 : i32
    %c1_i32_82 = arith.constant 1 : i32
    %168 = arith.addi %167, %c1_i32_82 : i32
    %169 = arith.index_cast %168 : i32 to index
    %170 = memref.load %arg1[%169] : memref<128xi32, #tpu.memory_space<smem>>
    %c6_i32_83 = arith.constant 6 : i32
    %171 = arith.addi %167, %c6_i32_83 : i32
    %172 = arith.index_cast %171 : i32 to index
    %173 = memref.load %arg1[%172] : memref<128xi32, #tpu.memory_space<smem>>
    %174 = arith.index_cast %170 : i32 to index
    %c0_84 = arith.constant 0 : index
    %175 = vector.load %arg2[%174, %c0_84] : memref<20x128xf32, #tpu.memory_space<vmem>>, vector<1x128xf32>
    %176 = arith.index_cast %173 : i32 to index
    %c0_85 = arith.constant 0 : index
    %177 = vector.load %arg3[%176, %c0_85] : memref<20x128xf32, #tpu.memory_space<vmem>>, vector<1x128xf32>
    %178 = arith.addf %175, %177 : vector<1x128xf32>
    %c11 = arith.constant 11 : index
    %c0_86 = arith.constant 0 : index
    %179 = vector.load %arg15[%c11, %c0_86] : memref<64x128xf32, #tpu.memory_space<vmem>>, vector<1x128xf32>
    tpu.vector_store %arg15[%c11, %c0_86], %178 {strides = array<i32>} : memref<64x128xf32, #tpu.memory_space<vmem>>, vector<1x128xf32>,
    %c8_i32_87 = arith.constant 8 : i32
    %180 = arith.muli %arg0, %c8_i32_87 : i32
    %c4_i32_88 = arith.constant 4 : i32
    %181 = arith.addi %180, %c4_i32_88 : i32
    %c8_i32_89 = arith.constant 8 : i32
    %182 = arith.muli %181, %c8_i32_89 : i32
    %c1_i32_90 = arith.constant 1 : i32
    %183 = arith.addi %182, %c1_i32_90 : i32
    %184 = arith.index_cast %183 : i32 to index
    %185 = memref.load %arg1[%184] : memref<128xi32, #tpu.memory_space<smem>>
    %c6_i32_91 = arith.constant 6 : i32
    %186 = arith.addi %182, %c6_i32_91 : i32
    %187 = arith.index_cast %186 : i32 to index
    %188 = memref.load %arg1[%187] : memref<128xi32, #tpu.memory_space<smem>>
    %189 = arith.index_cast %185 : i32 to index
    %c0_92 = arith.constant 0 : index
    %190 = vector.load %arg2[%189, %c0_92] : memref<20x128xf32, #tpu.memory_space<vmem>>, vector<1x128xf32>
    %191 = arith.index_cast %188 : i32 to index
    %c0_93 = arith.constant 0 : index
    %192 = vector.load %arg3[%191, %c0_93] : memref<20x128xf32, #tpu.memory_space<vmem>>, vector<1x128xf32>
    %193 = arith.addf %190, %192 : vector<1x128xf32>
    %c12 = arith.constant 12 : index
    %c0_94 = arith.constant 0 : index
    %194 = vector.load %arg15[%c12, %c0_94] : memref<64x128xf32, #tpu.memory_space<vmem>>, vector<1x128xf32>
    tpu.vector_store %arg15[%c12, %c0_94], %193 {strides = array<i32>} : memref<64x128xf32, #tpu.memory_space<vmem>>, vector<1x128xf32>,
    %c8_i32_95 = arith.constant 8 : i32
    %195 = arith.muli %arg0, %c8_i32_95 : i32
    %c5_i32_96 = arith.constant 5 : i32
    %196 = arith.addi %195, %c5_i32_96 : i32
    %c8_i32_97 = arith.constant 8 : i32
    %197 = arith.muli %196, %c8_i32_97 : i32
    %c1_i32_98 = arith.constant 1 : i32
    %198 = arith.addi %197, %c1_i32_98 : i32
    %199 = arith.index_cast %198 : i32 to index
    %200 = memref.load %arg1[%199] : memref<128xi32, #tpu.memory_space<smem>>
    %c6_i32_99 = arith.constant 6 : i32
    %201 = arith.addi %197, %c6_i32_99 : i32
    %202 = arith.index_cast %201 : i32 to index
    %203 = memref.load %arg1[%202] : memref<128xi32, #tpu.memory_space<smem>>
    %204 = arith.index_cast %200 : i32 to index
    %c0_100 = arith.constant 0 : index
    %205 = vector.load %arg2[%204, %c0_100] : memref<20x128xf32, #tpu.memory_space<vmem>>, vector<1x128xf32>
    %206 = arith.index_cast %203 : i32 to index
    %c0_101 = arith.constant 0 : index
    %207 = vector.load %arg3[%206, %c0_101] : memref<20x128xf32, #tpu.memory_space<vmem>>, vector<1x128xf32>
    %208 = arith.addf %205, %207 : vector<1x128xf32>
    %c13 = arith.constant 13 : index
    %c0_102 = arith.constant 0 : index
    %209 = vector.load %arg15[%c13, %c0_102] : memref<64x128xf32, #tpu.memory_space<vmem>>, vector<1x128xf32>
    tpu.vector_store %arg15[%c13, %c0_102], %208 {strides = array<i32>} : memref<64x128xf32, #tpu.memory_space<vmem>>, vector<1x128xf32>,
    %c8_i32_103 = arith.constant 8 : i32
    %210 = arith.muli %arg0, %c8_i32_103 : i32
    %c6_i32_104 = arith.constant 6 : i32
    %211 = arith.addi %210, %c6_i32_104 : i32
    %c8_i32_105 = arith.constant 8 : i32
    %212 = arith.muli %211, %c8_i32_105 : i32
    %c1_i32_106 = arith.constant 1 : i32
    %213 = arith.addi %212, %c1_i32_106 : i32
    %214 = arith.index_cast %213 : i32 to index
    %215 = memref.load %arg1[%214] : memref<128xi32, #tpu.memory_space<smem>>
    %c6_i32_107 = arith.constant 6 : i32
    %216 = arith.addi %212, %c6_i32_107 : i32
    %217 = arith.index_cast %216 : i32 to index
    %218 = memref.load %arg1[%217] : memref<128xi32, #tpu.memory_space<smem>>
    %219 = arith.index_cast %215 : i32 to index
    %c0_108 = arith.constant 0 : index
    %220 = vector.load %arg2[%219, %c0_108] : memref<20x128xf32, #tpu.memory_space<vmem>>, vector<1x128xf32>
    %221 = arith.index_cast %218 : i32 to index
    %c0_109 = arith.constant 0 : index
    %222 = vector.load %arg3[%221, %c0_109] : memref<20x128xf32, #tpu.memory_space<vmem>>, vector<1x128xf32>
    %223 = arith.addf %220, %222 : vector<1x128xf32>
    %c14 = arith.constant 14 : index
    %c0_110 = arith.constant 0 : index
    %224 = vector.load %arg15[%c14, %c0_110] : memref<64x128xf32, #tpu.memory_space<vmem>>, vector<1x128xf32>
    tpu.vector_store %arg15[%c14, %c0_110], %223 {strides = array<i32>} : memref<64x128xf32, #tpu.memory_space<vmem>>, vector<1x128xf32>,
    %c8_i32_111 = arith.constant 8 : i32
    %225 = arith.muli %arg0, %c8_i32_111 : i32
    %c7_i32_112 = arith.constant 7 : i32
    %226 = arith.addi %225, %c7_i32_112 : i32
    %c8_i32_113 = arith.constant 8 : i32
    %227 = arith.muli %226, %c8_i32_113 : i32
    %c1_i32_114 = arith.constant 1 : i32
    %228 = arith.addi %227, %c1_i32_114 : i32
    %229 = arith.index_cast %228 : i32 to index
    %230 = memref.load %arg1[%229] : memref<128xi32, #tpu.memory_space<smem>>
    %c6_i32_115 = arith.constant 6 : i32
    %231 = arith.addi %227, %c6_i32_115 : i32
    %232 = arith.index_cast %231 : i32 to index
    %233 = memref.load %arg1[%232] : memref<128xi32, #tpu.memory_space<smem>>
    %234 = arith.index_cast %230 : i32 to index
    %c0_116 = arith.constant 0 : index
    %235 = vector.load %arg2[%234, %c0_116] : memref<20x128xf32, #tpu.memory_space<vmem>>, vector<1x128xf32>
    %236 = arith.index_cast %233 : i32 to index
    %c0_117 = arith.constant 0 : index
    %237 = vector.load %arg3[%236, %c0_117] : memref<20x128xf32, #tpu.memory_space<vmem>>, vector<1x128xf32>
    %238 = arith.addf %235, %237 : vector<1x128xf32>
    %c15 = arith.constant 15 : index
    %c0_118 = arith.constant 0 : index
    %239 = vector.load %arg15[%c15, %c0_118] : memref<64x128xf32, #tpu.memory_space<vmem>>, vector<1x128xf32>
    tpu.vector_store %arg15[%c15, %c0_118], %238 {strides = array<i32>} : memref<64x128xf32, #tpu.memory_space<vmem>>, vector<1x128xf32>,
    %c8_i32_119 = arith.constant 8 : i32
    %240 = arith.muli %arg0, %c8_i32_119 : i32
    %c0_i32_120 = arith.constant 0 : i32
    %241 = arith.addi %240, %c0_i32_120 : i32
    %c8_i32_121 = arith.constant 8 : i32
    %242 = arith.muli %241, %c8_i32_121 : i32
    %c2_i32_122 = arith.constant 2 : i32
    %243 = arith.addi %242, %c2_i32_122 : i32
    %244 = arith.index_cast %243 : i32 to index
    %245 = memref.load %arg1[%244] : memref<128xi32, #tpu.memory_space<smem>>
    %c5_i32_123 = arith.constant 5 : i32
    %246 = arith.addi %242, %c5_i32_123 : i32
    %247 = arith.index_cast %246 : i32 to index
    %248 = memref.load %arg1[%247] : memref<128xi32, #tpu.memory_space<smem>>
    %249 = arith.index_cast %245 : i32 to index
    %c0_124 = arith.constant 0 : index
    %250 = vector.load %arg2[%249, %c0_124] : memref<20x128xf32, #tpu.memory_space<vmem>>, vector<1x128xf32>
    %251 = arith.index_cast %248 : i32 to index
    %c0_125 = arith.constant 0 : index
    %252 = vector.load %arg3[%251, %c0_125] : memref<20x128xf32, #tpu.memory_space<vmem>>, vector<1x128xf32>
    %253 = arith.addf %250, %252 : vector<1x128xf32>
    %c16 = arith.constant 16 : index
    %c0_126 = arith.constant 0 : index
    %254 = vector.load %arg15[%c16, %c0_126] : memref<64x128xf32, #tpu.memory_space<vmem>>, vector<1x128xf32>
    tpu.vector_store %arg15[%c16, %c0_126], %253 {strides = array<i32>} : memref<64x128xf32, #tpu.memory_space<vmem>>, vector<1x128xf32>,
    %c8_i32_127 = arith.constant 8 : i32
    %255 = arith.muli %arg0, %c8_i32_127 : i32
    %c1_i32_128 = arith.constant 1 : i32
    %256 = arith.addi %255, %c1_i32_128 : i32
    %c8_i32_129 = arith.constant 8 : i32
    %257 = arith.muli %256, %c8_i32_129 : i32
    %c2_i32_130 = arith.constant 2 : i32
    %258 = arith.addi %257, %c2_i32_130 : i32
    %259 = arith.index_cast %258 : i32 to index
    %260 = memref.load %arg1[%259] : memref<128xi32, #tpu.memory_space<smem>>
    %c5_i32_131 = arith.constant 5 : i32
    %261 = arith.addi %257, %c5_i32_131 : i32
    %262 = arith.index_cast %261 : i32 to index
    %263 = memref.load %arg1[%262] : memref<128xi32, #tpu.memory_space<smem>>
    %264 = arith.index_cast %260 : i32 to index
    %c0_132 = arith.constant 0 : index
    %265 = vector.load %arg2[%264, %c0_132] : memref<20x128xf32, #tpu.memory_space<vmem>>, vector<1x128xf32>
    %266 = arith.index_cast %263 : i32 to index
    %c0_133 = arith.constant 0 : index
    %267 = vector.load %arg3[%266, %c0_133] : memref<20x128xf32, #tpu.memory_space<vmem>>, vector<1x128xf32>
    %268 = arith.addf %265, %267 : vector<1x128xf32>
    %c17 = arith.constant 17 : index
    %c0_134 = arith.constant 0 : index
    %269 = vector.load %arg15[%c17, %c0_134] : memref<64x128xf32, #tpu.memory_space<vmem>>, vector<1x128xf32>
    tpu.vector_store %arg15[%c17, %c0_134], %268 {strides = array<i32>} : memref<64x128xf32, #tpu.memory_space<vmem>>, vector<1x128xf32>,
    %c8_i32_135 = arith.constant 8 : i32
    %270 = arith.muli %arg0, %c8_i32_135 : i32
    %c2_i32_136 = arith.constant 2 : i32
    %271 = arith.addi %270, %c2_i32_136 : i32
    %c8_i32_137 = arith.constant 8 : i32
    %272 = arith.muli %271, %c8_i32_137 : i32
    %c2_i32_138 = arith.constant 2 : i32
    %273 = arith.addi %272, %c2_i32_138 : i32
    %274 = arith.index_cast %273 : i32 to index
    %275 = memref.load %arg1[%274] : memref<128xi32, #tpu.memory_space<smem>>
    %c5_i32_139 = arith.constant 5 : i32
    %276 = arith.addi %272, %c5_i32_139 : i32
    %277 = arith.index_cast %276 : i32 to index
    %278 = memref.load %arg1[%277] : memref<128xi32, #tpu.memory_space<smem>>
    %279 = arith.index_cast %275 : i32 to index
    %c0_140 = arith.constant 0 : index
    %280 = vector.load %arg2[%279, %c0_140] : memref<20x128xf32, #tpu.memory_space<vmem>>, vector<1x128xf32>
    %281 = arith.index_cast %278 : i32 to index
    %c0_141 = arith.constant 0 : index
    %282 = vector.load %arg3[%281, %c0_141] : memref<20x128xf32, #tpu.memory_space<vmem>>, vector<1x128xf32>
    %283 = arith.addf %280, %282 : vector<1x128xf32>
    %c18 = arith.constant 18 : index
    %c0_142 = arith.constant 0 : index
    %284 = vector.load %arg15[%c18, %c0_142] : memref<64x128xf32, #tpu.memory_space<vmem>>, vector<1x128xf32>
    tpu.vector_store %arg15[%c18, %c0_142], %283 {strides = array<i32>} : memref<64x128xf32, #tpu.memory_space<vmem>>, vector<1x128xf32>,
    %c8_i32_143 = arith.constant 8 : i32
    %285 = arith.muli %arg0, %c8_i32_143 : i32
    %c3_i32_144 = arith.constant 3 : i32
    %286 = arith.addi %285, %c3_i32_144 : i32
    %c8_i32_145 = arith.constant 8 : i32
    %287 = arith.muli %286, %c8_i32_145 : i32
    %c2_i32_146 = arith.constant 2 : i32
    %288 = arith.addi %287, %c2_i32_146 : i32
    %289 = arith.index_cast %288 : i32 to index
    %290 = memref.load %arg1[%289] : memref<128xi32, #tpu.memory_space<smem>>
    %c5_i32_147 = arith.constant 5 : i32
    %291 = arith.addi %287, %c5_i32_147 : i32
    %292 = arith.index_cast %291 : i32 to index
    %293 = memref.load %arg1[%292] : memref<128xi32, #tpu.memory_space<smem>>
    %294 = arith.index_cast %290 : i32 to index
    %c0_148 = arith.constant 0 : index
    %295 = vector.load %arg2[%294, %c0_148] : memref<20x128xf32, #tpu.memory_space<vmem>>, vector<1x128xf32>
    %296 = arith.index_cast %293 : i32 to index
    %c0_149 = arith.constant 0 : index
    %297 = vector.load %arg3[%296, %c0_149] : memref<20x128xf32, #tpu.memory_space<vmem>>, vector<1x128xf32>
    %298 = arith.addf %295, %297 : vector<1x128xf32>
    %c19 = arith.constant 19 : index
    %c0_150 = arith.constant 0 : index
    %299 = vector.load %arg15[%c19, %c0_150] : memref<64x128xf32, #tpu.memory_space<vmem>>, vector<1x128xf32>
    tpu.vector_store %arg15[%c19, %c0_150], %298 {strides = array<i32>} : memref<64x128xf32, #tpu.memory_space<vmem>>, vector<1x128xf32>,
    %c8_i32_151 = arith.constant 8 : i32
    %300 = arith.muli %arg0, %c8_i32_151 : i32
    %c4_i32_152 = arith.constant 4 : i32
    %301 = arith.addi %300, %c4_i32_152 : i32
    %c8_i32_153 = arith.constant 8 : i32
    %302 = arith.muli %301, %c8_i32_153 : i32
    %c2_i32_154 = arith.constant 2 : i32
    %303 = arith.addi %302, %c2_i32_154 : i32
    %304 = arith.index_cast %303 : i32 to index
    %305 = memref.load %arg1[%304] : memref<128xi32, #tpu.memory_space<smem>>
    %c5_i32_155 = arith.constant 5 : i32
    %306 = arith.addi %302, %c5_i32_155 : i32
    %307 = arith.index_cast %306 : i32 to index
    %308 = memref.load %arg1[%307] : memref<128xi32, #tpu.memory_space<smem>>
    %309 = arith.index_cast %305 : i32 to index
    %c0_156 = arith.constant 0 : index
    %310 = vector.load %arg2[%309, %c0_156] : memref<20x128xf32, #tpu.memory_space<vmem>>, vector<1x128xf32>
    %311 = arith.index_cast %308 : i32 to index
    %c0_157 = arith.constant 0 : index
    %312 = vector.load %arg3[%311, %c0_157] : memref<20x128xf32, #tpu.memory_space<vmem>>, vector<1x128xf32>
    %313 = arith.addf %310, %312 : vector<1x128xf32>
    %c20 = arith.constant 20 : index
    %c0_158 = arith.constant 0 : index
    %314 = vector.load %arg15[%c20, %c0_158] : memref<64x128xf32, #tpu.memory_space<vmem>>, vector<1x128xf32>
    tpu.vector_store %arg15[%c20, %c0_158], %313 {strides = array<i32>} : memref<64x128xf32, #tpu.memory_space<vmem>>, vector<1x128xf32>,
    %c8_i32_159 = arith.constant 8 : i32
    %315 = arith.muli %arg0, %c8_i32_159 : i32
    %c5_i32_160 = arith.constant 5 : i32
    %316 = arith.addi %315, %c5_i32_160 : i32
    %c8_i32_161 = arith.constant 8 : i32
    %317 = arith.muli %316, %c8_i32_161 : i32
    %c2_i32_162 = arith.constant 2 : i32
    %318 = arith.addi %317, %c2_i32_162 : i32
    %319 = arith.index_cast %318 : i32 to index
    %320 = memref.load %arg1[%319] : memref<128xi32, #tpu.memory_space<smem>>
    %c5_i32_163 = arith.constant 5 : i32
    %321 = arith.addi %317, %c5_i32_163 : i32
    %322 = arith.index_cast %321 : i32 to index
    %323 = memref.load %arg1[%322] : memref<128xi32, #tpu.memory_space<smem>>
    %324 = arith.index_cast %320 : i32 to index
    %c0_164 = arith.constant 0 : index
    %325 = vector.load %arg2[%324, %c0_164] : memref<20x128xf32, #tpu.memory_space<vmem>>, vector<1x128xf32>
    %326 = arith.index_cast %323 : i32 to index
    %c0_165 = arith.constant 0 : index
    %327 = vector.load %arg3[%326, %c0_165] : memref<20x128xf32, #tpu.memory_space<vmem>>, vector<1x128xf32>
    %328 = arith.addf %325, %327 : vector<1x128xf32>
    %c21 = arith.constant 21 : index
    %c0_166 = arith.constant 0 : index
    %329 = vector.load %arg15[%c21, %c0_166] : memref<64x128xf32, #tpu.memory_space<vmem>>, vector<1x128xf32>
    tpu.vector_store %arg15[%c21, %c0_166], %328 {strides = array<i32>} : memref<64x128xf32, #tpu.memory_space<vmem>>, vector<1x128xf32>,
    %c8_i32_167 = arith.constant 8 : i32
    %330 = arith.muli %arg0, %c8_i32_167 : i32
    %c6_i32_168 = arith.constant 6 : i32
    %331 = arith.addi %330, %c6_i32_168 : i32
    %c8_i32_169 = arith.constant 8 : i32
    %332 = arith.muli %331, %c8_i32_169 : i32
    %c2_i32_170 = arith.constant 2 : i32
    %333 = arith.addi %332, %c2_i32_170 : i32
    %334 = arith.index_cast %333 : i32 to index
    %335 = memref.load %arg1[%334] : memref<128xi32, #tpu.memory_space<smem>>
    %c5_i32_171 = arith.constant 5 : i32
    %336 = arith.addi %332, %c5_i32_171 : i32
    %337 = arith.index_cast %336 : i32 to index
    %338 = memref.load %arg1[%337] : memref<128xi32, #tpu.memory_space<smem>>
    %339 = arith.index_cast %335 : i32 to index
    %c0_172 = arith.constant 0 : index
    %340 = vector.load %arg2[%339, %c0_172] : memref<20x128xf32, #tpu.memory_space<vmem>>, vector<1x128xf32>
    %341 = arith.index_cast %338 : i32 to index
    %c0_173 = arith.constant 0 : index
    %342 = vector.load %arg3[%341, %c0_173] : memref<20x128xf32, #tpu.memory_space<vmem>>, vector<1x128xf32>
    %343 = arith.addf %340, %342 : vector<1x128xf32>
    %c22 = arith.constant 22 : index
    %c0_174 = arith.constant 0 : index
    %344 = vector.load %arg15[%c22, %c0_174] : memref<64x128xf32, #tpu.memory_space<vmem>>, vector<1x128xf32>
    tpu.vector_store %arg15[%c22, %c0_174], %343 {strides = array<i32>} : memref<64x128xf32, #tpu.memory_space<vmem>>, vector<1x128xf32>,
    %c8_i32_175 = arith.constant 8 : i32
    %345 = arith.muli %arg0, %c8_i32_175 : i32
    %c7_i32_176 = arith.constant 7 : i32
    %346 = arith.addi %345, %c7_i32_176 : i32
    %c8_i32_177 = arith.constant 8 : i32
    %347 = arith.muli %346, %c8_i32_177 : i32
    %c2_i32_178 = arith.constant 2 : i32
    %348 = arith.addi %347, %c2_i32_178 : i32
    %349 = arith.index_cast %348 : i32 to index
    %350 = memref.load %arg1[%349] : memref<128xi32, #tpu.memory_space<smem>>
    %c5_i32_179 = arith.constant 5 : i32
    %351 = arith.addi %347, %c5_i32_179 : i32
    %352 = arith.index_cast %351 : i32 to index
    %353 = memref.load %arg1[%352] : memref<128xi32, #tpu.memory_space<smem>>
    %354 = arith.index_cast %350 : i32 to index
    %c0_180 = arith.constant 0 : index
    %355 = vector.load %arg2[%354, %c0_180] : memref<20x128xf32, #tpu.memory_space<vmem>>, vector<1x128xf32>
    %356 = arith.index_cast %353 : i32 to index
    %c0_181 = arith.constant 0 : index
    %357 = vector.load %arg3[%356, %c0_181] : memref<20x128xf32, #tpu.memory_space<vmem>>, vector<1x128xf32>
    %358 = arith.addf %355, %357 : vector<1x128xf32>
    %c23 = arith.constant 23 : index
    %c0_182 = arith.constant 0 : index
    %359 = vector.load %arg15[%c23, %c0_182] : memref<64x128xf32, #tpu.memory_space<vmem>>, vector<1x128xf32>
    tpu.vector_store %arg15[%c23, %c0_182], %358 {strides = array<i32>} : memref<64x128xf32, #tpu.memory_space<vmem>>, vector<1x128xf32>,
    %c8_i32_183 = arith.constant 8 : i32
    %360 = arith.muli %arg0, %c8_i32_183 : i32
    %c0_i32_184 = arith.constant 0 : i32
    %361 = arith.addi %360, %c0_i32_184 : i32
    %c8_i32_185 = arith.constant 8 : i32
    %362 = arith.muli %361, %c8_i32_185 : i32
    %c3_i32_186 = arith.constant 3 : i32
    %363 = arith.addi %362, %c3_i32_186 : i32
    %364 = arith.index_cast %363 : i32 to index
    %365 = memref.load %arg1[%364] : memref<128xi32, #tpu.memory_space<smem>>
    %c4_i32_187 = arith.constant 4 : i32
    %366 = arith.addi %362, %c4_i32_187 : i32
    %367 = arith.index_cast %366 : i32 to index
    %368 = memref.load %arg1[%367] : memref<128xi32, #tpu.memory_space<smem>>
    %369 = arith.index_cast %365 : i32 to index
    %c0_188 = arith.constant 0 : index
    %370 = vector.load %arg2[%369, %c0_188] : memref<20x128xf32, #tpu.memory_space<vmem>>, vector<1x128xf32>
    %371 = arith.index_cast %368 : i32 to index
    %c0_189 = arith.constant 0 : index
    %372 = vector.load %arg3[%371, %c0_189] : memref<20x128xf32, #tpu.memory_space<vmem>>, vector<1x128xf32>
    %373 = arith.addf %370, %372 : vector<1x128xf32>
    %c24 = arith.constant 24 : index
    %c0_190 = arith.constant 0 : index
    %374 = vector.load %arg15[%c24, %c0_190] : memref<64x128xf32, #tpu.memory_space<vmem>>, vector<1x128xf32>
    tpu.vector_store %arg15[%c24, %c0_190], %373 {strides = array<i32>} : memref<64x128xf32, #tpu.memory_space<vmem>>, vector<1x128xf32>,
    %c8_i32_191 = arith.constant 8 : i32
    %375 = arith.muli %arg0, %c8_i32_191 : i32
    %c1_i32_192 = arith.constant 1 : i32
    %376 = arith.addi %375, %c1_i32_192 : i32
    %c8_i32_193 = arith.constant 8 : i32
    %377 = arith.muli %376, %c8_i32_193 : i32
    %c3_i32_194 = arith.constant 3 : i32
    %378 = arith.addi %377, %c3_i32_194 : i32
    %379 = arith.index_cast %378 : i32 to index
    %380 = memref.load %arg1[%379] : memref<128xi32, #tpu.memory_space<smem>>
    %c4_i32_195 = arith.constant 4 : i32
    %381 = arith.addi %377, %c4_i32_195 : i32
    %382 = arith.index_cast %381 : i32 to index
    %383 = memref.load %arg1[%382] : memref<128xi32, #tpu.memory_space<smem>>
    %384 = arith.index_cast %380 : i32 to index
    %c0_196 = arith.constant 0 : index
    %385 = vector.load %arg2[%384, %c0_196] : memref<20x128xf32, #tpu.memory_space<vmem>>, vector<1x128xf32>
    %386 = arith.index_cast %383 : i32 to index
    %c0_197 = arith.constant 0 : index
    %387 = vector.load %arg3[%386, %c0_197] : memref<20x128xf32, #tpu.memory_space<vmem>>, vector<1x128xf32>
    %388 = arith.addf %385, %387 : vector<1x128xf32>
    %c25 = arith.constant 25 : index
    %c0_198 = arith.constant 0 : index
    %389 = vector.load %arg15[%c25, %c0_198] : memref<64x128xf32, #tpu.memory_space<vmem>>, vector<1x128xf32>
    tpu.vector_store %arg15[%c25, %c0_198], %388 {strides = array<i32>} : memref<64x128xf32, #tpu.memory_space<vmem>>, vector<1x128xf32>,
    %c8_i32_199 = arith.constant 8 : i32
    %390 = arith.muli %arg0, %c8_i32_199 : i32
    %c2_i32_200 = arith.constant 2 : i32
    %391 = arith.addi %390, %c2_i32_200 : i32
    %c8_i32_201 = arith.constant 8 : i32
    %392 = arith.muli %391, %c8_i32_201 : i32
    %c3_i32_202 = arith.constant 3 : i32
    %393 = arith.addi %392, %c3_i32_202 : i32
    %394 = arith.index_cast %393 : i32 to index
    %395 = memref.load %arg1[%394] : memref<128xi32, #tpu.memory_space<smem>>
    %c4_i32_203 = arith.constant 4 : i32
    %396 = arith.addi %392, %c4_i32_203 : i32
    %397 = arith.index_cast %396 : i32 to index
    %398 = memref.load %arg1[%397] : memref<128xi32, #tpu.memory_space<smem>>
    %399 = arith.index_cast %395 : i32 to index
    %c0_204 = arith.constant 0 : index
    %400 = vector.load %arg2[%399, %c0_204] : memref<20x128xf32, #tpu.memory_space<vmem>>, vector<1x128xf32>
    %401 = arith.index_cast %398 : i32 to index
    %c0_205 = arith.constant 0 : index
    %402 = vector.load %arg3[%401, %c0_205] : memref<20x128xf32, #tpu.memory_space<vmem>>, vector<1x128xf32>
    %403 = arith.addf %400, %402 : vector<1x128xf32>
    %c26 = arith.constant 26 : index
    %c0_206 = arith.constant 0 : index
    %404 = vector.load %arg15[%c26, %c0_206] : memref<64x128xf32, #tpu.memory_space<vmem>>, vector<1x128xf32>
    tpu.vector_store %arg15[%c26, %c0_206], %403 {strides = array<i32>} : memref<64x128xf32, #tpu.memory_space<vmem>>, vector<1x128xf32>,
    %c8_i32_207 = arith.constant 8 : i32
    %405 = arith.muli %arg0, %c8_i32_207 : i32
    %c3_i32_208 = arith.constant 3 : i32
    %406 = arith.addi %405, %c3_i32_208 : i32
    %c8_i32_209 = arith.constant 8 : i32
    %407 = arith.muli %406, %c8_i32_209 : i32
    %c3_i32_210 = arith.constant 3 : i32
    %408 = arith.addi %407, %c3_i32_210 : i32
    %409 = arith.index_cast %408 : i32 to index
    %410 = memref.load %arg1[%409] : memref<128xi32, #tpu.memory_space<smem>>
    %c4_i32_211 = arith.constant 4 : i32
    %411 = arith.addi %407, %c4_i32_211 : i32
    %412 = arith.index_cast %411 : i32 to index
    %413 = memref.load %arg1[%412] : memref<128xi32, #tpu.memory_space<smem>>
    %414 = arith.index_cast %410 : i32 to index
    %c0_212 = arith.constant 0 : index
    %415 = vector.load %arg2[%414, %c0_212] : memref<20x128xf32, #tpu.memory_space<vmem>>, vector<1x128xf32>
    %416 = arith.index_cast %413 : i32 to index
    %c0_213 = arith.constant 0 : index
    %417 = vector.load %arg3[%416, %c0_213] : memref<20x128xf32, #tpu.memory_space<vmem>>, vector<1x128xf32>
    %418 = arith.addf %415, %417 : vector<1x128xf32>
    %c27 = arith.constant 27 : index
    %c0_214 = arith.constant 0 : index
    %419 = vector.load %arg15[%c27, %c0_214] : memref<64x128xf32, #tpu.memory_space<vmem>>, vector<1x128xf32>
    tpu.vector_store %arg15[%c27, %c0_214], %418 {strides = array<i32>} : memref<64x128xf32, #tpu.memory_space<vmem>>, vector<1x128xf32>,
    %c8_i32_215 = arith.constant 8 : i32
    %420 = arith.muli %arg0, %c8_i32_215 : i32
    %c4_i32_216 = arith.constant 4 : i32
    %421 = arith.addi %420, %c4_i32_216 : i32
    %c8_i32_217 = arith.constant 8 : i32
    %422 = arith.muli %421, %c8_i32_217 : i32
    %c3_i32_218 = arith.constant 3 : i32
    %423 = arith.addi %422, %c3_i32_218 : i32
    %424 = arith.index_cast %423 : i32 to index
    %425 = memref.load %arg1[%424] : memref<128xi32, #tpu.memory_space<smem>>
    %c4_i32_219 = arith.constant 4 : i32
    %426 = arith.addi %422, %c4_i32_219 : i32
    %427 = arith.index_cast %426 : i32 to index
    %428 = memref.load %arg1[%427] : memref<128xi32, #tpu.memory_space<smem>>
    %429 = arith.index_cast %425 : i32 to index
    %c0_220 = arith.constant 0 : index
    %430 = vector.load %arg2[%429, %c0_220] : memref<20x128xf32, #tpu.memory_space<vmem>>, vector<1x128xf32>
    %431 = arith.index_cast %428 : i32 to index
    %c0_221 = arith.constant 0 : index
    %432 = vector.load %arg3[%431, %c0_221] : memref<20x128xf32, #tpu.memory_space<vmem>>, vector<1x128xf32>
    %433 = arith.addf %430, %432 : vector<1x128xf32>
    %c28 = arith.constant 28 : index
    %c0_222 = arith.constant 0 : index
    %434 = vector.load %arg15[%c28, %c0_222] : memref<64x128xf32, #tpu.memory_space<vmem>>, vector<1x128xf32>
    tpu.vector_store %arg15[%c28, %c0_222], %433 {strides = array<i32>} : memref<64x128xf32, #tpu.memory_space<vmem>>, vector<1x128xf32>,
    %c8_i32_223 = arith.constant 8 : i32
    %435 = arith.muli %arg0, %c8_i32_223 : i32
    %c5_i32_224 = arith.constant 5 : i32
    %436 = arith.addi %435, %c5_i32_224 : i32
    %c8_i32_225 = arith.constant 8 : i32
    %437 = arith.muli %436, %c8_i32_225 : i32
    %c3_i32_226 = arith.constant 3 : i32
    %438 = arith.addi %437, %c3_i32_226 : i32
    %439 = arith.index_cast %438 : i32 to index
    %440 = memref.load %arg1[%439] : memref<128xi32, #tpu.memory_space<smem>>
    %c4_i32_227 = arith.constant 4 : i32
    %441 = arith.addi %437, %c4_i32_227 : i32
    %442 = arith.index_cast %441 : i32 to index
    %443 = memref.load %arg1[%442] : memref<128xi32, #tpu.memory_space<smem>>
    %444 = arith.index_cast %440 : i32 to index
    %c0_228 = arith.constant 0 : index
    %445 = vector.load %arg2[%444, %c0_228] : memref<20x128xf32, #tpu.memory_space<vmem>>, vector<1x128xf32>
    %446 = arith.index_cast %443 : i32 to index
    %c0_229 = arith.constant 0 : index
    %447 = vector.load %arg3[%446, %c0_229] : memref<20x128xf32, #tpu.memory_space<vmem>>, vector<1x128xf32>
    %448 = arith.addf %445, %447 : vector<1x128xf32>
    %c29 = arith.constant 29 : index
    %c0_230 = arith.constant 0 : index
    %449 = vector.load %arg15[%c29, %c0_230] : memref<64x128xf32, #tpu.memory_space<vmem>>, vector<1x128xf32>
    tpu.vector_store %arg15[%c29, %c0_230], %448 {strides = array<i32>} : memref<64x128xf32, #tpu.memory_space<vmem>>, vector<1x128xf32>,
    %c8_i32_231 = arith.constant 8 : i32
    %450 = arith.muli %arg0, %c8_i32_231 : i32
    %c6_i32_232 = arith.constant 6 : i32
    %451 = arith.addi %450, %c6_i32_232 : i32
    %c8_i32_233 = arith.constant 8 : i32
    %452 = arith.muli %451, %c8_i32_233 : i32
    %c3_i32_234 = arith.constant 3 : i32
    %453 = arith.addi %452, %c3_i32_234 : i32
    %454 = arith.index_cast %453 : i32 to index
    %455 = memref.load %arg1[%454] : memref<128xi32, #tpu.memory_space<smem>>
    %c4_i32_235 = arith.constant 4 : i32
    %456 = arith.addi %452, %c4_i32_235 : i32
    %457 = arith.index_cast %456 : i32 to index
    %458 = memref.load %arg1[%457] : memref<128xi32, #tpu.memory_space<smem>>
    %459 = arith.index_cast %455 : i32 to index
    %c0_236 = arith.constant 0 : index
    %460 = vector.load %arg2[%459, %c0_236] : memref<20x128xf32, #tpu.memory_space<vmem>>, vector<1x128xf32>
    %461 = arith.index_cast %458 : i32 to index
    %c0_237 = arith.constant 0 : index
    %462 = vector.load %arg3[%461, %c0_237] : memref<20x128xf32, #tpu.memory_space<vmem>>, vector<1x128xf32>
    %463 = arith.addf %460, %462 : vector<1x128xf32>
    %c30 = arith.constant 30 : index
    %c0_238 = arith.constant 0 : index
    %464 = vector.load %arg15[%c30, %c0_238] : memref<64x128xf32, #tpu.memory_space<vmem>>, vector<1x128xf32>
    tpu.vector_store %arg15[%c30, %c0_238], %463 {strides = array<i32>} : memref<64x128xf32, #tpu.memory_space<vmem>>, vector<1x128xf32>,
    %c8_i32_239 = arith.constant 8 : i32
    %465 = arith.muli %arg0, %c8_i32_239 : i32
    %c7_i32_240 = arith.constant 7 : i32
    %466 = arith.addi %465, %c7_i32_240 : i32
    %c8_i32_241 = arith.constant 8 : i32
    %467 = arith.muli %466, %c8_i32_241 : i32
    %c3_i32_242 = arith.constant 3 : i32
    %468 = arith.addi %467, %c3_i32_242 : i32
    %469 = arith.index_cast %468 : i32 to index
    %470 = memref.load %arg1[%469] : memref<128xi32, #tpu.memory_space<smem>>
    %c4_i32_243 = arith.constant 4 : i32
    %471 = arith.addi %467, %c4_i32_243 : i32
    %472 = arith.index_cast %471 : i32 to index
    %473 = memref.load %arg1[%472] : memref<128xi32, #tpu.memory_space<smem>>
    %474 = arith.index_cast %470 : i32 to index
    %c0_244 = arith.constant 0 : index
    %475 = vector.load %arg2[%474, %c0_244] : memref<20x128xf32, #tpu.memory_space<vmem>>, vector<1x128xf32>
    %476 = arith.index_cast %473 : i32 to index
    %c0_245 = arith.constant 0 : index
    %477 = vector.load %arg3[%476, %c0_245] : memref<20x128xf32, #tpu.memory_space<vmem>>, vector<1x128xf32>
    %478 = arith.addf %475, %477 : vector<1x128xf32>
    %c31 = arith.constant 31 : index
    %c0_246 = arith.constant 0 : index
    %479 = vector.load %arg15[%c31, %c0_246] : memref<64x128xf32, #tpu.memory_space<vmem>>, vector<1x128xf32>
    tpu.vector_store %arg15[%c31, %c0_246], %478 {strides = array<i32>} : memref<64x128xf32, #tpu.memory_space<vmem>>, vector<1x128xf32>,
    %c8_i32_247 = arith.constant 8 : i32
    %480 = arith.muli %arg0, %c8_i32_247 : i32
    %c0_i32_248 = arith.constant 0 : i32
    %481 = arith.addi %480, %c0_i32_248 : i32
    %c8_i32_249 = arith.constant 8 : i32
    %482 = arith.muli %481, %c8_i32_249 : i32
    %c4_i32_250 = arith.constant 4 : i32
    %483 = arith.addi %482, %c4_i32_250 : i32
    %484 = arith.index_cast %483 : i32 to index
    %485 = memref.load %arg1[%484] : memref<128xi32, #tpu.memory_space<smem>>
    %c3_i32_251 = arith.constant 3 : i32
    %486 = arith.addi %482, %c3_i32_251 : i32
    %487 = arith.index_cast %486 : i32 to index
    %488 = memref.load %arg1[%487] : memref<128xi32, #tpu.memory_space<smem>>
    %489 = arith.index_cast %485 : i32 to index
    %c0_252 = arith.constant 0 : index
    %490 = vector.load %arg2[%489, %c0_252] : memref<20x128xf32, #tpu.memory_space<vmem>>, vector<1x128xf32>
    %491 = arith.index_cast %488 : i32 to index
    %c0_253 = arith.constant 0 : index
    %492 = vector.load %arg3[%491, %c0_253] : memref<20x128xf32, #tpu.memory_space<vmem>>, vector<1x128xf32>
    %493 = arith.addf %490, %492 : vector<1x128xf32>
    %c32 = arith.constant 32 : index
    %c0_254 = arith.constant 0 : index
    %494 = vector.load %arg15[%c32, %c0_254] : memref<64x128xf32, #tpu.memory_space<vmem>>, vector<1x128xf32>
    tpu.vector_store %arg15[%c32, %c0_254], %493 {strides = array<i32>} : memref<64x128xf32, #tpu.memory_space<vmem>>, vector<1x128xf32>,
    %c8_i32_255 = arith.constant 8 : i32
    %495 = arith.muli %arg0, %c8_i32_255 : i32
    %c1_i32_256 = arith.constant 1 : i32
    %496 = arith.addi %495, %c1_i32_256 : i32
    %c8_i32_257 = arith.constant 8 : i32
    %497 = arith.muli %496, %c8_i32_257 : i32
    %c4_i32_258 = arith.constant 4 : i32
    %498 = arith.addi %497, %c4_i32_258 : i32
    %499 = arith.index_cast %498 : i32 to index
    %500 = memref.load %arg1[%499] : memref<128xi32, #tpu.memory_space<smem>>
    %c3_i32_259 = arith.constant 3 : i32
    %501 = arith.addi %497, %c3_i32_259 : i32
    %502 = arith.index_cast %501 : i32 to index
    %503 = memref.load %arg1[%502] : memref<128xi32, #tpu.memory_space<smem>>
    %504 = arith.index_cast %500 : i32 to index
    %c0_260 = arith.constant 0 : index
    %505 = vector.load %arg2[%504, %c0_260] : memref<20x128xf32, #tpu.memory_space<vmem>>, vector<1x128xf32>
    %506 = arith.index_cast %503 : i32 to index
    %c0_261 = arith.constant 0 : index
    %507 = vector.load %arg3[%506, %c0_261] : memref<20x128xf32, #tpu.memory_space<vmem>>, vector<1x128xf32>
    %508 = arith.addf %505, %507 : vector<1x128xf32>
    %c33 = arith.constant 33 : index
    %c0_262 = arith.constant 0 : index
    %509 = vector.load %arg15[%c33, %c0_262] : memref<64x128xf32, #tpu.memory_space<vmem>>, vector<1x128xf32>
    tpu.vector_store %arg15[%c33, %c0_262], %508 {strides = array<i32>} : memref<64x128xf32, #tpu.memory_space<vmem>>, vector<1x128xf32>,
    %c8_i32_263 = arith.constant 8 : i32
    %510 = arith.muli %arg0, %c8_i32_263 : i32
    %c2_i32_264 = arith.constant 2 : i32
    %511 = arith.addi %510, %c2_i32_264 : i32
    %c8_i32_265 = arith.constant 8 : i32
    %512 = arith.muli %511, %c8_i32_265 : i32
    %c4_i32_266 = arith.constant 4 : i32
    %513 = arith.addi %512, %c4_i32_266 : i32
    %514 = arith.index_cast %513 : i32 to index
    %515 = memref.load %arg1[%514] : memref<128xi32, #tpu.memory_space<smem>>
    %c3_i32_267 = arith.constant 3 : i32
    %516 = arith.addi %512, %c3_i32_267 : i32
    %517 = arith.index_cast %516 : i32 to index
    %518 = memref.load %arg1[%517] : memref<128xi32, #tpu.memory_space<smem>>
    %519 = arith.index_cast %515 : i32 to index
    %c0_268 = arith.constant 0 : index
    %520 = vector.load %arg2[%519, %c0_268] : memref<20x128xf32, #tpu.memory_space<vmem>>, vector<1x128xf32>
    %521 = arith.index_cast %518 : i32 to index
    %c0_269 = arith.constant 0 : index
    %522 = vector.load %arg3[%521, %c0_269] : memref<20x128xf32, #tpu.memory_space<vmem>>, vector<1x128xf32>
    %523 = arith.addf %520, %522 : vector<1x128xf32>
    %c34 = arith.constant 34 : index
    %c0_270 = arith.constant 0 : index
    %524 = vector.load %arg15[%c34, %c0_270] : memref<64x128xf32, #tpu.memory_space<vmem>>, vector<1x128xf32>
    tpu.vector_store %arg15[%c34, %c0_270], %523 {strides = array<i32>} : memref<64x128xf32, #tpu.memory_space<vmem>>, vector<1x128xf32>,
    %c8_i32_271 = arith.constant 8 : i32
    %525 = arith.muli %arg0, %c8_i32_271 : i32
    %c3_i32_272 = arith.constant 3 : i32
    %526 = arith.addi %525, %c3_i32_272 : i32
    %c8_i32_273 = arith.constant 8 : i32
    %527 = arith.muli %526, %c8_i32_273 : i32
    %c4_i32_274 = arith.constant 4 : i32
    %528 = arith.addi %527, %c4_i32_274 : i32
    %529 = arith.index_cast %528 : i32 to index
    %530 = memref.load %arg1[%529] : memref<128xi32, #tpu.memory_space<smem>>
    %c3_i32_275 = arith.constant 3 : i32
    %531 = arith.addi %527, %c3_i32_275 : i32
    %532 = arith.index_cast %531 : i32 to index
    %533 = memref.load %arg1[%532] : memref<128xi32, #tpu.memory_space<smem>>
    %534 = arith.index_cast %530 : i32 to index
    %c0_276 = arith.constant 0 : index
    %535 = vector.load %arg2[%534, %c0_276] : memref<20x128xf32, #tpu.memory_space<vmem>>, vector<1x128xf32>
    %536 = arith.index_cast %533 : i32 to index
    %c0_277 = arith.constant 0 : index
    %537 = vector.load %arg3[%536, %c0_277] : memref<20x128xf32, #tpu.memory_space<vmem>>, vector<1x128xf32>
    %538 = arith.addf %535, %537 : vector<1x128xf32>
    %c35 = arith.constant 35 : index
    %c0_278 = arith.constant 0 : index
    %539 = vector.load %arg15[%c35, %c0_278] : memref<64x128xf32, #tpu.memory_space<vmem>>, vector<1x128xf32>
    tpu.vector_store %arg15[%c35, %c0_278], %538 {strides = array<i32>} : memref<64x128xf32, #tpu.memory_space<vmem>>, vector<1x128xf32>,
    %c8_i32_279 = arith.constant 8 : i32
    %540 = arith.muli %arg0, %c8_i32_279 : i32
    %c4_i32_280 = arith.constant 4 : i32
    %541 = arith.addi %540, %c4_i32_280 : i32
    %c8_i32_281 = arith.constant 8 : i32
    %542 = arith.muli %541, %c8_i32_281 : i32
    %c4_i32_282 = arith.constant 4 : i32
    %543 = arith.addi %542, %c4_i32_282 : i32
    %544 = arith.index_cast %543 : i32 to index
    %545 = memref.load %arg1[%544] : memref<128xi32, #tpu.memory_space<smem>>
    %c3_i32_283 = arith.constant 3 : i32
    %546 = arith.addi %542, %c3_i32_283 : i32
    %547 = arith.index_cast %546 : i32 to index
    %548 = memref.load %arg1[%547] : memref<128xi32, #tpu.memory_space<smem>>
    %549 = arith.index_cast %545 : i32 to index
    %c0_284 = arith.constant 0 : index
    %550 = vector.load %arg2[%549, %c0_284] : memref<20x128xf32, #tpu.memory_space<vmem>>, vector<1x128xf32>
    %551 = arith.index_cast %548 : i32 to index
    %c0_285 = arith.constant 0 : index
    %552 = vector.load %arg3[%551, %c0_285] : memref<20x128xf32, #tpu.memory_space<vmem>>, vector<1x128xf32>
    %553 = arith.addf %550, %552 : vector<1x128xf32>
    %c36 = arith.constant 36 : index
    %c0_286 = arith.constant 0 : index
    %554 = vector.load %arg15[%c36, %c0_286] : memref<64x128xf32, #tpu.memory_space<vmem>>, vector<1x128xf32>
    tpu.vector_store %arg15[%c36, %c0_286], %553 {strides = array<i32>} : memref<64x128xf32, #tpu.memory_space<vmem>>, vector<1x128xf32>,
    %c8_i32_287 = arith.constant 8 : i32
    %555 = arith.muli %arg0, %c8_i32_287 : i32
    %c5_i32_288 = arith.constant 5 : i32
    %556 = arith.addi %555, %c5_i32_288 : i32
    %c8_i32_289 = arith.constant 8 : i32
    %557 = arith.muli %556, %c8_i32_289 : i32
    %c4_i32_290 = arith.constant 4 : i32
    %558 = arith.addi %557, %c4_i32_290 : i32
    %559 = arith.index_cast %558 : i32 to index
    %560 = memref.load %arg1[%559] : memref<128xi32, #tpu.memory_space<smem>>
    %c3_i32_291 = arith.constant 3 : i32
    %561 = arith.addi %557, %c3_i32_291 : i32
    %562 = arith.index_cast %561 : i32 to index
    %563 = memref.load %arg1[%562] : memref<128xi32, #tpu.memory_space<smem>>
    %564 = arith.index_cast %560 : i32 to index
    %c0_292 = arith.constant 0 : index
    %565 = vector.load %arg2[%564, %c0_292] : memref<20x128xf32, #tpu.memory_space<vmem>>, vector<1x128xf32>
    %566 = arith.index_cast %563 : i32 to index
    %c0_293 = arith.constant 0 : index
    %567 = vector.load %arg3[%566, %c0_293] : memref<20x128xf32, #tpu.memory_space<vmem>>, vector<1x128xf32>
    %568 = arith.addf %565, %567 : vector<1x128xf32>
    %c37 = arith.constant 37 : index
    %c0_294 = arith.constant 0 : index
    %569 = vector.load %arg15[%c37, %c0_294] : memref<64x128xf32, #tpu.memory_space<vmem>>, vector<1x128xf32>
    tpu.vector_store %arg15[%c37, %c0_294], %568 {strides = array<i32>} : memref<64x128xf32, #tpu.memory_space<vmem>>, vector<1x128xf32>,
    %c8_i32_295 = arith.constant 8 : i32
    %570 = arith.muli %arg0, %c8_i32_295 : i32
    %c6_i32_296 = arith.constant 6 : i32
    %571 = arith.addi %570, %c6_i32_296 : i32
    %c8_i32_297 = arith.constant 8 : i32
    %572 = arith.muli %571, %c8_i32_297 : i32
    %c4_i32_298 = arith.constant 4 : i32
    %573 = arith.addi %572, %c4_i32_298 : i32
    %574 = arith.index_cast %573 : i32 to index
    %575 = memref.load %arg1[%574] : memref<128xi32, #tpu.memory_space<smem>>
    %c3_i32_299 = arith.constant 3 : i32
    %576 = arith.addi %572, %c3_i32_299 : i32
    %577 = arith.index_cast %576 : i32 to index
    %578 = memref.load %arg1[%577] : memref<128xi32, #tpu.memory_space<smem>>
    %579 = arith.index_cast %575 : i32 to index
    %c0_300 = arith.constant 0 : index
    %580 = vector.load %arg2[%579, %c0_300] : memref<20x128xf32, #tpu.memory_space<vmem>>, vector<1x128xf32>
    %581 = arith.index_cast %578 : i32 to index
    %c0_301 = arith.constant 0 : index
    %582 = vector.load %arg3[%581, %c0_301] : memref<20x128xf32, #tpu.memory_space<vmem>>, vector<1x128xf32>
    %583 = arith.addf %580, %582 : vector<1x128xf32>
    %c38 = arith.constant 38 : index
    %c0_302 = arith.constant 0 : index
    %584 = vector.load %arg15[%c38, %c0_302] : memref<64x128xf32, #tpu.memory_space<vmem>>, vector<1x128xf32>
    tpu.vector_store %arg15[%c38, %c0_302], %583 {strides = array<i32>} : memref<64x128xf32, #tpu.memory_space<vmem>>, vector<1x128xf32>,
    %c8_i32_303 = arith.constant 8 : i32
    %585 = arith.muli %arg0, %c8_i32_303 : i32
    %c7_i32_304 = arith.constant 7 : i32
    %586 = arith.addi %585, %c7_i32_304 : i32
    %c8_i32_305 = arith.constant 8 : i32
    %587 = arith.muli %586, %c8_i32_305 : i32
    %c4_i32_306 = arith.constant 4 : i32
    %588 = arith.addi %587, %c4_i32_306 : i32
    %589 = arith.index_cast %588 : i32 to index
    %590 = memref.load %arg1[%589] : memref<128xi32, #tpu.memory_space<smem>>
    %c3_i32_307 = arith.constant 3 : i32
    %591 = arith.addi %587, %c3_i32_307 : i32
    %592 = arith.index_cast %591 : i32 to index
    %593 = memref.load %arg1[%592] : memref<128xi32, #tpu.memory_space<smem>>
    %594 = arith.index_cast %590 : i32 to index
    %c0_308 = arith.constant 0 : index
    %595 = vector.load %arg2[%594, %c0_308] : memref<20x128xf32, #tpu.memory_space<vmem>>, vector<1x128xf32>
    %596 = arith.index_cast %593 : i32 to index
    %c0_309 = arith.constant 0 : index
    %597 = vector.load %arg3[%596, %c0_309] : memref<20x128xf32, #tpu.memory_space<vmem>>, vector<1x128xf32>
    %598 = arith.addf %595, %597 : vector<1x128xf32>
    %c39 = arith.constant 39 : index
    %c0_310 = arith.constant 0 : index
    %599 = vector.load %arg15[%c39, %c0_310] : memref<64x128xf32, #tpu.memory_space<vmem>>, vector<1x128xf32>
    tpu.vector_store %arg15[%c39, %c0_310], %598 {strides = array<i32>} : memref<64x128xf32, #tpu.memory_space<vmem>>, vector<1x128xf32>,
    %c8_i32_311 = arith.constant 8 : i32
    %600 = arith.muli %arg0, %c8_i32_311 : i32
    %c0_i32_312 = arith.constant 0 : i32
    %601 = arith.addi %600, %c0_i32_312 : i32
    %c8_i32_313 = arith.constant 8 : i32
    %602 = arith.muli %601, %c8_i32_313 : i32
    %c5_i32_314 = arith.constant 5 : i32
    %603 = arith.addi %602, %c5_i32_314 : i32
    %604 = arith.index_cast %603 : i32 to index
    %605 = memref.load %arg1[%604] : memref<128xi32, #tpu.memory_space<smem>>
    %c2_i32_315 = arith.constant 2 : i32
    %606 = arith.addi %602, %c2_i32_315 : i32
    %607 = arith.index_cast %606 : i32 to index
    %608 = memref.load %arg1[%607] : memref<128xi32, #tpu.memory_space<smem>>
    %609 = arith.index_cast %605 : i32 to index
    %c0_316 = arith.constant 0 : index
    %610 = vector.load %arg2[%609, %c0_316] : memref<20x128xf32, #tpu.memory_space<vmem>>, vector<1x128xf32>
    %611 = arith.index_cast %608 : i32 to index
    %c0_317 = arith.constant 0 : index
    %612 = vector.load %arg3[%611, %c0_317] : memref<20x128xf32, #tpu.memory_space<vmem>>, vector<1x128xf32>
    %613 = arith.addf %610, %612 : vector<1x128xf32>
    %c40 = arith.constant 40 : index
    %c0_318 = arith.constant 0 : index
    %614 = vector.load %arg15[%c40, %c0_318] : memref<64x128xf32, #tpu.memory_space<vmem>>, vector<1x128xf32>
    tpu.vector_store %arg15[%c40, %c0_318], %613 {strides = array<i32>} : memref<64x128xf32, #tpu.memory_space<vmem>>, vector<1x128xf32>,
    %c8_i32_319 = arith.constant 8 : i32
    %615 = arith.muli %arg0, %c8_i32_319 : i32
    %c1_i32_320 = arith.constant 1 : i32
    %616 = arith.addi %615, %c1_i32_320 : i32
    %c8_i32_321 = arith.constant 8 : i32
    %617 = arith.muli %616, %c8_i32_321 : i32
    %c5_i32_322 = arith.constant 5 : i32
    %618 = arith.addi %617, %c5_i32_322 : i32
    %619 = arith.index_cast %618 : i32 to index
    %620 = memref.load %arg1[%619] : memref<128xi32, #tpu.memory_space<smem>>
    %c2_i32_323 = arith.constant 2 : i32
    %621 = arith.addi %617, %c2_i32_323 : i32
    %622 = arith.index_cast %621 : i32 to index
    %623 = memref.load %arg1[%622] : memref<128xi32, #tpu.memory_space<smem>>
    %624 = arith.index_cast %620 : i32 to index
    %c0_324 = arith.constant 0 : index
    %625 = vector.load %arg2[%624, %c0_324] : memref<20x128xf32, #tpu.memory_space<vmem>>, vector<1x128xf32>
    %626 = arith.index_cast %623 : i32 to index
    %c0_325 = arith.constant 0 : index
    %627 = vector.load %arg3[%626, %c0_325] : memref<20x128xf32, #tpu.memory_space<vmem>>, vector<1x128xf32>
    %628 = arith.addf %625, %627 : vector<1x128xf32>
    %c41 = arith.constant 41 : index
    %c0_326 = arith.constant 0 : index
    %629 = vector.load %arg15[%c41, %c0_326] : memref<64x128xf32, #tpu.memory_space<vmem>>, vector<1x128xf32>
    tpu.vector_store %arg15[%c41, %c0_326], %628 {strides = array<i32>} : memref<64x128xf32, #tpu.memory_space<vmem>>, vector<1x128xf32>,
    %c8_i32_327 = arith.constant 8 : i32
    %630 = arith.muli %arg0, %c8_i32_327 : i32
    %c2_i32_328 = arith.constant 2 : i32
    %631 = arith.addi %630, %c2_i32_328 : i32
    %c8_i32_329 = arith.constant 8 : i32
    %632 = arith.muli %631, %c8_i32_329 : i32
    %c5_i32_330 = arith.constant 5 : i32
    %633 = arith.addi %632, %c5_i32_330 : i32
    %634 = arith.index_cast %633 : i32 to index
    %635 = memref.load %arg1[%634] : memref<128xi32, #tpu.memory_space<smem>>
    %c2_i32_331 = arith.constant 2 : i32
    %636 = arith.addi %632, %c2_i32_331 : i32
    %637 = arith.index_cast %636 : i32 to index
    %638 = memref.load %arg1[%637] : memref<128xi32, #tpu.memory_space<smem>>
    %639 = arith.index_cast %635 : i32 to index
    %c0_332 = arith.constant 0 : index
    %640 = vector.load %arg2[%639, %c0_332] : memref<20x128xf32, #tpu.memory_space<vmem>>, vector<1x128xf32>
    %641 = arith.index_cast %638 : i32 to index
    %c0_333 = arith.constant 0 : index
    %642 = vector.load %arg3[%641, %c0_333] : memref<20x128xf32, #tpu.memory_space<vmem>>, vector<1x128xf32>
    %643 = arith.addf %640, %642 : vector<1x128xf32>
    %c42 = arith.constant 42 : index
    %c0_334 = arith.constant 0 : index
    %644 = vector.load %arg15[%c42, %c0_334] : memref<64x128xf32, #tpu.memory_space<vmem>>, vector<1x128xf32>
    tpu.vector_store %arg15[%c42, %c0_334], %643 {strides = array<i32>} : memref<64x128xf32, #tpu.memory_space<vmem>>, vector<1x128xf32>,
    %c8_i32_335 = arith.constant 8 : i32
    %645 = arith.muli %arg0, %c8_i32_335 : i32
    %c3_i32_336 = arith.constant 3 : i32
    %646 = arith.addi %645, %c3_i32_336 : i32
    %c8_i32_337 = arith.constant 8 : i32
    %647 = arith.muli %646, %c8_i32_337 : i32
    %c5_i32_338 = arith.constant 5 : i32
    %648 = arith.addi %647, %c5_i32_338 : i32
    %649 = arith.index_cast %648 : i32 to index
    %650 = memref.load %arg1[%649] : memref<128xi32, #tpu.memory_space<smem>>
    %c2_i32_339 = arith.constant 2 : i32
    %651 = arith.addi %647, %c2_i32_339 : i32
    %652 = arith.index_cast %651 : i32 to index
    %653 = memref.load %arg1[%652] : memref<128xi32, #tpu.memory_space<smem>>
    %654 = arith.index_cast %650 : i32 to index
    %c0_340 = arith.constant 0 : index
    %655 = vector.load %arg2[%654, %c0_340] : memref<20x128xf32, #tpu.memory_space<vmem>>, vector<1x128xf32>
    %656 = arith.index_cast %653 : i32 to index
    %c0_341 = arith.constant 0 : index
    %657 = vector.load %arg3[%656, %c0_341] : memref<20x128xf32, #tpu.memory_space<vmem>>, vector<1x128xf32>
    %658 = arith.addf %655, %657 : vector<1x128xf32>
    %c43 = arith.constant 43 : index
    %c0_342 = arith.constant 0 : index
    %659 = vector.load %arg15[%c43, %c0_342] : memref<64x128xf32, #tpu.memory_space<vmem>>, vector<1x128xf32>
    tpu.vector_store %arg15[%c43, %c0_342], %658 {strides = array<i32>} : memref<64x128xf32, #tpu.memory_space<vmem>>, vector<1x128xf32>,
    %c8_i32_343 = arith.constant 8 : i32
    %660 = arith.muli %arg0, %c8_i32_343 : i32
    %c4_i32_344 = arith.constant 4 : i32
    %661 = arith.addi %660, %c4_i32_344 : i32
    %c8_i32_345 = arith.constant 8 : i32
    %662 = arith.muli %661, %c8_i32_345 : i32
    %c5_i32_346 = arith.constant 5 : i32
    %663 = arith.addi %662, %c5_i32_346 : i32
    %664 = arith.index_cast %663 : i32 to index
    %665 = memref.load %arg1[%664] : memref<128xi32, #tpu.memory_space<smem>>
    %c2_i32_347 = arith.constant 2 : i32
    %666 = arith.addi %662, %c2_i32_347 : i32
    %667 = arith.index_cast %666 : i32 to index
    %668 = memref.load %arg1[%667] : memref<128xi32, #tpu.memory_space<smem>>
    %669 = arith.index_cast %665 : i32 to index
    %c0_348 = arith.constant 0 : index
    %670 = vector.load %arg2[%669, %c0_348] : memref<20x128xf32, #tpu.memory_space<vmem>>, vector<1x128xf32>
    %671 = arith.index_cast %668 : i32 to index
    %c0_349 = arith.constant 0 : index
    %672 = vector.load %arg3[%671, %c0_349] : memref<20x128xf32, #tpu.memory_space<vmem>>, vector<1x128xf32>
    %673 = arith.addf %670, %672 : vector<1x128xf32>
    %c44 = arith.constant 44 : index
    %c0_350 = arith.constant 0 : index
    %674 = vector.load %arg15[%c44, %c0_350] : memref<64x128xf32, #tpu.memory_space<vmem>>, vector<1x128xf32>
    tpu.vector_store %arg15[%c44, %c0_350], %673 {strides = array<i32>} : memref<64x128xf32, #tpu.memory_space<vmem>>, vector<1x128xf32>,
    %c8_i32_351 = arith.constant 8 : i32
    %675 = arith.muli %arg0, %c8_i32_351 : i32
    %c5_i32_352 = arith.constant 5 : i32
    %676 = arith.addi %675, %c5_i32_352 : i32
    %c8_i32_353 = arith.constant 8 : i32
    %677 = arith.muli %676, %c8_i32_353 : i32
    %c5_i32_354 = arith.constant 5 : i32
    %678 = arith.addi %677, %c5_i32_354 : i32
    %679 = arith.index_cast %678 : i32 to index
    %680 = memref.load %arg1[%679] : memref<128xi32, #tpu.memory_space<smem>>
    %c2_i32_355 = arith.constant 2 : i32
    %681 = arith.addi %677, %c2_i32_355 : i32
    %682 = arith.index_cast %681 : i32 to index
    %683 = memref.load %arg1[%682] : memref<128xi32, #tpu.memory_space<smem>>
    %684 = arith.index_cast %680 : i32 to index
    %c0_356 = arith.constant 0 : index
    %685 = vector.load %arg2[%684, %c0_356] : memref<20x128xf32, #tpu.memory_space<vmem>>, vector<1x128xf32>
    %686 = arith.index_cast %683 : i32 to index
    %c0_357 = arith.constant 0 : index
    %687 = vector.load %arg3[%686, %c0_357] : memref<20x128xf32, #tpu.memory_space<vmem>>, vector<1x128xf32>
    %688 = arith.addf %685, %687 : vector<1x128xf32>
    %c45 = arith.constant 45 : index
    %c0_358 = arith.constant 0 : index
    %689 = vector.load %arg15[%c45, %c0_358] : memref<64x128xf32, #tpu.memory_space<vmem>>, vector<1x128xf32>
    tpu.vector_store %arg15[%c45, %c0_358], %688 {strides = array<i32>} : memref<64x128xf32, #tpu.memory_space<vmem>>, vector<1x128xf32>,
    %c8_i32_359 = arith.constant 8 : i32
    %690 = arith.muli %arg0, %c8_i32_359 : i32
    %c6_i32_360 = arith.constant 6 : i32
    %691 = arith.addi %690, %c6_i32_360 : i32
    %c8_i32_361 = arith.constant 8 : i32
    %692 = arith.muli %691, %c8_i32_361 : i32
    %c5_i32_362 = arith.constant 5 : i32
    %693 = arith.addi %692, %c5_i32_362 : i32
    %694 = arith.index_cast %693 : i32 to index
    %695 = memref.load %arg1[%694] : memref<128xi32, #tpu.memory_space<smem>>
    %c2_i32_363 = arith.constant 2 : i32
    %696 = arith.addi %692, %c2_i32_363 : i32
    %697 = arith.index_cast %696 : i32 to index
    %698 = memref.load %arg1[%697] : memref<128xi32, #tpu.memory_space<smem>>
    %699 = arith.index_cast %695 : i32 to index
    %c0_364 = arith.constant 0 : index
    %700 = vector.load %arg2[%699, %c0_364] : memref<20x128xf32, #tpu.memory_space<vmem>>, vector<1x128xf32>
    %701 = arith.index_cast %698 : i32 to index
    %c0_365 = arith.constant 0 : index
    %702 = vector.load %arg3[%701, %c0_365] : memref<20x128xf32, #tpu.memory_space<vmem>>, vector<1x128xf32>
    %703 = arith.addf %700, %702 : vector<1x128xf32>
    %c46 = arith.constant 46 : index
    %c0_366 = arith.constant 0 : index
    %704 = vector.load %arg15[%c46, %c0_366] : memref<64x128xf32, #tpu.memory_space<vmem>>, vector<1x128xf32>
    tpu.vector_store %arg15[%c46, %c0_366], %703 {strides = array<i32>} : memref<64x128xf32, #tpu.memory_space<vmem>>, vector<1x128xf32>,
    %c8_i32_367 = arith.constant 8 : i32
    %705 = arith.muli %arg0, %c8_i32_367 : i32
    %c7_i32_368 = arith.constant 7 : i32
    %706 = arith.addi %705, %c7_i32_368 : i32
    %c8_i32_369 = arith.constant 8 : i32
    %707 = arith.muli %706, %c8_i32_369 : i32
    %c5_i32_370 = arith.constant 5 : i32
    %708 = arith.addi %707, %c5_i32_370 : i32
    %709 = arith.index_cast %708 : i32 to index
    %710 = memref.load %arg1[%709] : memref<128xi32, #tpu.memory_space<smem>>
    %c2_i32_371 = arith.constant 2 : i32
    %711 = arith.addi %707, %c2_i32_371 : i32
    %712 = arith.index_cast %711 : i32 to index
    %713 = memref.load %arg1[%712] : memref<128xi32, #tpu.memory_space<smem>>
    %714 = arith.index_cast %710 : i32 to index
    %c0_372 = arith.constant 0 : index
    %715 = vector.load %arg2[%714, %c0_372] : memref<20x128xf32, #tpu.memory_space<vmem>>, vector<1x128xf32>
    %716 = arith.index_cast %713 : i32 to index
    %c0_373 = arith.constant 0 : index
    %717 = vector.load %arg3[%716, %c0_373] : memref<20x128xf32, #tpu.memory_space<vmem>>, vector<1x128xf32>
    %718 = arith.addf %715, %717 : vector<1x128xf32>
    %c47 = arith.constant 47 : index
    %c0_374 = arith.constant 0 : index
    %719 = vector.load %arg15[%c47, %c0_374] : memref<64x128xf32, #tpu.memory_space<vmem>>, vector<1x128xf32>
    tpu.vector_store %arg15[%c47, %c0_374], %718 {strides = array<i32>} : memref<64x128xf32, #tpu.memory_space<vmem>>, vector<1x128xf32>,
    %c8_i32_375 = arith.constant 8 : i32
    %720 = arith.muli %arg0, %c8_i32_375 : i32
    %c0_i32_376 = arith.constant 0 : i32
    %721 = arith.addi %720, %c0_i32_376 : i32
    %c8_i32_377 = arith.constant 8 : i32
    %722 = arith.muli %721, %c8_i32_377 : i32
    %c6_i32_378 = arith.constant 6 : i32
    %723 = arith.addi %722, %c6_i32_378 : i32
    %724 = arith.index_cast %723 : i32 to index
    %725 = memref.load %arg1[%724] : memref<128xi32, #tpu.memory_space<smem>>
    %c1_i32_379 = arith.constant 1 : i32
    %726 = arith.addi %722, %c1_i32_379 : i32
    %727 = arith.index_cast %726 : i32 to index
    %728 = memref.load %arg1[%727] : memref<128xi32, #tpu.memory_space<smem>>
    %729 = arith.index_cast %725 : i32 to index
    %c0_380 = arith.constant 0 : index
    %730 = vector.load %arg2[%729, %c0_380] : memref<20x128xf32, #tpu.memory_space<vmem>>, vector<1x128xf32>
    %731 = arith.index_cast %728 : i32 to index
    %c0_381 = arith.constant 0 : index
    %732 = vector.load %arg3[%731, %c0_381] : memref<20x128xf32, #tpu.memory_space<vmem>>, vector<1x128xf32>
    %733 = arith.addf %730, %732 : vector<1x128xf32>
    %c48 = arith.constant 48 : index
    %c0_382 = arith.constant 0 : index
    %734 = vector.load %arg15[%c48, %c0_382] : memref<64x128xf32, #tpu.memory_space<vmem>>, vector<1x128xf32>
    tpu.vector_store %arg15[%c48, %c0_382], %733 {strides = array<i32>} : memref<64x128xf32, #tpu.memory_space<vmem>>, vector<1x128xf32>,
    %c8_i32_383 = arith.constant 8 : i32
    %735 = arith.muli %arg0, %c8_i32_383 : i32
    %c1_i32_384 = arith.constant 1 : i32
    %736 = arith.addi %735, %c1_i32_384 : i32
    %c8_i32_385 = arith.constant 8 : i32
    %737 = arith.muli %736, %c8_i32_385 : i32
    %c6_i32_386 = arith.constant 6 : i32
    %738 = arith.addi %737, %c6_i32_386 : i32
    %739 = arith.index_cast %738 : i32 to index
    %740 = memref.load %arg1[%739] : memref<128xi32, #tpu.memory_space<smem>>
    %c1_i32_387 = arith.constant 1 : i32
    %741 = arith.addi %737, %c1_i32_387 : i32
    %742 = arith.index_cast %741 : i32 to index
    %743 = memref.load %arg1[%742] : memref<128xi32, #tpu.memory_space<smem>>
    %744 = arith.index_cast %740 : i32 to index
    %c0_388 = arith.constant 0 : index
    %745 = vector.load %arg2[%744, %c0_388] : memref<20x128xf32, #tpu.memory_space<vmem>>, vector<1x128xf32>
    %746 = arith.index_cast %743 : i32 to index
    %c0_389 = arith.constant 0 : index
    %747 = vector.load %arg3[%746, %c0_389] : memref<20x128xf32, #tpu.memory_space<vmem>>, vector<1x128xf32>
    %748 = arith.addf %745, %747 : vector<1x128xf32>
    %c49 = arith.constant 49 : index
    %c0_390 = arith.constant 0 : index
    %749 = vector.load %arg15[%c49, %c0_390] : memref<64x128xf32, #tpu.memory_space<vmem>>, vector<1x128xf32>
    tpu.vector_store %arg15[%c49, %c0_390], %748 {strides = array<i32>} : memref<64x128xf32, #tpu.memory_space<vmem>>, vector<1x128xf32>,
    %c8_i32_391 = arith.constant 8 : i32
    %750 = arith.muli %arg0, %c8_i32_391 : i32
    %c2_i32_392 = arith.constant 2 : i32
    %751 = arith.addi %750, %c2_i32_392 : i32
    %c8_i32_393 = arith.constant 8 : i32
    %752 = arith.muli %751, %c8_i32_393 : i32
    %c6_i32_394 = arith.constant 6 : i32
    %753 = arith.addi %752, %c6_i32_394 : i32
    %754 = arith.index_cast %753 : i32 to index
    %755 = memref.load %arg1[%754] : memref<128xi32, #tpu.memory_space<smem>>
    %c1_i32_395 = arith.constant 1 : i32
    %756 = arith.addi %752, %c1_i32_395 : i32
    %757 = arith.index_cast %756 : i32 to index
    %758 = memref.load %arg1[%757] : memref<128xi32, #tpu.memory_space<smem>>
    %759 = arith.index_cast %755 : i32 to index
    %c0_396 = arith.constant 0 : index
    %760 = vector.load %arg2[%759, %c0_396] : memref<20x128xf32, #tpu.memory_space<vmem>>, vector<1x128xf32>
    %761 = arith.index_cast %758 : i32 to index
    %c0_397 = arith.constant 0 : index
    %762 = vector.load %arg3[%761, %c0_397] : memref<20x128xf32, #tpu.memory_space<vmem>>, vector<1x128xf32>
    %763 = arith.addf %760, %762 : vector<1x128xf32>
    %c50 = arith.constant 50 : index
    %c0_398 = arith.constant 0 : index
    %764 = vector.load %arg15[%c50, %c0_398] : memref<64x128xf32, #tpu.memory_space<vmem>>, vector<1x128xf32>
    tpu.vector_store %arg15[%c50, %c0_398], %763 {strides = array<i32>} : memref<64x128xf32, #tpu.memory_space<vmem>>, vector<1x128xf32>,
    %c8_i32_399 = arith.constant 8 : i32
    %765 = arith.muli %arg0, %c8_i32_399 : i32
    %c3_i32_400 = arith.constant 3 : i32
    %766 = arith.addi %765, %c3_i32_400 : i32
    %c8_i32_401 = arith.constant 8 : i32
    %767 = arith.muli %766, %c8_i32_401 : i32
    %c6_i32_402 = arith.constant 6 : i32
    %768 = arith.addi %767, %c6_i32_402 : i32
    %769 = arith.index_cast %768 : i32 to index
    %770 = memref.load %arg1[%769] : memref<128xi32, #tpu.memory_space<smem>>
    %c1_i32_403 = arith.constant 1 : i32
    %771 = arith.addi %767, %c1_i32_403 : i32
    %772 = arith.index_cast %771 : i32 to index
    %773 = memref.load %arg1[%772] : memref<128xi32, #tpu.memory_space<smem>>
    %774 = arith.index_cast %770 : i32 to index
    %c0_404 = arith.constant 0 : index
    %775 = vector.load %arg2[%774, %c0_404] : memref<20x128xf32, #tpu.memory_space<vmem>>, vector<1x128xf32>
    %776 = arith.index_cast %773 : i32 to index
    %c0_405 = arith.constant 0 : index
    %777 = vector.load %arg3[%776, %c0_405] : memref<20x128xf32, #tpu.memory_space<vmem>>, vector<1x128xf32>
    %778 = arith.addf %775, %777 : vector<1x128xf32>
    %c51 = arith.constant 51 : index
    %c0_406 = arith.constant 0 : index
    %779 = vector.load %arg15[%c51, %c0_406] : memref<64x128xf32, #tpu.memory_space<vmem>>, vector<1x128xf32>
    tpu.vector_store %arg15[%c51, %c0_406], %778 {strides = array<i32>} : memref<64x128xf32, #tpu.memory_space<vmem>>, vector<1x128xf32>,
    %c8_i32_407 = arith.constant 8 : i32
    %780 = arith.muli %arg0, %c8_i32_407 : i32
    %c4_i32_408 = arith.constant 4 : i32
    %781 = arith.addi %780, %c4_i32_408 : i32
    %c8_i32_409 = arith.constant 8 : i32
    %782 = arith.muli %781, %c8_i32_409 : i32
    %c6_i32_410 = arith.constant 6 : i32
    %783 = arith.addi %782, %c6_i32_410 : i32
    %784 = arith.index_cast %783 : i32 to index
    %785 = memref.load %arg1[%784] : memref<128xi32, #tpu.memory_space<smem>>
    %c1_i32_411 = arith.constant 1 : i32
    %786 = arith.addi %782, %c1_i32_411 : i32
    %787 = arith.index_cast %786 : i32 to index
    %788 = memref.load %arg1[%787] : memref<128xi32, #tpu.memory_space<smem>>
    %789 = arith.index_cast %785 : i32 to index
    %c0_412 = arith.constant 0 : index
    %790 = vector.load %arg2[%789, %c0_412] : memref<20x128xf32, #tpu.memory_space<vmem>>, vector<1x128xf32>
    %791 = arith.index_cast %788 : i32 to index
    %c0_413 = arith.constant 0 : index
    %792 = vector.load %arg3[%791, %c0_413] : memref<20x128xf32, #tpu.memory_space<vmem>>, vector<1x128xf32>
    %793 = arith.addf %790, %792 : vector<1x128xf32>
    %c52 = arith.constant 52 : index
    %c0_414 = arith.constant 0 : index
    %794 = vector.load %arg15[%c52, %c0_414] : memref<64x128xf32, #tpu.memory_space<vmem>>, vector<1x128xf32>
    tpu.vector_store %arg15[%c52, %c0_414], %793 {strides = array<i32>} : memref<64x128xf32, #tpu.memory_space<vmem>>, vector<1x128xf32>,
    %c8_i32_415 = arith.constant 8 : i32
    %795 = arith.muli %arg0, %c8_i32_415 : i32
    %c5_i32_416 = arith.constant 5 : i32
    %796 = arith.addi %795, %c5_i32_416 : i32
    %c8_i32_417 = arith.constant 8 : i32
    %797 = arith.muli %796, %c8_i32_417 : i32
    %c6_i32_418 = arith.constant 6 : i32
    %798 = arith.addi %797, %c6_i32_418 : i32
    %799 = arith.index_cast %798 : i32 to index
    %800 = memref.load %arg1[%799] : memref<128xi32, #tpu.memory_space<smem>>
    %c1_i32_419 = arith.constant 1 : i32
    %801 = arith.addi %797, %c1_i32_419 : i32
    %802 = arith.index_cast %801 : i32 to index
    %803 = memref.load %arg1[%802] : memref<128xi32, #tpu.memory_space<smem>>
    %804 = arith.index_cast %800 : i32 to index
    %c0_420 = arith.constant 0 : index
    %805 = vector.load %arg2[%804, %c0_420] : memref<20x128xf32, #tpu.memory_space<vmem>>, vector<1x128xf32>
    %806 = arith.index_cast %803 : i32 to index
    %c0_421 = arith.constant 0 : index
    %807 = vector.load %arg3[%806, %c0_421] : memref<20x128xf32, #tpu.memory_space<vmem>>, vector<1x128xf32>
    %808 = arith.addf %805, %807 : vector<1x128xf32>
    %c53 = arith.constant 53 : index
    %c0_422 = arith.constant 0 : index
    %809 = vector.load %arg15[%c53, %c0_422] : memref<64x128xf32, #tpu.memory_space<vmem>>, vector<1x128xf32>
    tpu.vector_store %arg15[%c53, %c0_422], %808 {strides = array<i32>} : memref<64x128xf32, #tpu.memory_space<vmem>>, vector<1x128xf32>,
    %c8_i32_423 = arith.constant 8 : i32
    %810 = arith.muli %arg0, %c8_i32_423 : i32
    %c6_i32_424 = arith.constant 6 : i32
    %811 = arith.addi %810, %c6_i32_424 : i32
    %c8_i32_425 = arith.constant 8 : i32
    %812 = arith.muli %811, %c8_i32_425 : i32
    %c6_i32_426 = arith.constant 6 : i32
    %813 = arith.addi %812, %c6_i32_426 : i32
    %814 = arith.index_cast %813 : i32 to index
    %815 = memref.load %arg1[%814] : memref<128xi32, #tpu.memory_space<smem>>
    %c1_i32_427 = arith.constant 1 : i32
    %816 = arith.addi %812, %c1_i32_427 : i32
    %817 = arith.index_cast %816 : i32 to index
    %818 = memref.load %arg1[%817] : memref<128xi32, #tpu.memory_space<smem>>
    %819 = arith.index_cast %815 : i32 to index
    %c0_428 = arith.constant 0 : index
    %820 = vector.load %arg2[%819, %c0_428] : memref<20x128xf32, #tpu.memory_space<vmem>>, vector<1x128xf32>
    %821 = arith.index_cast %818 : i32 to index
    %c0_429 = arith.constant 0 : index
    %822 = vector.load %arg3[%821, %c0_429] : memref<20x128xf32, #tpu.memory_space<vmem>>, vector<1x128xf32>
    %823 = arith.addf %820, %822 : vector<1x128xf32>
    %c54 = arith.constant 54 : index
    %c0_430 = arith.constant 0 : index
    %824 = vector.load %arg15[%c54, %c0_430] : memref<64x128xf32, #tpu.memory_space<vmem>>, vector<1x128xf32>
    tpu.vector_store %arg15[%c54, %c0_430], %823 {strides = array<i32>} : memref<64x128xf32, #tpu.memory_space<vmem>>, vector<1x128xf32>,
    %c8_i32_431 = arith.constant 8 : i32
    %825 = arith.muli %arg0, %c8_i32_431 : i32
    %c7_i32_432 = arith.constant 7 : i32
    %826 = arith.addi %825, %c7_i32_432 : i32
    %c8_i32_433 = arith.constant 8 : i32
    %827 = arith.muli %826, %c8_i32_433 : i32
    %c6_i32_434 = arith.constant 6 : i32
    %828 = arith.addi %827, %c6_i32_434 : i32
    %829 = arith.index_cast %828 : i32 to index
    %830 = memref.load %arg1[%829] : memref<128xi32, #tpu.memory_space<smem>>
    %c1_i32_435 = arith.constant 1 : i32
    %831 = arith.addi %827, %c1_i32_435 : i32
    %832 = arith.index_cast %831 : i32 to index
    %833 = memref.load %arg1[%832] : memref<128xi32, #tpu.memory_space<smem>>
    %834 = arith.index_cast %830 : i32 to index
    %c0_436 = arith.constant 0 : index
    %835 = vector.load %arg2[%834, %c0_436] : memref<20x128xf32, #tpu.memory_space<vmem>>, vector<1x128xf32>
    %836 = arith.index_cast %833 : i32 to index
    %c0_437 = arith.constant 0 : index
    %837 = vector.load %arg3[%836, %c0_437] : memref<20x128xf32, #tpu.memory_space<vmem>>, vector<1x128xf32>
    %838 = arith.addf %835, %837 : vector<1x128xf32>
    %c55 = arith.constant 55 : index
    %c0_438 = arith.constant 0 : index
    %839 = vector.load %arg15[%c55, %c0_438] : memref<64x128xf32, #tpu.memory_space<vmem>>, vector<1x128xf32>
    tpu.vector_store %arg15[%c55, %c0_438], %838 {strides = array<i32>} : memref<64x128xf32, #tpu.memory_space<vmem>>, vector<1x128xf32>,
    %c8_i32_439 = arith.constant 8 : i32
    %840 = arith.muli %arg0, %c8_i32_439 : i32
    %c0_i32_440 = arith.constant 0 : i32
    %841 = arith.addi %840, %c0_i32_440 : i32
    %c8_i32_441 = arith.constant 8 : i32
    %842 = arith.muli %841, %c8_i32_441 : i32
    %c7_i32_442 = arith.constant 7 : i32
    %843 = arith.addi %842, %c7_i32_442 : i32
    %844 = arith.index_cast %843 : i32 to index
    %845 = memref.load %arg1[%844] : memref<128xi32, #tpu.memory_space<smem>>
    %c0_i32_443 = arith.constant 0 : i32
    %846 = arith.addi %842, %c0_i32_443 : i32
    %847 = arith.index_cast %846 : i32 to index
    %848 = memref.load %arg1[%847] : memref<128xi32, #tpu.memory_space<smem>>
    %849 = arith.index_cast %845 : i32 to index
    %c0_444 = arith.constant 0 : index
    %850 = vector.load %arg2[%849, %c0_444] : memref<20x128xf32, #tpu.memory_space<vmem>>, vector<1x128xf32>
    %851 = arith.index_cast %848 : i32 to index
    %c0_445 = arith.constant 0 : index
    %852 = vector.load %arg3[%851, %c0_445] : memref<20x128xf32, #tpu.memory_space<vmem>>, vector<1x128xf32>
    %853 = arith.addf %850, %852 : vector<1x128xf32>
    %c56 = arith.constant 56 : index
    %c0_446 = arith.constant 0 : index
    %854 = vector.load %arg15[%c56, %c0_446] : memref<64x128xf32, #tpu.memory_space<vmem>>, vector<1x128xf32>
    tpu.vector_store %arg15[%c56, %c0_446], %853 {strides = array<i32>} : memref<64x128xf32, #tpu.memory_space<vmem>>, vector<1x128xf32>,
    %c8_i32_447 = arith.constant 8 : i32
    %855 = arith.muli %arg0, %c8_i32_447 : i32
    %c1_i32_448 = arith.constant 1 : i32
    %856 = arith.addi %855, %c1_i32_448 : i32
    %c8_i32_449 = arith.constant 8 : i32
    %857 = arith.muli %856, %c8_i32_449 : i32
    %c7_i32_450 = arith.constant 7 : i32
    %858 = arith.addi %857, %c7_i32_450 : i32
    %859 = arith.index_cast %858 : i32 to index
    %860 = memref.load %arg1[%859] : memref<128xi32, #tpu.memory_space<smem>>
    %c0_i32_451 = arith.constant 0 : i32
    %861 = arith.addi %857, %c0_i32_451 : i32
    %862 = arith.index_cast %861 : i32 to index
    %863 = memref.load %arg1[%862] : memref<128xi32, #tpu.memory_space<smem>>
    %864 = arith.index_cast %860 : i32 to index
    %c0_452 = arith.constant 0 : index
    %865 = vector.load %arg2[%864, %c0_452] : memref<20x128xf32, #tpu.memory_space<vmem>>, vector<1x128xf32>
    %866 = arith.index_cast %863 : i32 to index
    %c0_453 = arith.constant 0 : index
    %867 = vector.load %arg3[%866, %c0_453] : memref<20x128xf32, #tpu.memory_space<vmem>>, vector<1x128xf32>
    %868 = arith.addf %865, %867 : vector<1x128xf32>
    %c57 = arith.constant 57 : index
    %c0_454 = arith.constant 0 : index
    %869 = vector.load %arg15[%c57, %c0_454] : memref<64x128xf32, #tpu.memory_space<vmem>>, vector<1x128xf32>
    tpu.vector_store %arg15[%c57, %c0_454], %868 {strides = array<i32>} : memref<64x128xf32, #tpu.memory_space<vmem>>, vector<1x128xf32>,
    %c8_i32_455 = arith.constant 8 : i32
    %870 = arith.muli %arg0, %c8_i32_455 : i32
    %c2_i32_456 = arith.constant 2 : i32
    %871 = arith.addi %870, %c2_i32_456 : i32
    %c8_i32_457 = arith.constant 8 : i32
    %872 = arith.muli %871, %c8_i32_457 : i32
    %c7_i32_458 = arith.constant 7 : i32
    %873 = arith.addi %872, %c7_i32_458 : i32
    %874 = arith.index_cast %873 : i32 to index
    %875 = memref.load %arg1[%874] : memref<128xi32, #tpu.memory_space<smem>>
    %c0_i32_459 = arith.constant 0 : i32
    %876 = arith.addi %872, %c0_i32_459 : i32
    %877 = arith.index_cast %876 : i32 to index
    %878 = memref.load %arg1[%877] : memref<128xi32, #tpu.memory_space<smem>>
    %879 = arith.index_cast %875 : i32 to index
    %c0_460 = arith.constant 0 : index
    %880 = vector.load %arg2[%879, %c0_460] : memref<20x128xf32, #tpu.memory_space<vmem>>, vector<1x128xf32>
    %881 = arith.index_cast %878 : i32 to index
    %c0_461 = arith.constant 0 : index
    %882 = vector.load %arg3[%881, %c0_461] : memref<20x128xf32, #tpu.memory_space<vmem>>, vector<1x128xf32>
    %883 = arith.addf %880, %882 : vector<1x128xf32>
    %c58 = arith.constant 58 : index
    %c0_462 = arith.constant 0 : index
    %884 = vector.load %arg15[%c58, %c0_462] : memref<64x128xf32, #tpu.memory_space<vmem>>, vector<1x128xf32>
    tpu.vector_store %arg15[%c58, %c0_462], %883 {strides = array<i32>} : memref<64x128xf32, #tpu.memory_space<vmem>>, vector<1x128xf32>,
    %c8_i32_463 = arith.constant 8 : i32
    %885 = arith.muli %arg0, %c8_i32_463 : i32
    %c3_i32_464 = arith.constant 3 : i32
    %886 = arith.addi %885, %c3_i32_464 : i32
    %c8_i32_465 = arith.constant 8 : i32
    %887 = arith.muli %886, %c8_i32_465 : i32
    %c7_i32_466 = arith.constant 7 : i32
    %888 = arith.addi %887, %c7_i32_466 : i32
    %889 = arith.index_cast %888 : i32 to index
    %890 = memref.load %arg1[%889] : memref<128xi32, #tpu.memory_space<smem>>
    %c0_i32_467 = arith.constant 0 : i32
    %891 = arith.addi %887, %c0_i32_467 : i32
    %892 = arith.index_cast %891 : i32 to index
    %893 = memref.load %arg1[%892] : memref<128xi32, #tpu.memory_space<smem>>
    %894 = arith.index_cast %890 : i32 to index
    %c0_468 = arith.constant 0 : index
    %895 = vector.load %arg2[%894, %c0_468] : memref<20x128xf32, #tpu.memory_space<vmem>>, vector<1x128xf32>
    %896 = arith.index_cast %893 : i32 to index
    %c0_469 = arith.constant 0 : index
    %897 = vector.load %arg3[%896, %c0_469] : memref<20x128xf32, #tpu.memory_space<vmem>>, vector<1x128xf32>
    %898 = arith.addf %895, %897 : vector<1x128xf32>
    %c59 = arith.constant 59 : index
    %c0_470 = arith.constant 0 : index
    %899 = vector.load %arg15[%c59, %c0_470] : memref<64x128xf32, #tpu.memory_space<vmem>>, vector<1x128xf32>
    tpu.vector_store %arg15[%c59, %c0_470], %898 {strides = array<i32>} : memref<64x128xf32, #tpu.memory_space<vmem>>, vector<1x128xf32>,
    %c8_i32_471 = arith.constant 8 : i32
    %900 = arith.muli %arg0, %c8_i32_471 : i32
    %c4_i32_472 = arith.constant 4 : i32
    %901 = arith.addi %900, %c4_i32_472 : i32
    %c8_i32_473 = arith.constant 8 : i32
    %902 = arith.muli %901, %c8_i32_473 : i32
    %c7_i32_474 = arith.constant 7 : i32
    %903 = arith.addi %902, %c7_i32_474 : i32
    %904 = arith.index_cast %903 : i32 to index
    %905 = memref.load %arg1[%904] : memref<128xi32, #tpu.memory_space<smem>>
    %c0_i32_475 = arith.constant 0 : i32
    %906 = arith.addi %902, %c0_i32_475 : i32
    %907 = arith.index_cast %906 : i32 to index
    %908 = memref.load %arg1[%907] : memref<128xi32, #tpu.memory_space<smem>>
    %909 = arith.index_cast %905 : i32 to index
    %c0_476 = arith.constant 0 : index
    %910 = vector.load %arg2[%909, %c0_476] : memref<20x128xf32, #tpu.memory_space<vmem>>, vector<1x128xf32>
    %911 = arith.index_cast %908 : i32 to index
    %c0_477 = arith.constant 0 : index
    %912 = vector.load %arg3[%911, %c0_477] : memref<20x128xf32, #tpu.memory_space<vmem>>, vector<1x128xf32>
    %913 = arith.addf %910, %912 : vector<1x128xf32>
    %c60 = arith.constant 60 : index
    %c0_478 = arith.constant 0 : index
    %914 = vector.load %arg15[%c60, %c0_478] : memref<64x128xf32, #tpu.memory_space<vmem>>, vector<1x128xf32>
    tpu.vector_store %arg15[%c60, %c0_478], %913 {strides = array<i32>} : memref<64x128xf32, #tpu.memory_space<vmem>>, vector<1x128xf32>,
    %c8_i32_479 = arith.constant 8 : i32
    %915 = arith.muli %arg0, %c8_i32_479 : i32
    %c5_i32_480 = arith.constant 5 : i32
    %916 = arith.addi %915, %c5_i32_480 : i32
    %c8_i32_481 = arith.constant 8 : i32
    %917 = arith.muli %916, %c8_i32_481 : i32
    %c7_i32_482 = arith.constant 7 : i32
    %918 = arith.addi %917, %c7_i32_482 : i32
    %919 = arith.index_cast %918 : i32 to index
    %920 = memref.load %arg1[%919] : memref<128xi32, #tpu.memory_space<smem>>
    %c0_i32_483 = arith.constant 0 : i32
    %921 = arith.addi %917, %c0_i32_483 : i32
    %922 = arith.index_cast %921 : i32 to index
    %923 = memref.load %arg1[%922] : memref<128xi32, #tpu.memory_space<smem>>
    %924 = arith.index_cast %920 : i32 to index
    %c0_484 = arith.constant 0 : index
    %925 = vector.load %arg2[%924, %c0_484] : memref<20x128xf32, #tpu.memory_space<vmem>>, vector<1x128xf32>
    %926 = arith.index_cast %923 : i32 to index
    %c0_485 = arith.constant 0 : index
    %927 = vector.load %arg3[%926, %c0_485] : memref<20x128xf32, #tpu.memory_space<vmem>>, vector<1x128xf32>
    %928 = arith.addf %925, %927 : vector<1x128xf32>
    %c61 = arith.constant 61 : index
    %c0_486 = arith.constant 0 : index
    %929 = vector.load %arg15[%c61, %c0_486] : memref<64x128xf32, #tpu.memory_space<vmem>>, vector<1x128xf32>
    tpu.vector_store %arg15[%c61, %c0_486], %928 {strides = array<i32>} : memref<64x128xf32, #tpu.memory_space<vmem>>, vector<1x128xf32>,
    %c8_i32_487 = arith.constant 8 : i32
    %930 = arith.muli %arg0, %c8_i32_487 : i32
    %c6_i32_488 = arith.constant 6 : i32
    %931 = arith.addi %930, %c6_i32_488 : i32
    %c8_i32_489 = arith.constant 8 : i32
    %932 = arith.muli %931, %c8_i32_489 : i32
    %c7_i32_490 = arith.constant 7 : i32
    %933 = arith.addi %932, %c7_i32_490 : i32
    %934 = arith.index_cast %933 : i32 to index
    %935 = memref.load %arg1[%934] : memref<128xi32, #tpu.memory_space<smem>>
    %c0_i32_491 = arith.constant 0 : i32
    %936 = arith.addi %932, %c0_i32_491 : i32
    %937 = arith.index_cast %936 : i32 to index
    %938 = memref.load %arg1[%937] : memref<128xi32, #tpu.memory_space<smem>>
    %939 = arith.index_cast %935 : i32 to index
    %c0_492 = arith.constant 0 : index
    %940 = vector.load %arg2[%939, %c0_492] : memref<20x128xf32, #tpu.memory_space<vmem>>, vector<1x128xf32>
    %941 = arith.index_cast %938 : i32 to index
    %c0_493 = arith.constant 0 : index
    %942 = vector.load %arg3[%941, %c0_493] : memref<20x128xf32, #tpu.memory_space<vmem>>, vector<1x128xf32>
    %943 = arith.addf %940, %942 : vector<1x128xf32>
    %c62 = arith.constant 62 : index
    %c0_494 = arith.constant 0 : index
    %944 = vector.load %arg15[%c62, %c0_494] : memref<64x128xf32, #tpu.memory_space<vmem>>, vector<1x128xf32>
    tpu.vector_store %arg15[%c62, %c0_494], %943 {strides = array<i32>} : memref<64x128xf32, #tpu.memory_space<vmem>>, vector<1x128xf32>,
    %c8_i32_495 = arith.constant 8 : i32
    %945 = arith.muli %arg0, %c8_i32_495 : i32
    %c7_i32_496 = arith.constant 7 : i32
    %946 = arith.addi %945, %c7_i32_496 : i32
    %c8_i32_497 = arith.constant 8 : i32
    %947 = arith.muli %946, %c8_i32_497 : i32
    %c7_i32_498 = arith.constant 7 : i32
    %948 = arith.addi %947, %c7_i32_498 : i32
    %949 = arith.index_cast %948 : i32 to index
    %950 = memref.load %arg1[%949] : memref<128xi32, #tpu.memory_space<smem>>
    %c0_i32_499 = arith.constant 0 : i32
    %951 = arith.addi %947, %c0_i32_499 : i32
    %952 = arith.index_cast %951 : i32 to index
    %953 = memref.load %arg1[%952] : memref<128xi32, #tpu.memory_space<smem>>
    %954 = arith.index_cast %950 : i32 to index
    %c0_500 = arith.constant 0 : index
    %955 = vector.load %arg2[%954, %c0_500] : memref<20x128xf32, #tpu.memory_space<vmem>>, vector<1x128xf32>
    %956 = arith.index_cast %953 : i32 to index
    %c0_501 = arith.constant 0 : index
    %957 = vector.load %arg3[%956, %c0_501] : memref<20x128xf32, #tpu.memory_space<vmem>>, vector<1x128xf32>
    %958 = arith.addf %955, %957 : vector<1x128xf32>
    %c63 = arith.constant 63 : index
    %c0_502 = arith.constant 0 : index
    %959 = vector.load %arg15[%c63, %c0_502] : memref<64x128xf32, #tpu.memory_space<vmem>>, vector<1x128xf32>
    tpu.vector_store %arg15[%c63, %c0_502], %958 {strides = array<i32>} : memref<64x128xf32, #tpu.memory_space<vmem>>, vector<1x128xf32>,
    %c0_503 = arith.constant 0 : index
    %c0_504 = arith.constant 0 : index
    %960 = vector.load %arg4[%c0_503, %c0_504] : memref<32x128xf32, #tpu.memory_space<vmem>>, vector<32x128xf32>
    %c0_505 = arith.constant 0 : index
    %c0_506 = arith.constant 0 : index
    %961 = vector.load %arg5[%c0_505, %c0_506] : memref<8x32xf32, #tpu.memory_space<vmem>>, vector<8x32xf32>
    %c0_507 = arith.constant 0 : index
    %c0_508 = arith.constant 0 : index
    %962 = vector.load %arg6[%c0_507, %c0_508] : memref<8x32xf32, #tpu.memory_space<vmem>>, vector<8x32xf32>
    %c0_509 = arith.constant 0 : index
    %c0_510 = arith.constant 0 : index
    %963 = vector.load %arg15[%c0_509, %c0_510] : memref<64x128xf32, #tpu.memory_space<vmem>>, vector<8x128xf32>
    %cst = arith.constant dense<0.000000e+00> : vector<8x128xf32>
    %964 = tpu.matmul %961, %960, %cst {dimension_numbers = #tpu.dot_dimension_numbers<[1], [0], [0], [1], [0, 0, 1, 1], [], []>} : vector<8x32xf32>, vector<32x128xf32>, vector<8x128xf32> -> vector<8x128xf32>
    %965 = arith.addf %963, %964 : vector<8x128xf32>
    %966 = vector.extract_strided_slice %965 {offsets = [0, 0], sizes = [8, 64], strides = [1, 1]} : vector<8x128xf32> to vector<8x64xf32>
    %967 = arith.negf %966 : vector<8x64xf32>
    %968 = math.exp %967 : vector<8x64xf32>
    %cst_511 = arith.constant 1.000000e+00 : f32
    %969 = vector.broadcast %cst_511 : f32 to vector<8x64xf32>
    %970 = arith.addf %969, %968 : vector<8x64xf32>
    %971 = arith.divf %969, %970 : vector<8x64xf32>
    %972 = vector.extract_strided_slice %965 {offsets = [0, 64], sizes = [8, 32], strides = [1, 1]} : vector<8x128xf32> to vector<8x32xf32>
    %973 = math.tanh %972 : vector<8x32xf32>
    %974 = vector.extract_strided_slice %965 {offsets = [0, 96], sizes = [8, 32], strides = [1, 1]} : vector<8x128xf32> to vector<8x32xf32>
    %975 = arith.negf %974 : vector<8x32xf32>
    %976 = math.exp %975 : vector<8x32xf32>
    %cst_512 = arith.constant 1.000000e+00 : f32
    %977 = vector.broadcast %cst_512 : f32 to vector<8x32xf32>
    %978 = arith.addf %977, %976 : vector<8x32xf32>
    %979 = arith.divf %977, %978 : vector<8x32xf32>
    %980 = vector.extract_strided_slice %971 {offsets = [0, 32], sizes = [8, 32], strides = [1, 1]} : vector<8x64xf32> to vector<8x32xf32>
    %981 = arith.mulf %980, %962 : vector<8x32xf32>
    %982 = vector.extract_strided_slice %971 {offsets = [0, 0], sizes = [8, 32], strides = [1, 1]} : vector<8x64xf32> to vector<8x32xf32>
    %983 = arith.mulf %982, %973 : vector<8x32xf32>
    %984 = arith.addf %981, %983 : vector<8x32xf32>
    %985 = math.tanh %984 : vector<8x32xf32>
    %986 = arith.mulf %979, %985 : vector<8x32xf32>
    %987 = vector.extract_strided_slice %986 {offsets = [0, 0], sizes = [8, 16], strides = [1, 1]} : vector<8x32xf32> to vector<8x16xf32>
    %c0_513 = arith.constant 0 : index
    %c0_514 = arith.constant 0 : index
    %988 = vector.load %arg16[%c0_513, %c0_514] : memref<64x32xf32, #tpu.memory_space<vmem>>, vector<8x16xf32>
    tpu.vector_store %arg16[%c0_513, %c0_514], %987 {strides = array<i32>} : memref<64x32xf32, #tpu.memory_space<vmem>>, vector<8x16xf32>,
    %989 = vector.extract_strided_slice %986 {offsets = [0, 16], sizes = [8, 16], strides = [1, 1]} : vector<8x32xf32> to vector<8x16xf32>
    %c56_515 = arith.constant 56 : index
    %c16_516 = arith.constant 16 : index
    %990 = vector.load %arg16[%c56_515, %c16_516] : memref<64x32xf32, #tpu.memory_space<vmem>>, vector<8x16xf32>
    tpu.vector_store %arg16[%c56_515, %c16_516], %989 {strides = array<i32>} : memref<64x32xf32, #tpu.memory_space<vmem>>, vector<8x16xf32>,
    %c8_517 = arith.constant 8 : index
    %c0_518 = arith.constant 0 : index
    %991 = vector.load %arg15[%c8_517, %c0_518] : memref<64x128xf32, #tpu.memory_space<vmem>>, vector<8x128xf32>
    %cst_519 = arith.constant dense<0.000000e+00> : vector<8x128xf32>
    %992 = tpu.matmul %986, %960, %cst_519 {dimension_numbers = #tpu.dot_dimension_numbers<[1], [0], [0], [1], [0, 0, 1, 1], [], []>} : vector<8x32xf32>, vector<32x128xf32>, vector<8x128xf32> -> vector<8x128xf32>
    %993 = arith.addf %991, %992 : vector<8x128xf32>
    %994 = vector.extract_strided_slice %993 {offsets = [0, 0], sizes = [8, 64], strides = [1, 1]} : vector<8x128xf32> to vector<8x64xf32>
    %995 = arith.negf %994 : vector<8x64xf32>
    %996 = math.exp %995 : vector<8x64xf32>
    %cst_520 = arith.constant 1.000000e+00 : f32
    %997 = vector.broadcast %cst_520 : f32 to vector<8x64xf32>
    %998 = arith.addf %997, %996 : vector<8x64xf32>
    %999 = arith.divf %997, %998 : vector<8x64xf32>
    %1000 = vector.extract_strided_slice %993 {offsets = [0, 64], sizes = [8, 32], strides = [1, 1]} : vector<8x128xf32> to vector<8x32xf32>
    %1001 = math.tanh %1000 : vector<8x32xf32>
    %1002 = vector.extract_strided_slice %993 {offsets = [0, 96], sizes = [8, 32], strides = [1, 1]} : vector<8x128xf32> to vector<8x32xf32>
    %1003 = arith.negf %1002 : vector<8x32xf32>
    %1004 = math.exp %1003 : vector<8x32xf32>
    %cst_521 = arith.constant 1.000000e+00 : f32
    %1005 = vector.broadcast %cst_521 : f32 to vector<8x32xf32>
    %1006 = arith.addf %1005, %1004 : vector<8x32xf32>
    %1007 = arith.divf %1005, %1006 : vector<8x32xf32>
    %1008 = vector.extract_strided_slice %999 {offsets = [0, 32], sizes = [8, 32], strides = [1, 1]} : vector<8x64xf32> to vector<8x32xf32>
    %1009 = arith.mulf %1008, %984 : vector<8x32xf32>
    %1010 = vector.extract_strided_slice %999 {offsets = [0, 0], sizes = [8, 32], strides = [1, 1]} : vector<8x64xf32> to vector<8x32xf32>
    %1011 = arith.mulf %1010, %1001 : vector<8x32xf32>
    %1012 = arith.addf %1009, %1011 : vector<8x32xf32>
    %1013 = math.tanh %1012 : vector<8x32xf32>
    %1014 = arith.mulf %1007, %1013 : vector<8x32xf32>
    %1015 = vector.extract_strided_slice %1014 {offsets = [0, 0], sizes = [8, 16], strides = [1, 1]} : vector<8x32xf32> to vector<8x16xf32>
    %c8_522 = arith.constant 8 : index
    %c0_523 = arith.constant 0 : index
    %1016 = vector.load %arg16[%c8_522, %c0_523] : memref<64x32xf32, #tpu.memory_space<vmem>>, vector<8x16xf32>
    tpu.vector_store %arg16[%c8_522, %c0_523], %1015 {strides = array<i32>} : memref<64x32xf32, #tpu.memory_space<vmem>>, vector<8x16xf32>,
    %1017 = vector.extract_strided_slice %1014 {offsets = [0, 16], sizes = [8, 16], strides = [1, 1]} : vector<8x32xf32> to vector<8x16xf32>
    %c48_524 = arith.constant 48 : index
    %c16_525 = arith.constant 16 : index
    %1018 = vector.load %arg16[%c48_524, %c16_525] : memref<64x32xf32, #tpu.memory_space<vmem>>, vector<8x16xf32>
    tpu.vector_store %arg16[%c48_524, %c16_525], %1017 {strides = array<i32>} : memref<64x32xf32, #tpu.memory_space<vmem>>, vector<8x16xf32>,
    %c16_526 = arith.constant 16 : index
    %c0_527 = arith.constant 0 : index
    %1019 = vector.load %arg15[%c16_526, %c0_527] : memref<64x128xf32, #tpu.memory_space<vmem>>, vector<8x128xf32>
    %cst_528 = arith.constant dense<0.000000e+00> : vector<8x128xf32>
    %1020 = tpu.matmul %1014, %960, %cst_528 {dimension_numbers = #tpu.dot_dimension_numbers<[1], [0], [0], [1], [0, 0, 1, 1], [], []>} : vector<8x32xf32>, vector<32x128xf32>, vector<8x128xf32> -> vector<8x128xf32>
    %1021 = arith.addf %1019, %1020 : vector<8x128xf32>
    %1022 = vector.extract_strided_slice %1021 {offsets = [0, 0], sizes = [8, 64], strides = [1, 1]} : vector<8x128xf32> to vector<8x64xf32>
    %1023 = arith.negf %1022 : vector<8x64xf32>
    %1024 = math.exp %1023 : vector<8x64xf32>
    %cst_529 = arith.constant 1.000000e+00 : f32
    %1025 = vector.broadcast %cst_529 : f32 to vector<8x64xf32>
    %1026 = arith.addf %1025, %1024 : vector<8x64xf32>
    %1027 = arith.divf %1025, %1026 : vector<8x64xf32>
    %1028 = vector.extract_strided_slice %1021 {offsets = [0, 64], sizes = [8, 32], strides = [1, 1]} : vector<8x128xf32> to vector<8x32xf32>
    %1029 = math.tanh %1028 : vector<8x32xf32>
    %1030 = vector.extract_strided_slice %1021 {offsets = [0, 96], sizes = [8, 32], strides = [1, 1]} : vector<8x128xf32> to vector<8x32xf32>
    %1031 = arith.negf %1030 : vector<8x32xf32>
    %1032 = math.exp %1031 : vector<8x32xf32>
    %cst_530 = arith.constant 1.000000e+00 : f32
    %1033 = vector.broadcast %cst_530 : f32 to vector<8x32xf32>
    %1034 = arith.addf %1033, %1032 : vector<8x32xf32>
    %1035 = arith.divf %1033, %1034 : vector<8x32xf32>
    %1036 = vector.extract_strided_slice %1027 {offsets = [0, 32], sizes = [8, 32], strides = [1, 1]} : vector<8x64xf32> to vector<8x32xf32>
    %1037 = arith.mulf %1036, %1012 : vector<8x32xf32>
    %1038 = vector.extract_strided_slice %1027 {offsets = [0, 0], sizes = [8, 32], strides = [1, 1]} : vector<8x64xf32> to vector<8x32xf32>
    %1039 = arith.mulf %1038, %1029 : vector<8x32xf32>
    %1040 = arith.addf %1037, %1039 : vector<8x32xf32>
    %1041 = math.tanh %1040 : vector<8x32xf32>
    %1042 = arith.mulf %1035, %1041 : vector<8x32xf32>
    %1043 = vector.extract_strided_slice %1042 {offsets = [0, 0], sizes = [8, 16], strides = [1, 1]} : vector<8x32xf32> to vector<8x16xf32>
    %c16_531 = arith.constant 16 : index
    %c0_532 = arith.constant 0 : index
    %1044 = vector.load %arg16[%c16_531, %c0_532] : memref<64x32xf32, #tpu.memory_space<vmem>>, vector<8x16xf32>
    tpu.vector_store %arg16[%c16_531, %c0_532], %1043 {strides = array<i32>} : memref<64x32xf32, #tpu.memory_space<vmem>>, vector<8x16xf32>,
    %1045 = vector.extract_strided_slice %1042 {offsets = [0, 16], sizes = [8, 16], strides = [1, 1]} : vector<8x32xf32> to vector<8x16xf32>
    %c40_533 = arith.constant 40 : index
    %c16_534 = arith.constant 16 : index
    %1046 = vector.load %arg16[%c40_533, %c16_534] : memref<64x32xf32, #tpu.memory_space<vmem>>, vector<8x16xf32>
    tpu.vector_store %arg16[%c40_533, %c16_534], %1045 {strides = array<i32>} : memref<64x32xf32, #tpu.memory_space<vmem>>, vector<8x16xf32>,
    %c24_535 = arith.constant 24 : index
    %c0_536 = arith.constant 0 : index
    %1047 = vector.load %arg15[%c24_535, %c0_536] : memref<64x128xf32, #tpu.memory_space<vmem>>, vector<8x128xf32>
    %cst_537 = arith.constant dense<0.000000e+00> : vector<8x128xf32>
    %1048 = tpu.matmul %1042, %960, %cst_537 {dimension_numbers = #tpu.dot_dimension_numbers<[1], [0], [0], [1], [0, 0, 1, 1], [], []>} : vector<8x32xf32>, vector<32x128xf32>, vector<8x128xf32> -> vector<8x128xf32>
    %1049 = arith.addf %1047, %1048 : vector<8x128xf32>
    %1050 = vector.extract_strided_slice %1049 {offsets = [0, 0], sizes = [8, 64], strides = [1, 1]} : vector<8x128xf32> to vector<8x64xf32>
    %1051 = arith.negf %1050 : vector<8x64xf32>
    %1052 = math.exp %1051 : vector<8x64xf32>
    %cst_538 = arith.constant 1.000000e+00 : f32
    %1053 = vector.broadcast %cst_538 : f32 to vector<8x64xf32>
    %1054 = arith.addf %1053, %1052 : vector<8x64xf32>
    %1055 = arith.divf %1053, %1054 : vector<8x64xf32>
    %1056 = vector.extract_strided_slice %1049 {offsets = [0, 64], sizes = [8, 32], strides = [1, 1]} : vector<8x128xf32> to vector<8x32xf32>
    %1057 = math.tanh %1056 : vector<8x32xf32>
    %1058 = vector.extract_strided_slice %1049 {offsets = [0, 96], sizes = [8, 32], strides = [1, 1]} : vector<8x128xf32> to vector<8x32xf32>
    %1059 = arith.negf %1058 : vector<8x32xf32>
    %1060 = math.exp %1059 : vector<8x32xf32>
    %cst_539 = arith.constant 1.000000e+00 : f32
    %1061 = vector.broadcast %cst_539 : f32 to vector<8x32xf32>
    %1062 = arith.addf %1061, %1060 : vector<8x32xf32>
    %1063 = arith.divf %1061, %1062 : vector<8x32xf32>
    %1064 = vector.extract_strided_slice %1055 {offsets = [0, 32], sizes = [8, 32], strides = [1, 1]} : vector<8x64xf32> to vector<8x32xf32>
    %1065 = arith.mulf %1064, %1040 : vector<8x32xf32>
    %1066 = vector.extract_strided_slice %1055 {offsets = [0, 0], sizes = [8, 32], strides = [1, 1]} : vector<8x64xf32> to vector<8x32xf32>
    %1067 = arith.mulf %1066, %1057 : vector<8x32xf32>
    %1068 = arith.addf %1065, %1067 : vector<8x32xf32>
    %1069 = math.tanh %1068 : vector<8x32xf32>
    %1070 = arith.mulf %1063, %1069 : vector<8x32xf32>
    %1071 = vector.extract_strided_slice %1070 {offsets = [0, 0], sizes = [8, 16], strides = [1, 1]} : vector<8x32xf32> to vector<8x16xf32>
    %c24_540 = arith.constant 24 : index
    %c0_541 = arith.constant 0 : index
    %1072 = vector.load %arg16[%c24_540, %c0_541] : memref<64x32xf32, #tpu.memory_space<vmem>>, vector<8x16xf32>
    tpu.vector_store %arg16[%c24_540, %c0_541], %1071 {strides = array<i32>} : memref<64x32xf32, #tpu.memory_space<vmem>>, vector<8x16xf32>,
    %1073 = vector.extract_strided_slice %1070 {offsets = [0, 16], sizes = [8, 16], strides = [1, 1]} : vector<8x32xf32> to vector<8x16xf32>
    %c32_542 = arith.constant 32 : index
    %c16_543 = arith.constant 16 : index
    %1074 = vector.load %arg16[%c32_542, %c16_543] : memref<64x32xf32, #tpu.memory_space<vmem>>, vector<8x16xf32>
    tpu.vector_store %arg16[%c32_542, %c16_543], %1073 {strides = array<i32>} : memref<64x32xf32, #tpu.memory_space<vmem>>, vector<8x16xf32>,
    %c32_544 = arith.constant 32 : index
    %c0_545 = arith.constant 0 : index
    %1075 = vector.load %arg15[%c32_544, %c0_545] : memref<64x128xf32, #tpu.memory_space<vmem>>, vector<8x128xf32>
    %cst_546 = arith.constant dense<0.000000e+00> : vector<8x128xf32>
    %1076 = tpu.matmul %1070, %960, %cst_546 {dimension_numbers = #tpu.dot_dimension_numbers<[1], [0], [0], [1], [0, 0, 1, 1], [], []>} : vector<8x32xf32>, vector<32x128xf32>, vector<8x128xf32> -> vector<8x128xf32>
    %1077 = arith.addf %1075, %1076 : vector<8x128xf32>
    %1078 = vector.extract_strided_slice %1077 {offsets = [0, 0], sizes = [8, 64], strides = [1, 1]} : vector<8x128xf32> to vector<8x64xf32>
    %1079 = arith.negf %1078 : vector<8x64xf32>
    %1080 = math.exp %1079 : vector<8x64xf32>
    %cst_547 = arith.constant 1.000000e+00 : f32
    %1081 = vector.broadcast %cst_547 : f32 to vector<8x64xf32>
    %1082 = arith.addf %1081, %1080 : vector<8x64xf32>
    %1083 = arith.divf %1081, %1082 : vector<8x64xf32>
    %1084 = vector.extract_strided_slice %1077 {offsets = [0, 64], sizes = [8, 32], strides = [1, 1]} : vector<8x128xf32> to vector<8x32xf32>
    %1085 = math.tanh %1084 : vector<8x32xf32>
    %1086 = vector.extract_strided_slice %1077 {offsets = [0, 96], sizes = [8, 32], strides = [1, 1]} : vector<8x128xf32> to vector<8x32xf32>
    %1087 = arith.negf %1086 : vector<8x32xf32>
    %1088 = math.exp %1087 : vector<8x32xf32>
    %cst_548 = arith.constant 1.000000e+00 : f32
    %1089 = vector.broadcast %cst_548 : f32 to vector<8x32xf32>
    %1090 = arith.addf %1089, %1088 : vector<8x32xf32>
    %1091 = arith.divf %1089, %1090 : vector<8x32xf32>
    %1092 = vector.extract_strided_slice %1083 {offsets = [0, 32], sizes = [8, 32], strides = [1, 1]} : vector<8x64xf32> to vector<8x32xf32>
    %1093 = arith.mulf %1092, %1068 : vector<8x32xf32>
    %1094 = vector.extract_strided_slice %1083 {offsets = [0, 0], sizes = [8, 32], strides = [1, 1]} : vector<8x64xf32> to vector<8x32xf32>
    %1095 = arith.mulf %1094, %1085 : vector<8x32xf32>
    %1096 = arith.addf %1093, %1095 : vector<8x32xf32>
    %1097 = math.tanh %1096 : vector<8x32xf32>
    %1098 = arith.mulf %1091, %1097 : vector<8x32xf32>
    %1099 = vector.extract_strided_slice %1098 {offsets = [0, 0], sizes = [8, 16], strides = [1, 1]} : vector<8x32xf32> to vector<8x16xf32>
    %c32_549 = arith.constant 32 : index
    %c0_550 = arith.constant 0 : index
    %1100 = vector.load %arg16[%c32_549, %c0_550] : memref<64x32xf32, #tpu.memory_space<vmem>>, vector<8x16xf32>
    tpu.vector_store %arg16[%c32_549, %c0_550], %1099 {strides = array<i32>} : memref<64x32xf32, #tpu.memory_space<vmem>>, vector<8x16xf32>,
    %1101 = vector.extract_strided_slice %1098 {offsets = [0, 16], sizes = [8, 16], strides = [1, 1]} : vector<8x32xf32> to vector<8x16xf32>
    %c24_551 = arith.constant 24 : index
    %c16_552 = arith.constant 16 : index
    %1102 = vector.load %arg16[%c24_551, %c16_552] : memref<64x32xf32, #tpu.memory_space<vmem>>, vector<8x16xf32>
    tpu.vector_store %arg16[%c24_551, %c16_552], %1101 {strides = array<i32>} : memref<64x32xf32, #tpu.memory_space<vmem>>, vector<8x16xf32>,
    %c40_553 = arith.constant 40 : index
    %c0_554 = arith.constant 0 : index
    %1103 = vector.load %arg15[%c40_553, %c0_554] : memref<64x128xf32, #tpu.memory_space<vmem>>, vector<8x128xf32>
    %cst_555 = arith.constant dense<0.000000e+00> : vector<8x128xf32>
    %1104 = tpu.matmul %1098, %960, %cst_555 {dimension_numbers = #tpu.dot_dimension_numbers<[1], [0], [0], [1], [0, 0, 1, 1], [], []>} : vector<8x32xf32>, vector<32x128xf32>, vector<8x128xf32> -> vector<8x128xf32>
    %1105 = arith.addf %1103, %1104 : vector<8x128xf32>
    %1106 = vector.extract_strided_slice %1105 {offsets = [0, 0], sizes = [8, 64], strides = [1, 1]} : vector<8x128xf32> to vector<8x64xf32>
    %1107 = arith.negf %1106 : vector<8x64xf32>
    %1108 = math.exp %1107 : vector<8x64xf32>
    %cst_556 = arith.constant 1.000000e+00 : f32
    %1109 = vector.broadcast %cst_556 : f32 to vector<8x64xf32>
    %1110 = arith.addf %1109, %1108 : vector<8x64xf32>
    %1111 = arith.divf %1109, %1110 : vector<8x64xf32>
    %1112 = vector.extract_strided_slice %1105 {offsets = [0, 64], sizes = [8, 32], strides = [1, 1]} : vector<8x128xf32> to vector<8x32xf32>
    %1113 = math.tanh %1112 : vector<8x32xf32>
    %1114 = vector.extract_strided_slice %1105 {offsets = [0, 96], sizes = [8, 32], strides = [1, 1]} : vector<8x128xf32> to vector<8x32xf32>
    %1115 = arith.negf %1114 : vector<8x32xf32>
    %1116 = math.exp %1115 : vector<8x32xf32>
    %cst_557 = arith.constant 1.000000e+00 : f32
    %1117 = vector.broadcast %cst_557 : f32 to vector<8x32xf32>
    %1118 = arith.addf %1117, %1116 : vector<8x32xf32>
    %1119 = arith.divf %1117, %1118 : vector<8x32xf32>
    %1120 = vector.extract_strided_slice %1111 {offsets = [0, 32], sizes = [8, 32], strides = [1, 1]} : vector<8x64xf32> to vector<8x32xf32>
    %1121 = arith.mulf %1120, %1096 : vector<8x32xf32>
    %1122 = vector.extract_strided_slice %1111 {offsets = [0, 0], sizes = [8, 32], strides = [1, 1]} : vector<8x64xf32> to vector<8x32xf32>
    %1123 = arith.mulf %1122, %1113 : vector<8x32xf32>
    %1124 = arith.addf %1121, %1123 : vector<8x32xf32>
    %1125 = math.tanh %1124 : vector<8x32xf32>
    %1126 = arith.mulf %1119, %1125 : vector<8x32xf32>
    %1127 = vector.extract_strided_slice %1126 {offsets = [0, 0], sizes = [8, 16], strides = [1, 1]} : vector<8x32xf32> to vector<8x16xf32>
    %c40_558 = arith.constant 40 : index
    %c0_559 = arith.constant 0 : index
    %1128 = vector.load %arg16[%c40_558, %c0_559] : memref<64x32xf32, #tpu.memory_space<vmem>>, vector<8x16xf32>
    tpu.vector_store %arg16[%c40_558, %c0_559], %1127 {strides = array<i32>} : memref<64x32xf32, #tpu.memory_space<vmem>>, vector<8x16xf32>,
    %1129 = vector.extract_strided_slice %1126 {offsets = [0, 16], sizes = [8, 16], strides = [1, 1]} : vector<8x32xf32> to vector<8x16xf32>
    %c16_560 = arith.constant 16 : index
    %c16_561 = arith.constant 16 : index
    %1130 = vector.load %arg16[%c16_560, %c16_561] : memref<64x32xf32, #tpu.memory_space<vmem>>, vector<8x16xf32>
    tpu.vector_store %arg16[%c16_560, %c16_561], %1129 {strides = array<i32>} : memref<64x32xf32, #tpu.memory_space<vmem>>, vector<8x16xf32>,
    %c48_562 = arith.constant 48 : index
    %c0_563 = arith.constant 0 : index
    %1131 = vector.load %arg15[%c48_562, %c0_563] : memref<64x128xf32, #tpu.memory_space<vmem>>, vector<8x128xf32>
    %cst_564 = arith.constant dense<0.000000e+00> : vector<8x128xf32>
    %1132 = tpu.matmul %1126, %960, %cst_564 {dimension_numbers = #tpu.dot_dimension_numbers<[1], [0], [0], [1], [0, 0, 1, 1], [], []>} : vector<8x32xf32>, vector<32x128xf32>, vector<8x128xf32> -> vector<8x128xf32>
    %1133 = arith.addf %1131, %1132 : vector<8x128xf32>
    %1134 = vector.extract_strided_slice %1133 {offsets = [0, 0], sizes = [8, 64], strides = [1, 1]} : vector<8x128xf32> to vector<8x64xf32>
    %1135 = arith.negf %1134 : vector<8x64xf32>
    %1136 = math.exp %1135 : vector<8x64xf32>
    %cst_565 = arith.constant 1.000000e+00 : f32
    %1137 = vector.broadcast %cst_565 : f32 to vector<8x64xf32>
    %1138 = arith.addf %1137, %1136 : vector<8x64xf32>
    %1139 = arith.divf %1137, %1138 : vector<8x64xf32>
    %1140 = vector.extract_strided_slice %1133 {offsets = [0, 64], sizes = [8, 32], strides = [1, 1]} : vector<8x128xf32> to vector<8x32xf32>
    %1141 = math.tanh %1140 : vector<8x32xf32>
    %1142 = vector.extract_strided_slice %1133 {offsets = [0, 96], sizes = [8, 32], strides = [1, 1]} : vector<8x128xf32> to vector<8x32xf32>
    %1143 = arith.negf %1142 : vector<8x32xf32>
    %1144 = math.exp %1143 : vector<8x32xf32>
    %cst_566 = arith.constant 1.000000e+00 : f32
    %1145 = vector.broadcast %cst_566 : f32 to vector<8x32xf32>
    %1146 = arith.addf %1145, %1144 : vector<8x32xf32>
    %1147 = arith.divf %1145, %1146 : vector<8x32xf32>
    %1148 = vector.extract_strided_slice %1139 {offsets = [0, 32], sizes = [8, 32], strides = [1, 1]} : vector<8x64xf32> to vector<8x32xf32>
    %1149 = arith.mulf %1148, %1124 : vector<8x32xf32>
    %1150 = vector.extract_strided_slice %1139 {offsets = [0, 0], sizes = [8, 32], strides = [1, 1]} : vector<8x64xf32> to vector<8x32xf32>
    %1151 = arith.mulf %1150, %1141 : vector<8x32xf32>
    %1152 = arith.addf %1149, %1151 : vector<8x32xf32>
    %1153 = math.tanh %1152 : vector<8x32xf32>
    %1154 = arith.mulf %1147, %1153 : vector<8x32xf32>
    %1155 = vector.extract_strided_slice %1154 {offsets = [0, 0], sizes = [8, 16], strides = [1, 1]} : vector<8x32xf32> to vector<8x16xf32>
    %c48_567 = arith.constant 48 : index
    %c0_568 = arith.constant 0 : index
    %1156 = vector.load %arg16[%c48_567, %c0_568] : memref<64x32xf32, #tpu.memory_space<vmem>>, vector<8x16xf32>
    tpu.vector_store %arg16[%c48_567, %c0_568], %1155 {strides = array<i32>} : memref<64x32xf32, #tpu.memory_space<vmem>>, vector<8x16xf32>,
    %1157 = vector.extract_strided_slice %1154 {offsets = [0, 16], sizes = [8, 16], strides = [1, 1]} : vector<8x32xf32> to vector<8x16xf32>
    %c8_569 = arith.constant 8 : index
    %c16_570 = arith.constant 16 : index
    %1158 = vector.load %arg16[%c8_569, %c16_570] : memref<64x32xf32, #tpu.memory_space<vmem>>, vector<8x16xf32>
    tpu.vector_store %arg16[%c8_569, %c16_570], %1157 {strides = array<i32>} : memref<64x32xf32, #tpu.memory_space<vmem>>, vector<8x16xf32>,
    %c56_571 = arith.constant 56 : index
    %c0_572 = arith.constant 0 : index
    %1159 = vector.load %arg15[%c56_571, %c0_572] : memref<64x128xf32, #tpu.memory_space<vmem>>, vector<8x128xf32>
    %cst_573 = arith.constant dense<0.000000e+00> : vector<8x128xf32>
    %1160 = tpu.matmul %1154, %960, %cst_573 {dimension_numbers = #tpu.dot_dimension_numbers<[1], [0], [0], [1], [0, 0, 1, 1], [], []>} : vector<8x32xf32>, vector<32x128xf32>, vector<8x128xf32> -> vector<8x128xf32>
    %1161 = arith.addf %1159, %1160 : vector<8x128xf32>
    %1162 = vector.extract_strided_slice %1161 {offsets = [0, 0], sizes = [8, 64], strides = [1, 1]} : vector<8x128xf32> to vector<8x64xf32>
    %1163 = arith.negf %1162 : vector<8x64xf32>
    %1164 = math.exp %1163 : vector<8x64xf32>
    %cst_574 = arith.constant 1.000000e+00 : f32
    %1165 = vector.broadcast %cst_574 : f32 to vector<8x64xf32>
    %1166 = arith.addf %1165, %1164 : vector<8x64xf32>
    %1167 = arith.divf %1165, %1166 : vector<8x64xf32>
    %1168 = vector.extract_strided_slice %1161 {offsets = [0, 64], sizes = [8, 32], strides = [1, 1]} : vector<8x128xf32> to vector<8x32xf32>
    %1169 = math.tanh %1168 : vector<8x32xf32>
    %1170 = vector.extract_strided_slice %1161 {offsets = [0, 96], sizes = [8, 32], strides = [1, 1]} : vector<8x128xf32> to vector<8x32xf32>
    %1171 = arith.negf %1170 : vector<8x32xf32>
    %1172 = math.exp %1171 : vector<8x32xf32>
    %cst_575 = arith.constant 1.000000e+00 : f32
    %1173 = vector.broadcast %cst_575 : f32 to vector<8x32xf32>
    %1174 = arith.addf %1173, %1172 : vector<8x32xf32>
    %1175 = arith.divf %1173, %1174 : vector<8x32xf32>
    %1176 = vector.extract_strided_slice %1167 {offsets = [0, 32], sizes = [8, 32], strides = [1, 1]} : vector<8x64xf32> to vector<8x32xf32>
    %1177 = arith.mulf %1176, %1152 : vector<8x32xf32>
    %1178 = vector.extract_strided_slice %1167 {offsets = [0, 0], sizes = [8, 32], strides = [1, 1]} : vector<8x64xf32> to vector<8x32xf32>
    %1179 = arith.mulf %1178, %1169 : vector<8x32xf32>
    %1180 = arith.addf %1177, %1179 : vector<8x32xf32>
    %1181 = math.tanh %1180 : vector<8x32xf32>
    %1182 = arith.mulf %1175, %1181 : vector<8x32xf32>
    %1183 = vector.extract_strided_slice %1182 {offsets = [0, 0], sizes = [8, 16], strides = [1, 1]} : vector<8x32xf32> to vector<8x16xf32>
    %c56_576 = arith.constant 56 : index
    %c0_577 = arith.constant 0 : index
    %1184 = vector.load %arg16[%c56_576, %c0_577] : memref<64x32xf32, #tpu.memory_space<vmem>>, vector<8x16xf32>
    tpu.vector_store %arg16[%c56_576, %c0_577], %1183 {strides = array<i32>} : memref<64x32xf32, #tpu.memory_space<vmem>>, vector<8x16xf32>,
    %1185 = vector.extract_strided_slice %1182 {offsets = [0, 16], sizes = [8, 16], strides = [1, 1]} : vector<8x32xf32> to vector<8x16xf32>
    %c0_578 = arith.constant 0 : index
    %c16_579 = arith.constant 16 : index
    %1186 = vector.load %arg16[%c0_578, %c16_579] : memref<64x32xf32, #tpu.memory_space<vmem>>, vector<8x16xf32>
    tpu.vector_store %arg16[%c0_578, %c16_579], %1185 {strides = array<i32>} : memref<64x32xf32, #tpu.memory_space<vmem>>, vector<8x16xf32>,
    %c0_580 = arith.constant 0 : index
    %c0_581 = arith.constant 0 : index
    %1187 = vector.load %arg7[%c0_580, %c0_581] : memref<32x128xf32, #tpu.memory_space<vmem>>, vector<32x128xf32>
    %c0_582 = arith.constant 0 : index
    %c0_583 = arith.constant 0 : index
    %1188 = vector.load %arg8[%c0_582, %c0_583] : memref<1x128xf32, #tpu.memory_space<vmem>>, vector<1x128xf32>
    %1189 = vector.shape_cast %1188 : vector<1x128xf32> to vector<1x128xf32>
    %1190 = vector.broadcast %1189 : vector<1x128xf32> to vector<8x128xf32>
    %c0_584 = arith.constant 0 : index
    %c0_585 = arith.constant 0 : index
    %1191 = vector.load %arg9[%c0_584, %c0_585] : memref<8x8xf32, #tpu.memory_space<vmem>>, vector<8x8xf32>
    %1192 = vector.extract_strided_slice %1191 {offsets = [0, 0], sizes = [1, 8], strides = [1, 1]} : vector<8x8xf32> to vector<1x8xf32>
    %1193 = vector.extract_strided_slice %1191 {offsets = [1, 0], sizes = [1, 8], strides = [1, 1]} : vector<8x8xf32> to vector<1x8xf32>
    %1194 = vector.extract_strided_slice %1191 {offsets = [2, 0], sizes = [1, 8], strides = [1, 1]} : vector<8x8xf32> to vector<1x8xf32>
    %1195 = vector.extract_strided_slice %1191 {offsets = [3, 0], sizes = [1, 8], strides = [1, 1]} : vector<8x8xf32> to vector<1x8xf32>
    %1196 = vector.extract_strided_slice %1191 {offsets = [4, 0], sizes = [1, 8], strides = [1, 1]} : vector<8x8xf32> to vector<1x8xf32>
    %1197 = tpu.iota {dimensions = array<i32: 1>} : vector<8x8xi32>
    %1198 = arith.sitofp %1197 : vector<8x8xi32> to vector<8x8xf32>
    %1199 = tpu.iota {dimensions = array<i32: 1>} : vector<1x8xi32>
    %c0_i32_586 = arith.constant 0 : i32
    %1200 = vector.broadcast %c0_i32_586 : i32 to vector<1x8xi32>
    %1201 = arith.cmpi eq, %1199, %1200 : vector<1x8xi32>
    %c1_i32_587 = arith.constant 1 : i32
    %1202 = vector.broadcast %c1_i32_587 : i32 to vector<1x8xi32>
    %1203 = arith.cmpi eq, %1199, %1202 : vector<1x8xi32>
    %c2_i32_588 = arith.constant 2 : i32
    %1204 = vector.broadcast %c2_i32_588 : i32 to vector<1x8xi32>
    %1205 = arith.cmpi eq, %1199, %1204 : vector<1x8xi32>
    %c3_i32_589 = arith.constant 3 : i32
    %1206 = vector.broadcast %c3_i32_589 : i32 to vector<1x8xi32>
    %1207 = arith.cmpi eq, %1199, %1206 : vector<1x8xi32>
    %c4_i32_590 = arith.constant 4 : i32
    %1208 = vector.broadcast %c4_i32_590 : i32 to vector<1x8xi32>
    %1209 = arith.cmpi eq, %1199, %1208 : vector<1x8xi32>
    %c0_591 = arith.constant 0 : index
    %c0_592 = arith.constant 0 : index
    %1210 = vector.load %arg11[%c0_591, %c0_592] : memref<8x8xf32, #tpu.memory_space<vmem>>, vector<8x8xf32>
    %c0_593 = arith.constant 0 : index
    %c0_594 = arith.constant 0 : index
    %1211 = vector.load %arg16[%c0_593, %c0_594] : memref<64x32xf32, #tpu.memory_space<vmem>>, vector<8x32xf32>
    %cst_595 = arith.constant dense<0.000000e+00> : vector<8x128xf32>
    %1212 = tpu.matmul %1211, %1187, %cst_595 {dimension_numbers = #tpu.dot_dimension_numbers<[1], [0], [0], [1], [0, 0, 1, 1], [], []>} : vector<8x32xf32>, vector<32x128xf32>, vector<8x128xf32> -> vector<8x128xf32>
    %1213 = arith.addf %1212, %1190 : vector<8x128xf32>
    %c0_596 = arith.constant 0 : index
    %c0_597 = arith.constant 0 : index
    %1214 = vector.load %arg12[%c0_596, %c0_597] : memref<64x128xf32, #tpu.memory_space<vmem>>, vector<8x128xf32>
    tpu.vector_store %arg12[%c0_596, %c0_597], %1213 {strides = array<i32>} : memref<64x128xf32, #tpu.memory_space<vmem>>, vector<8x128xf32>,
    %1215 = vector.extract_strided_slice %1213 {offsets = [0, 0], sizes = [8, 8], strides = [1, 1]} : vector<8x128xf32> to vector<8x8xf32>
    %cst_598 = arith.constant 0.000000e+00 : f32
    %1216 = vector.broadcast %cst_598 : f32 to vector<8x8xf32>
    %1217 = vector.broadcast %1192 : vector<1x8xf32> to vector<8x8xf32>
    %1218 = arith.addf %1210, %1217 : vector<8x8xf32>
    %cst_599 = arith.constant dense<0xFF800000> : vector<8xf32>
    %1219 = vector.multi_reduction <maximumf>, %1218, %cst_599 [1] : vector<8x8xf32> to vector<8xf32>
    %1220 = vector.shape_cast %1219 : vector<8xf32> to vector<8x1xf32>
    %1221 = vector.broadcast %1220 : vector<8x1xf32> to vector<8x8xf32>
    %1222 = arith.cmpf oeq, %1218, %1221 : vector<8x8xf32>
    %cst_600 = arith.constant 8.000000e+00 : f32
    %1223 = vector.broadcast %cst_600 : f32 to vector<8x8xf32>
    %1224 = arith.select %1222, %1198, %1223 : vector<8x8xi1>, vector<8x8xf32>
    %cst_601 = arith.constant dense<0x7F800000> : vector<8xf32>
    %1225 = vector.multi_reduction <minimumf>, %1224, %cst_601 [1] : vector<8x8xf32> to vector<8xf32>
    %1226 = vector.shape_cast %1225 : vector<8xf32> to vector<8x1xf32>
    %cst_602 = arith.constant 0.000000e+00 : f32
    %1227 = vector.shape_cast %1201 : vector<1x8xi1> to vector<1x8xi1>
    %1228 = vector.broadcast %1227 : vector<1x8xi1> to vector<8x8xi1>
    %1229 = vector.shape_cast %1220 : vector<8x1xf32> to vector<8x1xf32>
    %1230 = vector.broadcast %1229 : vector<8x1xf32> to vector<8x8xf32>
    %1231 = vector.broadcast %cst_602 : f32 to vector<8x8xf32>
    %1232 = arith.select %1228, %1230, %1231 : vector<8x8xi1>, vector<8x8xf32>
    %1233 = arith.addf %1215, %1232 : vector<8x8xf32>
    %1234 = vector.shape_cast %1201 : vector<1x8xi1> to vector<1x8xi1>
    %1235 = vector.broadcast %1234 : vector<1x8xi1> to vector<8x8xi1>
    %1236 = vector.shape_cast %1226 : vector<8x1xf32> to vector<8x1xf32>
    %1237 = vector.broadcast %1236 : vector<8x1xf32> to vector<8x8xf32>
    %1238 = arith.select %1235, %1237, %1216 : vector<8x8xi1>, vector<8x8xf32>
    %1239 = vector.broadcast %1193 : vector<1x8xf32> to vector<8x8xf32>
    %1240 = arith.addf %1210, %1239 : vector<8x8xf32>
    %cst_603 = arith.constant dense<0xFF800000> : vector<8xf32>
    %1241 = vector.multi_reduction <maximumf>, %1240, %cst_603 [1] : vector<8x8xf32> to vector<8xf32>
    %1242 = vector.shape_cast %1241 : vector<8xf32> to vector<8x1xf32>
    %1243 = vector.broadcast %1242 : vector<8x1xf32> to vector<8x8xf32>
    %1244 = arith.cmpf oeq, %1240, %1243 : vector<8x8xf32>
    %cst_604 = arith.constant 8.000000e+00 : f32
    %1245 = vector.broadcast %cst_604 : f32 to vector<8x8xf32>
    %1246 = arith.select %1244, %1198, %1245 : vector<8x8xi1>, vector<8x8xf32>
    %cst_605 = arith.constant dense<0x7F800000> : vector<8xf32>
    %1247 = vector.multi_reduction <minimumf>, %1246, %cst_605 [1] : vector<8x8xf32> to vector<8xf32>
    %1248 = vector.shape_cast %1247 : vector<8xf32> to vector<8x1xf32>
    %cst_606 = arith.constant 0.000000e+00 : f32
    %1249 = vector.shape_cast %1203 : vector<1x8xi1> to vector<1x8xi1>
    %1250 = vector.broadcast %1249 : vector<1x8xi1> to vector<8x8xi1>
    %1251 = vector.shape_cast %1242 : vector<8x1xf32> to vector<8x1xf32>
    %1252 = vector.broadcast %1251 : vector<8x1xf32> to vector<8x8xf32>
    %1253 = vector.broadcast %cst_606 : f32 to vector<8x8xf32>
    %1254 = arith.select %1250, %1252, %1253 : vector<8x8xi1>, vector<8x8xf32>
    %1255 = arith.addf %1233, %1254 : vector<8x8xf32>
    %1256 = vector.shape_cast %1203 : vector<1x8xi1> to vector<1x8xi1>
    %1257 = vector.broadcast %1256 : vector<1x8xi1> to vector<8x8xi1>
    %1258 = vector.shape_cast %1248 : vector<8x1xf32> to vector<8x1xf32>
    %1259 = vector.broadcast %1258 : vector<8x1xf32> to vector<8x8xf32>
    %1260 = arith.select %1257, %1259, %1238 : vector<8x8xi1>, vector<8x8xf32>
    %1261 = vector.broadcast %1194 : vector<1x8xf32> to vector<8x8xf32>
    %1262 = arith.addf %1210, %1261 : vector<8x8xf32>
    %cst_607 = arith.constant dense<0xFF800000> : vector<8xf32>
    %1263 = vector.multi_reduction <maximumf>, %1262, %cst_607 [1] : vector<8x8xf32> to vector<8xf32>
    %1264 = vector.shape_cast %1263 : vector<8xf32> to vector<8x1xf32>
    %1265 = vector.broadcast %1264 : vector<8x1xf32> to vector<8x8xf32>
    %1266 = arith.cmpf oeq, %1262, %1265 : vector<8x8xf32>
    %cst_608 = arith.constant 8.000000e+00 : f32
    %1267 = vector.broadcast %cst_608 : f32 to vector<8x8xf32>
    %1268 = arith.select %1266, %1198, %1267 : vector<8x8xi1>, vector<8x8xf32>
    %cst_609 = arith.constant dense<0x7F800000> : vector<8xf32>
    %1269 = vector.multi_reduction <minimumf>, %1268, %cst_609 [1] : vector<8x8xf32> to vector<8xf32>
    %1270 = vector.shape_cast %1269 : vector<8xf32> to vector<8x1xf32>
    %cst_610 = arith.constant 0.000000e+00 : f32
    %1271 = vector.shape_cast %1205 : vector<1x8xi1> to vector<1x8xi1>
    %1272 = vector.broadcast %1271 : vector<1x8xi1> to vector<8x8xi1>
    %1273 = vector.shape_cast %1264 : vector<8x1xf32> to vector<8x1xf32>
    %1274 = vector.broadcast %1273 : vector<8x1xf32> to vector<8x8xf32>
    %1275 = vector.broadcast %cst_610 : f32 to vector<8x8xf32>
    %1276 = arith.select %1272, %1274, %1275 : vector<8x8xi1>, vector<8x8xf32>
    %1277 = arith.addf %1255, %1276 : vector<8x8xf32>
    %1278 = vector.shape_cast %1205 : vector<1x8xi1> to vector<1x8xi1>
    %1279 = vector.broadcast %1278 : vector<1x8xi1> to vector<8x8xi1>
    %1280 = vector.shape_cast %1270 : vector<8x1xf32> to vector<8x1xf32>
    %1281 = vector.broadcast %1280 : vector<8x1xf32> to vector<8x8xf32>
    %1282 = arith.select %1279, %1281, %1260 : vector<8x8xi1>, vector<8x8xf32>
    %1283 = vector.broadcast %1195 : vector<1x8xf32> to vector<8x8xf32>
    %1284 = arith.addf %1210, %1283 : vector<8x8xf32>
    %cst_611 = arith.constant dense<0xFF800000> : vector<8xf32>
    %1285 = vector.multi_reduction <maximumf>, %1284, %cst_611 [1] : vector<8x8xf32> to vector<8xf32>
    %1286 = vector.shape_cast %1285 : vector<8xf32> to vector<8x1xf32>
    %1287 = vector.broadcast %1286 : vector<8x1xf32> to vector<8x8xf32>
    %1288 = arith.cmpf oeq, %1284, %1287 : vector<8x8xf32>
    %cst_612 = arith.constant 8.000000e+00 : f32
    %1289 = vector.broadcast %cst_612 : f32 to vector<8x8xf32>
    %1290 = arith.select %1288, %1198, %1289 : vector<8x8xi1>, vector<8x8xf32>
    %cst_613 = arith.constant dense<0x7F800000> : vector<8xf32>
    %1291 = vector.multi_reduction <minimumf>, %1290, %cst_613 [1] : vector<8x8xf32> to vector<8xf32>
    %1292 = vector.shape_cast %1291 : vector<8xf32> to vector<8x1xf32>
    %cst_614 = arith.constant 0.000000e+00 : f32
    %1293 = vector.shape_cast %1207 : vector<1x8xi1> to vector<1x8xi1>
    %1294 = vector.broadcast %1293 : vector<1x8xi1> to vector<8x8xi1>
    %1295 = vector.shape_cast %1286 : vector<8x1xf32> to vector<8x1xf32>
    %1296 = vector.broadcast %1295 : vector<8x1xf32> to vector<8x8xf32>
    %1297 = vector.broadcast %cst_614 : f32 to vector<8x8xf32>
    %1298 = arith.select %1294, %1296, %1297 : vector<8x8xi1>, vector<8x8xf32>
    %1299 = arith.addf %1277, %1298 : vector<8x8xf32>
    %1300 = vector.shape_cast %1207 : vector<1x8xi1> to vector<1x8xi1>
    %1301 = vector.broadcast %1300 : vector<1x8xi1> to vector<8x8xi1>
    %1302 = vector.shape_cast %1292 : vector<8x1xf32> to vector<8x1xf32>
    %1303 = vector.broadcast %1302 : vector<8x1xf32> to vector<8x8xf32>
    %1304 = arith.select %1301, %1303, %1282 : vector<8x8xi1>, vector<8x8xf32>
    %1305 = vector.broadcast %1196 : vector<1x8xf32> to vector<8x8xf32>
    %1306 = arith.addf %1210, %1305 : vector<8x8xf32>
    %cst_615 = arith.constant dense<0xFF800000> : vector<8xf32>
    %1307 = vector.multi_reduction <maximumf>, %1306, %cst_615 [1] : vector<8x8xf32> to vector<8xf32>
    %1308 = vector.shape_cast %1307 : vector<8xf32> to vector<8x1xf32>
    %1309 = vector.broadcast %1308 : vector<8x1xf32> to vector<8x8xf32>
    %1310 = arith.cmpf oeq, %1306, %1309 : vector<8x8xf32>
    %cst_616 = arith.constant 8.000000e+00 : f32
    %1311 = vector.broadcast %cst_616 : f32 to vector<8x8xf32>
    %1312 = arith.select %1310, %1198, %1311 : vector<8x8xi1>, vector<8x8xf32>
    %cst_617 = arith.constant dense<0x7F800000> : vector<8xf32>
    %1313 = vector.multi_reduction <minimumf>, %1312, %cst_617 [1] : vector<8x8xf32> to vector<8xf32>
    %1314 = vector.shape_cast %1313 : vector<8xf32> to vector<8x1xf32>
    %cst_618 = arith.constant 0.000000e+00 : f32
    %1315 = vector.shape_cast %1209 : vector<1x8xi1> to vector<1x8xi1>
    %1316 = vector.broadcast %1315 : vector<1x8xi1> to vector<8x8xi1>
    %1317 = vector.shape_cast %1308 : vector<8x1xf32> to vector<8x1xf32>
    %1318 = vector.broadcast %1317 : vector<8x1xf32> to vector<8x8xf32>
    %1319 = vector.broadcast %cst_618 : f32 to vector<8x8xf32>
    %1320 = arith.select %1316, %1318, %1319 : vector<8x8xi1>, vector<8x8xf32>
    %1321 = arith.addf %1299, %1320 : vector<8x8xf32>
    %1322 = vector.shape_cast %1209 : vector<1x8xi1> to vector<1x8xi1>
    %1323 = vector.broadcast %1322 : vector<1x8xi1> to vector<8x8xi1>
    %1324 = vector.shape_cast %1314 : vector<8x1xf32> to vector<8x1xf32>
    %1325 = vector.broadcast %1324 : vector<8x1xf32> to vector<8x8xf32>
    %1326 = arith.select %1323, %1325, %1304 : vector<8x8xi1>, vector<8x8xf32>
    %c8_619 = arith.constant 8 : index
    %c0_620 = arith.constant 0 : index
    %1327 = vector.load %arg16[%c8_619, %c0_620] : memref<64x32xf32, #tpu.memory_space<vmem>>, vector<8x32xf32>
    %cst_621 = arith.constant dense<0.000000e+00> : vector<8x128xf32>
    %1328 = tpu.matmul %1327, %1187, %cst_621 {dimension_numbers = #tpu.dot_dimension_numbers<[1], [0], [0], [1], [0, 0, 1, 1], [], []>} : vector<8x32xf32>, vector<32x128xf32>, vector<8x128xf32> -> vector<8x128xf32>
    %1329 = arith.addf %1328, %1190 : vector<8x128xf32>
    %c8_622 = arith.constant 8 : index
    %c0_623 = arith.constant 0 : index
    %1330 = vector.load %arg12[%c8_622, %c0_623] : memref<64x128xf32, #tpu.memory_space<vmem>>, vector<8x128xf32>
    tpu.vector_store %arg12[%c8_622, %c0_623], %1329 {strides = array<i32>} : memref<64x128xf32, #tpu.memory_space<vmem>>, vector<8x128xf32>,
    %1331 = vector.extract_strided_slice %1329 {offsets = [0, 0], sizes = [8, 8], strides = [1, 1]} : vector<8x128xf32> to vector<8x8xf32>
    %cst_624 = arith.constant 0.000000e+00 : f32
    %1332 = vector.broadcast %cst_624 : f32 to vector<8x8xf32>
    %1333 = vector.broadcast %1192 : vector<1x8xf32> to vector<8x8xf32>
    %1334 = arith.addf %1321, %1333 : vector<8x8xf32>
    %cst_625 = arith.constant dense<0xFF800000> : vector<8xf32>
    %1335 = vector.multi_reduction <maximumf>, %1334, %cst_625 [1] : vector<8x8xf32> to vector<8xf32>
    %1336 = vector.shape_cast %1335 : vector<8xf32> to vector<8x1xf32>
    %1337 = vector.broadcast %1336 : vector<8x1xf32> to vector<8x8xf32>
    %1338 = arith.cmpf oeq, %1334, %1337 : vector<8x8xf32>
    %cst_626 = arith.constant 8.000000e+00 : f32
    %1339 = vector.broadcast %cst_626 : f32 to vector<8x8xf32>
    %1340 = arith.select %1338, %1198, %1339 : vector<8x8xi1>, vector<8x8xf32>
    %cst_627 = arith.constant dense<0x7F800000> : vector<8xf32>
    %1341 = vector.multi_reduction <minimumf>, %1340, %cst_627 [1] : vector<8x8xf32> to vector<8xf32>
    %1342 = vector.shape_cast %1341 : vector<8xf32> to vector<8x1xf32>
    %cst_628 = arith.constant 0.000000e+00 : f32
    %1343 = vector.shape_cast %1201 : vector<1x8xi1> to vector<1x8xi1>
    %1344 = vector.broadcast %1343 : vector<1x8xi1> to vector<8x8xi1>
    %1345 = vector.shape_cast %1336 : vector<8x1xf32> to vector<8x1xf32>
    %1346 = vector.broadcast %1345 : vector<8x1xf32> to vector<8x8xf32>
    %1347 = vector.broadcast %cst_628 : f32 to vector<8x8xf32>
    %1348 = arith.select %1344, %1346, %1347 : vector<8x8xi1>, vector<8x8xf32>
    %1349 = arith.addf %1331, %1348 : vector<8x8xf32>
    %1350 = vector.shape_cast %1201 : vector<1x8xi1> to vector<1x8xi1>
    %1351 = vector.broadcast %1350 : vector<1x8xi1> to vector<8x8xi1>
    %1352 = vector.shape_cast %1342 : vector<8x1xf32> to vector<8x1xf32>
    %1353 = vector.broadcast %1352 : vector<8x1xf32> to vector<8x8xf32>
    %1354 = arith.select %1351, %1353, %1332 : vector<8x8xi1>, vector<8x8xf32>
    %1355 = vector.broadcast %1193 : vector<1x8xf32> to vector<8x8xf32>
    %1356 = arith.addf %1321, %1355 : vector<8x8xf32>
    %cst_629 = arith.constant dense<0xFF800000> : vector<8xf32>
    %1357 = vector.multi_reduction <maximumf>, %1356, %cst_629 [1] : vector<8x8xf32> to vector<8xf32>
    %1358 = vector.shape_cast %1357 : vector<8xf32> to vector<8x1xf32>
    %1359 = vector.broadcast %1358 : vector<8x1xf32> to vector<8x8xf32>
    %1360 = arith.cmpf oeq, %1356, %1359 : vector<8x8xf32>
    %cst_630 = arith.constant 8.000000e+00 : f32
    %1361 = vector.broadcast %cst_630 : f32 to vector<8x8xf32>
    %1362 = arith.select %1360, %1198, %1361 : vector<8x8xi1>, vector<8x8xf32>
    %cst_631 = arith.constant dense<0x7F800000> : vector<8xf32>
    %1363 = vector.multi_reduction <minimumf>, %1362, %cst_631 [1] : vector<8x8xf32> to vector<8xf32>
    %1364 = vector.shape_cast %1363 : vector<8xf32> to vector<8x1xf32>
    %cst_632 = arith.constant 0.000000e+00 : f32
    %1365 = vector.shape_cast %1203 : vector<1x8xi1> to vector<1x8xi1>
    %1366 = vector.broadcast %1365 : vector<1x8xi1> to vector<8x8xi1>
    %1367 = vector.shape_cast %1358 : vector<8x1xf32> to vector<8x1xf32>
    %1368 = vector.broadcast %1367 : vector<8x1xf32> to vector<8x8xf32>
    %1369 = vector.broadcast %cst_632 : f32 to vector<8x8xf32>
    %1370 = arith.select %1366, %1368, %1369 : vector<8x8xi1>, vector<8x8xf32>
    %1371 = arith.addf %1349, %1370 : vector<8x8xf32>
    %1372 = vector.shape_cast %1203 : vector<1x8xi1> to vector<1x8xi1>
    %1373 = vector.broadcast %1372 : vector<1x8xi1> to vector<8x8xi1>
    %1374 = vector.shape_cast %1364 : vector<8x1xf32> to vector<8x1xf32>
    %1375 = vector.broadcast %1374 : vector<8x1xf32> to vector<8x8xf32>
    %1376 = arith.select %1373, %1375, %1354 : vector<8x8xi1>, vector<8x8xf32>
    %1377 = vector.broadcast %1194 : vector<1x8xf32> to vector<8x8xf32>
    %1378 = arith.addf %1321, %1377 : vector<8x8xf32>
    %cst_633 = arith.constant dense<0xFF800000> : vector<8xf32>
    %1379 = vector.multi_reduction <maximumf>, %1378, %cst_633 [1] : vector<8x8xf32> to vector<8xf32>
    %1380 = vector.shape_cast %1379 : vector<8xf32> to vector<8x1xf32>
    %1381 = vector.broadcast %1380 : vector<8x1xf32> to vector<8x8xf32>
    %1382 = arith.cmpf oeq, %1378, %1381 : vector<8x8xf32>
    %cst_634 = arith.constant 8.000000e+00 : f32
    %1383 = vector.broadcast %cst_634 : f32 to vector<8x8xf32>
    %1384 = arith.select %1382, %1198, %1383 : vector<8x8xi1>, vector<8x8xf32>
    %cst_635 = arith.constant dense<0x7F800000> : vector<8xf32>
    %1385 = vector.multi_reduction <minimumf>, %1384, %cst_635 [1] : vector<8x8xf32> to vector<8xf32>
    %1386 = vector.shape_cast %1385 : vector<8xf32> to vector<8x1xf32>
    %cst_636 = arith.constant 0.000000e+00 : f32
    %1387 = vector.shape_cast %1205 : vector<1x8xi1> to vector<1x8xi1>
    %1388 = vector.broadcast %1387 : vector<1x8xi1> to vector<8x8xi1>
    %1389 = vector.shape_cast %1380 : vector<8x1xf32> to vector<8x1xf32>
    %1390 = vector.broadcast %1389 : vector<8x1xf32> to vector<8x8xf32>
    %1391 = vector.broadcast %cst_636 : f32 to vector<8x8xf32>
    %1392 = arith.select %1388, %1390, %1391 : vector<8x8xi1>, vector<8x8xf32>
    %1393 = arith.addf %1371, %1392 : vector<8x8xf32>
    %1394 = vector.shape_cast %1205 : vector<1x8xi1> to vector<1x8xi1>
    %1395 = vector.broadcast %1394 : vector<1x8xi1> to vector<8x8xi1>
    %1396 = vector.shape_cast %1386 : vector<8x1xf32> to vector<8x1xf32>
    %1397 = vector.broadcast %1396 : vector<8x1xf32> to vector<8x8xf32>
    %1398 = arith.select %1395, %1397, %1376 : vector<8x8xi1>, vector<8x8xf32>
    %1399 = vector.broadcast %1195 : vector<1x8xf32> to vector<8x8xf32>
    %1400 = arith.addf %1321, %1399 : vector<8x8xf32>
    %cst_637 = arith.constant dense<0xFF800000> : vector<8xf32>
    %1401 = vector.multi_reduction <maximumf>, %1400, %cst_637 [1] : vector<8x8xf32> to vector<8xf32>
    %1402 = vector.shape_cast %1401 : vector<8xf32> to vector<8x1xf32>
    %1403 = vector.broadcast %1402 : vector<8x1xf32> to vector<8x8xf32>
    %1404 = arith.cmpf oeq, %1400, %1403 : vector<8x8xf32>
    %cst_638 = arith.constant 8.000000e+00 : f32
    %1405 = vector.broadcast %cst_638 : f32 to vector<8x8xf32>
    %1406 = arith.select %1404, %1198, %1405 : vector<8x8xi1>, vector<8x8xf32>
    %cst_639 = arith.constant dense<0x7F800000> : vector<8xf32>
    %1407 = vector.multi_reduction <minimumf>, %1406, %cst_639 [1] : vector<8x8xf32> to vector<8xf32>
    %1408 = vector.shape_cast %1407 : vector<8xf32> to vector<8x1xf32>
    %cst_640 = arith.constant 0.000000e+00 : f32
    %1409 = vector.shape_cast %1207 : vector<1x8xi1> to vector<1x8xi1>
    %1410 = vector.broadcast %1409 : vector<1x8xi1> to vector<8x8xi1>
    %1411 = vector.shape_cast %1402 : vector<8x1xf32> to vector<8x1xf32>
    %1412 = vector.broadcast %1411 : vector<8x1xf32> to vector<8x8xf32>
    %1413 = vector.broadcast %cst_640 : f32 to vector<8x8xf32>
    %1414 = arith.select %1410, %1412, %1413 : vector<8x8xi1>, vector<8x8xf32>
    %1415 = arith.addf %1393, %1414 : vector<8x8xf32>
    %1416 = vector.shape_cast %1207 : vector<1x8xi1> to vector<1x8xi1>
    %1417 = vector.broadcast %1416 : vector<1x8xi1> to vector<8x8xi1>
    %1418 = vector.shape_cast %1408 : vector<8x1xf32> to vector<8x1xf32>
    %1419 = vector.broadcast %1418 : vector<8x1xf32> to vector<8x8xf32>
    %1420 = arith.select %1417, %1419, %1398 : vector<8x8xi1>, vector<8x8xf32>
    %1421 = vector.broadcast %1196 : vector<1x8xf32> to vector<8x8xf32>
    %1422 = arith.addf %1321, %1421 : vector<8x8xf32>
    %cst_641 = arith.constant dense<0xFF800000> : vector<8xf32>
    %1423 = vector.multi_reduction <maximumf>, %1422, %cst_641 [1] : vector<8x8xf32> to vector<8xf32>
    %1424 = vector.shape_cast %1423 : vector<8xf32> to vector<8x1xf32>
    %1425 = vector.broadcast %1424 : vector<8x1xf32> to vector<8x8xf32>
    %1426 = arith.cmpf oeq, %1422, %1425 : vector<8x8xf32>
    %cst_642 = arith.constant 8.000000e+00 : f32
    %1427 = vector.broadcast %cst_642 : f32 to vector<8x8xf32>
    %1428 = arith.select %1426, %1198, %1427 : vector<8x8xi1>, vector<8x8xf32>
    %cst_643 = arith.constant dense<0x7F800000> : vector<8xf32>
    %1429 = vector.multi_reduction <minimumf>, %1428, %cst_643 [1] : vector<8x8xf32> to vector<8xf32>
    %1430 = vector.shape_cast %1429 : vector<8xf32> to vector<8x1xf32>
    %cst_644 = arith.constant 0.000000e+00 : f32
    %1431 = vector.shape_cast %1209 : vector<1x8xi1> to vector<1x8xi1>
    %1432 = vector.broadcast %1431 : vector<1x8xi1> to vector<8x8xi1>
    %1433 = vector.shape_cast %1424 : vector<8x1xf32> to vector<8x1xf32>
    %1434 = vector.broadcast %1433 : vector<8x1xf32> to vector<8x8xf32>
    %1435 = vector.broadcast %cst_644 : f32 to vector<8x8xf32>
    %1436 = arith.select %1432, %1434, %1435 : vector<8x8xi1>, vector<8x8xf32>
    %1437 = arith.addf %1415, %1436 : vector<8x8xf32>
    %1438 = vector.shape_cast %1209 : vector<1x8xi1> to vector<1x8xi1>
    %1439 = vector.broadcast %1438 : vector<1x8xi1> to vector<8x8xi1>
    %1440 = vector.shape_cast %1430 : vector<8x1xf32> to vector<8x1xf32>
    %1441 = vector.broadcast %1440 : vector<8x1xf32> to vector<8x8xf32>
    %1442 = arith.select %1439, %1441, %1420 : vector<8x8xi1>, vector<8x8xf32>
    %c16_645 = arith.constant 16 : index
    %c0_646 = arith.constant 0 : index
    %1443 = vector.load %arg16[%c16_645, %c0_646] : memref<64x32xf32, #tpu.memory_space<vmem>>, vector<8x32xf32>
    %cst_647 = arith.constant dense<0.000000e+00> : vector<8x128xf32>
    %1444 = tpu.matmul %1443, %1187, %cst_647 {dimension_numbers = #tpu.dot_dimension_numbers<[1], [0], [0], [1], [0, 0, 1, 1], [], []>} : vector<8x32xf32>, vector<32x128xf32>, vector<8x128xf32> -> vector<8x128xf32>
    %1445 = arith.addf %1444, %1190 : vector<8x128xf32>
    %c16_648 = arith.constant 16 : index
    %c0_649 = arith.constant 0 : index
    %1446 = vector.load %arg12[%c16_648, %c0_649] : memref<64x128xf32, #tpu.memory_space<vmem>>, vector<8x128xf32>
    tpu.vector_store %arg12[%c16_648, %c0_649], %1445 {strides = array<i32>} : memref<64x128xf32, #tpu.memory_space<vmem>>, vector<8x128xf32>,
    %1447 = vector.extract_strided_slice %1445 {offsets = [0, 0], sizes = [8, 8], strides = [1, 1]} : vector<8x128xf32> to vector<8x8xf32>
    %cst_650 = arith.constant 0.000000e+00 : f32
    %1448 = vector.broadcast %cst_650 : f32 to vector<8x8xf32>
    %1449 = vector.broadcast %1192 : vector<1x8xf32> to vector<8x8xf32>
    %1450 = arith.addf %1437, %1449 : vector<8x8xf32>
    %cst_651 = arith.constant dense<0xFF800000> : vector<8xf32>
    %1451 = vector.multi_reduction <maximumf>, %1450, %cst_651 [1] : vector<8x8xf32> to vector<8xf32>
    %1452 = vector.shape_cast %1451 : vector<8xf32> to vector<8x1xf32>
    %1453 = vector.broadcast %1452 : vector<8x1xf32> to vector<8x8xf32>
    %1454 = arith.cmpf oeq, %1450, %1453 : vector<8x8xf32>
    %cst_652 = arith.constant 8.000000e+00 : f32
    %1455 = vector.broadcast %cst_652 : f32 to vector<8x8xf32>
    %1456 = arith.select %1454, %1198, %1455 : vector<8x8xi1>, vector<8x8xf32>
    %cst_653 = arith.constant dense<0x7F800000> : vector<8xf32>
    %1457 = vector.multi_reduction <minimumf>, %1456, %cst_653 [1] : vector<8x8xf32> to vector<8xf32>
    %1458 = vector.shape_cast %1457 : vector<8xf32> to vector<8x1xf32>
    %cst_654 = arith.constant 0.000000e+00 : f32
    %1459 = vector.shape_cast %1201 : vector<1x8xi1> to vector<1x8xi1>
    %1460 = vector.broadcast %1459 : vector<1x8xi1> to vector<8x8xi1>
    %1461 = vector.shape_cast %1452 : vector<8x1xf32> to vector<8x1xf32>
    %1462 = vector.broadcast %1461 : vector<8x1xf32> to vector<8x8xf32>
    %1463 = vector.broadcast %cst_654 : f32 to vector<8x8xf32>
    %1464 = arith.select %1460, %1462, %1463 : vector<8x8xi1>, vector<8x8xf32>
    %1465 = arith.addf %1447, %1464 : vector<8x8xf32>
    %1466 = vector.shape_cast %1201 : vector<1x8xi1> to vector<1x8xi1>
    %1467 = vector.broadcast %1466 : vector<1x8xi1> to vector<8x8xi1>
    %1468 = vector.shape_cast %1458 : vector<8x1xf32> to vector<8x1xf32>
    %1469 = vector.broadcast %1468 : vector<8x1xf32> to vector<8x8xf32>
    %1470 = arith.select %1467, %1469, %1448 : vector<8x8xi1>, vector<8x8xf32>
    %1471 = vector.broadcast %1193 : vector<1x8xf32> to vector<8x8xf32>
    %1472 = arith.addf %1437, %1471 : vector<8x8xf32>
    %cst_655 = arith.constant dense<0xFF800000> : vector<8xf32>
    %1473 = vector.multi_reduction <maximumf>, %1472, %cst_655 [1] : vector<8x8xf32> to vector<8xf32>
    %1474 = vector.shape_cast %1473 : vector<8xf32> to vector<8x1xf32>
    %1475 = vector.broadcast %1474 : vector<8x1xf32> to vector<8x8xf32>
    %1476 = arith.cmpf oeq, %1472, %1475 : vector<8x8xf32>
    %cst_656 = arith.constant 8.000000e+00 : f32
    %1477 = vector.broadcast %cst_656 : f32 to vector<8x8xf32>
    %1478 = arith.select %1476, %1198, %1477 : vector<8x8xi1>, vector<8x8xf32>
    %cst_657 = arith.constant dense<0x7F800000> : vector<8xf32>
    %1479 = vector.multi_reduction <minimumf>, %1478, %cst_657 [1] : vector<8x8xf32> to vector<8xf32>
    %1480 = vector.shape_cast %1479 : vector<8xf32> to vector<8x1xf32>
    %cst_658 = arith.constant 0.000000e+00 : f32
    %1481 = vector.shape_cast %1203 : vector<1x8xi1> to vector<1x8xi1>
    %1482 = vector.broadcast %1481 : vector<1x8xi1> to vector<8x8xi1>
    %1483 = vector.shape_cast %1474 : vector<8x1xf32> to vector<8x1xf32>
    %1484 = vector.broadcast %1483 : vector<8x1xf32> to vector<8x8xf32>
    %1485 = vector.broadcast %cst_658 : f32 to vector<8x8xf32>
    %1486 = arith.select %1482, %1484, %1485 : vector<8x8xi1>, vector<8x8xf32>
    %1487 = arith.addf %1465, %1486 : vector<8x8xf32>
    %1488 = vector.shape_cast %1203 : vector<1x8xi1> to vector<1x8xi1>
    %1489 = vector.broadcast %1488 : vector<1x8xi1> to vector<8x8xi1>
    %1490 = vector.shape_cast %1480 : vector<8x1xf32> to vector<8x1xf32>
    %1491 = vector.broadcast %1490 : vector<8x1xf32> to vector<8x8xf32>
    %1492 = arith.select %1489, %1491, %1470 : vector<8x8xi1>, vector<8x8xf32>
    %1493 = vector.broadcast %1194 : vector<1x8xf32> to vector<8x8xf32>
    %1494 = arith.addf %1437, %1493 : vector<8x8xf32>
    %cst_659 = arith.constant dense<0xFF800000> : vector<8xf32>
    %1495 = vector.multi_reduction <maximumf>, %1494, %cst_659 [1] : vector<8x8xf32> to vector<8xf32>
    %1496 = vector.shape_cast %1495 : vector<8xf32> to vector<8x1xf32>
    %1497 = vector.broadcast %1496 : vector<8x1xf32> to vector<8x8xf32>
    %1498 = arith.cmpf oeq, %1494, %1497 : vector<8x8xf32>
    %cst_660 = arith.constant 8.000000e+00 : f32
    %1499 = vector.broadcast %cst_660 : f32 to vector<8x8xf32>
    %1500 = arith.select %1498, %1198, %1499 : vector<8x8xi1>, vector<8x8xf32>
    %cst_661 = arith.constant dense<0x7F800000> : vector<8xf32>
    %1501 = vector.multi_reduction <minimumf>, %1500, %cst_661 [1] : vector<8x8xf32> to vector<8xf32>
    %1502 = vector.shape_cast %1501 : vector<8xf32> to vector<8x1xf32>
    %cst_662 = arith.constant 0.000000e+00 : f32
    %1503 = vector.shape_cast %1205 : vector<1x8xi1> to vector<1x8xi1>
    %1504 = vector.broadcast %1503 : vector<1x8xi1> to vector<8x8xi1>
    %1505 = vector.shape_cast %1496 : vector<8x1xf32> to vector<8x1xf32>
    %1506 = vector.broadcast %1505 : vector<8x1xf32> to vector<8x8xf32>
    %1507 = vector.broadcast %cst_662 : f32 to vector<8x8xf32>
    %1508 = arith.select %1504, %1506, %1507 : vector<8x8xi1>, vector<8x8xf32>
    %1509 = arith.addf %1487, %1508 : vector<8x8xf32>
    %1510 = vector.shape_cast %1205 : vector<1x8xi1> to vector<1x8xi1>
    %1511 = vector.broadcast %1510 : vector<1x8xi1> to vector<8x8xi1>
    %1512 = vector.shape_cast %1502 : vector<8x1xf32> to vector<8x1xf32>
    %1513 = vector.broadcast %1512 : vector<8x1xf32> to vector<8x8xf32>
    %1514 = arith.select %1511, %1513, %1492 : vector<8x8xi1>, vector<8x8xf32>
    %1515 = vector.broadcast %1195 : vector<1x8xf32> to vector<8x8xf32>
    %1516 = arith.addf %1437, %1515 : vector<8x8xf32>
    %cst_663 = arith.constant dense<0xFF800000> : vector<8xf32>
    %1517 = vector.multi_reduction <maximumf>, %1516, %cst_663 [1] : vector<8x8xf32> to vector<8xf32>
    %1518 = vector.shape_cast %1517 : vector<8xf32> to vector<8x1xf32>
    %1519 = vector.broadcast %1518 : vector<8x1xf32> to vector<8x8xf32>
    %1520 = arith.cmpf oeq, %1516, %1519 : vector<8x8xf32>
    %cst_664 = arith.constant 8.000000e+00 : f32
    %1521 = vector.broadcast %cst_664 : f32 to vector<8x8xf32>
    %1522 = arith.select %1520, %1198, %1521 : vector<8x8xi1>, vector<8x8xf32>
    %cst_665 = arith.constant dense<0x7F800000> : vector<8xf32>
    %1523 = vector.multi_reduction <minimumf>, %1522, %cst_665 [1] : vector<8x8xf32> to vector<8xf32>
    %1524 = vector.shape_cast %1523 : vector<8xf32> to vector<8x1xf32>
    %cst_666 = arith.constant 0.000000e+00 : f32
    %1525 = vector.shape_cast %1207 : vector<1x8xi1> to vector<1x8xi1>
    %1526 = vector.broadcast %1525 : vector<1x8xi1> to vector<8x8xi1>
    %1527 = vector.shape_cast %1518 : vector<8x1xf32> to vector<8x1xf32>
    %1528 = vector.broadcast %1527 : vector<8x1xf32> to vector<8x8xf32>
    %1529 = vector.broadcast %cst_666 : f32 to vector<8x8xf32>
    %1530 = arith.select %1526, %1528, %1529 : vector<8x8xi1>, vector<8x8xf32>
    %1531 = arith.addf %1509, %1530 : vector<8x8xf32>
    %1532 = vector.shape_cast %1207 : vector<1x8xi1> to vector<1x8xi1>
    %1533 = vector.broadcast %1532 : vector<1x8xi1> to vector<8x8xi1>
    %1534 = vector.shape_cast %1524 : vector<8x1xf32> to vector<8x1xf32>
    %1535 = vector.broadcast %1534 : vector<8x1xf32> to vector<8x8xf32>
    %1536 = arith.select %1533, %1535, %1514 : vector<8x8xi1>, vector<8x8xf32>
    %1537 = vector.broadcast %1196 : vector<1x8xf32> to vector<8x8xf32>
    %1538 = arith.addf %1437, %1537 : vector<8x8xf32>
    %cst_667 = arith.constant dense<0xFF800000> : vector<8xf32>
    %1539 = vector.multi_reduction <maximumf>, %1538, %cst_667 [1] : vector<8x8xf32> to vector<8xf32>
    %1540 = vector.shape_cast %1539 : vector<8xf32> to vector<8x1xf32>
    %1541 = vector.broadcast %1540 : vector<8x1xf32> to vector<8x8xf32>
    %1542 = arith.cmpf oeq, %1538, %1541 : vector<8x8xf32>
    %cst_668 = arith.constant 8.000000e+00 : f32
    %1543 = vector.broadcast %cst_668 : f32 to vector<8x8xf32>
    %1544 = arith.select %1542, %1198, %1543 : vector<8x8xi1>, vector<8x8xf32>
    %cst_669 = arith.constant dense<0x7F800000> : vector<8xf32>
    %1545 = vector.multi_reduction <minimumf>, %1544, %cst_669 [1] : vector<8x8xf32> to vector<8xf32>
    %1546 = vector.shape_cast %1545 : vector<8xf32> to vector<8x1xf32>
    %cst_670 = arith.constant 0.000000e+00 : f32
    %1547 = vector.shape_cast %1209 : vector<1x8xi1> to vector<1x8xi1>
    %1548 = vector.broadcast %1547 : vector<1x8xi1> to vector<8x8xi1>
    %1549 = vector.shape_cast %1540 : vector<8x1xf32> to vector<8x1xf32>
    %1550 = vector.broadcast %1549 : vector<8x1xf32> to vector<8x8xf32>
    %1551 = vector.broadcast %cst_670 : f32 to vector<8x8xf32>
    %1552 = arith.select %1548, %1550, %1551 : vector<8x8xi1>, vector<8x8xf32>
    %1553 = arith.addf %1531, %1552 : vector<8x8xf32>
    %1554 = vector.shape_cast %1209 : vector<1x8xi1> to vector<1x8xi1>
    %1555 = vector.broadcast %1554 : vector<1x8xi1> to vector<8x8xi1>
    %1556 = vector.shape_cast %1546 : vector<8x1xf32> to vector<8x1xf32>
    %1557 = vector.broadcast %1556 : vector<8x1xf32> to vector<8x8xf32>
    %1558 = arith.select %1555, %1557, %1536 : vector<8x8xi1>, vector<8x8xf32>
    %c24_671 = arith.constant 24 : index
    %c0_672 = arith.constant 0 : index
    %1559 = vector.load %arg16[%c24_671, %c0_672] : memref<64x32xf32, #tpu.memory_space<vmem>>, vector<8x32xf32>
    %cst_673 = arith.constant dense<0.000000e+00> : vector<8x128xf32>
    %1560 = tpu.matmul %1559, %1187, %cst_673 {dimension_numbers = #tpu.dot_dimension_numbers<[1], [0], [0], [1], [0, 0, 1, 1], [], []>} : vector<8x32xf32>, vector<32x128xf32>, vector<8x128xf32> -> vector<8x128xf32>
    %1561 = arith.addf %1560, %1190 : vector<8x128xf32>
    %c24_674 = arith.constant 24 : index
    %c0_675 = arith.constant 0 : index
    %1562 = vector.load %arg12[%c24_674, %c0_675] : memref<64x128xf32, #tpu.memory_space<vmem>>, vector<8x128xf32>
    tpu.vector_store %arg12[%c24_674, %c0_675], %1561 {strides = array<i32>} : memref<64x128xf32, #tpu.memory_space<vmem>>, vector<8x128xf32>,
    %1563 = vector.extract_strided_slice %1561 {offsets = [0, 0], sizes = [8, 8], strides = [1, 1]} : vector<8x128xf32> to vector<8x8xf32>
    %cst_676 = arith.constant 0.000000e+00 : f32
    %1564 = vector.broadcast %cst_676 : f32 to vector<8x8xf32>
    %1565 = vector.broadcast %1192 : vector<1x8xf32> to vector<8x8xf32>
    %1566 = arith.addf %1553, %1565 : vector<8x8xf32>
    %cst_677 = arith.constant dense<0xFF800000> : vector<8xf32>
    %1567 = vector.multi_reduction <maximumf>, %1566, %cst_677 [1] : vector<8x8xf32> to vector<8xf32>
    %1568 = vector.shape_cast %1567 : vector<8xf32> to vector<8x1xf32>
    %1569 = vector.broadcast %1568 : vector<8x1xf32> to vector<8x8xf32>
    %1570 = arith.cmpf oeq, %1566, %1569 : vector<8x8xf32>
    %cst_678 = arith.constant 8.000000e+00 : f32
    %1571 = vector.broadcast %cst_678 : f32 to vector<8x8xf32>
    %1572 = arith.select %1570, %1198, %1571 : vector<8x8xi1>, vector<8x8xf32>
    %cst_679 = arith.constant dense<0x7F800000> : vector<8xf32>
    %1573 = vector.multi_reduction <minimumf>, %1572, %cst_679 [1] : vector<8x8xf32> to vector<8xf32>
    %1574 = vector.shape_cast %1573 : vector<8xf32> to vector<8x1xf32>
    %cst_680 = arith.constant 0.000000e+00 : f32
    %1575 = vector.shape_cast %1201 : vector<1x8xi1> to vector<1x8xi1>
    %1576 = vector.broadcast %1575 : vector<1x8xi1> to vector<8x8xi1>
    %1577 = vector.shape_cast %1568 : vector<8x1xf32> to vector<8x1xf32>
    %1578 = vector.broadcast %1577 : vector<8x1xf32> to vector<8x8xf32>
    %1579 = vector.broadcast %cst_680 : f32 to vector<8x8xf32>
    %1580 = arith.select %1576, %1578, %1579 : vector<8x8xi1>, vector<8x8xf32>
    %1581 = arith.addf %1563, %1580 : vector<8x8xf32>
    %1582 = vector.shape_cast %1201 : vector<1x8xi1> to vector<1x8xi1>
    %1583 = vector.broadcast %1582 : vector<1x8xi1> to vector<8x8xi1>
    %1584 = vector.shape_cast %1574 : vector<8x1xf32> to vector<8x1xf32>
    %1585 = vector.broadcast %1584 : vector<8x1xf32> to vector<8x8xf32>
    %1586 = arith.select %1583, %1585, %1564 : vector<8x8xi1>, vector<8x8xf32>
    %1587 = vector.broadcast %1193 : vector<1x8xf32> to vector<8x8xf32>
    %1588 = arith.addf %1553, %1587 : vector<8x8xf32>
    %cst_681 = arith.constant dense<0xFF800000> : vector<8xf32>
    %1589 = vector.multi_reduction <maximumf>, %1588, %cst_681 [1] : vector<8x8xf32> to vector<8xf32>
    %1590 = vector.shape_cast %1589 : vector<8xf32> to vector<8x1xf32>
    %1591 = vector.broadcast %1590 : vector<8x1xf32> to vector<8x8xf32>
    %1592 = arith.cmpf oeq, %1588, %1591 : vector<8x8xf32>
    %cst_682 = arith.constant 8.000000e+00 : f32
    %1593 = vector.broadcast %cst_682 : f32 to vector<8x8xf32>
    %1594 = arith.select %1592, %1198, %1593 : vector<8x8xi1>, vector<8x8xf32>
    %cst_683 = arith.constant dense<0x7F800000> : vector<8xf32>
    %1595 = vector.multi_reduction <minimumf>, %1594, %cst_683 [1] : vector<8x8xf32> to vector<8xf32>
    %1596 = vector.shape_cast %1595 : vector<8xf32> to vector<8x1xf32>
    %cst_684 = arith.constant 0.000000e+00 : f32
    %1597 = vector.shape_cast %1203 : vector<1x8xi1> to vector<1x8xi1>
    %1598 = vector.broadcast %1597 : vector<1x8xi1> to vector<8x8xi1>
    %1599 = vector.shape_cast %1590 : vector<8x1xf32> to vector<8x1xf32>
    %1600 = vector.broadcast %1599 : vector<8x1xf32> to vector<8x8xf32>
    %1601 = vector.broadcast %cst_684 : f32 to vector<8x8xf32>
    %1602 = arith.select %1598, %1600, %1601 : vector<8x8xi1>, vector<8x8xf32>
    %1603 = arith.addf %1581, %1602 : vector<8x8xf32>
    %1604 = vector.shape_cast %1203 : vector<1x8xi1> to vector<1x8xi1>
    %1605 = vector.broadcast %1604 : vector<1x8xi1> to vector<8x8xi1>
    %1606 = vector.shape_cast %1596 : vector<8x1xf32> to vector<8x1xf32>
    %1607 = vector.broadcast %1606 : vector<8x1xf32> to vector<8x8xf32>
    %1608 = arith.select %1605, %1607, %1586 : vector<8x8xi1>, vector<8x8xf32>
    %1609 = vector.broadcast %1194 : vector<1x8xf32> to vector<8x8xf32>
    %1610 = arith.addf %1553, %1609 : vector<8x8xf32>
    %cst_685 = arith.constant dense<0xFF800000> : vector<8xf32>
    %1611 = vector.multi_reduction <maximumf>, %1610, %cst_685 [1] : vector<8x8xf32> to vector<8xf32>
    %1612 = vector.shape_cast %1611 : vector<8xf32> to vector<8x1xf32>
    %1613 = vector.broadcast %1612 : vector<8x1xf32> to vector<8x8xf32>
    %1614 = arith.cmpf oeq, %1610, %1613 : vector<8x8xf32>
    %cst_686 = arith.constant 8.000000e+00 : f32
    %1615 = vector.broadcast %cst_686 : f32 to vector<8x8xf32>
    %1616 = arith.select %1614, %1198, %1615 : vector<8x8xi1>, vector<8x8xf32>
    %cst_687 = arith.constant dense<0x7F800000> : vector<8xf32>
    %1617 = vector.multi_reduction <minimumf>, %1616, %cst_687 [1] : vector<8x8xf32> to vector<8xf32>
    %1618 = vector.shape_cast %1617 : vector<8xf32> to vector<8x1xf32>
    %cst_688 = arith.constant 0.000000e+00 : f32
    %1619 = vector.shape_cast %1205 : vector<1x8xi1> to vector<1x8xi1>
    %1620 = vector.broadcast %1619 : vector<1x8xi1> to vector<8x8xi1>
    %1621 = vector.shape_cast %1612 : vector<8x1xf32> to vector<8x1xf32>
    %1622 = vector.broadcast %1621 : vector<8x1xf32> to vector<8x8xf32>
    %1623 = vector.broadcast %cst_688 : f32 to vector<8x8xf32>
    %1624 = arith.select %1620, %1622, %1623 : vector<8x8xi1>, vector<8x8xf32>
    %1625 = arith.addf %1603, %1624 : vector<8x8xf32>
    %1626 = vector.shape_cast %1205 : vector<1x8xi1> to vector<1x8xi1>
    %1627 = vector.broadcast %1626 : vector<1x8xi1> to vector<8x8xi1>
    %1628 = vector.shape_cast %1618 : vector<8x1xf32> to vector<8x1xf32>
    %1629 = vector.broadcast %1628 : vector<8x1xf32> to vector<8x8xf32>
    %1630 = arith.select %1627, %1629, %1608 : vector<8x8xi1>, vector<8x8xf32>
    %1631 = vector.broadcast %1195 : vector<1x8xf32> to vector<8x8xf32>
    %1632 = arith.addf %1553, %1631 : vector<8x8xf32>
    %cst_689 = arith.constant dense<0xFF800000> : vector<8xf32>
    %1633 = vector.multi_reduction <maximumf>, %1632, %cst_689 [1] : vector<8x8xf32> to vector<8xf32>
    %1634 = vector.shape_cast %1633 : vector<8xf32> to vector<8x1xf32>
    %1635 = vector.broadcast %1634 : vector<8x1xf32> to vector<8x8xf32>
    %1636 = arith.cmpf oeq, %1632, %1635 : vector<8x8xf32>
    %cst_690 = arith.constant 8.000000e+00 : f32
    %1637 = vector.broadcast %cst_690 : f32 to vector<8x8xf32>
    %1638 = arith.select %1636, %1198, %1637 : vector<8x8xi1>, vector<8x8xf32>
    %cst_691 = arith.constant dense<0x7F800000> : vector<8xf32>
    %1639 = vector.multi_reduction <minimumf>, %1638, %cst_691 [1] : vector<8x8xf32> to vector<8xf32>
    %1640 = vector.shape_cast %1639 : vector<8xf32> to vector<8x1xf32>
    %cst_692 = arith.constant 0.000000e+00 : f32
    %1641 = vector.shape_cast %1207 : vector<1x8xi1> to vector<1x8xi1>
    %1642 = vector.broadcast %1641 : vector<1x8xi1> to vector<8x8xi1>
    %1643 = vector.shape_cast %1634 : vector<8x1xf32> to vector<8x1xf32>
    %1644 = vector.broadcast %1643 : vector<8x1xf32> to vector<8x8xf32>
    %1645 = vector.broadcast %cst_692 : f32 to vector<8x8xf32>
    %1646 = arith.select %1642, %1644, %1645 : vector<8x8xi1>, vector<8x8xf32>
    %1647 = arith.addf %1625, %1646 : vector<8x8xf32>
    %1648 = vector.shape_cast %1207 : vector<1x8xi1> to vector<1x8xi1>
    %1649 = vector.broadcast %1648 : vector<1x8xi1> to vector<8x8xi1>
    %1650 = vector.shape_cast %1640 : vector<8x1xf32> to vector<8x1xf32>
    %1651 = vector.broadcast %1650 : vector<8x1xf32> to vector<8x8xf32>
    %1652 = arith.select %1649, %1651, %1630 : vector<8x8xi1>, vector<8x8xf32>
    %1653 = vector.broadcast %1196 : vector<1x8xf32> to vector<8x8xf32>
    %1654 = arith.addf %1553, %1653 : vector<8x8xf32>
    %cst_693 = arith.constant dense<0xFF800000> : vector<8xf32>
    %1655 = vector.multi_reduction <maximumf>, %1654, %cst_693 [1] : vector<8x8xf32> to vector<8xf32>
    %1656 = vector.shape_cast %1655 : vector<8xf32> to vector<8x1xf32>
    %1657 = vector.broadcast %1656 : vector<8x1xf32> to vector<8x8xf32>
    %1658 = arith.cmpf oeq, %1654, %1657 : vector<8x8xf32>
    %cst_694 = arith.constant 8.000000e+00 : f32
    %1659 = vector.broadcast %cst_694 : f32 to vector<8x8xf32>
    %1660 = arith.select %1658, %1198, %1659 : vector<8x8xi1>, vector<8x8xf32>
    %cst_695 = arith.constant dense<0x7F800000> : vector<8xf32>
    %1661 = vector.multi_reduction <minimumf>, %1660, %cst_695 [1] : vector<8x8xf32> to vector<8xf32>
    %1662 = vector.shape_cast %1661 : vector<8xf32> to vector<8x1xf32>
    %cst_696 = arith.constant 0.000000e+00 : f32
    %1663 = vector.shape_cast %1209 : vector<1x8xi1> to vector<1x8xi1>
    %1664 = vector.broadcast %1663 : vector<1x8xi1> to vector<8x8xi1>
    %1665 = vector.shape_cast %1656 : vector<8x1xf32> to vector<8x1xf32>
    %1666 = vector.broadcast %1665 : vector<8x1xf32> to vector<8x8xf32>
    %1667 = vector.broadcast %cst_696 : f32 to vector<8x8xf32>
    %1668 = arith.select %1664, %1666, %1667 : vector<8x8xi1>, vector<8x8xf32>
    %1669 = arith.addf %1647, %1668 : vector<8x8xf32>
    %1670 = vector.shape_cast %1209 : vector<1x8xi1> to vector<1x8xi1>
    %1671 = vector.broadcast %1670 : vector<1x8xi1> to vector<8x8xi1>
    %1672 = vector.shape_cast %1662 : vector<8x1xf32> to vector<8x1xf32>
    %1673 = vector.broadcast %1672 : vector<8x1xf32> to vector<8x8xf32>
    %1674 = arith.select %1671, %1673, %1652 : vector<8x8xi1>, vector<8x8xf32>
    %c32_697 = arith.constant 32 : index
    %c0_698 = arith.constant 0 : index
    %1675 = vector.load %arg16[%c32_697, %c0_698] : memref<64x32xf32, #tpu.memory_space<vmem>>, vector<8x32xf32>
    %cst_699 = arith.constant dense<0.000000e+00> : vector<8x128xf32>
    %1676 = tpu.matmul %1675, %1187, %cst_699 {dimension_numbers = #tpu.dot_dimension_numbers<[1], [0], [0], [1], [0, 0, 1, 1], [], []>} : vector<8x32xf32>, vector<32x128xf32>, vector<8x128xf32> -> vector<8x128xf32>
    %1677 = arith.addf %1676, %1190 : vector<8x128xf32>
    %c32_700 = arith.constant 32 : index
    %c0_701 = arith.constant 0 : index
    %1678 = vector.load %arg12[%c32_700, %c0_701] : memref<64x128xf32, #tpu.memory_space<vmem>>, vector<8x128xf32>
    tpu.vector_store %arg12[%c32_700, %c0_701], %1677 {strides = array<i32>} : memref<64x128xf32, #tpu.memory_space<vmem>>, vector<8x128xf32>,
    %1679 = vector.extract_strided_slice %1677 {offsets = [0, 0], sizes = [8, 8], strides = [1, 1]} : vector<8x128xf32> to vector<8x8xf32>
    %cst_702 = arith.constant 0.000000e+00 : f32
    %1680 = vector.broadcast %cst_702 : f32 to vector<8x8xf32>
    %1681 = vector.broadcast %1192 : vector<1x8xf32> to vector<8x8xf32>
    %1682 = arith.addf %1669, %1681 : vector<8x8xf32>
    %cst_703 = arith.constant dense<0xFF800000> : vector<8xf32>
    %1683 = vector.multi_reduction <maximumf>, %1682, %cst_703 [1] : vector<8x8xf32> to vector<8xf32>
    %1684 = vector.shape_cast %1683 : vector<8xf32> to vector<8x1xf32>
    %1685 = vector.broadcast %1684 : vector<8x1xf32> to vector<8x8xf32>
    %1686 = arith.cmpf oeq, %1682, %1685 : vector<8x8xf32>
    %cst_704 = arith.constant 8.000000e+00 : f32
    %1687 = vector.broadcast %cst_704 : f32 to vector<8x8xf32>
    %1688 = arith.select %1686, %1198, %1687 : vector<8x8xi1>, vector<8x8xf32>
    %cst_705 = arith.constant dense<0x7F800000> : vector<8xf32>
    %1689 = vector.multi_reduction <minimumf>, %1688, %cst_705 [1] : vector<8x8xf32> to vector<8xf32>
    %1690 = vector.shape_cast %1689 : vector<8xf32> to vector<8x1xf32>
    %cst_706 = arith.constant 0.000000e+00 : f32
    %1691 = vector.shape_cast %1201 : vector<1x8xi1> to vector<1x8xi1>
    %1692 = vector.broadcast %1691 : vector<1x8xi1> to vector<8x8xi1>
    %1693 = vector.shape_cast %1684 : vector<8x1xf32> to vector<8x1xf32>
    %1694 = vector.broadcast %1693 : vector<8x1xf32> to vector<8x8xf32>
    %1695 = vector.broadcast %cst_706 : f32 to vector<8x8xf32>
    %1696 = arith.select %1692, %1694, %1695 : vector<8x8xi1>, vector<8x8xf32>
    %1697 = arith.addf %1679, %1696 : vector<8x8xf32>
    %1698 = vector.shape_cast %1201 : vector<1x8xi1> to vector<1x8xi1>
    %1699 = vector.broadcast %1698 : vector<1x8xi1> to vector<8x8xi1>
    %1700 = vector.shape_cast %1690 : vector<8x1xf32> to vector<8x1xf32>
    %1701 = vector.broadcast %1700 : vector<8x1xf32> to vector<8x8xf32>
    %1702 = arith.select %1699, %1701, %1680 : vector<8x8xi1>, vector<8x8xf32>
    %1703 = vector.broadcast %1193 : vector<1x8xf32> to vector<8x8xf32>
    %1704 = arith.addf %1669, %1703 : vector<8x8xf32>
    %cst_707 = arith.constant dense<0xFF800000> : vector<8xf32>
    %1705 = vector.multi_reduction <maximumf>, %1704, %cst_707 [1] : vector<8x8xf32> to vector<8xf32>
    %1706 = vector.shape_cast %1705 : vector<8xf32> to vector<8x1xf32>
    %1707 = vector.broadcast %1706 : vector<8x1xf32> to vector<8x8xf32>
    %1708 = arith.cmpf oeq, %1704, %1707 : vector<8x8xf32>
    %cst_708 = arith.constant 8.000000e+00 : f32
    %1709 = vector.broadcast %cst_708 : f32 to vector<8x8xf32>
    %1710 = arith.select %1708, %1198, %1709 : vector<8x8xi1>, vector<8x8xf32>
    %cst_709 = arith.constant dense<0x7F800000> : vector<8xf32>
    %1711 = vector.multi_reduction <minimumf>, %1710, %cst_709 [1] : vector<8x8xf32> to vector<8xf32>
    %1712 = vector.shape_cast %1711 : vector<8xf32> to vector<8x1xf32>
    %cst_710 = arith.constant 0.000000e+00 : f32
    %1713 = vector.shape_cast %1203 : vector<1x8xi1> to vector<1x8xi1>
    %1714 = vector.broadcast %1713 : vector<1x8xi1> to vector<8x8xi1>
    %1715 = vector.shape_cast %1706 : vector<8x1xf32> to vector<8x1xf32>
    %1716 = vector.broadcast %1715 : vector<8x1xf32> to vector<8x8xf32>
    %1717 = vector.broadcast %cst_710 : f32 to vector<8x8xf32>
    %1718 = arith.select %1714, %1716, %1717 : vector<8x8xi1>, vector<8x8xf32>
    %1719 = arith.addf %1697, %1718 : vector<8x8xf32>
    %1720 = vector.shape_cast %1203 : vector<1x8xi1> to vector<1x8xi1>
    %1721 = vector.broadcast %1720 : vector<1x8xi1> to vector<8x8xi1>
    %1722 = vector.shape_cast %1712 : vector<8x1xf32> to vector<8x1xf32>
    %1723 = vector.broadcast %1722 : vector<8x1xf32> to vector<8x8xf32>
    %1724 = arith.select %1721, %1723, %1702 : vector<8x8xi1>, vector<8x8xf32>
    %1725 = vector.broadcast %1194 : vector<1x8xf32> to vector<8x8xf32>
    %1726 = arith.addf %1669, %1725 : vector<8x8xf32>
    %cst_711 = arith.constant dense<0xFF800000> : vector<8xf32>
    %1727 = vector.multi_reduction <maximumf>, %1726, %cst_711 [1] : vector<8x8xf32> to vector<8xf32>
    %1728 = vector.shape_cast %1727 : vector<8xf32> to vector<8x1xf32>
    %1729 = vector.broadcast %1728 : vector<8x1xf32> to vector<8x8xf32>
    %1730 = arith.cmpf oeq, %1726, %1729 : vector<8x8xf32>
    %cst_712 = arith.constant 8.000000e+00 : f32
    %1731 = vector.broadcast %cst_712 : f32 to vector<8x8xf32>
    %1732 = arith.select %1730, %1198, %1731 : vector<8x8xi1>, vector<8x8xf32>
    %cst_713 = arith.constant dense<0x7F800000> : vector<8xf32>
    %1733 = vector.multi_reduction <minimumf>, %1732, %cst_713 [1] : vector<8x8xf32> to vector<8xf32>
    %1734 = vector.shape_cast %1733 : vector<8xf32> to vector<8x1xf32>
    %cst_714 = arith.constant 0.000000e+00 : f32
    %1735 = vector.shape_cast %1205 : vector<1x8xi1> to vector<1x8xi1>
    %1736 = vector.broadcast %1735 : vector<1x8xi1> to vector<8x8xi1>
    %1737 = vector.shape_cast %1728 : vector<8x1xf32> to vector<8x1xf32>
    %1738 = vector.broadcast %1737 : vector<8x1xf32> to vector<8x8xf32>
    %1739 = vector.broadcast %cst_714 : f32 to vector<8x8xf32>
    %1740 = arith.select %1736, %1738, %1739 : vector<8x8xi1>, vector<8x8xf32>
    %1741 = arith.addf %1719, %1740 : vector<8x8xf32>
    %1742 = vector.shape_cast %1205 : vector<1x8xi1> to vector<1x8xi1>
    %1743 = vector.broadcast %1742 : vector<1x8xi1> to vector<8x8xi1>
    %1744 = vector.shape_cast %1734 : vector<8x1xf32> to vector<8x1xf32>
    %1745 = vector.broadcast %1744 : vector<8x1xf32> to vector<8x8xf32>
    %1746 = arith.select %1743, %1745, %1724 : vector<8x8xi1>, vector<8x8xf32>
    %1747 = vector.broadcast %1195 : vector<1x8xf32> to vector<8x8xf32>
    %1748 = arith.addf %1669, %1747 : vector<8x8xf32>
    %cst_715 = arith.constant dense<0xFF800000> : vector<8xf32>
    %1749 = vector.multi_reduction <maximumf>, %1748, %cst_715 [1] : vector<8x8xf32> to vector<8xf32>
    %1750 = vector.shape_cast %1749 : vector<8xf32> to vector<8x1xf32>
    %1751 = vector.broadcast %1750 : vector<8x1xf32> to vector<8x8xf32>
    %1752 = arith.cmpf oeq, %1748, %1751 : vector<8x8xf32>
    %cst_716 = arith.constant 8.000000e+00 : f32
    %1753 = vector.broadcast %cst_716 : f32 to vector<8x8xf32>
    %1754 = arith.select %1752, %1198, %1753 : vector<8x8xi1>, vector<8x8xf32>
    %cst_717 = arith.constant dense<0x7F800000> : vector<8xf32>
    %1755 = vector.multi_reduction <minimumf>, %1754, %cst_717 [1] : vector<8x8xf32> to vector<8xf32>
    %1756 = vector.shape_cast %1755 : vector<8xf32> to vector<8x1xf32>
    %cst_718 = arith.constant 0.000000e+00 : f32
    %1757 = vector.shape_cast %1207 : vector<1x8xi1> to vector<1x8xi1>
    %1758 = vector.broadcast %1757 : vector<1x8xi1> to vector<8x8xi1>
    %1759 = vector.shape_cast %1750 : vector<8x1xf32> to vector<8x1xf32>
    %1760 = vector.broadcast %1759 : vector<8x1xf32> to vector<8x8xf32>
    %1761 = vector.broadcast %cst_718 : f32 to vector<8x8xf32>
    %1762 = arith.select %1758, %1760, %1761 : vector<8x8xi1>, vector<8x8xf32>
    %1763 = arith.addf %1741, %1762 : vector<8x8xf32>
    %1764 = vector.shape_cast %1207 : vector<1x8xi1> to vector<1x8xi1>
    %1765 = vector.broadcast %1764 : vector<1x8xi1> to vector<8x8xi1>
    %1766 = vector.shape_cast %1756 : vector<8x1xf32> to vector<8x1xf32>
    %1767 = vector.broadcast %1766 : vector<8x1xf32> to vector<8x8xf32>
    %1768 = arith.select %1765, %1767, %1746 : vector<8x8xi1>, vector<8x8xf32>
    %1769 = vector.broadcast %1196 : vector<1x8xf32> to vector<8x8xf32>
    %1770 = arith.addf %1669, %1769 : vector<8x8xf32>
    %cst_719 = arith.constant dense<0xFF800000> : vector<8xf32>
    %1771 = vector.multi_reduction <maximumf>, %1770, %cst_719 [1] : vector<8x8xf32> to vector<8xf32>
    %1772 = vector.shape_cast %1771 : vector<8xf32> to vector<8x1xf32>
    %1773 = vector.broadcast %1772 : vector<8x1xf32> to vector<8x8xf32>
    %1774 = arith.cmpf oeq, %1770, %1773 : vector<8x8xf32>
    %cst_720 = arith.constant 8.000000e+00 : f32
    %1775 = vector.broadcast %cst_720 : f32 to vector<8x8xf32>
    %1776 = arith.select %1774, %1198, %1775 : vector<8x8xi1>, vector<8x8xf32>
    %cst_721 = arith.constant dense<0x7F800000> : vector<8xf32>
    %1777 = vector.multi_reduction <minimumf>, %1776, %cst_721 [1] : vector<8x8xf32> to vector<8xf32>
    %1778 = vector.shape_cast %1777 : vector<8xf32> to vector<8x1xf32>
    %cst_722 = arith.constant 0.000000e+00 : f32
    %1779 = vector.shape_cast %1209 : vector<1x8xi1> to vector<1x8xi1>
    %1780 = vector.broadcast %1779 : vector<1x8xi1> to vector<8x8xi1>
    %1781 = vector.shape_cast %1772 : vector<8x1xf32> to vector<8x1xf32>
    %1782 = vector.broadcast %1781 : vector<8x1xf32> to vector<8x8xf32>
    %1783 = vector.broadcast %cst_722 : f32 to vector<8x8xf32>
    %1784 = arith.select %1780, %1782, %1783 : vector<8x8xi1>, vector<8x8xf32>
    %1785 = arith.addf %1763, %1784 : vector<8x8xf32>
    %1786 = vector.shape_cast %1209 : vector<1x8xi1> to vector<1x8xi1>
    %1787 = vector.broadcast %1786 : vector<1x8xi1> to vector<8x8xi1>
    %1788 = vector.shape_cast %1778 : vector<8x1xf32> to vector<8x1xf32>
    %1789 = vector.broadcast %1788 : vector<8x1xf32> to vector<8x8xf32>
    %1790 = arith.select %1787, %1789, %1768 : vector<8x8xi1>, vector<8x8xf32>
    %c40_723 = arith.constant 40 : index
    %c0_724 = arith.constant 0 : index
    %1791 = vector.load %arg16[%c40_723, %c0_724] : memref<64x32xf32, #tpu.memory_space<vmem>>, vector<8x32xf32>
    %cst_725 = arith.constant dense<0.000000e+00> : vector<8x128xf32>
    %1792 = tpu.matmul %1791, %1187, %cst_725 {dimension_numbers = #tpu.dot_dimension_numbers<[1], [0], [0], [1], [0, 0, 1, 1], [], []>} : vector<8x32xf32>, vector<32x128xf32>, vector<8x128xf32> -> vector<8x128xf32>
    %1793 = arith.addf %1792, %1190 : vector<8x128xf32>
    %c40_726 = arith.constant 40 : index
    %c0_727 = arith.constant 0 : index
    %1794 = vector.load %arg12[%c40_726, %c0_727] : memref<64x128xf32, #tpu.memory_space<vmem>>, vector<8x128xf32>
    tpu.vector_store %arg12[%c40_726, %c0_727], %1793 {strides = array<i32>} : memref<64x128xf32, #tpu.memory_space<vmem>>, vector<8x128xf32>,
    %1795 = vector.extract_strided_slice %1793 {offsets = [0, 0], sizes = [8, 8], strides = [1, 1]} : vector<8x128xf32> to vector<8x8xf32>
    %cst_728 = arith.constant 0.000000e+00 : f32
    %1796 = vector.broadcast %cst_728 : f32 to vector<8x8xf32>
    %1797 = vector.broadcast %1192 : vector<1x8xf32> to vector<8x8xf32>
    %1798 = arith.addf %1785, %1797 : vector<8x8xf32>
    %cst_729 = arith.constant dense<0xFF800000> : vector<8xf32>
    %1799 = vector.multi_reduction <maximumf>, %1798, %cst_729 [1] : vector<8x8xf32> to vector<8xf32>
    %1800 = vector.shape_cast %1799 : vector<8xf32> to vector<8x1xf32>
    %1801 = vector.broadcast %1800 : vector<8x1xf32> to vector<8x8xf32>
    %1802 = arith.cmpf oeq, %1798, %1801 : vector<8x8xf32>
    %cst_730 = arith.constant 8.000000e+00 : f32
    %1803 = vector.broadcast %cst_730 : f32 to vector<8x8xf32>
    %1804 = arith.select %1802, %1198, %1803 : vector<8x8xi1>, vector<8x8xf32>
    %cst_731 = arith.constant dense<0x7F800000> : vector<8xf32>
    %1805 = vector.multi_reduction <minimumf>, %1804, %cst_731 [1] : vector<8x8xf32> to vector<8xf32>
    %1806 = vector.shape_cast %1805 : vector<8xf32> to vector<8x1xf32>
    %cst_732 = arith.constant 0.000000e+00 : f32
    %1807 = vector.shape_cast %1201 : vector<1x8xi1> to vector<1x8xi1>
    %1808 = vector.broadcast %1807 : vector<1x8xi1> to vector<8x8xi1>
    %1809 = vector.shape_cast %1800 : vector<8x1xf32> to vector<8x1xf32>
    %1810 = vector.broadcast %1809 : vector<8x1xf32> to vector<8x8xf32>
    %1811 = vector.broadcast %cst_732 : f32 to vector<8x8xf32>
    %1812 = arith.select %1808, %1810, %1811 : vector<8x8xi1>, vector<8x8xf32>
    %1813 = arith.addf %1795, %1812 : vector<8x8xf32>
    %1814 = vector.shape_cast %1201 : vector<1x8xi1> to vector<1x8xi1>
    %1815 = vector.broadcast %1814 : vector<1x8xi1> to vector<8x8xi1>
    %1816 = vector.shape_cast %1806 : vector<8x1xf32> to vector<8x1xf32>
    %1817 = vector.broadcast %1816 : vector<8x1xf32> to vector<8x8xf32>
    %1818 = arith.select %1815, %1817, %1796 : vector<8x8xi1>, vector<8x8xf32>
    %1819 = vector.broadcast %1193 : vector<1x8xf32> to vector<8x8xf32>
    %1820 = arith.addf %1785, %1819 : vector<8x8xf32>
    %cst_733 = arith.constant dense<0xFF800000> : vector<8xf32>
    %1821 = vector.multi_reduction <maximumf>, %1820, %cst_733 [1] : vector<8x8xf32> to vector<8xf32>
    %1822 = vector.shape_cast %1821 : vector<8xf32> to vector<8x1xf32>
    %1823 = vector.broadcast %1822 : vector<8x1xf32> to vector<8x8xf32>
    %1824 = arith.cmpf oeq, %1820, %1823 : vector<8x8xf32>
    %cst_734 = arith.constant 8.000000e+00 : f32
    %1825 = vector.broadcast %cst_734 : f32 to vector<8x8xf32>
    %1826 = arith.select %1824, %1198, %1825 : vector<8x8xi1>, vector<8x8xf32>
    %cst_735 = arith.constant dense<0x7F800000> : vector<8xf32>
    %1827 = vector.multi_reduction <minimumf>, %1826, %cst_735 [1] : vector<8x8xf32> to vector<8xf32>
    %1828 = vector.shape_cast %1827 : vector<8xf32> to vector<8x1xf32>
    %cst_736 = arith.constant 0.000000e+00 : f32
    %1829 = vector.shape_cast %1203 : vector<1x8xi1> to vector<1x8xi1>
    %1830 = vector.broadcast %1829 : vector<1x8xi1> to vector<8x8xi1>
    %1831 = vector.shape_cast %1822 : vector<8x1xf32> to vector<8x1xf32>
    %1832 = vector.broadcast %1831 : vector<8x1xf32> to vector<8x8xf32>
    %1833 = vector.broadcast %cst_736 : f32 to vector<8x8xf32>
    %1834 = arith.select %1830, %1832, %1833 : vector<8x8xi1>, vector<8x8xf32>
    %1835 = arith.addf %1813, %1834 : vector<8x8xf32>
    %1836 = vector.shape_cast %1203 : vector<1x8xi1> to vector<1x8xi1>
    %1837 = vector.broadcast %1836 : vector<1x8xi1> to vector<8x8xi1>
    %1838 = vector.shape_cast %1828 : vector<8x1xf32> to vector<8x1xf32>
    %1839 = vector.broadcast %1838 : vector<8x1xf32> to vector<8x8xf32>
    %1840 = arith.select %1837, %1839, %1818 : vector<8x8xi1>, vector<8x8xf32>
    %1841 = vector.broadcast %1194 : vector<1x8xf32> to vector<8x8xf32>
    %1842 = arith.addf %1785, %1841 : vector<8x8xf32>
    %cst_737 = arith.constant dense<0xFF800000> : vector<8xf32>
    %1843 = vector.multi_reduction <maximumf>, %1842, %cst_737 [1] : vector<8x8xf32> to vector<8xf32>
    %1844 = vector.shape_cast %1843 : vector<8xf32> to vector<8x1xf32>
    %1845 = vector.broadcast %1844 : vector<8x1xf32> to vector<8x8xf32>
    %1846 = arith.cmpf oeq, %1842, %1845 : vector<8x8xf32>
    %cst_738 = arith.constant 8.000000e+00 : f32
    %1847 = vector.broadcast %cst_738 : f32 to vector<8x8xf32>
    %1848 = arith.select %1846, %1198, %1847 : vector<8x8xi1>, vector<8x8xf32>
    %cst_739 = arith.constant dense<0x7F800000> : vector<8xf32>
    %1849 = vector.multi_reduction <minimumf>, %1848, %cst_739 [1] : vector<8x8xf32> to vector<8xf32>
    %1850 = vector.shape_cast %1849 : vector<8xf32> to vector<8x1xf32>
    %cst_740 = arith.constant 0.000000e+00 : f32
    %1851 = vector.shape_cast %1205 : vector<1x8xi1> to vector<1x8xi1>
    %1852 = vector.broadcast %1851 : vector<1x8xi1> to vector<8x8xi1>
    %1853 = vector.shape_cast %1844 : vector<8x1xf32> to vector<8x1xf32>
    %1854 = vector.broadcast %1853 : vector<8x1xf32> to vector<8x8xf32>
    %1855 = vector.broadcast %cst_740 : f32 to vector<8x8xf32>
    %1856 = arith.select %1852, %1854, %1855 : vector<8x8xi1>, vector<8x8xf32>
    %1857 = arith.addf %1835, %1856 : vector<8x8xf32>
    %1858 = vector.shape_cast %1205 : vector<1x8xi1> to vector<1x8xi1>
    %1859 = vector.broadcast %1858 : vector<1x8xi1> to vector<8x8xi1>
    %1860 = vector.shape_cast %1850 : vector<8x1xf32> to vector<8x1xf32>
    %1861 = vector.broadcast %1860 : vector<8x1xf32> to vector<8x8xf32>
    %1862 = arith.select %1859, %1861, %1840 : vector<8x8xi1>, vector<8x8xf32>
    %1863 = vector.broadcast %1195 : vector<1x8xf32> to vector<8x8xf32>
    %1864 = arith.addf %1785, %1863 : vector<8x8xf32>
    %cst_741 = arith.constant dense<0xFF800000> : vector<8xf32>
    %1865 = vector.multi_reduction <maximumf>, %1864, %cst_741 [1] : vector<8x8xf32> to vector<8xf32>
    %1866 = vector.shape_cast %1865 : vector<8xf32> to vector<8x1xf32>
    %1867 = vector.broadcast %1866 : vector<8x1xf32> to vector<8x8xf32>
    %1868 = arith.cmpf oeq, %1864, %1867 : vector<8x8xf32>
    %cst_742 = arith.constant 8.000000e+00 : f32
    %1869 = vector.broadcast %cst_742 : f32 to vector<8x8xf32>
    %1870 = arith.select %1868, %1198, %1869 : vector<8x8xi1>, vector<8x8xf32>
    %cst_743 = arith.constant dense<0x7F800000> : vector<8xf32>
    %1871 = vector.multi_reduction <minimumf>, %1870, %cst_743 [1] : vector<8x8xf32> to vector<8xf32>
    %1872 = vector.shape_cast %1871 : vector<8xf32> to vector<8x1xf32>
    %cst_744 = arith.constant 0.000000e+00 : f32
    %1873 = vector.shape_cast %1207 : vector<1x8xi1> to vector<1x8xi1>
    %1874 = vector.broadcast %1873 : vector<1x8xi1> to vector<8x8xi1>
    %1875 = vector.shape_cast %1866 : vector<8x1xf32> to vector<8x1xf32>
    %1876 = vector.broadcast %1875 : vector<8x1xf32> to vector<8x8xf32>
    %1877 = vector.broadcast %cst_744 : f32 to vector<8x8xf32>
    %1878 = arith.select %1874, %1876, %1877 : vector<8x8xi1>, vector<8x8xf32>
    %1879 = arith.addf %1857, %1878 : vector<8x8xf32>
    %1880 = vector.shape_cast %1207 : vector<1x8xi1> to vector<1x8xi1>
    %1881 = vector.broadcast %1880 : vector<1x8xi1> to vector<8x8xi1>
    %1882 = vector.shape_cast %1872 : vector<8x1xf32> to vector<8x1xf32>
    %1883 = vector.broadcast %1882 : vector<8x1xf32> to vector<8x8xf32>
    %1884 = arith.select %1881, %1883, %1862 : vector<8x8xi1>, vector<8x8xf32>
    %1885 = vector.broadcast %1196 : vector<1x8xf32> to vector<8x8xf32>
    %1886 = arith.addf %1785, %1885 : vector<8x8xf32>
    %cst_745 = arith.constant dense<0xFF800000> : vector<8xf32>
    %1887 = vector.multi_reduction <maximumf>, %1886, %cst_745 [1] : vector<8x8xf32> to vector<8xf32>
    %1888 = vector.shape_cast %1887 : vector<8xf32> to vector<8x1xf32>
    %1889 = vector.broadcast %1888 : vector<8x1xf32> to vector<8x8xf32>
    %1890 = arith.cmpf oeq, %1886, %1889 : vector<8x8xf32>
    %cst_746 = arith.constant 8.000000e+00 : f32
    %1891 = vector.broadcast %cst_746 : f32 to vector<8x8xf32>
    %1892 = arith.select %1890, %1198, %1891 : vector<8x8xi1>, vector<8x8xf32>
    %cst_747 = arith.constant dense<0x7F800000> : vector<8xf32>
    %1893 = vector.multi_reduction <minimumf>, %1892, %cst_747 [1] : vector<8x8xf32> to vector<8xf32>
    %1894 = vector.shape_cast %1893 : vector<8xf32> to vector<8x1xf32>
    %cst_748 = arith.constant 0.000000e+00 : f32
    %1895 = vector.shape_cast %1209 : vector<1x8xi1> to vector<1x8xi1>
    %1896 = vector.broadcast %1895 : vector<1x8xi1> to vector<8x8xi1>
    %1897 = vector.shape_cast %1888 : vector<8x1xf32> to vector<8x1xf32>
    %1898 = vector.broadcast %1897 : vector<8x1xf32> to vector<8x8xf32>
    %1899 = vector.broadcast %cst_748 : f32 to vector<8x8xf32>
    %1900 = arith.select %1896, %1898, %1899 : vector<8x8xi1>, vector<8x8xf32>
    %1901 = arith.addf %1879, %1900 : vector<8x8xf32>
    %1902 = vector.shape_cast %1209 : vector<1x8xi1> to vector<1x8xi1>
    %1903 = vector.broadcast %1902 : vector<1x8xi1> to vector<8x8xi1>
    %1904 = vector.shape_cast %1894 : vector<8x1xf32> to vector<8x1xf32>
    %1905 = vector.broadcast %1904 : vector<8x1xf32> to vector<8x8xf32>
    %1906 = arith.select %1903, %1905, %1884 : vector<8x8xi1>, vector<8x8xf32>
    %c48_749 = arith.constant 48 : index
    %c0_750 = arith.constant 0 : index
    %1907 = vector.load %arg16[%c48_749, %c0_750] : memref<64x32xf32, #tpu.memory_space<vmem>>, vector<8x32xf32>
    %cst_751 = arith.constant dense<0.000000e+00> : vector<8x128xf32>
    %1908 = tpu.matmul %1907, %1187, %cst_751 {dimension_numbers = #tpu.dot_dimension_numbers<[1], [0], [0], [1], [0, 0, 1, 1], [], []>} : vector<8x32xf32>, vector<32x128xf32>, vector<8x128xf32> -> vector<8x128xf32>
    %1909 = arith.addf %1908, %1190 : vector<8x128xf32>
    %c48_752 = arith.constant 48 : index
    %c0_753 = arith.constant 0 : index
    %1910 = vector.load %arg12[%c48_752, %c0_753] : memref<64x128xf32, #tpu.memory_space<vmem>>, vector<8x128xf32>
    tpu.vector_store %arg12[%c48_752, %c0_753], %1909 {strides = array<i32>} : memref<64x128xf32, #tpu.memory_space<vmem>>, vector<8x128xf32>,
    %1911 = vector.extract_strided_slice %1909 {offsets = [0, 0], sizes = [8, 8], strides = [1, 1]} : vector<8x128xf32> to vector<8x8xf32>
    %cst_754 = arith.constant 0.000000e+00 : f32
    %1912 = vector.broadcast %cst_754 : f32 to vector<8x8xf32>
    %1913 = vector.broadcast %1192 : vector<1x8xf32> to vector<8x8xf32>
    %1914 = arith.addf %1901, %1913 : vector<8x8xf32>
    %cst_755 = arith.constant dense<0xFF800000> : vector<8xf32>
    %1915 = vector.multi_reduction <maximumf>, %1914, %cst_755 [1] : vector<8x8xf32> to vector<8xf32>
    %1916 = vector.shape_cast %1915 : vector<8xf32> to vector<8x1xf32>
    %1917 = vector.broadcast %1916 : vector<8x1xf32> to vector<8x8xf32>
    %1918 = arith.cmpf oeq, %1914, %1917 : vector<8x8xf32>
    %cst_756 = arith.constant 8.000000e+00 : f32
    %1919 = vector.broadcast %cst_756 : f32 to vector<8x8xf32>
    %1920 = arith.select %1918, %1198, %1919 : vector<8x8xi1>, vector<8x8xf32>
    %cst_757 = arith.constant dense<0x7F800000> : vector<8xf32>
    %1921 = vector.multi_reduction <minimumf>, %1920, %cst_757 [1] : vector<8x8xf32> to vector<8xf32>
    %1922 = vector.shape_cast %1921 : vector<8xf32> to vector<8x1xf32>
    %cst_758 = arith.constant 0.000000e+00 : f32
    %1923 = vector.shape_cast %1201 : vector<1x8xi1> to vector<1x8xi1>
    %1924 = vector.broadcast %1923 : vector<1x8xi1> to vector<8x8xi1>
    %1925 = vector.shape_cast %1916 : vector<8x1xf32> to vector<8x1xf32>
    %1926 = vector.broadcast %1925 : vector<8x1xf32> to vector<8x8xf32>
    %1927 = vector.broadcast %cst_758 : f32 to vector<8x8xf32>
    %1928 = arith.select %1924, %1926, %1927 : vector<8x8xi1>, vector<8x8xf32>
    %1929 = arith.addf %1911, %1928 : vector<8x8xf32>
    %1930 = vector.shape_cast %1201 : vector<1x8xi1> to vector<1x8xi1>
    %1931 = vector.broadcast %1930 : vector<1x8xi1> to vector<8x8xi1>
    %1932 = vector.shape_cast %1922 : vector<8x1xf32> to vector<8x1xf32>
    %1933 = vector.broadcast %1932 : vector<8x1xf32> to vector<8x8xf32>
    %1934 = arith.select %1931, %1933, %1912 : vector<8x8xi1>, vector<8x8xf32>
    %1935 = vector.broadcast %1193 : vector<1x8xf32> to vector<8x8xf32>
    %1936 = arith.addf %1901, %1935 : vector<8x8xf32>
    %cst_759 = arith.constant dense<0xFF800000> : vector<8xf32>
    %1937 = vector.multi_reduction <maximumf>, %1936, %cst_759 [1] : vector<8x8xf32> to vector<8xf32>
    %1938 = vector.shape_cast %1937 : vector<8xf32> to vector<8x1xf32>
    %1939 = vector.broadcast %1938 : vector<8x1xf32> to vector<8x8xf32>
    %1940 = arith.cmpf oeq, %1936, %1939 : vector<8x8xf32>
    %cst_760 = arith.constant 8.000000e+00 : f32
    %1941 = vector.broadcast %cst_760 : f32 to vector<8x8xf32>
    %1942 = arith.select %1940, %1198, %1941 : vector<8x8xi1>, vector<8x8xf32>
    %cst_761 = arith.constant dense<0x7F800000> : vector<8xf32>
    %1943 = vector.multi_reduction <minimumf>, %1942, %cst_761 [1] : vector<8x8xf32> to vector<8xf32>
    %1944 = vector.shape_cast %1943 : vector<8xf32> to vector<8x1xf32>
    %cst_762 = arith.constant 0.000000e+00 : f32
    %1945 = vector.shape_cast %1203 : vector<1x8xi1> to vector<1x8xi1>
    %1946 = vector.broadcast %1945 : vector<1x8xi1> to vector<8x8xi1>
    %1947 = vector.shape_cast %1938 : vector<8x1xf32> to vector<8x1xf32>
    %1948 = vector.broadcast %1947 : vector<8x1xf32> to vector<8x8xf32>
    %1949 = vector.broadcast %cst_762 : f32 to vector<8x8xf32>
    %1950 = arith.select %1946, %1948, %1949 : vector<8x8xi1>, vector<8x8xf32>
    %1951 = arith.addf %1929, %1950 : vector<8x8xf32>
    %1952 = vector.shape_cast %1203 : vector<1x8xi1> to vector<1x8xi1>
    %1953 = vector.broadcast %1952 : vector<1x8xi1> to vector<8x8xi1>
    %1954 = vector.shape_cast %1944 : vector<8x1xf32> to vector<8x1xf32>
    %1955 = vector.broadcast %1954 : vector<8x1xf32> to vector<8x8xf32>
    %1956 = arith.select %1953, %1955, %1934 : vector<8x8xi1>, vector<8x8xf32>
    %1957 = vector.broadcast %1194 : vector<1x8xf32> to vector<8x8xf32>
    %1958 = arith.addf %1901, %1957 : vector<8x8xf32>
    %cst_763 = arith.constant dense<0xFF800000> : vector<8xf32>
    %1959 = vector.multi_reduction <maximumf>, %1958, %cst_763 [1] : vector<8x8xf32> to vector<8xf32>
    %1960 = vector.shape_cast %1959 : vector<8xf32> to vector<8x1xf32>
    %1961 = vector.broadcast %1960 : vector<8x1xf32> to vector<8x8xf32>
    %1962 = arith.cmpf oeq, %1958, %1961 : vector<8x8xf32>
    %cst_764 = arith.constant 8.000000e+00 : f32
    %1963 = vector.broadcast %cst_764 : f32 to vector<8x8xf32>
    %1964 = arith.select %1962, %1198, %1963 : vector<8x8xi1>, vector<8x8xf32>
    %cst_765 = arith.constant dense<0x7F800000> : vector<8xf32>
    %1965 = vector.multi_reduction <minimumf>, %1964, %cst_765 [1] : vector<8x8xf32> to vector<8xf32>
    %1966 = vector.shape_cast %1965 : vector<8xf32> to vector<8x1xf32>
    %cst_766 = arith.constant 0.000000e+00 : f32
    %1967 = vector.shape_cast %1205 : vector<1x8xi1> to vector<1x8xi1>
    %1968 = vector.broadcast %1967 : vector<1x8xi1> to vector<8x8xi1>
    %1969 = vector.shape_cast %1960 : vector<8x1xf32> to vector<8x1xf32>
    %1970 = vector.broadcast %1969 : vector<8x1xf32> to vector<8x8xf32>
    %1971 = vector.broadcast %cst_766 : f32 to vector<8x8xf32>
    %1972 = arith.select %1968, %1970, %1971 : vector<8x8xi1>, vector<8x8xf32>
    %1973 = arith.addf %1951, %1972 : vector<8x8xf32>
    %1974 = vector.shape_cast %1205 : vector<1x8xi1> to vector<1x8xi1>
    %1975 = vector.broadcast %1974 : vector<1x8xi1> to vector<8x8xi1>
    %1976 = vector.shape_cast %1966 : vector<8x1xf32> to vector<8x1xf32>
    %1977 = vector.broadcast %1976 : vector<8x1xf32> to vector<8x8xf32>
    %1978 = arith.select %1975, %1977, %1956 : vector<8x8xi1>, vector<8x8xf32>
    %1979 = vector.broadcast %1195 : vector<1x8xf32> to vector<8x8xf32>
    %1980 = arith.addf %1901, %1979 : vector<8x8xf32>
    %cst_767 = arith.constant dense<0xFF800000> : vector<8xf32>
    %1981 = vector.multi_reduction <maximumf>, %1980, %cst_767 [1] : vector<8x8xf32> to vector<8xf32>
    %1982 = vector.shape_cast %1981 : vector<8xf32> to vector<8x1xf32>
    %1983 = vector.broadcast %1982 : vector<8x1xf32> to vector<8x8xf32>
    %1984 = arith.cmpf oeq, %1980, %1983 : vector<8x8xf32>
    %cst_768 = arith.constant 8.000000e+00 : f32
    %1985 = vector.broadcast %cst_768 : f32 to vector<8x8xf32>
    %1986 = arith.select %1984, %1198, %1985 : vector<8x8xi1>, vector<8x8xf32>
    %cst_769 = arith.constant dense<0x7F800000> : vector<8xf32>
    %1987 = vector.multi_reduction <minimumf>, %1986, %cst_769 [1] : vector<8x8xf32> to vector<8xf32>
    %1988 = vector.shape_cast %1987 : vector<8xf32> to vector<8x1xf32>
    %cst_770 = arith.constant 0.000000e+00 : f32
    %1989 = vector.shape_cast %1207 : vector<1x8xi1> to vector<1x8xi1>
    %1990 = vector.broadcast %1989 : vector<1x8xi1> to vector<8x8xi1>
    %1991 = vector.shape_cast %1982 : vector<8x1xf32> to vector<8x1xf32>
    %1992 = vector.broadcast %1991 : vector<8x1xf32> to vector<8x8xf32>
    %1993 = vector.broadcast %cst_770 : f32 to vector<8x8xf32>
    %1994 = arith.select %1990, %1992, %1993 : vector<8x8xi1>, vector<8x8xf32>
    %1995 = arith.addf %1973, %1994 : vector<8x8xf32>
    %1996 = vector.shape_cast %1207 : vector<1x8xi1> to vector<1x8xi1>
    %1997 = vector.broadcast %1996 : vector<1x8xi1> to vector<8x8xi1>
    %1998 = vector.shape_cast %1988 : vector<8x1xf32> to vector<8x1xf32>
    %1999 = vector.broadcast %1998 : vector<8x1xf32> to vector<8x8xf32>
    %2000 = arith.select %1997, %1999, %1978 : vector<8x8xi1>, vector<8x8xf32>
    %2001 = vector.broadcast %1196 : vector<1x8xf32> to vector<8x8xf32>
    %2002 = arith.addf %1901, %2001 : vector<8x8xf32>
    %cst_771 = arith.constant dense<0xFF800000> : vector<8xf32>
    %2003 = vector.multi_reduction <maximumf>, %2002, %cst_771 [1] : vector<8x8xf32> to vector<8xf32>
    %2004 = vector.shape_cast %2003 : vector<8xf32> to vector<8x1xf32>
    %2005 = vector.broadcast %2004 : vector<8x1xf32> to vector<8x8xf32>
    %2006 = arith.cmpf oeq, %2002, %2005 : vector<8x8xf32>
    %cst_772 = arith.constant 8.000000e+00 : f32
    %2007 = vector.broadcast %cst_772 : f32 to vector<8x8xf32>
    %2008 = arith.select %2006, %1198, %2007 : vector<8x8xi1>, vector<8x8xf32>
    %cst_773 = arith.constant dense<0x7F800000> : vector<8xf32>
    %2009 = vector.multi_reduction <minimumf>, %2008, %cst_773 [1] : vector<8x8xf32> to vector<8xf32>
    %2010 = vector.shape_cast %2009 : vector<8xf32> to vector<8x1xf32>
    %cst_774 = arith.constant 0.000000e+00 : f32
    %2011 = vector.shape_cast %1209 : vector<1x8xi1> to vector<1x8xi1>
    %2012 = vector.broadcast %2011 : vector<1x8xi1> to vector<8x8xi1>
    %2013 = vector.shape_cast %2004 : vector<8x1xf32> to vector<8x1xf32>
    %2014 = vector.broadcast %2013 : vector<8x1xf32> to vector<8x8xf32>
    %2015 = vector.broadcast %cst_774 : f32 to vector<8x8xf32>
    %2016 = arith.select %2012, %2014, %2015 : vector<8x8xi1>, vector<8x8xf32>
    %2017 = arith.addf %1995, %2016 : vector<8x8xf32>
    %2018 = vector.shape_cast %1209 : vector<1x8xi1> to vector<1x8xi1>
    %2019 = vector.broadcast %2018 : vector<1x8xi1> to vector<8x8xi1>
    %2020 = vector.shape_cast %2010 : vector<8x1xf32> to vector<8x1xf32>
    %2021 = vector.broadcast %2020 : vector<8x1xf32> to vector<8x8xf32>
    %2022 = arith.select %2019, %2021, %2000 : vector<8x8xi1>, vector<8x8xf32>
    %c56_775 = arith.constant 56 : index
    %c0_776 = arith.constant 0 : index
    %2023 = vector.load %arg16[%c56_775, %c0_776] : memref<64x32xf32, #tpu.memory_space<vmem>>, vector<8x32xf32>
    %cst_777 = arith.constant dense<0.000000e+00> : vector<8x128xf32>
    %2024 = tpu.matmul %2023, %1187, %cst_777 {dimension_numbers = #tpu.dot_dimension_numbers<[1], [0], [0], [1], [0, 0, 1, 1], [], []>} : vector<8x32xf32>, vector<32x128xf32>, vector<8x128xf32> -> vector<8x128xf32>
    %2025 = arith.addf %2024, %1190 : vector<8x128xf32>
    %c56_778 = arith.constant 56 : index
    %c0_779 = arith.constant 0 : index
    %2026 = vector.load %arg12[%c56_778, %c0_779] : memref<64x128xf32, #tpu.memory_space<vmem>>, vector<8x128xf32>
    tpu.vector_store %arg12[%c56_778, %c0_779], %2025 {strides = array<i32>} : memref<64x128xf32, #tpu.memory_space<vmem>>, vector<8x128xf32>,
    %2027 = vector.extract_strided_slice %2025 {offsets = [0, 0], sizes = [8, 8], strides = [1, 1]} : vector<8x128xf32> to vector<8x8xf32>
    %cst_780 = arith.constant 0.000000e+00 : f32
    %2028 = vector.broadcast %cst_780 : f32 to vector<8x8xf32>
    %2029 = vector.broadcast %1192 : vector<1x8xf32> to vector<8x8xf32>
    %2030 = arith.addf %2017, %2029 : vector<8x8xf32>
    %cst_781 = arith.constant dense<0xFF800000> : vector<8xf32>
    %2031 = vector.multi_reduction <maximumf>, %2030, %cst_781 [1] : vector<8x8xf32> to vector<8xf32>
    %2032 = vector.shape_cast %2031 : vector<8xf32> to vector<8x1xf32>
    %2033 = vector.broadcast %2032 : vector<8x1xf32> to vector<8x8xf32>
    %2034 = arith.cmpf oeq, %2030, %2033 : vector<8x8xf32>
    %cst_782 = arith.constant 8.000000e+00 : f32
    %2035 = vector.broadcast %cst_782 : f32 to vector<8x8xf32>
    %2036 = arith.select %2034, %1198, %2035 : vector<8x8xi1>, vector<8x8xf32>
    %cst_783 = arith.constant dense<0x7F800000> : vector<8xf32>
    %2037 = vector.multi_reduction <minimumf>, %2036, %cst_783 [1] : vector<8x8xf32> to vector<8xf32>
    %2038 = vector.shape_cast %2037 : vector<8xf32> to vector<8x1xf32>
    %cst_784 = arith.constant 0.000000e+00 : f32
    %2039 = vector.shape_cast %1201 : vector<1x8xi1> to vector<1x8xi1>
    %2040 = vector.broadcast %2039 : vector<1x8xi1> to vector<8x8xi1>
    %2041 = vector.shape_cast %2032 : vector<8x1xf32> to vector<8x1xf32>
    %2042 = vector.broadcast %2041 : vector<8x1xf32> to vector<8x8xf32>
    %2043 = vector.broadcast %cst_784 : f32 to vector<8x8xf32>
    %2044 = arith.select %2040, %2042, %2043 : vector<8x8xi1>, vector<8x8xf32>
    %2045 = arith.addf %2027, %2044 : vector<8x8xf32>
    %2046 = vector.shape_cast %1201 : vector<1x8xi1> to vector<1x8xi1>
    %2047 = vector.broadcast %2046 : vector<1x8xi1> to vector<8x8xi1>
    %2048 = vector.shape_cast %2038 : vector<8x1xf32> to vector<8x1xf32>
    %2049 = vector.broadcast %2048 : vector<8x1xf32> to vector<8x8xf32>
    %2050 = arith.select %2047, %2049, %2028 : vector<8x8xi1>, vector<8x8xf32>
    %2051 = vector.broadcast %1193 : vector<1x8xf32> to vector<8x8xf32>
    %2052 = arith.addf %2017, %2051 : vector<8x8xf32>
    %cst_785 = arith.constant dense<0xFF800000> : vector<8xf32>
    %2053 = vector.multi_reduction <maximumf>, %2052, %cst_785 [1] : vector<8x8xf32> to vector<8xf32>
    %2054 = vector.shape_cast %2053 : vector<8xf32> to vector<8x1xf32>
    %2055 = vector.broadcast %2054 : vector<8x1xf32> to vector<8x8xf32>
    %2056 = arith.cmpf oeq, %2052, %2055 : vector<8x8xf32>
    %cst_786 = arith.constant 8.000000e+00 : f32
    %2057 = vector.broadcast %cst_786 : f32 to vector<8x8xf32>
    %2058 = arith.select %2056, %1198, %2057 : vector<8x8xi1>, vector<8x8xf32>
    %cst_787 = arith.constant dense<0x7F800000> : vector<8xf32>
    %2059 = vector.multi_reduction <minimumf>, %2058, %cst_787 [1] : vector<8x8xf32> to vector<8xf32>
    %2060 = vector.shape_cast %2059 : vector<8xf32> to vector<8x1xf32>
    %cst_788 = arith.constant 0.000000e+00 : f32
    %2061 = vector.shape_cast %1203 : vector<1x8xi1> to vector<1x8xi1>
    %2062 = vector.broadcast %2061 : vector<1x8xi1> to vector<8x8xi1>
    %2063 = vector.shape_cast %2054 : vector<8x1xf32> to vector<8x1xf32>
    %2064 = vector.broadcast %2063 : vector<8x1xf32> to vector<8x8xf32>
    %2065 = vector.broadcast %cst_788 : f32 to vector<8x8xf32>
    %2066 = arith.select %2062, %2064, %2065 : vector<8x8xi1>, vector<8x8xf32>
    %2067 = arith.addf %2045, %2066 : vector<8x8xf32>
    %2068 = vector.shape_cast %1203 : vector<1x8xi1> to vector<1x8xi1>
    %2069 = vector.broadcast %2068 : vector<1x8xi1> to vector<8x8xi1>
    %2070 = vector.shape_cast %2060 : vector<8x1xf32> to vector<8x1xf32>
    %2071 = vector.broadcast %2070 : vector<8x1xf32> to vector<8x8xf32>
    %2072 = arith.select %2069, %2071, %2050 : vector<8x8xi1>, vector<8x8xf32>
    %2073 = vector.broadcast %1194 : vector<1x8xf32> to vector<8x8xf32>
    %2074 = arith.addf %2017, %2073 : vector<8x8xf32>
    %cst_789 = arith.constant dense<0xFF800000> : vector<8xf32>
    %2075 = vector.multi_reduction <maximumf>, %2074, %cst_789 [1] : vector<8x8xf32> to vector<8xf32>
    %2076 = vector.shape_cast %2075 : vector<8xf32> to vector<8x1xf32>
    %2077 = vector.broadcast %2076 : vector<8x1xf32> to vector<8x8xf32>
    %2078 = arith.cmpf oeq, %2074, %2077 : vector<8x8xf32>
    %cst_790 = arith.constant 8.000000e+00 : f32
    %2079 = vector.broadcast %cst_790 : f32 to vector<8x8xf32>
    %2080 = arith.select %2078, %1198, %2079 : vector<8x8xi1>, vector<8x8xf32>
    %cst_791 = arith.constant dense<0x7F800000> : vector<8xf32>
    %2081 = vector.multi_reduction <minimumf>, %2080, %cst_791 [1] : vector<8x8xf32> to vector<8xf32>
    %2082 = vector.shape_cast %2081 : vector<8xf32> to vector<8x1xf32>
    %cst_792 = arith.constant 0.000000e+00 : f32
    %2083 = vector.shape_cast %1205 : vector<1x8xi1> to vector<1x8xi1>
    %2084 = vector.broadcast %2083 : vector<1x8xi1> to vector<8x8xi1>
    %2085 = vector.shape_cast %2076 : vector<8x1xf32> to vector<8x1xf32>
    %2086 = vector.broadcast %2085 : vector<8x1xf32> to vector<8x8xf32>
    %2087 = vector.broadcast %cst_792 : f32 to vector<8x8xf32>
    %2088 = arith.select %2084, %2086, %2087 : vector<8x8xi1>, vector<8x8xf32>
    %2089 = arith.addf %2067, %2088 : vector<8x8xf32>
    %2090 = vector.shape_cast %1205 : vector<1x8xi1> to vector<1x8xi1>
    %2091 = vector.broadcast %2090 : vector<1x8xi1> to vector<8x8xi1>
    %2092 = vector.shape_cast %2082 : vector<8x1xf32> to vector<8x1xf32>
    %2093 = vector.broadcast %2092 : vector<8x1xf32> to vector<8x8xf32>
    %2094 = arith.select %2091, %2093, %2072 : vector<8x8xi1>, vector<8x8xf32>
    %2095 = vector.broadcast %1195 : vector<1x8xf32> to vector<8x8xf32>
    %2096 = arith.addf %2017, %2095 : vector<8x8xf32>
    %cst_793 = arith.constant dense<0xFF800000> : vector<8xf32>
    %2097 = vector.multi_reduction <maximumf>, %2096, %cst_793 [1] : vector<8x8xf32> to vector<8xf32>
    %2098 = vector.shape_cast %2097 : vector<8xf32> to vector<8x1xf32>
    %2099 = vector.broadcast %2098 : vector<8x1xf32> to vector<8x8xf32>
    %2100 = arith.cmpf oeq, %2096, %2099 : vector<8x8xf32>
    %cst_794 = arith.constant 8.000000e+00 : f32
    %2101 = vector.broadcast %cst_794 : f32 to vector<8x8xf32>
    %2102 = arith.select %2100, %1198, %2101 : vector<8x8xi1>, vector<8x8xf32>
    %cst_795 = arith.constant dense<0x7F800000> : vector<8xf32>
    %2103 = vector.multi_reduction <minimumf>, %2102, %cst_795 [1] : vector<8x8xf32> to vector<8xf32>
    %2104 = vector.shape_cast %2103 : vector<8xf32> to vector<8x1xf32>
    %cst_796 = arith.constant 0.000000e+00 : f32
    %2105 = vector.shape_cast %1207 : vector<1x8xi1> to vector<1x8xi1>
    %2106 = vector.broadcast %2105 : vector<1x8xi1> to vector<8x8xi1>
    %2107 = vector.shape_cast %2098 : vector<8x1xf32> to vector<8x1xf32>
    %2108 = vector.broadcast %2107 : vector<8x1xf32> to vector<8x8xf32>
    %2109 = vector.broadcast %cst_796 : f32 to vector<8x8xf32>
    %2110 = arith.select %2106, %2108, %2109 : vector<8x8xi1>, vector<8x8xf32>
    %2111 = arith.addf %2089, %2110 : vector<8x8xf32>
    %2112 = vector.shape_cast %1207 : vector<1x8xi1> to vector<1x8xi1>
    %2113 = vector.broadcast %2112 : vector<1x8xi1> to vector<8x8xi1>
    %2114 = vector.shape_cast %2104 : vector<8x1xf32> to vector<8x1xf32>
    %2115 = vector.broadcast %2114 : vector<8x1xf32> to vector<8x8xf32>
    %2116 = arith.select %2113, %2115, %2094 : vector<8x8xi1>, vector<8x8xf32>
    %2117 = vector.broadcast %1196 : vector<1x8xf32> to vector<8x8xf32>
    %2118 = arith.addf %2017, %2117 : vector<8x8xf32>
    %cst_797 = arith.constant dense<0xFF800000> : vector<8xf32>
    %2119 = vector.multi_reduction <maximumf>, %2118, %cst_797 [1] : vector<8x8xf32> to vector<8xf32>
    %2120 = vector.shape_cast %2119 : vector<8xf32> to vector<8x1xf32>
    %2121 = vector.broadcast %2120 : vector<8x1xf32> to vector<8x8xf32>
    %2122 = arith.cmpf oeq, %2118, %2121 : vector<8x8xf32>
    %cst_798 = arith.constant 8.000000e+00 : f32
    %2123 = vector.broadcast %cst_798 : f32 to vector<8x8xf32>
    %2124 = arith.select %2122, %1198, %2123 : vector<8x8xi1>, vector<8x8xf32>
    %cst_799 = arith.constant dense<0x7F800000> : vector<8xf32>
    %2125 = vector.multi_reduction <minimumf>, %2124, %cst_799 [1] : vector<8x8xf32> to vector<8xf32>
    %2126 = vector.shape_cast %2125 : vector<8xf32> to vector<8x1xf32>
    %cst_800 = arith.constant 0.000000e+00 : f32
    %2127 = vector.shape_cast %1209 : vector<1x8xi1> to vector<1x8xi1>
    %2128 = vector.broadcast %2127 : vector<1x8xi1> to vector<8x8xi1>
    %2129 = vector.shape_cast %2120 : vector<8x1xf32> to vector<8x1xf32>
    %2130 = vector.broadcast %2129 : vector<8x1xf32> to vector<8x8xf32>
    %2131 = vector.broadcast %cst_800 : f32 to vector<8x8xf32>
    %2132 = arith.select %2128, %2130, %2131 : vector<8x8xi1>, vector<8x8xf32>
    %2133 = arith.addf %2111, %2132 : vector<8x8xf32>
    %2134 = vector.shape_cast %1209 : vector<1x8xi1> to vector<1x8xi1>
    %2135 = vector.broadcast %2134 : vector<1x8xi1> to vector<8x8xi1>
    %2136 = vector.shape_cast %2126 : vector<8x1xf32> to vector<8x1xf32>
    %2137 = vector.broadcast %2136 : vector<8x1xf32> to vector<8x8xf32>
    %2138 = arith.select %2135, %2137, %2116 : vector<8x8xi1>, vector<8x8xf32>
    %2139 = tpu.concatenate %1326, %1442, %1558, %1674, %1790, %1906, %2022, %2138 in 0 : vector<8x8xf32>, vector<8x8xf32>, vector<8x8xf32>, vector<8x8xf32>, vector<8x8xf32>, vector<8x8xf32>, vector<8x8xf32>, vector<8x8xf32> -> vector<64x8xf32>
    %2140 = arith.fptosi %2139 : vector<64x8xf32> to vector<64x8xi32>
    %c0_801 = arith.constant 0 : index
    %c0_802 = arith.constant 0 : index
    %2141 = vector.load %arg13[%c0_801, %c0_802] : memref<64x8xi32, #tpu.memory_space<vmem>>, vector<64x8xi32>
    tpu.vector_store %arg13[%c0_801, %c0_802], %2140 {strides = array<i32>} : memref<64x8xi32, #tpu.memory_space<vmem>>, vector<64x8xi32>,
    %c0_803 = arith.constant 0 : index
    %c0_804 = arith.constant 0 : index
    %2142 = vector.load %arg10[%c0_803, %c0_804] : memref<1x8xf32, #tpu.memory_space<vmem>>, vector<1x8xf32>
    %2143 = vector.broadcast %2142 : vector<1x8xf32> to vector<8x8xf32>
    %2144 = arith.addf %2133, %2143 : vector<8x8xf32>
    %c0_805 = arith.constant 0 : index
    %c0_806 = arith.constant 0 : index
    %2145 = vector.load %arg14[%c0_805, %c0_806] : memref<8x8xf32, #tpu.memory_space<vmem>>, vector<8x8xf32>
    tpu.vector_store %arg14[%c0_805, %c0_806], %2144 {strides = array<i32>} : memref<8x8xf32, #tpu.memory_space<vmem>>, vector<8x8xf32>,
    return
  }
  func.func @transform_0(%arg0: i32, %arg1: memref<128xi32, #tpu.memory_space<smem>>) -> (i32, i32) {
    %c0_i32 = arith.constant 0 : i32
    %c0_i32_0 = arith.constant 0 : i32
    %c0_i32_1 = arith.constant 0 : i32
    return %c0_i32, %c0_i32_0 : i32, i32
  }
  func.func @transform_1(%arg0: i32, %arg1: memref<128xi32, #tpu.memory_space<smem>>) -> (i32, i32) {
    %c0_i32 = arith.constant 0 : i32
    %c0_i32_0 = arith.constant 0 : i32
    %c0_i32_1 = arith.constant 0 : i32
    return %c0_i32, %c0_i32_0 : i32, i32
  }
  func.func @transform_2(%arg0: i32, %arg1: memref<128xi32, #tpu.memory_space<smem>>) -> (i32, i32) {
    %c0_i32 = arith.constant 0 : i32
    %c0_i32_0 = arith.constant 0 : i32
    %c0_i32_1 = arith.constant 0 : i32
    return %c0_i32, %c0_i32_0 : i32, i32
  }
  func.func @transform_3(%arg0: i32, %arg1: memref<128xi32, #tpu.memory_space<smem>>) -> (i32, i32) {
    %c0_i32 = arith.constant 0 : i32
    %c0_i32_0 = arith.constant 0 : i32
    %c0_i32_1 = arith.constant 0 : i32
    return %c0_i32, %c0_i32_0 : i32, i32
  }
  func.func @transform_4(%arg0: i32, %arg1: memref<128xi32, #tpu.memory_space<smem>>) -> (i32, i32) {
    %c0_i32 = arith.constant 0 : i32
    %c0_i32_0 = arith.constant 0 : i32
    %c0_i32_1 = arith.constant 0 : i32
    return %c0_i32, %c0_i32_0 : i32, i32
  }
  func.func @transform_5(%arg0: i32, %arg1: memref<128xi32, #tpu.memory_space<smem>>) -> (i32, i32) {
    %c0_i32 = arith.constant 0 : i32
    %c0_i32_0 = arith.constant 0 : i32
    %c0_i32_1 = arith.constant 0 : i32
    return %c0_i32, %c0_i32_0 : i32, i32
  }
  func.func @transform_6(%arg0: i32, %arg1: memref<128xi32, #tpu.memory_space<smem>>) -> (i32, i32) {
    %c0_i32 = arith.constant 0 : i32
    %c0_i32_0 = arith.constant 0 : i32
    %c0_i32_1 = arith.constant 0 : i32
    return %c0_i32, %c0_i32_0 : i32, i32
  }
  func.func @transform_7(%arg0: i32, %arg1: memref<128xi32, #tpu.memory_space<smem>>) -> (i32, i32) {
    %c0_i32 = arith.constant 0 : i32
    %c0_i32_0 = arith.constant 0 : i32
    %c0_i32_1 = arith.constant 0 : i32
    return %c0_i32, %c0_i32_0 : i32, i32
  }
  func.func @transform_8(%arg0: i32, %arg1: memref<128xi32, #tpu.memory_space<smem>>) -> (i32, i32) {
    %c0_i32 = arith.constant 0 : i32
    %c0_i32_0 = arith.constant 0 : i32
    %c0_i32_1 = arith.constant 0 : i32
    return %c0_i32, %c0_i32_0 : i32, i32
  }
  func.func @transform_9(%arg0: i32, %arg1: memref<128xi32, #tpu.memory_space<smem>>) -> (i32, i32) {
    %c0_i32 = arith.constant 0 : i32
    %c0_i32_0 = arith.constant 0 : i32
    %c0_i32_1 = arith.constant 0 : i32
    return %c0_i32, %c0_i32_0 : i32, i32
  }
  func.func @transform_10(%arg0: i32, %arg1: memref<128xi32, #tpu.memory_space<smem>>) -> (i32, i32) {
    %c0_i32 = arith.constant 0 : i32
    %c0_i32_0 = arith.constant 0 : i32
    return %arg0, %c0_i32 : i32, i32
  }
  func.func @transform_11(%arg0: i32, %arg1: memref<128xi32, #tpu.memory_space<smem>>) -> (i32, i32) {
    %c0_i32 = arith.constant 0 : i32
    %c0_i32_0 = arith.constant 0 : i32
    return %arg0, %c0_i32 : i32, i32
  }
  func.func @transform_12(%arg0: i32, %arg1: memref<128xi32, #tpu.memory_space<smem>>) -> (i32, i32) {
    %c0_i32 = arith.constant 0 : i32
    %c0_i32_0 = arith.constant 0 : i32
    return %arg0, %c0_i32 : i32, i32
  }
}

</mosaic_0001>

<llo_original>
// kernel: tpu_custom_call.1
$region0: #{tpu_custom_call.1}
  #allocation0 [shape = 'u32[]', space=smem, size = 0x4, offset = 0x4, fixed_abs, tag = 'smem constant byte address 0x4 - core index']
  #allocation1 [shape = 'u32[144,128]{1,0:T(1,128)}', space=vmem, size = 0x12000, scoped, tag = 'internal scratch']
  #allocation2 [shape = 'f32[64,128]{1,0:T(8,128)}', space=vmem, size = 0x8000, scoped, tag = 'scratch operand']
  #allocation3 [shape = 'f32[64,32]{1,0:T(8,128)}', space=vmem, size = 0x8000, scoped, tag = 'scratch operand']
  #allocation4 [shape = 's32[1]{0}', space=sflag, size = 0x4, scoped, tag = 'scoped memory for tpu_custom_call.1']
  #allocation5 [shape = 'u8[512]{0}', space=smem, size = 0x200, scoped, tag = 'prefetched SMEM operand 0']
  %s0 = inlined_call_operand.hbm [shape: s32[128], index: 0, kind: input, shape index: {}]
  %s1 = inlined_call_operand.hbm [shape: f32[20,128], index: 1, kind: input, shape index: {}]
  %s2 = inlined_call_operand.hbm [shape: f32[20,128], index: 2, kind: input, shape index: {}]
  %s3 = inlined_call_operand.hbm [shape: f32[32,128], index: 3, kind: input, shape index: {}]
  %s4 = inlined_call_operand.vmem [shape: f32[8,32], index: 4, kind: input, shape index: {}]
  %s5 = inlined_call_operand.vmem [shape: f32[8,32], index: 5, kind: input, shape index: {}]
  %s6 = inlined_call_operand.hbm [shape: f32[32,128], index: 6, kind: input, shape index: {}]
  %s7 = inlined_call_operand.vmem [shape: f32[1,128], index: 7, kind: input, shape index: {}]
  %s8 = inlined_call_operand.vmem [shape: f32[8,8], index: 8, kind: input, shape index: {}]
  %s9 = inlined_call_operand.vmem [shape: f32[1,8], index: 9, kind: input, shape index: {}]
  %s10 = inlined_call_operand.vmem [shape: f32[8,8], index: 10, kind: input, shape index: {}]
  %s11 = inlined_call_operand.hbm [shape: f32[128,128], index: 11, kind: output, shape index: {0}]
  %s12 = inlined_call_operand.vmem [shape: s32[128,8], index: 12, kind: output, shape index: {1}]
  %s13 = inlined_call_operand.vmem [shape: f32[16,8], index: 13, kind: output, shape index: {2}]
  %14 = xla_tuple %s11, %s12, %s13
  %s15 = sld [smem:[#allocation0]]
  $region105: #{tpu_custom_call.1} parent=0
    _
  %s17 = ssub.s32 1, %s15
  %s18 = scalar_select 0, %s17, %s15
  %20 = dma.hbm_to_smem %s0, 16, [#allocation5], [#allocation4]
  %21 = dma.done [#allocation4], 16
  %22 = sfence
  $region1: #{tpu_custom_call.1} parent=0
    #allocation6 [shape = 'u8[12288]{0}', space=vmem, size = 0x3000, scoped, tag = 'input window, operand 1, single buffered']
    #allocation7 [shape = 's32[2]{0}', space=sflag, size = 0x8, scoped, tag = 'scoped memory for tpu_custom_call.1']
    #allocation8 [shape = 's32[2]{0}', space=sflag, size = 0x8, scoped, tag = 'scoped memory for tpu_custom_call.1']
    #allocation9 [shape = 'u8[12288]{0}', space=vmem, size = 0x3000, scoped, tag = 'input window, operand 2, single buffered']
    #allocation10 [shape = 's32[1]{0}', space=sflag, size = 0x4, scoped, tag = 'scoped memory for tpu_custom_call.1']
    #allocation11 [shape = 'u8[16384]{0}', space=vmem, size = 0x4000, scoped, tag = 'input window, operand 3, single buffered']
    #allocation12 [shape = 'u8[16384]{0}', space=vmem, size = 0x4000, scoped, tag = 'input window, operand 6, single buffered']
    #allocation13 [shape = 's32[1]{0}', space=sflag, size = 0x4, scoped, tag = 'scoped memory for tpu_custom_call.1']
    #allocation14 [shape = 'u8[65536]{0}', space=vmem, size = 0x10000, scoped, tag = 'output window, operand 0']
    %23 = vsyncpa [#allocation7], 0
    %24 = vsyncpa [#allocation10], 0
    %25 = vsyncpa [#allocation13], 0
    %26 = vsyncpa [#allocation8], 0
    %s27 = scalar_lea.sflag [#allocation8], 1
    %28 = vsyncpa %s27, 0
    loop: start=0, step=1, limit=4
    $region2: #{tpu_custom_call.1} parent=1 // loop_pre_header
      _
    $region3: #{tpu_custom_call.1} parent=1 // loop_header
      %s30 = sphi 0, %s34
      %p31 = scmp.ge.s32.totalorder %s30, 4
      %s38 = sphi 0, %s38
      %s40 = sphi 0, %s38
      %s41 = sphi 0, %s40
      %s55 = sphi 0, %s41
      %s59 = sphi 0, %s59
      %s61 = sphi 0, %s59
      %s62 = sphi 0, %s61
      %s76 = sphi 0, %s62
      %s80 = sphi 0, %s80
      %s82 = sphi 0, %s80
      %s83 = sphi 0, %s82
      %s97 = sphi 0, %s83
      %s101 = sphi 0, %s101
      %s103 = sphi 0, %s101
      %s104 = sphi 0, %s103
      %s118 = sphi 0, %s104
      %s122 = sphi 0, %s122
      %s124 = sphi 0, %s122
      %s125 = sphi 0, %s124
      %s139 = sphi 0, %s125
      %s143 = sphi 0, %s143
      %s145 = sphi 0, %s143
      %s146 = sphi 0, %s145
      %s160 = sphi 0, %s146
      %s164 = sphi 0, %s164
      %s166 = sphi 0, %s164
      %s167 = sphi 0, %s166
      %s181 = sphi 0, %s167
      %s185 = sphi 0, %s185
      %s187 = sphi 0, %s185
      %s188 = sphi 0, %s187
      %s202 = sphi 0, %s188
      %s206 = sphi 0, %s206
      %s208 = sphi 0, %s206
      %s209 = sphi 0, %s208
      %s223 = sphi 0, %s209
      %s227 = sphi 0, %s227
      %s229 = sphi 0, %s227
      %s230 = sphi 0, %s229
      %s244 = sphi 0, %s230
      %s250 = sphi 0, %s252
      %s253 = sphi 0, %s250
      %s254 = sphi 0, %s253
      %s270 = sphi 0, %s254
      %s276 = sphi 0, %s278
      %s279 = sphi 0, %s276
      %s280 = sphi 0, %s279
      %s296 = sphi 0, %s280
      %s302 = sphi 0, %s304
      %s305 = sphi 0, %s302
      %s306 = sphi 0, %s305
      %s322 = sphi 0, %s306
    $region4: #{tpu_custom_call.1} parent=1 // loop_header_branch
      %33 = sbr.rel (%p31) target = $region8
    $region5: #{tpu_custom_call.1} parent=1 // loop_body
      %s35 = ssub.s32 %s30, 1
      %s36 = ssub.s32 %s30, 2
      %s37 = sadd.s32 %s30, 1
      %s39 = sadd.s32 %s38, 1
      %p42 = scmp.eq.s32.totalorder %s30, 1
      %p43 = scmp.ne.s32.totalorder %s38, %s40
      %p44 = scmp.eq.s32.totalorder %s30, 0
      %p45 = por %p43, %p44
      %p46 = scmp.ne.s32.totalorder %s38, %s40
      %p47 = scmp.eq.s32.totalorder %s35, 1
      %p48 = por %p46, %p47
      %p49 = scmp.ne.s32.totalorder %s40, %s41
      %p50 = scmp.eq.s32.totalorder %s35, 0
      %p51 = por %p49, %p50
      %p52 = scmp.ne.s32.totalorder %s40, %s41
      %p53 = scmp.eq.s32.totalorder %s36, 1
      %p54 = por %p52, %p53
      %p56 = scmp.ne.s32.totalorder %s41, %s55
      %p57 = scmp.eq.s32.totalorder %s36, 0
      %p58 = por %p56, %p57
      %s60 = sadd.s32 %s59, 1
      %p63 = scmp.eq.s32.totalorder %s30, 1
      %p64 = scmp.ne.s32.totalorder %s59, %s61
      %p65 = scmp.eq.s32.totalorder %s30, 0
      %p66 = por %p64, %p65
      %p67 = scmp.ne.s32.totalorder %s59, %s61
      %p68 = scmp.eq.s32.totalorder %s35, 1
      %p69 = por %p67, %p68
      %p70 = scmp.ne.s32.totalorder %s61, %s62
      %p71 = scmp.eq.s32.totalorder %s35, 0
      %p72 = por %p70, %p71
      %p73 = scmp.ne.s32.totalorder %s61, %s62
      %p74 = scmp.eq.s32.totalorder %s36, 1
      %p75 = por %p73, %p74
      %p77 = scmp.ne.s32.totalorder %s62, %s76
      %p78 = scmp.eq.s32.totalorder %s36, 0
      %p79 = por %p77, %p78
      %s81 = sadd.s32 %s80, 1
      %p84 = scmp.eq.s32.totalorder %s30, 1
      %p85 = scmp.ne.s32.totalorder %s80, %s82
      %p86 = scmp.eq.s32.totalorder %s30, 0
      %p87 = por %p85, %p86
      %p88 = scmp.ne.s32.totalorder %s80, %s82
      %p89 = scmp.eq.s32.totalorder %s35, 1
      %p90 = por %p88, %p89
      %p91 = scmp.ne.s32.totalorder %s82, %s83
      %p92 = scmp.eq.s32.totalorder %s35, 0
      %p93 = por %p91, %p92
      %p94 = scmp.ne.s32.totalorder %s82, %s83
      %p95 = scmp.eq.s32.totalorder %s36, 1
      %p96 = por %p94, %p95
      %p98 = scmp.ne.s32.totalorder %s83, %s97
      %p99 = scmp.eq.s32.totalorder %s36, 0
      %p100 = por %p98, %p99
      %s102 = sadd.s32 %s101, 1
      %p105 = scmp.eq.s32.totalorder %s30, 1
      %p106 = scmp.ne.s32.totalorder %s101, %s103
      %p107 = scmp.eq.s32.totalorder %s30, 0
      %p108 = por %p106, %p107
      %p109 = scmp.ne.s32.totalorder %s101, %s103
      %p110 = scmp.eq.s32.totalorder %s35, 1
      %p111 = por %p109, %p110
      %p112 = scmp.ne.s32.totalorder %s103, %s104
      %p113 = scmp.eq.s32.totalorder %s35, 0
      %p114 = por %p112, %p113
      %p115 = scmp.ne.s32.totalorder %s103, %s104
      %p116 = scmp.eq.s32.totalorder %s36, 1
      %p117 = por %p115, %p116
      %p119 = scmp.ne.s32.totalorder %s104, %s118
      %p120 = scmp.eq.s32.totalorder %s36, 0
      %p121 = por %p119, %p120
      %s123 = sadd.s32 %s122, 1
      %p126 = scmp.eq.s32.totalorder %s30, 1
      %p127 = scmp.ne.s32.totalorder %s122, %s124
      %p128 = scmp.eq.s32.totalorder %s30, 0
      %p129 = por %p127, %p128
      %p130 = scmp.ne.s32.totalorder %s122, %s124
      %p131 = scmp.eq.s32.totalorder %s35, 1
      %p132 = por %p130, %p131
      %p133 = scmp.ne.s32.totalorder %s124, %s125
      %p134 = scmp.eq.s32.totalorder %s35, 0
      %p135 = por %p133, %p134
      %p136 = scmp.ne.s32.totalorder %s124, %s125
      %p137 = scmp.eq.s32.totalorder %s36, 1
      %p138 = por %p136, %p137
      %p140 = scmp.ne.s32.totalorder %s125, %s139
      %p141 = scmp.eq.s32.totalorder %s36, 0
      %p142 = por %p140, %p141
      %s144 = sadd.s32 %s143, 1
      %p147 = scmp.eq.s32.totalorder %s30, 1
      %p148 = scmp.ne.s32.totalorder %s143, %s145
      %p149 = scmp.eq.s32.totalorder %s30, 0
      %p150 = por %p148, %p149
      %p151 = scmp.ne.s32.totalorder %s143, %s145
      %p152 = scmp.eq.s32.totalorder %s35, 1
      %p153 = por %p151, %p152
      %p154 = scmp.ne.s32.totalorder %s145, %s146
      %p155 = scmp.eq.s32.totalorder %s35, 0
      %p156 = por %p154, %p155
      %p157 = scmp.ne.s32.totalorder %s145, %s146
      %p158 = scmp.eq.s32.totalorder %s36, 1
      %p159 = por %p157, %p158
      %p161 = scmp.ne.s32.totalorder %s146, %s160
      %p162 = scmp.eq.s32.totalorder %s36, 0
      %p163 = por %p161, %p162
      %s165 = sadd.s32 %s164, 1
      %p168 = scmp.eq.s32.totalorder %s30, 1
      %p169 = scmp.ne.s32.totalorder %s164, %s166
      %p170 = scmp.eq.s32.totalorder %s30, 0
      %p171 = por %p169, %p170
      %p172 = scmp.ne.s32.totalorder %s164, %s166
      %p173 = scmp.eq.s32.totalorder %s35, 1
      %p174 = por %p172, %p173
      %p175 = scmp.ne.s32.totalorder %s166, %s167
      %p176 = scmp.eq.s32.totalorder %s35, 0
      %p177 = por %p175, %p176
      %p178 = scmp.ne.s32.totalorder %s166, %s167
      %p179 = scmp.eq.s32.totalorder %s36, 1
      %p180 = por %p178, %p179
      %p182 = scmp.ne.s32.totalorder %s167, %s181
      %p183 = scmp.eq.s32.totalorder %s36, 0
      %p184 = por %p182, %p183
      %s186 = sadd.s32 %s185, 1
      %p189 = scmp.eq.s32.totalorder %s30, 1
      %p190 = scmp.ne.s32.totalorder %s185, %s187
      %p191 = scmp.eq.s32.totalorder %s30, 0
      %p192 = por %p190, %p191
      %p193 = scmp.ne.s32.totalorder %s185, %s187
      %p194 = scmp.eq.s32.totalorder %s35, 1
      %p195 = por %p193, %p194
      %p196 = scmp.ne.s32.totalorder %s187, %s188
      %p197 = scmp.eq.s32.totalorder %s35, 0
      %p198 = por %p196, %p197
      %p199 = scmp.ne.s32.totalorder %s187, %s188
      %p200 = scmp.eq.s32.totalorder %s36, 1
      %p201 = por %p199, %p200
      %p203 = scmp.ne.s32.totalorder %s188, %s202
      %p204 = scmp.eq.s32.totalorder %s36, 0
      %p205 = por %p203, %p204
      %s207 = sadd.s32 %s206, 1
      %p210 = scmp.eq.s32.totalorder %s30, 1
      %p211 = scmp.ne.s32.totalorder %s206, %s208
      %p212 = scmp.eq.s32.totalorder %s30, 0
      %p213 = por %p211, %p212
      %p214 = scmp.ne.s32.totalorder %s206, %s208
      %p215 = scmp.eq.s32.totalorder %s35, 1
      %p216 = por %p214, %p215
      %p217 = scmp.ne.s32.totalorder %s208, %s209
      %p218 = scmp.eq.s32.totalorder %s35, 0
      %p219 = por %p217, %p218
      %p220 = scmp.ne.s32.totalorder %s208, %s209
      %p221 = scmp.eq.s32.totalorder %s36, 1
      %p222 = por %p220, %p221
      %p224 = scmp.ne.s32.totalorder %s209, %s223
      %p225 = scmp.eq.s32.totalorder %s36, 0
      %p226 = por %p224, %p225
      %s228 = sadd.s32 %s227, 1
      %p231 = scmp.eq.s32.totalorder %s30, 1
      %p232 = scmp.ne.s32.totalorder %s227, %s229
      %p233 = scmp.eq.s32.totalorder %s30, 0
      %p234 = por %p232, %p233
      %p235 = scmp.ne.s32.totalorder %s227, %s229
      %p236 = scmp.eq.s32.totalorder %s35, 1
      %p237 = por %p235, %p236
      %p238 = scmp.ne.s32.totalorder %s229, %s230
      %p239 = scmp.eq.s32.totalorder %s35, 0
      %p240 = por %p238, %p239
      %p241 = scmp.ne.s32.totalorder %s229, %s230
      %p242 = scmp.eq.s32.totalorder %s36, 1
      %p243 = por %p241, %p242
      %p245 = scmp.ne.s32.totalorder %s230, %s244
      %p246 = scmp.eq.s32.totalorder %s36, 0
      %p247 = por %p245, %p246
      %s248 = ssub.s32 %s30, %s37
      %p249 = scmp.eq.s32.totalorder %s248, 0
      %s251 = sadd.s32 %s250, 1
      %s252 = scalar_select %p249, %s250, %s251
      %p255 = pneg %p249
      %p256 = scmp.eq.s32.totalorder %s30, 1
      %p257 = por %p255, %p256
      %p258 = scmp.ne.s32.totalorder %s250, %s253
      %p259 = scmp.eq.s32.totalorder %s30, 0
      %p260 = por %p258, %p259
      %p261 = scmp.ne.s32.totalorder %s250, %s253
      %p262 = scmp.eq.s32.totalorder %s35, 1
      %p263 = por %p261, %p262
      %p264 = scmp.ne.s32.totalorder %s253, %s254
      %p265 = scmp.eq.s32.totalorder %s35, 0
      %p266 = por %p264, %p265
      %p267 = scmp.ne.s32.totalorder %s253, %s254
      %p268 = scmp.eq.s32.totalorder %s36, 1
      %p269 = por %p267, %p268
      %p271 = scmp.ne.s32.totalorder %s254, %s270
      %p272 = scmp.eq.s32.totalorder %s36, 0
      %p273 = por %p271, %p272
      %s274 = ssub.s32 %s30, %s37
      %p275 = scmp.eq.s32.totalorder %s274, 0
      %s277 = sadd.s32 %s276, 1
      %s278 = scalar_select %p275, %s276, %s277
      %p281 = pneg %p275
      %p282 = scmp.eq.s32.totalorder %s30, 1
      %p283 = por %p281, %p282
      %p284 = scmp.ne.s32.totalorder %s276, %s279
      %p285 = scmp.eq.s32.totalorder %s30, 0
      %p286 = por %p284, %p285
      %p287 = scmp.ne.s32.totalorder %s276, %s279
      %p288 = scmp.eq.s32.totalorder %s35, 1
      %p289 = por %p287, %p288
      %p290 = scmp.ne.s32.totalorder %s279, %s280
      %p291 = scmp.eq.s32.totalorder %s35, 0
      %p292 = por %p290, %p291
      %p293 = scmp.ne.s32.totalorder %s279, %s280
      %p294 = scmp.eq.s32.totalorder %s36, 1
      %p295 = por %p293, %p294
      %p297 = scmp.ne.s32.totalorder %s280, %s296
      %p298 = scmp.eq.s32.totalorder %s36, 0
      %p299 = por %p297, %p298
      %s300 = ssub.s32 %s30, %s37
      %p301 = scmp.eq.s32.totalorder %s300, 0
      %s303 = sadd.s32 %s302, 1
      %s304 = scalar_select %p301, %s302, %s303
      %p307 = pneg %p301
      %p308 = scmp.eq.s32.totalorder %s30, 1
      %p309 = por %p307, %p308
      %p310 = scmp.ne.s32.totalorder %s302, %s305
      %p311 = scmp.eq.s32.totalorder %s30, 0
      %p312 = por %p310, %p311
      %p313 = scmp.ne.s32.totalorder %s302, %s305
      %p314 = scmp.eq.s32.totalorder %s35, 1
      %p315 = por %p313, %p314
      %p316 = scmp.ne.s32.totalorder %s305, %s306
      %p317 = scmp.eq.s32.totalorder %s35, 0
      %p318 = por %p316, %p317
      %p319 = scmp.ne.s32.totalorder %s305, %s306
      %p320 = scmp.eq.s32.totalorder %s36, 1
      %p321 = por %p319, %p320
      %p323 = scmp.ne.s32.totalorder %s306, %s322
      %p324 = scmp.eq.s32.totalorder %s36, 0
      %p325 = por %p323, %p324
      %p326 = scmp.le.s32.totalorder 1, %s30
      %p327 = scmp.lt.s32.totalorder %s30, 3
      %p328 = pnand %p326, %p327
      %p329 = pneg %p328
      // Predicated region
      $region9: #{tpu_custom_call.1} parent=5 // pred_check
        _
      $region10: #{tpu_custom_call.1} parent=5 // pred_check_branch
        %331 = sbr.rel (%p328) target = $region12
      $region11: #{tpu_custom_call.1} parent=5 // pred_region
        %s332 = ssub.s32 %s30, 1
        // Predicated region
        $region13: #{tpu_custom_call.1} parent=11 // pred_check
          %p333 = pneg %p51
        $region14: #{tpu_custom_call.1} parent=11 // pred_check_branch
          %335 = sbr.rel (%p333) target = $region16
        $region15: #{tpu_custom_call.1} parent=11 // pred_region
          %s337 = ssub.s32 384, 384
          %338 = vsyncadd [#allocation7], %s337
          %s339 = sshll.u32 [#allocation6], 4
          %s340 = int_to_ptr.vmem [resolvable:$true] %s339
          %345 = dma.hbm_to_vmem [thread:$0]  %s1, 384, %s340, [#allocation7], 128, 128, 8
        $region16: #{tpu_custom_call.1} parent=11 // pred_fallthru
          _
        // Predicated region
        $region17: #{tpu_custom_call.1} parent=11 // pred_check
          %p346 = pneg %p72
        $region18: #{tpu_custom_call.1} parent=11 // pred_check_branch
          %348 = sbr.rel (%p346) target = $region20
        $region19: #{tpu_custom_call.1} parent=11 // pred_region
          %s350 = ssub.s32 384, 384
          %351 = vsyncadd [#allocation10], %s350
          %s352 = sshll.u32 [#allocation9], 4
          %s353 = int_to_ptr.vmem [resolvable:$true] %s352
          %358 = dma.hbm_to_vmem [thread:$0]  %s2, 384, %s353, [#allocation10], 128, 128, 8
        $region20: #{tpu_custom_call.1} parent=11 // pred_fallthru
          _
        // Predicated region
        $region21: #{tpu_custom_call.1} parent=11 // pred_check
          %p359 = pneg %p93
        $region22: #{tpu_custom_call.1} parent=11 // pred_check_branch
          %361 = sbr.rel (%p359) target = $region24
        $region23: #{tpu_custom_call.1} parent=11 // pred_region
          %s363 = ssub.s32 512, 512
          %364 = vsyncadd [#allocation10], %s363
          %s365 = sshll.u32 [#allocation11], 4
          %s366 = int_to_ptr.vmem [resolvable:$true] %s365
          %371 = dma.hbm_to_vmem [thread:$0]  %s3, 512, %s366, [#allocation10], 128, 128, 8
        $region24: #{tpu_custom_call.1} parent=11 // pred_fallthru
          _
        // Predicated region
        $region25: #{tpu_custom_call.1} parent=11 // pred_check
          %p372 = pneg %p114
        $region26: #{tpu_custom_call.1} parent=11 // pred_check_branch
          %374 = sbr.rel (%p372) target = $region28
        $region27: #{tpu_custom_call.1} parent=11 // pred_region
          _
        $region28: #{tpu_custom_call.1} parent=11 // pred_fallthru
          _
        // Predicated region
        $region29: #{tpu_custom_call.1} parent=11 // pred_check
          %p375 = pneg %p135
        $region30: #{tpu_custom_call.1} parent=11 // pred_check_branch
          %377 = sbr.rel (%p375) target = $region32
        $region31: #{tpu_custom_call.1} parent=11 // pred_region
          _
        $region32: #{tpu_custom_call.1} parent=11 // pred_fallthru
          _
        // Predicated region
        $region33: #{tpu_custom_call.1} parent=11 // pred_check
          %p378 = pneg %p156
        $region34: #{tpu_custom_call.1} parent=11 // pred_check_branch
          %380 = sbr.rel (%p378) target = $region36
        $region35: #{tpu_custom_call.1} parent=11 // pred_region
          %s382 = ssub.s32 512, 512
          %383 = vsyncadd [#allocation13], %s382
          %s384 = sshll.u32 [#allocation12], 4
          %s385 = int_to_ptr.vmem [resolvable:$true] %s384
          %390 = dma.hbm_to_vmem [thread:$0]  %s6, 512, %s385, [#allocation13], 128, 128, 8
        $region36: #{tpu_custom_call.1} parent=11 // pred_fallthru
          _
        // Predicated region
        $region37: #{tpu_custom_call.1} parent=11 // pred_check
          %p391 = pneg %p177
        $region38: #{tpu_custom_call.1} parent=11 // pred_check_branch
          %393 = sbr.rel (%p391) target = $region40
        $region39: #{tpu_custom_call.1} parent=11 // pred_region
          _
        $region40: #{tpu_custom_call.1} parent=11 // pred_fallthru
          _
        // Predicated region
        $region41: #{tpu_custom_call.1} parent=11 // pred_check
          %p394 = pneg %p198
        $region42: #{tpu_custom_call.1} parent=11 // pred_check_branch
          %396 = sbr.rel (%p394) target = $region44
        $region43: #{tpu_custom_call.1} parent=11 // pred_region
          _
        $region44: #{tpu_custom_call.1} parent=11 // pred_fallthru
          _
        // Predicated region
        $region45: #{tpu_custom_call.1} parent=11 // pred_check
          %p397 = pneg %p219
        $region46: #{tpu_custom_call.1} parent=11 // pred_check_branch
          %399 = sbr.rel (%p397) target = $region48
        $region47: #{tpu_custom_call.1} parent=11 // pred_region
          _
        $region48: #{tpu_custom_call.1} parent=11 // pred_fallthru
          _
        // Predicated region
        $region49: #{tpu_custom_call.1} parent=11 // pred_check
          %p400 = pneg %p240
        $region50: #{tpu_custom_call.1} parent=11 // pred_check_branch
          %402 = sbr.rel (%p400) target = $region52
        $region51: #{tpu_custom_call.1} parent=11 // pred_region
          _
        $region52: #{tpu_custom_call.1} parent=11 // pred_fallthru
          _
      $region12: #{tpu_custom_call.1} parent=5 // pred_fallthru
        _
      %p403 = scmp.lt.s32.totalorder %s30, 2
      // Predicated region
      $region53: #{tpu_custom_call.1} parent=5 // pred_check
        %p404 = pneg %p403
      $region54: #{tpu_custom_call.1} parent=5 // pred_check_branch
        %406 = sbr.rel (%p404) target = $region56
      $region55: #{tpu_custom_call.1} parent=5 // pred_region
        _
      $region56: #{tpu_custom_call.1} parent=5 // pred_fallthru
        _
      %p407 = scmp.le.s32.totalorder 1, %s30
      %p408 = scmp.lt.s32.totalorder %s30, 3
      %p409 = pnand %p407, %p408
      %p410 = pneg %p409
      // Predicated region
      $region57: #{tpu_custom_call.1} parent=5 // pred_check
        _
      $region58: #{tpu_custom_call.1} parent=5 // pred_check_branch
        %412 = sbr.rel (%p409) target = $region60
      $region59: #{tpu_custom_call.1} parent=5 // pred_region
        %s413 = ssub.s32 %s30, 1
        // Predicated region
        $region61: #{tpu_custom_call.1} parent=59 // pred_check
          %p414 = pneg %p51
        $region62: #{tpu_custom_call.1} parent=59 // pred_check_branch
          %416 = sbr.rel (%p414) target = $region64
        $region63: #{tpu_custom_call.1} parent=59 // pred_region
          %417 = dma.done [#allocation7], 384
        $region64: #{tpu_custom_call.1} parent=59 // pred_fallthru
          _
        // Predicated region
        $region65: #{tpu_custom_call.1} parent=59 // pred_check
          %p418 = pneg %p72
        $region66: #{tpu_custom_call.1} parent=59 // pred_check_branch
          %420 = sbr.rel (%p418) target = $region68
        $region67: #{tpu_custom_call.1} parent=59 // pred_region
          %421 = dma.done [#allocation10], 384
        $region68: #{tpu_custom_call.1} parent=59 // pred_fallthru
          _
        // Predicated region
        $region69: #{tpu_custom_call.1} parent=59 // pred_check
          %p422 = pneg %p93
        $region70: #{tpu_custom_call.1} parent=59 // pred_check_branch
          %424 = sbr.rel (%p422) target = $region72
        $region71: #{tpu_custom_call.1} parent=59 // pred_region
          %425 = dma.done [#allocation10], 512
        $region72: #{tpu_custom_call.1} parent=59 // pred_fallthru
          _
        // Predicated region
        $region73: #{tpu_custom_call.1} parent=59 // pred_check
          %p426 = pneg %p156
        $region74: #{tpu_custom_call.1} parent=59 // pred_check_branch
          %428 = sbr.rel (%p426) target = $region76
        $region75: #{tpu_custom_call.1} parent=59 // pred_region
          %429 = dma.done [#allocation13], 512
        $region76: #{tpu_custom_call.1} parent=59 // pred_fallthru
          _
        %p430 = pneg %p51
        %p431 = pneg %p48
        %p432 = pneg %p72
        %p433 = pneg %p69
        %p434 = pneg %p93
        %p435 = pneg %p90
        %p436 = pneg %p114
        %p437 = pneg %p111
        %p438 = pneg %p135
        %p439 = pneg %p132
        %p440 = pneg %p156
        %p441 = pneg %p153
        %p442 = pneg %p177
        %p443 = pneg %p174
        %p444 = pneg %p198
        %p445 = pneg %p195
        %p446 = pneg %p219
        %p447 = pneg %p216
        %p448 = pneg %p240
        %p449 = pneg %p237
        %p450 = pneg %p266
        %p451 = pneg %p263
        %s452 = sand.u32 %s253, 1
        %s453 = scalar_lea.sflag [#allocation8], %s452
        %s454 = sand.u32 %s253, 1
        %s455 = smul.addr %s454, 64
        %s456 = scalar_lea.vmem [#allocation14], %s455
        %p457 = pneg %p292
        %p458 = pneg %p289
        %s459 = smul.u32 8, %s35
        %p460 = scmp.lt.s32.totalorder %s459, 15
        %s461 = scalar_select %p460, %s459, 15
        %s462 = smul.addr %s461, 8
        %s463 = scalar_lea.vmem %s12, %s462
        %p464 = pneg %p318
        %p465 = pneg %p315
        %p466 = scmp.lt.s32.totalorder %s35, 1
        %s467 = scalar_select %p466, %s35, 1
        %s468 = smul.addr %s467, 8
        %s469 = scalar_lea.vmem %s13, %s468
        %s470 = smul.u32 8, %s35
        %s471 = smul.u32 8, %s35
        %p472 = scmp.lt.s32.totalorder %s471, 15
        %s473 = scalar_select %p472, %s471, 15
        %s474 = smul.addr %s473, 8
        %s475 = scalar_lea.vmem %s12, %s474
        %s476 = smul.u32 8, %s35
        %p477 = scmp.lt.s32.totalorder %s35, 1
        %s478 = scalar_select %p477, %s35, 1
        %s479 = smul.addr %s478, 8
        %s480 = scalar_lea.vmem %s13, %s479
        %s481 = smul.u32 %s35, 64
        %s482 = sld [smem:[#allocation5 + %s481]]
        %s483 = sadd.s32 %s481, 7
        %s484 = sld [smem:[#allocation5 + %s483]]
        %s485 = scalar_lea.vmem [#allocation6], %s482
        %v486 = vld [vmem:[%s485] sm:$0x1]
        %s487 = scalar_lea.vmem [#allocation9], %s484
        %v488 = vld [vmem:[%s487] sm:$0x1]
        %v489 = vadd.f32 %v486, %v488
        %490 = vst [vmem:[#allocation2] sm:$0x1] %v489
        %s491 = smul.u32 %s35, 8
        %s492 = sadd.s32 %s491, 1
        %s493 = smul.u32 %s492, 8
        %s494 = sld [smem:[#allocation5 + %s493]]
        %s495 = sadd.s32 %s493, 7
        %s496 = sld [smem:[#allocation5 + %s495]]
        %s497 = scalar_lea.vmem [#allocation6], %s494
        %v498 = vld [vmem:[%s497] sm:$0x1]
        %s499 = scalar_lea.vmem [#allocation9], %s496
        %v500 = vld [vmem:[%s499] sm:$0x1]
        %v501 = vadd.f32 %v498, %v500
        %502 = vst [vmem:[#allocation2 + $0x1] sm:$0x1] %v501
        %s503 = sadd.s32 %s491, 2
        %s504 = smul.u32 %s503, 8
        %s505 = sld [smem:[#allocation5 + %s504]]
        %s506 = sadd.s32 %s504, 7
        %s507 = sld [smem:[#allocation5 + %s506]]
        %s508 = scalar_lea.vmem [#allocation6], %s505
        %v509 = vld [vmem:[%s508] sm:$0x1]
        %s510 = scalar_lea.vmem [#allocation9], %s507
        %v511 = vld [vmem:[%s510] sm:$0x1]
        %v512 = vadd.f32 %v509, %v511
        %513 = vst [vmem:[#allocation2 + $0x2] sm:$0x1] %v512
        %s514 = sadd.s32 %s491, 3
        %s515 = smul.u32 %s514, 8
        %s516 = sld [smem:[#allocation5 + %s515]]
        %s517 = sadd.s32 %s515, 7
        %s518 = sld [smem:[#allocation5 + %s517]]
        %s519 = scalar_lea.vmem [#allocation6], %s516
        %v520 = vld [vmem:[%s519] sm:$0x1]
        %s521 = scalar_lea.vmem [#allocation9], %s518
        %v522 = vld [vmem:[%s521] sm:$0x1]
        %v523 = vadd.f32 %v520, %v522
        %524 = vst [vmem:[#allocation2 + $0x3] sm:$0x1] %v523
        %s525 = sadd.s32 %s491, 4
        %s526 = smul.u32 %s525, 8
        %s527 = sld [smem:[#allocation5 + %s526]]
        %s528 = sadd.s32 %s526, 7
        %s529 = sld [smem:[#allocation5 + %s528]]
        %s530 = scalar_lea.vmem [#allocation6], %s527
        %v531 = vld [vmem:[%s530] sm:$0x1]
        %s532 = scalar_lea.vmem [#allocation9], %s529
        %v533 = vld [vmem:[%s532] sm:$0x1]
        %v534 = vadd.f32 %v531, %v533
        %535 = vst [vmem:[#allocation2 + $0x4] sm:$0x1] %v534
        %s536 = sadd.s32 %s491, 5
        %s537 = smul.u32 %s536, 8
        %s538 = sld [smem:[#allocation5 + %s537]]
        %s539 = sadd.s32 %s537, 7
        %s540 = sld [smem:[#allocation5 + %s539]]
        %s541 = scalar_lea.vmem [#allocation6], %s538
        %v542 = vld [vmem:[%s541] sm:$0x1]
        %s543 = scalar_lea.vmem [#allocation9], %s540
        %v544 = vld [vmem:[%s543] sm:$0x1]
        %v545 = vadd.f32 %v542, %v544
        %546 = vst [vmem:[#allocation2 + $0x5] sm:$0x1] %v545
        %s547 = sadd.s32 %s491, 6
        %s548 = smul.u32 %s547, 8
        %s549 = sld [smem:[#allocation5 + %s548]]
        %s550 = sadd.s32 %s548, 7
        %s551 = sld [smem:[#allocation5 + %s550]]
        %s552 = scalar_lea.vmem [#allocation6], %s549
        %v553 = vld [vmem:[%s552] sm:$0x1]
        %s554 = scalar_lea.vmem [#allocation9], %s551
        %v555 = vld [vmem:[%s554] sm:$0x1]
        %v556 = vadd.f32 %v553, %v555
        %557 = vst [vmem:[#allocation2 + $0x6] sm:$0x1] %v556
        %s558 = sadd.s32 %s491, 7
        %s559 = smul.u32 %s558, 8
        %s560 = sld [smem:[#allocation5 + %s559]]
        %s561 = sadd.s32 %s559, 7
        %s562 = sld [smem:[#allocation5 + %s561]]
        %s563 = scalar_lea.vmem [#allocation6], %s560
        %v564 = vld [vmem:[%s563] sm:$0x1]
        %s565 = scalar_lea.vmem [#allocation9], %s562
        %v566 = vld [vmem:[%s565] sm:$0x1]
        %v567 = vadd.f32 %v564, %v566
        %568 = vst [vmem:[#allocation2 + $0x7] sm:$0x1] %v567
        %s569 = sadd.s32 %s481, 1
        %s570 = sld [smem:[#allocation5 + %s569]]
        %s571 = sadd.s32 %s481, 6
        %s572 = sld [smem:[#allocation5 + %s571]]
        %s573 = scalar_lea.vmem [#allocation6], %s570
        %v574 = vld [vmem:[%s573] sm:$0x1]
        %s575 = scalar_lea.vmem [#allocation9], %s572
        %v576 = vld [vmem:[%s575] sm:$0x1]
        %v577 = vadd.f32 %v574, %v576
        %578 = vst [vmem:[#allocation2 + $0x8] sm:$0x1] %v577
        %s579 = sadd.s32 %s493, 1
        %s580 = sld [smem:[#allocation5 + %s579]]
        %s581 = sadd.s32 %s493, 6
        %s582 = sld [smem:[#allocation5 + %s581]]
        %s583 = scalar_lea.vmem [#allocation6], %s580
        %v584 = vld [vmem:[%s583] sm:$0x1]
        %s585 = scalar_lea.vmem [#allocation9], %s582
        %v586 = vld [vmem:[%s585] sm:$0x1]
        %v587 = vadd.f32 %v584, %v586
        %588 = vst [vmem:[#allocation2 + $0x9] sm:$0x1] %v587
        %s589 = sadd.s32 %s504, 1
        %s590 = sld [smem:[#allocation5 + %s589]]
        %s591 = sadd.s32 %s504, 6
        %s592 = sld [smem:[#allocation5 + %s591]]
        %s593 = scalar_lea.vmem [#allocation6], %s590
        %v594 = vld [vmem:[%s593] sm:$0x1]
        %s595 = scalar_lea.vmem [#allocation9], %s592
        %v596 = vld [vmem:[%s595] sm:$0x1]
        %v597 = vadd.f32 %v594, %v596
        %598 = vst [vmem:[#allocation2 + $0xa] sm:$0x1] %v597
        %s599 = sadd.s32 %s515, 1
        %s600 = sld [smem:[#allocation5 + %s599]]
        %s601 = sadd.s32 %s515, 6
        %s602 = sld [smem:[#allocation5 + %s601]]
        %s603 = scalar_lea.vmem [#allocation6], %s600
        %v604 = vld [vmem:[%s603] sm:$0x1]
        %s605 = scalar_lea.vmem [#allocation9], %s602
        %v606 = vld [vmem:[%s605] sm:$0x1]
        %v607 = vadd.f32 %v604, %v606
        %608 = vst [vmem:[#allocation2 + $0xb] sm:$0x1] %v607
        %s609 = sadd.s32 %s526, 1
        %s610 = sld [smem:[#allocation5 + %s609]]
        %s611 = sadd.s32 %s526, 6
        %s612 = sld [smem:[#allocation5 + %s611]]
        %s613 = scalar_lea.vmem [#allocation6], %s610
        %v614 = vld [vmem:[%s613] sm:$0x1]
        %s615 = scalar_lea.vmem [#allocation9], %s612
        %v616 = vld [vmem:[%s615] sm:$0x1]
        %v617 = vadd.f32 %v614, %v616
        %618 = vst [vmem:[#allocation2 + $0xc] sm:$0x1] %v617
        %s619 = sadd.s32 %s537, 1
        %s620 = sld [smem:[#allocation5 + %s619]]
        %s621 = sadd.s32 %s537, 6
        %s622 = sld [smem:[#allocation5 + %s621]]
        %s623 = scalar_lea.vmem [#allocation6], %s620
        %v624 = vld [vmem:[%s623] sm:$0x1]
        %s625 = scalar_lea.vmem [#allocation9], %s622
        %v626 = vld [vmem:[%s625] sm:$0x1]
        %v627 = vadd.f32 %v624, %v626
        %628 = vst [vmem:[#allocation2 + $0xd] sm:$0x1] %v627
        %s629 = sadd.s32 %s548, 1
        %s630 = sld [smem:[#allocation5 + %s629]]
        %s631 = sadd.s32 %s548, 6
        %s632 = sld [smem:[#allocation5 + %s631]]
        %s633 = scalar_lea.vmem [#allocation6], %s630
        %v634 = vld [vmem:[%s633] sm:$0x1]
        %s635 = scalar_lea.vmem [#allocation9], %s632
        %v636 = vld [vmem:[%s635] sm:$0x1]
        %v637 = vadd.f32 %v634, %v636
        %638 = vst [vmem:[#allocation2 + $0xe] sm:$0x1] %v637
        %s639 = sadd.s32 %s559, 1
        %s640 = sld [smem:[#allocation5 + %s639]]
        %s641 = sadd.s32 %s559, 6
        %s642 = sld [smem:[#allocation5 + %s641]]
        %s643 = scalar_lea.vmem [#allocation6], %s640
        %v644 = vld [vmem:[%s643] sm:$0x1]
        %s645 = scalar_lea.vmem [#allocation9], %s642
        %v646 = vld [vmem:[%s645] sm:$0x1]
        %v647 = vadd.f32 %v644, %v646
        %648 = vst [vmem:[#allocation2 + $0xf] sm:$0x1] %v647
        %s649 = sadd.s32 %s481, 2
        %s650 = sld [smem:[#allocation5 + %s649]]
        %s651 = sadd.s32 %s481, 5
        %s652 = sld [smem:[#allocation5 + %s651]]
        %s653 = scalar_lea.vmem [#allocation6], %s650
        %v654 = vld [vmem:[%s653] sm:$0x1]
        %s655 = scalar_lea.vmem [#allocation9], %s652
        %v656 = vld [vmem:[%s655] sm:$0x1]
        %v657 = vadd.f32 %v654, %v656
        %658 = vst [vmem:[#allocation2 + $0x10] sm:$0x1] %v657
        %s659 = sadd.s32 %s493, 2
        %s660 = sld [smem:[#allocation5 + %s659]]
        %s661 = sadd.s32 %s493, 5
        %s662 = sld [smem:[#allocation5 + %s661]]
        %s663 = scalar_lea.vmem [#allocation6], %s660
        %v664 = vld [vmem:[%s663] sm:$0x1]
        %s665 = scalar_lea.vmem [#allocation9], %s662
        %v666 = vld [vmem:[%s665] sm:$0x1]
        %v667 = vadd.f32 %v664, %v666
        %668 = vst [vmem:[#allocation2 + $0x11] sm:$0x1] %v667
        %s669 = sadd.s32 %s504, 2
        %s670 = sld [smem:[#allocation5 + %s669]]
        %s671 = sadd.s32 %s504, 5
        %s672 = sld [smem:[#allocation5 + %s671]]
        %s673 = scalar_lea.vmem [#allocation6], %s670
        %v674 = vld [vmem:[%s673] sm:$0x1]
        %s675 = scalar_lea.vmem [#allocation9], %s672
        %v676 = vld [vmem:[%s675] sm:$0x1]
        %v677 = vadd.f32 %v674, %v676
        %678 = vst [vmem:[#allocation2 + $0x12] sm:$0x1] %v677
        %s679 = sadd.s32 %s515, 2
        %s680 = sld [smem:[#allocation5 + %s679]]
        %s681 = sadd.s32 %s515, 5
        %s682 = sld [smem:[#allocation5 + %s681]]
        %s683 = scalar_lea.vmem [#allocation6], %s680
        %v684 = vld [vmem:[%s683] sm:$0x1]
        %s685 = scalar_lea.vmem [#allocation9], %s682
        %v686 = vld [vmem:[%s685] sm:$0x1]
        %v687 = vadd.f32 %v684, %v686
        %688 = vst [vmem:[#allocation2 + $0x13] sm:$0x1] %v687
        %s689 = sadd.s32 %s526, 2
        %s690 = sld [smem:[#allocation5 + %s689]]
        %s691 = sadd.s32 %s526, 5
        %s692 = sld [smem:[#allocation5 + %s691]]
        %s693 = scalar_lea.vmem [#allocation6], %s690
        %v694 = vld [vmem:[%s693] sm:$0x1]
        %s695 = scalar_lea.vmem [#allocation9], %s692
        %v696 = vld [vmem:[%s695] sm:$0x1]
        %v697 = vadd.f32 %v694, %v696
        %698 = vst [vmem:[#allocation2 + $0x14] sm:$0x1] %v697
        %s699 = sadd.s32 %s537, 2
        %s700 = sld [smem:[#allocation5 + %s699]]
        %s701 = sadd.s32 %s537, 5
        %s702 = sld [smem:[#allocation5 + %s701]]
        %s703 = scalar_lea.vmem [#allocation6], %s700
        %v704 = vld [vmem:[%s703] sm:$0x1]
        %s705 = scalar_lea.vmem [#allocation9], %s702
        %v706 = vld [vmem:[%s705] sm:$0x1]
        %v707 = vadd.f32 %v704, %v706
        %708 = vst [vmem:[#allocation2 + $0x15] sm:$0x1] %v707
        %s709 = sadd.s32 %s548, 2
        %s710 = sld [smem:[#allocation5 + %s709]]
        %s711 = sadd.s32 %s548, 5
        %s712 = sld [smem:[#allocation5 + %s711]]
        %s713 = scalar_lea.vmem [#allocation6], %s710
        %v714 = vld [vmem:[%s713] sm:$0x1]
        %s715 = scalar_lea.vmem [#allocation9], %s712
        %v716 = vld [vmem:[%s715] sm:$0x1]
        %v717 = vadd.f32 %v714, %v716
        %718 = vst [vmem:[#allocation2 + $0x16] sm:$0x1] %v717
        %s719 = sadd.s32 %s559, 2
        %s720 = sld [smem:[#allocation5 + %s719]]
        %s721 = sadd.s32 %s559, 5
        %s722 = sld [smem:[#allocation5 + %s721]]
        %s723 = scalar_lea.vmem [#allocation6], %s720
        %v724 = vld [vmem:[%s723] sm:$0x1]
        %s725 = scalar_lea.vmem [#allocation9], %s722
        %v726 = vld [vmem:[%s725] sm:$0x1]
        %v727 = vadd.f32 %v724, %v726
        %728 = vst [vmem:[#allocation2 + $0x17] sm:$0x1] %v727
        %s729 = sadd.s32 %s481, 3
        %s730 = sld [smem:[#allocation5 + %s729]]
        %s731 = sadd.s32 %s481, 4
        %s732 = sld [smem:[#allocation5 + %s731]]
        %s733 = scalar_lea.vmem [#allocation6], %s730
        %v734 = vld [vmem:[%s733] sm:$0x1]
        %s735 = scalar_lea.vmem [#allocation9], %s732
        %v736 = vld [vmem:[%s735] sm:$0x1]
        %v737 = vadd.f32 %v734, %v736
        %738 = vst [vmem:[#allocation2 + $0x18] sm:$0x1] %v737
        %s739 = sadd.s32 %s493, 3
        %s740 = sld [smem:[#allocation5 + %s739]]
        %s741 = sadd.s32 %s493, 4
        %s742 = sld [smem:[#allocation5 + %s741]]
        %s743 = scalar_lea.vmem [#allocation6], %s740
        %v744 = vld [vmem:[%s743] sm:$0x1]
        %s745 = scalar_lea.vmem [#allocation9], %s742
        %v746 = vld [vmem:[%s745] sm:$0x1]
        %v747 = vadd.f32 %v744, %v746
        %748 = vst [vmem:[#allocation2 + $0x19] sm:$0x1] %v747
        %s749 = sadd.s32 %s504, 3
        %s750 = sld [smem:[#allocation5 + %s749]]
        %s751 = sadd.s32 %s504, 4
        %s752 = sld [smem:[#allocation5 + %s751]]
        %s753 = scalar_lea.vmem [#allocation6], %s750
        %v754 = vld [vmem:[%s753] sm:$0x1]
        %s755 = scalar_lea.vmem [#allocation9], %s752
        %v756 = vld [vmem:[%s755] sm:$0x1]
        %v757 = vadd.f32 %v754, %v756
        %758 = vst [vmem:[#allocation2 + $0x1a] sm:$0x1] %v757
        %s759 = sadd.s32 %s515, 3
        %s760 = sld [smem:[#allocation5 + %s759]]
        %s761 = sadd.s32 %s515, 4
        %s762 = sld [smem:[#allocation5 + %s761]]
        %s763 = scalar_lea.vmem [#allocation6], %s760
        %v764 = vld [vmem:[%s763] sm:$0x1]
        %s765 = scalar_lea.vmem [#allocation9], %s762
        %v766 = vld [vmem:[%s765] sm:$0x1]
        %v767 = vadd.f32 %v764, %v766
        %768 = vst [vmem:[#allocation2 + $0x1b] sm:$0x1] %v767
        %s769 = sadd.s32 %s526, 3
        %s770 = sld [smem:[#allocation5 + %s769]]
        %s771 = sadd.s32 %s526, 4
        %s772 = sld [smem:[#allocation5 + %s771]]
        %s773 = scalar_lea.vmem [#allocation6], %s770
        %v774 = vld [vmem:[%s773] sm:$0x1]
        %s775 = scalar_lea.vmem [#allocation9], %s772
        %v776 = vld [vmem:[%s775] sm:$0x1]
        %v777 = vadd.f32 %v774, %v776
        %778 = vst [vmem:[#allocation2 + $0x1c] sm:$0x1] %v777
        %s779 = sadd.s32 %s537, 3
        %s780 = sld [smem:[#allocation5 + %s779]]
        %s781 = sadd.s32 %s537, 4
        %s782 = sld [smem:[#allocation5 + %s781]]
        %s783 = scalar_lea.vmem [#allocation6], %s780
        %v784 = vld [vmem:[%s783] sm:$0x1]
        %s785 = scalar_lea.vmem [#allocation9], %s782
        %v786 = vld [vmem:[%s785] sm:$0x1]
        %v787 = vadd.f32 %v784, %v786
        %788 = vst [vmem:[#allocation2 + $0x1d] sm:$0x1] %v787
        %s789 = sadd.s32 %s548, 3
        %s790 = sld [smem:[#allocation5 + %s789]]
        %s791 = sadd.s32 %s548, 4
        %s792 = sld [smem:[#allocation5 + %s791]]
        %s793 = scalar_lea.vmem [#allocation6], %s790
        %v794 = vld [vmem:[%s793] sm:$0x1]
        %s795 = scalar_lea.vmem [#allocation9], %s792
        %v796 = vld [vmem:[%s795] sm:$0x1]
        %v797 = vadd.f32 %v794, %v796
        %798 = vst [vmem:[#allocation2 + $0x1e] sm:$0x1] %v797
        %s799 = sadd.s32 %s559, 3
        %s800 = sld [smem:[#allocation5 + %s799]]
        %s801 = sadd.s32 %s559, 4
        %s802 = sld [smem:[#allocation5 + %s801]]
        %s803 = scalar_lea.vmem [#allocation6], %s800
        %v804 = vld [vmem:[%s803] sm:$0x1]
        %s805 = scalar_lea.vmem [#allocation9], %s802
        %v806 = vld [vmem:[%s805] sm:$0x1]
        %v807 = vadd.f32 %v804, %v806
        %808 = vst [vmem:[#allocation2 + $0x1f] sm:$0x1] %v807
        %s809 = sld [smem:[#allocation5 + %s731]]
        %s810 = sld [smem:[#allocation5 + %s729]]
        %s811 = scalar_lea.vmem [#allocation6], %s809
        %v812 = vld [vmem:[%s811] sm:$0x1]
        %s813 = scalar_lea.vmem [#allocation9], %s810
        %v814 = vld [vmem:[%s813] sm:$0x1]
        %v815 = vadd.f32 %v812, %v814
        %816 = vst [vmem:[#allocation2 + $0x20] sm:$0x1] %v815
        %s817 = sld [smem:[#allocation5 + %s741]]
        %s818 = sld [smem:[#allocation5 + %s739]]
        %s819 = scalar_lea.vmem [#allocation6], %s817
        %v820 = vld [vmem:[%s819] sm:$0x1]
        %s821 = scalar_lea.vmem [#allocation9], %s818
        %v822 = vld [vmem:[%s821] sm:$0x1]
        %v823 = vadd.f32 %v820, %v822
        %824 = vst [vmem:[#allocation2 + $0x21] sm:$0x1] %v823
        %s825 = sld [smem:[#allocation5 + %s751]]
        %s826 = sld [smem:[#allocation5 + %s749]]
        %s827 = scalar_lea.vmem [#allocation6], %s825
        %v828 = vld [vmem:[%s827] sm:$0x1]
        %s829 = scalar_lea.vmem [#allocation9], %s826
        %v830 = vld [vmem:[%s829] sm:$0x1]
        %v831 = vadd.f32 %v828, %v830
        %832 = vst [vmem:[#allocation2 + $0x22] sm:$0x1] %v831
        %s833 = sld [smem:[#allocation5 + %s761]]
        %s834 = sld [smem:[#allocation5 + %s759]]
        %s835 = scalar_lea.vmem [#allocation6], %s833
        %v836 = vld [vmem:[%s835] sm:$0x1]
        %s837 = scalar_lea.vmem [#allocation9], %s834
        %v838 = vld [vmem:[%s837] sm:$0x1]
        %v839 = vadd.f32 %v836, %v838
        %840 = vst [vmem:[#allocation2 + $0x23] sm:$0x1] %v839
        %s841 = sld [smem:[#allocation5 + %s771]]
        %s842 = sld [smem:[#allocation5 + %s769]]
        %s843 = scalar_lea.vmem [#allocation6], %s841
        %v844 = vld [vmem:[%s843] sm:$0x1]
        %s845 = scalar_lea.vmem [#allocation9], %s842
        %v846 = vld [vmem:[%s845] sm:$0x1]
        %v847 = vadd.f32 %v844, %v846
        %848 = vst [vmem:[#allocation2 + $0x24] sm:$0x1] %v847
        %s849 = sld [smem:[#allocation5 + %s781]]
        %s850 = sld [smem:[#allocation5 + %s779]]
        %s851 = scalar_lea.vmem [#allocation6], %s849
        %v852 = vld [vmem:[%s851] sm:$0x1]
        %s853 = scalar_lea.vmem [#allocation9], %s850
        %v854 = vld [vmem:[%s853] sm:$0x1]
        %v855 = vadd.f32 %v852, %v854
        %856 = vst [vmem:[#allocation2 + $0x25] sm:$0x1] %v855
        %s857 = sld [smem:[#allocation5 + %s791]]
        %s858 = sld [smem:[#allocation5 + %s789]]
        %s859 = scalar_lea.vmem [#allocation6], %s857
        %v860 = vld [vmem:[%s859] sm:$0x1]
        %s861 = scalar_lea.vmem [#allocation9], %s858
        %v862 = vld [vmem:[%s861] sm:$0x1]
        %v863 = vadd.f32 %v860, %v862
        %864 = vst [vmem:[#allocation2 + $0x26] sm:$0x1] %v863
        %s865 = sld [smem:[#allocation5 + %s801]]
        %s866 = sld [smem:[#allocation5 + %s799]]
        %s867 = scalar_lea.vmem [#allocation6], %s865
        %v868 = vld [vmem:[%s867] sm:$0x1]
        %s869 = scalar_lea.vmem [#allocation9], %s866
        %v870 = vld [vmem:[%s869] sm:$0x1]
        %v871 = vadd.f32 %v868, %v870
        %872 = vst [vmem:[#allocation2 + $0x27] sm:$0x1] %v871
        %s873 = sld [smem:[#allocation5 + %s651]]
        %s874 = sld [smem:[#allocation5 + %s649]]
        %s875 = scalar_lea.vmem [#allocation6], %s873
        %v876 = vld [vmem:[%s875] sm:$0x1]
        %s877 = scalar_lea.vmem [#allocation9], %s874
        %v878 = vld [vmem:[%s877] sm:$0x1]
        %v879 = vadd.f32 %v876, %v878
        %880 = vst [vmem:[#allocation2 + $0x28] sm:$0x1] %v879
        %s881 = sld [smem:[#allocation5 + %s661]]
        %s882 = sld [smem:[#allocation5 + %s659]]
        %s883 = scalar_lea.vmem [#allocation6], %s881
        %v884 = vld [vmem:[%s883] sm:$0x1]
        %s885 = scalar_lea.vmem [#allocation9], %s882
        %v886 = vld [vmem:[%s885] sm:$0x1]
        %v887 = vadd.f32 %v884, %v886
        %888 = vst [vmem:[#allocation2 + $0x29] sm:$0x1] %v887
        %s889 = sld [smem:[#allocation5 + %s671]]
        %s890 = sld [smem:[#allocation5 + %s669]]
        %s891 = scalar_lea.vmem [#allocation6], %s889
        %v892 = vld [vmem:[%s891] sm:$0x1]
        %s893 = scalar_lea.vmem [#allocation9], %s890
        %v894 = vld [vmem:[%s893] sm:$0x1]
        %v895 = vadd.f32 %v892, %v894
        %896 = vst [vmem:[#allocation2 + $0x2a] sm:$0x1] %v895
        %s897 = sld [smem:[#allocation5 + %s681]]
        %s898 = sld [smem:[#allocation5 + %s679]]
        %s899 = scalar_lea.vmem [#allocation6], %s897
        %v900 = vld [vmem:[%s899] sm:$0x1]
        %s901 = scalar_lea.vmem [#allocation9], %s898
        %v902 = vld [vmem:[%s901] sm:$0x1]
        %v903 = vadd.f32 %v900, %v902
        %904 = vst [vmem:[#allocation2 + $0x2b] sm:$0x1] %v903
        %s905 = sld [smem:[#allocation5 + %s691]]
        %s906 = sld [smem:[#allocation5 + %s689]]
        %s907 = scalar_lea.vmem [#allocation6], %s905
        %v908 = vld [vmem:[%s907] sm:$0x1]
        %s909 = scalar_lea.vmem [#allocation9], %s906
        %v910 = vld [vmem:[%s909] sm:$0x1]
        %v911 = vadd.f32 %v908, %v910
        %912 = vst [vmem:[#allocation2 + $0x2c] sm:$0x1] %v911
        %s913 = sld [smem:[#allocation5 + %s701]]
        %s914 = sld [smem:[#allocation5 + %s699]]
        %s915 = scalar_lea.vmem [#allocation6], %s913
        %v916 = vld [vmem:[%s915] sm:$0x1]
        %s917 = scalar_lea.vmem [#allocation9], %s914
        %v918 = vld [vmem:[%s917] sm:$0x1]
        %v919 = vadd.f32 %v916, %v918
        %920 = vst [vmem:[#allocation2 + $0x2d] sm:$0x1] %v919
        %s921 = sld [smem:[#allocation5 + %s711]]
        %s922 = sld [smem:[#allocation5 + %s709]]
        %s923 = scalar_lea.vmem [#allocation6], %s921
        %v924 = vld [vmem:[%s923] sm:$0x1]
        %s925 = scalar_lea.vmem [#allocation9], %s922
        %v926 = vld [vmem:[%s925] sm:$0x1]
        %v927 = vadd.f32 %v924, %v926
        %928 = vst [vmem:[#allocation2 + $0x2e] sm:$0x1] %v927
        %s929 = sld [smem:[#allocation5 + %s721]]
        %s930 = sld [smem:[#allocation5 + %s719]]
        %s931 = scalar_lea.vmem [#allocation6], %s929
        %v932 = vld [vmem:[%s931] sm:$0x1]
        %s933 = scalar_lea.vmem [#allocation9], %s930
        %v934 = vld [vmem:[%s933] sm:$0x1]
        %v935 = vadd.f32 %v932, %v934
        %936 = vst [vmem:[#allocation2 + $0x2f] sm:$0x1] %v935
        %s937 = sld [smem:[#allocation5 + %s571]]
        %s938 = sld [smem:[#allocation5 + %s569]]
        %s939 = scalar_lea.vmem [#allocation6], %s937
        %v940 = vld [vmem:[%s939] sm:$0x1]
        %s941 = scalar_lea.vmem [#allocation9], %s938
        %v942 = vld [vmem:[%s941] sm:$0x1]
        %v943 = vadd.f32 %v940, %v942
        %944 = vst [vmem:[#allocation2 + $0x30] sm:$0x1] %v943
        %s945 = sld [smem:[#allocation5 + %s581]]
        %s946 = sld [smem:[#allocation5 + %s579]]
        %s947 = scalar_lea.vmem [#allocation6], %s945
        %v948 = vld [vmem:[%s947] sm:$0x1]
        %s949 = scalar_lea.vmem [#allocation9], %s946
        %v950 = vld [vmem:[%s949] sm:$0x1]
        %v951 = vadd.f32 %v948, %v950
        %952 = vst [vmem:[#allocation2 + $0x31] sm:$0x1] %v951
        %s953 = sld [smem:[#allocation5 + %s591]]
        %s954 = sld [smem:[#allocation5 + %s589]]
        %s955 = scalar_lea.vmem [#allocation6], %s953
        %v956 = vld [vmem:[%s955] sm:$0x1]
        %s957 = scalar_lea.vmem [#allocation9], %s954
        %v958 = vld [vmem:[%s957] sm:$0x1]
        %v959 = vadd.f32 %v956, %v958
        %960 = vst [vmem:[#allocation2 + $0x32] sm:$0x1] %v959
        %s961 = sld [smem:[#allocation5 + %s601]]
        %s962 = sld [smem:[#allocation5 + %s599]]
        %s963 = scalar_lea.vmem [#allocation6], %s961
        %v964 = vld [vmem:[%s963] sm:$0x1]
        %s965 = scalar_lea.vmem [#allocation9], %s962
        %v966 = vld [vmem:[%s965] sm:$0x1]
        %v967 = vadd.f32 %v964, %v966
        %968 = vst [vmem:[#allocation2 + $0x33] sm:$0x1] %v967
        %s969 = sld [smem:[#allocation5 + %s611]]
        %s970 = sld [smem:[#allocation5 + %s609]]
        %s971 = scalar_lea.vmem [#allocation6], %s969
        %v972 = vld [vmem:[%s971] sm:$0x1]
        %s973 = scalar_lea.vmem [#allocation9], %s970
        %v974 = vld [vmem:[%s973] sm:$0x1]
        %v975 = vadd.f32 %v972, %v974
        %976 = vst [vmem:[#allocation2 + $0x34] sm:$0x1] %v975
        %s977 = sld [smem:[#allocation5 + %s621]]
        %s978 = sld [smem:[#allocation5 + %s619]]
        %s979 = scalar_lea.vmem [#allocation6], %s977
        %v980 = vld [vmem:[%s979] sm:$0x1]
        %s981 = scalar_lea.vmem [#allocation9], %s978
        %v982 = vld [vmem:[%s981] sm:$0x1]
        %v983 = vadd.f32 %v980, %v982
        %984 = vst [vmem:[#allocation2 + $0x35] sm:$0x1] %v983
        %s985 = sld [smem:[#allocation5 + %s631]]
        %s986 = sld [smem:[#allocation5 + %s629]]
        %s987 = scalar_lea.vmem [#allocation6], %s985
        %v988 = vld [vmem:[%s987] sm:$0x1]
        %s989 = scalar_lea.vmem [#allocation9], %s986
        %v990 = vld [vmem:[%s989] sm:$0x1]
        %v991 = vadd.f32 %v988, %v990
        %992 = vst [vmem:[#allocation2 + $0x36] sm:$0x1] %v991
        %s993 = sld [smem:[#allocation5 + %s641]]
        %s994 = sld [smem:[#allocation5 + %s639]]
        %s995 = scalar_lea.vmem [#allocation6], %s993
        %v996 = vld [vmem:[%s995] sm:$0x1]
        %s997 = scalar_lea.vmem [#allocation9], %s994
        %v998 = vld [vmem:[%s997] sm:$0x1]
        %v999 = vadd.f32 %v996, %v998
        %1000 = vst [vmem:[#allocation2 + $0x37] sm:$0x1] %v999
        %s1001 = sld [smem:[#allocation5 + %s483]]
        %s1002 = sld [smem:[#allocation5 + %s481]]
        %s1003 = scalar_lea.vmem [#allocation6], %s1001
        %v1004 = vld [vmem:[%s1003] sm:$0x1]
        %s1005 = scalar_lea.vmem [#allocation9], %s1002
        %v1006 = vld [vmem:[%s1005] sm:$0x1]
        %v1007 = vadd.f32 %v1004, %v1006
        %1008 = vst [vmem:[#allocation2 + $0x38] sm:$0x1] %v1007
        %s1009 = sld [smem:[#allocation5 + %s495]]
        %s1010 = sld [smem:[#allocation5 + %s493]]
        %s1011 = scalar_lea.vmem [#allocation6], %s1009
        %v1012 = vld [vmem:[%s1011] sm:$0x1]
        %s1013 = scalar_lea.vmem [#allocation9], %s1010
        %v1014 = vld [vmem:[%s1013] sm:$0x1]
        %v1015 = vadd.f32 %v1012, %v1014
        %1016 = vst [vmem:[#allocation2 + $0x39] sm:$0x1] %v1015
        %s1017 = sld [smem:[#allocation5 + %s506]]
        %s1018 = sld [smem:[#allocation5 + %s504]]
        %s1019 = scalar_lea.vmem [#allocation6], %s1017
        %v1020 = vld [vmem:[%s1019] sm:$0x1]
        %s1021 = scalar_lea.vmem [#allocation9], %s1018
        %v1022 = vld [vmem:[%s1021] sm:$0x1]
        %v1023 = vadd.f32 %v1020, %v1022
        %1024 = vst [vmem:[#allocation2 + $0x3a] sm:$0x1] %v1023
        %s1025 = sld [smem:[#allocation5 + %s517]]
        %s1026 = sld [smem:[#allocation5 + %s515]]
        %s1027 = scalar_lea.vmem [#allocation6], %s1025
        %v1028 = vld [vmem:[%s1027] sm:$0x1]
        %s1029 = scalar_lea.vmem [#allocation9], %s1026
        %v1030 = vld [vmem:[%s1029] sm:$0x1]
        %v1031 = vadd.f32 %v1028, %v1030
        %1032 = vst [vmem:[#allocation2 + $0x3b] sm:$0x1] %v1031
        %s1033 = sld [smem:[#allocation5 + %s528]]
        %s1034 = sld [smem:[#allocation5 + %s526]]
        %s1035 = scalar_lea.vmem [#allocation6], %s1033
        %v1036 = vld [vmem:[%s1035] sm:$0x1]
        %s1037 = scalar_lea.vmem [#allocation9], %s1034
        %v1038 = vld [vmem:[%s1037] sm:$0x1]
        %v1039 = vadd.f32 %v1036, %v1038
        %1040 = vst [vmem:[#allocation2 + $0x3c] sm:$0x1] %v1039
        %s1041 = sld [smem:[#allocation5 + %s539]]
        %s1042 = sld [smem:[#allocation5 + %s537]]
        %s1043 = scalar_lea.vmem [#allocation6], %s1041
        %v1044 = vld [vmem:[%s1043] sm:$0x1]
        %s1045 = scalar_lea.vmem [#allocation9], %s1042
        %v1046 = vld [vmem:[%s1045] sm:$0x1]
        %v1047 = vadd.f32 %v1044, %v1046
        %1048 = vst [vmem:[#allocation2 + $0x3d] sm:$0x1] %v1047
        %s1049 = sld [smem:[#allocation5 + %s550]]
        %s1050 = sld [smem:[#allocation5 + %s548]]
        %s1051 = scalar_lea.vmem [#allocation6], %s1049
        %v1052 = vld [vmem:[%s1051] sm:$0x1]
        %s1053 = scalar_lea.vmem [#allocation9], %s1050
        %v1054 = vld [vmem:[%s1053] sm:$0x1]
        %v1055 = vadd.f32 %v1052, %v1054
        %1056 = vst [vmem:[#allocation2 + $0x3e] sm:$0x1] %v1055
        %s1057 = sld [smem:[#allocation5 + %s561]]
        %s1058 = sld [smem:[#allocation5 + %s559]]
        %s1059 = scalar_lea.vmem [#allocation6], %s1057
        %v1060 = vld [vmem:[%s1059] sm:$0x1]
        %s1061 = scalar_lea.vmem [#allocation9], %s1058
        %v1062 = vld [vmem:[%s1061] sm:$0x1]
        %v1063 = vadd.f32 %v1060, %v1062
        %1064 = vst [vmem:[#allocation2 + $0x3f] sm:$0x1] %v1063
        %v1065 = vld [vmem:[#allocation11] sm:$0xff]
        %v1066 = vld [vmem:[#allocation11 + $0x8] sm:$0xff]
        %v1067 = vld [vmem:[#allocation11 + $0x10] sm:$0xff]
        %v1068 = vld [vmem:[#allocation11 + $0x18] sm:$0xff]
        %v1069 = vld [vmem:[%s4] sm:$0xff]
        %v1070 = vld [vmem:[%s5] sm:$0xff]
        %v1071 = vld [vmem:[#allocation2] sm:$0xff]
        %vm1072 = vcmask 261120
        %v1074 = vsel %vm1072, %v1069, 0
        %1076 = vmatprep.subr.mxu0 0.0
        %1077 = vmatpush1.msra.mxu0 %v1065
        %1078 = vmatprep.subr.mxu0 0.0
        %1079 = vmatpush1.msra.mxu0 %v1066
        %1080 = vmatprep.subr.mxu0 0.0
        %1081 = vmatpush1.msra.mxu0 %v1067
        %1082 = vmatprep.subr.mxu0 0.0
        %1083 = vmatpush1.msra.mxu0 %v1068
        %1084 = vmatprep.subr.mxu0 0.0
        %1085 = vmatpush1.msra.mxu0 0.0
        %1086 = vmatprep.subr.mxu0 0.0
        %1087 = vmatpush1.msra.mxu0 0.0
        %1088 = vmatprep.subr.mxu0 0.0
        %1089 = vmatpush1.msra.mxu0 0.0
        %1090 = vmatprep.subr.mxu0 0.0
        %1091 = vmatpush1.msra.mxu0 0.0
        %1092 = vmatprep.subr.mxu0 0.0
        %1093 = vmatpush1.msra.mxu0 0.0
        %1094 = vmatprep.subr.mxu0 0.0
        %1095 = vmatpush1.msra.mxu0 0.0
        %1096 = vmatprep.subr.mxu0 0.0
        %1097 = vmatpush1.msra.mxu0 0.0
        %1098 = vmatprep.subr.mxu0 0.0
        %1099 = vmatpush1.msra.mxu0 0.0
        %1100 = vmatprep.subr.mxu0 0.0
        %1101 = vmatpush1.msra.mxu0 0.0
        %1102 = vmatprep.subr.mxu0 0.0
        %1103 = vmatpush1.msra.mxu0 0.0
        %1104 = vmatprep.subr.mxu0 0.0
        %1105 = vmatpush1.msra.mxu0 0.0
        %1106 = vmatprep.subr.mxu0 0.0
        %1107 = vmatpush1.msra.mxu0 0.0
        %1108 = vmatprep.subr.mxu0 0.0
        %1109 = vmatpush1.msra.mxu0 0.0
        %1110 = vmatprep.subr.mxu0 0.0
        %1111 = vmatpush1.msra.mxu0 0.0
        %1112 = vmatprep.subr.mxu0 0.0
        %1113 = vmatpush1.msra.mxu0 0.0
        %1114 = vmatprep.subr.mxu0 0.0
        %1115 = vmatpush1.msra.mxu0 0.0
        %1116 = vmatprep.subr.mxu0 0.0
        %1117 = vmatpush1.msra.mxu0 0.0
        %1118 = vmatprep.subr.mxu0 0.0
        %1119 = vmatpush1.msra.mxu0 0.0
        %1120 = vmatprep.subr.mxu0 0.0
        %1121 = vmatpush1.msra.mxu0 0.0
        %1122 = vmatprep.subr.mxu0 0.0
        %1123 = vmatpush1.msra.mxu0 0.0
        %1124 = vmatprep.subr.mxu0 0.0
        %1125 = vmatpush1.msra.mxu0 0.0
        %1126 = vmatprep.subr.mxu0 0.0
        %1127 = vmatpush1.msra.mxu0 0.0
        %1128 = vmatprep.subr.mxu0 0.0
        %1129 = vmatpush1.msra.mxu0 0.0
        %1130 = vmatprep.subr.mxu0 0.0
        %1131 = vmatpush1.msra.mxu0 0.0
        %1132 = vmatprep.subr.mxu0 0.0
        %1133 = vmatpush1.msra.mxu0 0.0
        %1134 = vmatprep.subr.mxu0 0.0
        %1135 = vmatpush1.msra.mxu0 0.0
        %1136 = vmatprep.subr.mxu0 0.0
        %1137 = vmatpush1.msra.mxu0 0.0
        %1138 = vmatprep.subr.mxu0 0.0
        %1139 = vmatpush1.msra.mxu0 0.0
        %1140 = vmatprep.mubr.f32.mxu0 0.0
        %1141 = vmatmul.mubr.f32.gmra.mrb[0].mxu0 %v1074
        %v1142 = vpop.f32.mrb[0].mxu0
        %v1143 = vadd.f32 0.0, %v1142
        %v1144 = vpop.f32.mrb[0].mxu0
        %1145 = vdwg.mxu0
        %v1146 = vadd.f32 %v1071, %v1143
        %v1147 = vxor.u32 %v1146, 2147483648
        %v1148 = vmul.f32 %v1147, 1.442695
        %v1149 = vpow.pop %v1148
        %v1150 = vadd.f32 %v1149, 1.0
        %v1151 = vrcp.pop %v1150
        %v1152 = vmul.f32 1.0, %v1151
        %v1153 = vtanh.pop %v1146
        %1155 = vrot.lane.b32.xlu0 %v1070, 32
        %v1156 = vpop.permute.xlu0 %1155
        %v1158 = vmul.f32 %v1152, %v1156
        %1160 = vrot.lane.b32.xlu0 %v1153, 64
        %v1161 = vpop.permute.xlu0 %1160
        %v1163 = vmul.f32 %v1152, %v1161
        %1165 = vrot.lane.b32.xlu0 %v1163, 32
        %v1166 = vpop.permute.xlu0 %1165
        %v1168 = vadd.f32 %v1158, %v1166
        %v1169 = vtanh.pop %v1168
        %1171 = vrot.lane.b32.xlu0 %v1169, 64
        %v1172 = vpop.permute.xlu0 %1171
        %v1174 = vmul.f32 %v1152, %v1172
        %1176 = vrot.lane.b32.xlu0 %v1174, 32
        %v1177 = vpop.permute.xlu0 %1176
        %vm1179 = vcmask 130048
        %1180 = vst.msk [vmem:[#allocation3] sm:$0xff] %vm1179, %v1177
        %vm1181 = vcmask 261248
        %1182 = vst.msk [vmem:[#allocation3 + $0x38] sm:$0xff] %vm1181, %v1177
        %v1183 = vld [vmem:[#allocation2 + $0x8] sm:$0xff]
        %v1184 = vsel %vm1072, %v1177, 0
        %1186 = vmatprep.subr.mxu0 0.0
        %1187 = vmatpush1.msra.mxu0 %v1065
        %1188 = vmatprep.subr.mxu0 0.0
        %1189 = vmatpush1.msra.mxu0 %v1066
        %1190 = vmatprep.subr.mxu0 0.0
        %1191 = vmatpush1.msra.mxu0 %v1067
        %1192 = vmatprep.subr.mxu0 0.0
        %1193 = vmatpush1.msra.mxu0 %v1068
        %1194 = vmatprep.subr.mxu0 0.0
        %1195 = vmatpush1.msra.mxu0 0.0
        %1196 = vmatprep.subr.mxu0 0.0
        %1197 = vmatpush1.msra.mxu0 0.0
        %1198 = vmatprep.subr.mxu0 0.0
        %1199 = vmatpush1.msra.mxu0 0.0
        %1200 = vmatprep.subr.mxu0 0.0
        %1201 = vmatpush1.msra.mxu0 0.0
        %1202 = vmatprep.subr.mxu0 0.0
        %1203 = vmatpush1.msra.mxu0 0.0
        %1204 = vmatprep.subr.mxu0 0.0
        %1205 = vmatpush1.msra.mxu0 0.0
        %1206 = vmatprep.subr.mxu0 0.0
        %1207 = vmatpush1.msra.mxu0 0.0
        %1208 = vmatprep.subr.mxu0 0.0
        %1209 = vmatpush1.msra.mxu0 0.0
        %1210 = vmatprep.subr.mxu0 0.0
        %1211 = vmatpush1.msra.mxu0 0.0
        %1212 = vmatprep.subr.mxu0 0.0
        %1213 = vmatpush1.msra.mxu0 0.0
        %1214 = vmatprep.subr.mxu0 0.0
        %1215 = vmatpush1.msra.mxu0 0.0
        %1216 = vmatprep.subr.mxu0 0.0
        %1217 = vmatpush1.msra.mxu0 0.0
        %1218 = vmatprep.subr.mxu0 0.0
        %1219 = vmatpush1.msra.mxu0 0.0
        %1220 = vmatprep.subr.mxu0 0.0
        %1221 = vmatpush1.msra.mxu0 0.0
        %1222 = vmatprep.subr.mxu0 0.0
        %1223 = vmatpush1.msra.mxu0 0.0
        %1224 = vmatprep.subr.mxu0 0.0
        %1225 = vmatpush1.msra.mxu0 0.0
        %1226 = vmatprep.subr.mxu0 0.0
        %1227 = vmatpush1.msra.mxu0 0.0
        %1228 = vmatprep.subr.mxu0 0.0
        %1229 = vmatpush1.msra.mxu0 0.0
        %1230 = vmatprep.subr.mxu0 0.0
        %1231 = vmatpush1.msra.mxu0 0.0
        %1232 = vmatprep.subr.mxu0 0.0
        %1233 = vmatpush1.msra.mxu0 0.0
        %1234 = vmatprep.subr.mxu0 0.0
        %1235 = vmatpush1.msra.mxu0 0.0
        %1236 = vmatprep.subr.mxu0 0.0
        %1237 = vmatpush1.msra.mxu0 0.0
        %1238 = vmatprep.subr.mxu0 0.0
        %1239 = vmatpush1.msra.mxu0 0.0
        %1240 = vmatprep.subr.mxu0 0.0
        %1241 = vmatpush1.msra.mxu0 0.0
        %1242 = vmatprep.subr.mxu0 0.0
        %1243 = vmatpush1.msra.mxu0 0.0
        %1244 = vmatprep.subr.mxu0 0.0
        %1245 = vmatpush1.msra.mxu0 0.0
        %1246 = vmatprep.subr.mxu0 0.0
        %1247 = vmatpush1.msra.mxu0 0.0
        %1248 = vmatprep.subr.mxu0 0.0
        %1249 = vmatpush1.msra.mxu0 0.0
        %1250 = vmatprep.mubr.f32.mxu0 0.0
        %1251 = vmatmul.mubr.f32.gmra.mrb[0].mxu0 %v1184
        %v1252 = vpop.f32.mrb[0].mxu0
        %v1253 = vadd.f32 0.0, %v1252
        %v1254 = vpop.f32.mrb[0].mxu0
        %1255 = vdwg.mxu0
        %v1256 = vadd.f32 %v1183, %v1253
        %v1257 = vxor.u32 %v1256, 2147483648
        %v1258 = vmul.f32 %v1257, 1.442695
        %v1259 = vpow.pop %v1258
        %v1260 = vadd.f32 %v1259, 1.0
        %v1261 = vrcp.pop %v1260
        %v1262 = vmul.f32 1.0, %v1261
        %v1263 = vtanh.pop %v1256
        %v1264 = vmul.f32 %v1262, %v1168
        %1266 = vrot.lane.b32.xlu0 %v1263, 64
        %v1267 = vpop.permute.xlu0 %1266
        %v1269 = vmul.f32 %v1262, %v1267
        %1271 = vrot.lane.b32.xlu0 %v1269, 32
        %v1272 = vpop.permute.xlu0 %1271
        %v1274 = vadd.f32 %v1264, %v1272
        %v1275 = vtanh.pop %v1274
        %1277 = vrot.lane.b32.xlu0 %v1275, 64
        %v1278 = vpop.permute.xlu0 %1277
        %v1280 = vmul.f32 %v1262, %v1278
        %1282 = vrot.lane.b32.xlu0 %v1280, 32
        %v1283 = vpop.permute.xlu0 %1282
        %1285 = vst.msk [vmem:[#allocation3 + $0x8] sm:$0xff] %vm1179, %v1283
        %1286 = vst.msk [vmem:[#allocation3 + $0x30] sm:$0xff] %vm1181, %v1283
        %v1287 = vld [vmem:[#allocation2 + $0x10] sm:$0xff]
        %v1288 = vsel %vm1072, %v1283, 0
        %1290 = vmatprep.subr.mxu0 0.0
        %1291 = vmatpush1.msra.mxu0 %v1065
        %1292 = vmatprep.subr.mxu0 0.0
        %1293 = vmatpush1.msra.mxu0 %v1066
        %1294 = vmatprep.subr.mxu0 0.0
        %1295 = vmatpush1.msra.mxu0 %v1067
        %1296 = vmatprep.subr.mxu0 0.0
        %1297 = vmatpush1.msra.mxu0 %v1068
        %1298 = vmatprep.subr.mxu0 0.0
        %1299 = vmatpush1.msra.mxu0 0.0
        %1300 = vmatprep.subr.mxu0 0.0
        %1301 = vmatpush1.msra.mxu0 0.0
        %1302 = vmatprep.subr.mxu0 0.0
        %1303 = vmatpush1.msra.mxu0 0.0
        %1304 = vmatprep.subr.mxu0 0.0
        %1305 = vmatpush1.msra.mxu0 0.0
        %1306 = vmatprep.subr.mxu0 0.0
        %1307 = vmatpush1.msra.mxu0 0.0
        %1308 = vmatprep.subr.mxu0 0.0
        %1309 = vmatpush1.msra.mxu0 0.0
        %1310 = vmatprep.subr.mxu0 0.0
        %1311 = vmatpush1.msra.mxu0 0.0
        %1312 = vmatprep.subr.mxu0 0.0
        %1313 = vmatpush1.msra.mxu0 0.0
        %1314 = vmatprep.subr.mxu0 0.0
        %1315 = vmatpush1.msra.mxu0 0.0
        %1316 = vmatprep.subr.mxu0 0.0
        %1317 = vmatpush1.msra.mxu0 0.0
        %1318 = vmatprep.subr.mxu0 0.0
        %1319 = vmatpush1.msra.mxu0 0.0
        %1320 = vmatprep.subr.mxu0 0.0
        %1321 = vmatpush1.msra.mxu0 0.0
        %1322 = vmatprep.subr.mxu0 0.0
        %1323 = vmatpush1.msra.mxu0 0.0
        %1324 = vmatprep.subr.mxu0 0.0
        %1325 = vmatpush1.msra.mxu0 0.0
        %1326 = vmatprep.subr.mxu0 0.0
        %1327 = vmatpush1.msra.mxu0 0.0
        %1328 = vmatprep.subr.mxu0 0.0
        %1329 = vmatpush1.msra.mxu0 0.0
        %1330 = vmatprep.subr.mxu0 0.0
        %1331 = vmatpush1.msra.mxu0 0.0
        %1332 = vmatprep.subr.mxu0 0.0
        %1333 = vmatpush1.msra.mxu0 0.0
        %1334 = vmatprep.subr.mxu0 0.0
        %1335 = vmatpush1.msra.mxu0 0.0
        %1336 = vmatprep.subr.mxu0 0.0
        %1337 = vmatpush1.msra.mxu0 0.0
        %1338 = vmatprep.subr.mxu0 0.0
        %1339 = vmatpush1.msra.mxu0 0.0
        %1340 = vmatprep.subr.mxu0 0.0
        %1341 = vmatpush1.msra.mxu0 0.0
        %1342 = vmatprep.subr.mxu0 0.0
        %1343 = vmatpush1.msra.mxu0 0.0
        %1344 = vmatprep.subr.mxu0 0.0
        %1345 = vmatpush1.msra.mxu0 0.0
        %1346 = vmatprep.subr.mxu0 0.0
        %1347 = vmatpush1.msra.mxu0 0.0
        %1348 = vmatprep.subr.mxu0 0.0
        %1349 = vmatpush1.msra.mxu0 0.0
        %1350 = vmatprep.subr.mxu0 0.0
        %1351 = vmatpush1.msra.mxu0 0.0
        %1352 = vmatprep.subr.mxu0 0.0
        %1353 = vmatpush1.msra.mxu0 0.0
        %1354 = vmatprep.mubr.f32.mxu0 0.0
        %1355 = vmatmul.mubr.f32.gmra.mrb[0].mxu0 %v1288
        %v1356 = vpop.f32.mrb[0].mxu0
        %v1357 = vadd.f32 0.0, %v1356
        %v1358 = vpop.f32.mrb[0].mxu0
        %1359 = vdwg.mxu0
        %v1360 = vadd.f32 %v1287, %v1357
        %v1361 = vxor.u32 %v1360, 2147483648
        %v1362 = vmul.f32 %v1361, 1.442695
        %v1363 = vpow.pop %v1362
        %v1364 = vadd.f32 %v1363, 1.0
        %v1365 = vrcp.pop %v1364
        %v1366 = vmul.f32 1.0, %v1365
        %v1367 = vtanh.pop %v1360
        %v1368 = vmul.f32 %v1366, %v1274
        %1370 = vrot.lane.b32.xlu0 %v1367, 64
        %v1371 = vpop.permute.xlu0 %1370
        %v1373 = vmul.f32 %v1366, %v1371
        %1375 = vrot.lane.b32.xlu0 %v1373, 32
        %v1376 = vpop.permute.xlu0 %1375
        %v1378 = vadd.f32 %v1368, %v1376
        %v1379 = vtanh.pop %v1378
        %1381 = vrot.lane.b32.xlu0 %v1379, 64
        %v1382 = vpop.permute.xlu0 %1381
        %v1384 = vmul.f32 %v1366, %v1382
        %1386 = vrot.lane.b32.xlu0 %v1384, 32
        %v1387 = vpop.permute.xlu0 %1386
        %1389 = vst.msk [vmem:[#allocation3 + $0x10] sm:$0xff] %vm1179, %v1387
        %1390 = vst.msk [vmem:[#allocation3 + $0x28] sm:$0xff] %vm1181, %v1387
        %v1391 = vld [vmem:[#allocation2 + $0x18] sm:$0xff]
        %v1392 = vsel %vm1072, %v1387, 0
        %1394 = vmatprep.subr.mxu0 0.0
        %1395 = vmatpush1.msra.mxu0 %v1065
        %1396 = vmatprep.subr.mxu0 0.0
        %1397 = vmatpush1.msra.mxu0 %v1066
        %1398 = vmatprep.subr.mxu0 0.0
        %1399 = vmatpush1.msra.mxu0 %v1067
        %1400 = vmatprep.subr.mxu0 0.0
        %1401 = vmatpush1.msra.mxu0 %v1068
        %1402 = vmatprep.subr.mxu0 0.0
        %1403 = vmatpush1.msra.mxu0 0.0
        %1404 = vmatprep.subr.mxu0 0.0
        %1405 = vmatpush1.msra.mxu0 0.0
        %1406 = vmatprep.subr.mxu0 0.0
        %1407 = vmatpush1.msra.mxu0 0.0
        %1408 = vmatprep.subr.mxu0 0.0
        %1409 = vmatpush1.msra.mxu0 0.0
        %1410 = vmatprep.subr.mxu0 0.0
        %1411 = vmatpush1.msra.mxu0 0.0
        %1412 = vmatprep.subr.mxu0 0.0
        %1413 = vmatpush1.msra.mxu0 0.0
        %1414 = vmatprep.subr.mxu0 0.0
        %1415 = vmatpush1.msra.mxu0 0.0
        %1416 = vmatprep.subr.mxu0 0.0
        %1417 = vmatpush1.msra.mxu0 0.0
        %1418 = vmatprep.subr.mxu0 0.0
        %1419 = vmatpush1.msra.mxu0 0.0
        %1420 = vmatprep.subr.mxu0 0.0
        %1421 = vmatpush1.msra.mxu0 0.0
        %1422 = vmatprep.subr.mxu0 0.0
        %1423 = vmatpush1.msra.mxu0 0.0
        %1424 = vmatprep.subr.mxu0 0.0
        %1425 = vmatpush1.msra.mxu0 0.0
        %1426 = vmatprep.subr.mxu0 0.0
        %1427 = vmatpush1.msra.mxu0 0.0
        %1428 = vmatprep.subr.mxu0 0.0
        %1429 = vmatpush1.msra.mxu0 0.0
        %1430 = vmatprep.subr.mxu0 0.0
        %1431 = vmatpush1.msra.mxu0 0.0
        %1432 = vmatprep.subr.mxu0 0.0
        %1433 = vmatpush1.msra.mxu0 0.0
        %1434 = vmatprep.subr.mxu0 0.0
        %1435 = vmatpush1.msra.mxu0 0.0
        %1436 = vmatprep.subr.mxu0 0.0
        %1437 = vmatpush1.msra.mxu0 0.0
        %1438 = vmatprep.subr.mxu0 0.0
        %1439 = vmatpush1.msra.mxu0 0.0
        %1440 = vmatprep.subr.mxu0 0.0
        %1441 = vmatpush1.msra.mxu0 0.0
        %1442 = vmatprep.subr.mxu0 0.0
        %1443 = vmatpush1.msra.mxu0 0.0
        %1444 = vmatprep.subr.mxu0 0.0
        %1445 = vmatpush1.msra.mxu0 0.0
        %1446 = vmatprep.subr.mxu0 0.0
        %1447 = vmatpush1.msra.mxu0 0.0
        %1448 = vmatprep.subr.mxu0 0.0
        %1449 = vmatpush1.msra.mxu0 0.0
        %1450 = vmatprep.subr.mxu0 0.0
        %1451 = vmatpush1.msra.mxu0 0.0
        %1452 = vmatprep.subr.mxu0 0.0
        %1453 = vmatpush1.msra.mxu0 0.0
        %1454 = vmatprep.subr.mxu0 0.0
        %1455 = vmatpush1.msra.mxu0 0.0
        %1456 = vmatprep.subr.mxu0 0.0
        %1457 = vmatpush1.msra.mxu0 0.0
        %1458 = vmatprep.mubr.f32.mxu0 0.0
        %1459 = vmatmul.mubr.f32.gmra.mrb[0].mxu0 %v1392
        %v1460 = vpop.f32.mrb[0].mxu0
        %v1461 = vadd.f32 0.0, %v1460
        %v1462 = vpop.f32.mrb[0].mxu0
        %1463 = vdwg.mxu0
        %v1464 = vadd.f32 %v1391, %v1461
        %v1465 = vxor.u32 %v1464, 2147483648
        %v1466 = vmul.f32 %v1465, 1.442695
        %v1467 = vpow.pop %v1466
        %v1468 = vadd.f32 %v1467, 1.0
        %v1469 = vrcp.pop %v1468
        %v1470 = vmul.f32 1.0, %v1469
        %v1471 = vtanh.pop %v1464
        %v1472 = vmul.f32 %v1470, %v1378
        %1474 = vrot.lane.b32.xlu0 %v1471, 64
        %v1475 = vpop.permute.xlu0 %1474
        %v1477 = vmul.f32 %v1470, %v1475
        %1479 = vrot.lane.b32.xlu0 %v1477, 32
        %v1480 = vpop.permute.xlu0 %1479
        %v1482 = vadd.f32 %v1472, %v1480
        %v1483 = vtanh.pop %v1482
        %1485 = vrot.lane.b32.xlu0 %v1483, 64
        %v1486 = vpop.permute.xlu0 %1485
        %v1488 = vmul.f32 %v1470, %v1486
        %1490 = vrot.lane.b32.xlu0 %v1488, 32
        %v1491 = vpop.permute.xlu0 %1490
        %1493 = vst.msk [vmem:[#allocation3 + $0x18] sm:$0xff] %vm1179, %v1491
        %1494 = vst.msk [vmem:[#allocation3 + $0x20] sm:$0xff] %vm1181, %v1491
        %v1495 = vld [vmem:[#allocation2 + $0x20] sm:$0xff]
        %v1496 = vsel %vm1072, %v1491, 0
        %1498 = vmatprep.subr.mxu0 0.0
        %1499 = vmatpush1.msra.mxu0 %v1065
        %1500 = vmatprep.subr.mxu0 0.0
        %1501 = vmatpush1.msra.mxu0 %v1066
        %1502 = vmatprep.subr.mxu0 0.0
        %1503 = vmatpush1.msra.mxu0 %v1067
        %1504 = vmatprep.subr.mxu0 0.0
        %1505 = vmatpush1.msra.mxu0 %v1068
        %1506 = vmatprep.subr.mxu0 0.0
        %1507 = vmatpush1.msra.mxu0 0.0
        %1508 = vmatprep.subr.mxu0 0.0
        %1509 = vmatpush1.msra.mxu0 0.0
        %1510 = vmatprep.subr.mxu0 0.0
        %1511 = vmatpush1.msra.mxu0 0.0
        %1512 = vmatprep.subr.mxu0 0.0
        %1513 = vmatpush1.msra.mxu0 0.0
        %1514 = vmatprep.subr.mxu0 0.0
        %1515 = vmatpush1.msra.mxu0 0.0
        %1516 = vmatprep.subr.mxu0 0.0
        %1517 = vmatpush1.msra.mxu0 0.0
        %1518 = vmatprep.subr.mxu0 0.0
        %1519 = vmatpush1.msra.mxu0 0.0
        %1520 = vmatprep.subr.mxu0 0.0
        %1521 = vmatpush1.msra.mxu0 0.0
        %1522 = vmatprep.subr.mxu0 0.0
        %1523 = vmatpush1.msra.mxu0 0.0
        %1524 = vmatprep.subr.mxu0 0.0
        %1525 = vmatpush1.msra.mxu0 0.0
        %1526 = vmatprep.subr.mxu0 0.0
        %1527 = vmatpush1.msra.mxu0 0.0
        %1528 = vmatprep.subr.mxu0 0.0
        %1529 = vmatpush1.msra.mxu0 0.0
        %1530 = vmatprep.subr.mxu0 0.0
        %1531 = vmatpush1.msra.mxu0 0.0
        %1532 = vmatprep.subr.mxu0 0.0
        %1533 = vmatpush1.msra.mxu0 0.0
        %1534 = vmatprep.subr.mxu0 0.0
        %1535 = vmatpush1.msra.mxu0 0.0
        %1536 = vmatprep.subr.mxu0 0.0
        %1537 = vmatpush1.msra.mxu0 0.0
        %1538 = vmatprep.subr.mxu0 0.0
        %1539 = vmatpush1.msra.mxu0 0.0
        %1540 = vmatprep.subr.mxu0 0.0
        %1541 = vmatpush1.msra.mxu0 0.0
        %1542 = vmatprep.subr.mxu0 0.0
        %1543 = vmatpush1.msra.mxu0 0.0
        %1544 = vmatprep.subr.mxu0 0.0
        %1545 = vmatpush1.msra.mxu0 0.0
        %1546 = vmatprep.subr.mxu0 0.0
        %1547 = vmatpush1.msra.mxu0 0.0
        %1548 = vmatprep.subr.mxu0 0.0
        %1549 = vmatpush1.msra.mxu0 0.0
        %1550 = vmatprep.subr.mxu0 0.0
        %1551 = vmatpush1.msra.mxu0 0.0
        %1552 = vmatprep.subr.mxu0 0.0
        %1553 = vmatpush1.msra.mxu0 0.0
        %1554 = vmatprep.subr.mxu0 0.0
        %1555 = vmatpush1.msra.mxu0 0.0
        %1556 = vmatprep.subr.mxu0 0.0
        %1557 = vmatpush1.msra.mxu0 0.0
        %1558 = vmatprep.subr.mxu0 0.0
        %1559 = vmatpush1.msra.mxu0 0.0
        %1560 = vmatprep.subr.mxu0 0.0
        %1561 = vmatpush1.msra.mxu0 0.0
        %1562 = vmatprep.mubr.f32.mxu0 0.0
        %1563 = vmatmul.mubr.f32.gmra.mrb[0].mxu0 %v1496
        %v1564 = vpop.f32.mrb[0].mxu0
        %v1565 = vadd.f32 0.0, %v1564
        %v1566 = vpop.f32.mrb[0].mxu0
        %1567 = vdwg.mxu0
        %v1568 = vadd.f32 %v1495, %v1565
        %v1569 = vxor.u32 %v1568, 2147483648
        %v1570 = vmul.f32 %v1569, 1.442695
        %v1571 = vpow.pop %v1570
        %v1572 = vadd.f32 %v1571, 1.0
        %v1573 = vrcp.pop %v1572
        %v1574 = vmul.f32 1.0, %v1573
        %v1575 = vtanh.pop %v1568
        %v1576 = vmul.f32 %v1574, %v1482
        %1578 = vrot.lane.b32.xlu0 %v1575, 64
        %v1579 = vpop.permute.xlu0 %1578
        %v1581 = vmul.f32 %v1574, %v1579
        %1583 = vrot.lane.b32.xlu0 %v1581, 32
        %v1584 = vpop.permute.xlu0 %1583
        %v1586 = vadd.f32 %v1576, %v1584
        %v1587 = vtanh.pop %v1586
        %1589 = vrot.lane.b32.xlu0 %v1587, 64
        %v1590 = vpop.permute.xlu0 %1589
        %v1592 = vmul.f32 %v1574, %v1590
        %1594 = vrot.lane.b32.xlu0 %v1592, 32
        %v1595 = vpop.permute.xlu0 %1594
        %1597 = vst.msk [vmem:[#allocation3 + $0x20] sm:$0xff] %vm1179, %v1595
        %1598 = vst.msk [vmem:[#allocation3 + $0x18] sm:$0xff] %vm1181, %v1595
        %v1599 = vld [vmem:[#allocation2 + $0x28] sm:$0xff]
        %v1600 = vsel %vm1072, %v1595, 0
        %1602 = vmatprep.subr.mxu0 0.0
        %1603 = vmatpush1.msra.mxu0 %v1065
        %1604 = vmatprep.subr.mxu0 0.0
        %1605 = vmatpush1.msra.mxu0 %v1066
        %1606 = vmatprep.subr.mxu0 0.0
        %1607 = vmatpush1.msra.mxu0 %v1067
        %1608 = vmatprep.subr.mxu0 0.0
        %1609 = vmatpush1.msra.mxu0 %v1068
        %1610 = vmatprep.subr.mxu0 0.0
        %1611 = vmatpush1.msra.mxu0 0.0
        %1612 = vmatprep.subr.mxu0 0.0
        %1613 = vmatpush1.msra.mxu0 0.0
        %1614 = vmatprep.subr.mxu0 0.0
        %1615 = vmatpush1.msra.mxu0 0.0
        %1616 = vmatprep.subr.mxu0 0.0
        %1617 = vmatpush1.msra.mxu0 0.0
        %1618 = vmatprep.subr.mxu0 0.0
        %1619 = vmatpush1.msra.mxu0 0.0
        %1620 = vmatprep.subr.mxu0 0.0
        %1621 = vmatpush1.msra.mxu0 0.0
        %1622 = vmatprep.subr.mxu0 0.0
        %1623 = vmatpush1.msra.mxu0 0.0
        %1624 = vmatprep.subr.mxu0 0.0
        %1625 = vmatpush1.msra.mxu0 0.0
        %1626 = vmatprep.subr.mxu0 0.0
        %1627 = vmatpush1.msra.mxu0 0.0
        %1628 = vmatprep.subr.mxu0 0.0
        %1629 = vmatpush1.msra.mxu0 0.0
        %1630 = vmatprep.subr.mxu0 0.0
        %1631 = vmatpush1.msra.mxu0 0.0
        %1632 = vmatprep.subr.mxu0 0.0
        %1633 = vmatpush1.msra.mxu0 0.0
        %1634 = vmatprep.subr.mxu0 0.0
        %1635 = vmatpush1.msra.mxu0 0.0
        %1636 = vmatprep.subr.mxu0 0.0
        %1637 = vmatpush1.msra.mxu0 0.0
        %1638 = vmatprep.subr.mxu0 0.0
        %1639 = vmatpush1.msra.mxu0 0.0
        %1640 = vmatprep.subr.mxu0 0.0
        %1641 = vmatpush1.msra.mxu0 0.0
        %1642 = vmatprep.subr.mxu0 0.0
        %1643 = vmatpush1.msra.mxu0 0.0
        %1644 = vmatprep.subr.mxu0 0.0
        %1645 = vmatpush1.msra.mxu0 0.0
        %1646 = vmatprep.subr.mxu0 0.0
        %1647 = vmatpush1.msra.mxu0 0.0
        %1648 = vmatprep.subr.mxu0 0.0
        %1649 = vmatpush1.msra.mxu0 0.0
        %1650 = vmatprep.subr.mxu0 0.0
        %1651 = vmatpush1.msra.mxu0 0.0
        %1652 = vmatprep.subr.mxu0 0.0
        %1653 = vmatpush1.msra.mxu0 0.0
        %1654 = vmatprep.subr.mxu0 0.0
        %1655 = vmatpush1.msra.mxu0 0.0
        %1656 = vmatprep.subr.mxu0 0.0
        %1657 = vmatpush1.msra.mxu0 0.0
        %1658 = vmatprep.subr.mxu0 0.0
        %1659 = vmatpush1.msra.mxu0 0.0
        %1660 = vmatprep.subr.mxu0 0.0
        %1661 = vmatpush1.msra.mxu0 0.0
        %1662 = vmatprep.subr.mxu0 0.0
        %1663 = vmatpush1.msra.mxu0 0.0
        %1664 = vmatprep.subr.mxu0 0.0
        %1665 = vmatpush1.msra.mxu0 0.0
        %1666 = vmatprep.mubr.f32.mxu0 0.0
        %1667 = vmatmul.mubr.f32.gmra.mrb[0].mxu0 %v1600
        %v1668 = vpop.f32.mrb[0].mxu0
        %v1669 = vadd.f32 0.0, %v1668
        %v1670 = vpop.f32.mrb[0].mxu0
        %1671 = vdwg.mxu0
        %v1672 = vadd.f32 %v1599, %v1669
        %v1673 = vxor.u32 %v1672, 2147483648
        %v1674 = vmul.f32 %v1673, 1.442695
        %v1675 = vpow.pop %v1674
        %v1676 = vadd.f32 %v1675, 1.0
        %v1677 = vrcp.pop %v1676
        %v1678 = vmul.f32 1.0, %v1677
        %v1679 = vtanh.pop %v1672
        %v1680 = vmul.f32 %v1678, %v1586
        %1682 = vrot.lane.b32.xlu0 %v1679, 64
        %v1683 = vpop.permute.xlu0 %1682
        %v1685 = vmul.f32 %v1678, %v1683
        %1687 = vrot.lane.b32.xlu0 %v1685, 32
        %v1688 = vpop.permute.xlu0 %1687
        %v1690 = vadd.f32 %v1680, %v1688
        %v1691 = vtanh.pop %v1690
        %1693 = vrot.lane.b32.xlu0 %v1691, 64
        %v1694 = vpop.permute.xlu0 %1693
        %v1696 = vmul.f32 %v1678, %v1694
        %1698 = vrot.lane.b32.xlu0 %v1696, 32
        %v1699 = vpop.permute.xlu0 %1698
        %1701 = vst.msk [vmem:[#allocation3 + $0x28] sm:$0xff] %vm1179, %v1699
        %1702 = vst.msk [vmem:[#allocation3 + $0x10] sm:$0xff] %vm1181, %v1699
        %v1703 = vld [vmem:[#allocation2 + $0x30] sm:$0xff]
        %v1704 = vsel %vm1072, %v1699, 0
        %1706 = vmatprep.subr.mxu0 0.0
        %1707 = vmatpush1.msra.mxu0 %v1065
        %1708 = vmatprep.subr.mxu0 0.0
        %1709 = vmatpush1.msra.mxu0 %v1066
        %1710 = vmatprep.subr.mxu0 0.0
        %1711 = vmatpush1.msra.mxu0 %v1067
        %1712 = vmatprep.subr.mxu0 0.0
        %1713 = vmatpush1.msra.mxu0 %v1068
        %1714 = vmatprep.subr.mxu0 0.0
        %1715 = vmatpush1.msra.mxu0 0.0
        %1716 = vmatprep.subr.mxu0 0.0
        %1717 = vmatpush1.msra.mxu0 0.0
        %1718 = vmatprep.subr.mxu0 0.0
        %1719 = vmatpush1.msra.mxu0 0.0
        %1720 = vmatprep.subr.mxu0 0.0
        %1721 = vmatpush1.msra.mxu0 0.0
        %1722 = vmatprep.subr.mxu0 0.0
        %1723 = vmatpush1.msra.mxu0 0.0
        %1724 = vmatprep.subr.mxu0 0.0
        %1725 = vmatpush1.msra.mxu0 0.0
        %1726 = vmatprep.subr.mxu0 0.0
        %1727 = vmatpush1.msra.mxu0 0.0
        %1728 = vmatprep.subr.mxu0 0.0
        %1729 = vmatpush1.msra.mxu0 0.0
        %1730 = vmatprep.subr.mxu0 0.0
        %1731 = vmatpush1.msra.mxu0 0.0
        %1732 = vmatprep.subr.mxu0 0.0
        %1733 = vmatpush1.msra.mxu0 0.0
        %1734 = vmatprep.subr.mxu0 0.0
        %1735 = vmatpush1.msra.mxu0 0.0
        %1736 = vmatprep.subr.mxu0 0.0
        %1737 = vmatpush1.msra.mxu0 0.0
        %1738 = vmatprep.subr.mxu0 0.0
        %1739 = vmatpush1.msra.mxu0 0.0
        %1740 = vmatprep.subr.mxu0 0.0
        %1741 = vmatpush1.msra.mxu0 0.0
        %1742 = vmatprep.subr.mxu0 0.0
        %1743 = vmatpush1.msra.mxu0 0.0
        %1744 = vmatprep.subr.mxu0 0.0
        %1745 = vmatpush1.msra.mxu0 0.0
        %1746 = vmatprep.subr.mxu0 0.0
        %1747 = vmatpush1.msra.mxu0 0.0
        %1748 = vmatprep.subr.mxu0 0.0
        %1749 = vmatpush1.msra.mxu0 0.0
        %1750 = vmatprep.subr.mxu0 0.0
        %1751 = vmatpush1.msra.mxu0 0.0
        %1752 = vmatprep.subr.mxu0 0.0
        %1753 = vmatpush1.msra.mxu0 0.0
        %1754 = vmatprep.subr.mxu0 0.0
        %1755 = vmatpush1.msra.mxu0 0.0
        %1756 = vmatprep.subr.mxu0 0.0
        %1757 = vmatpush1.msra.mxu0 0.0
        %1758 = vmatprep.subr.mxu0 0.0
        %1759 = vmatpush1.msra.mxu0 0.0
        %1760 = vmatprep.subr.mxu0 0.0
        %1761 = vmatpush1.msra.mxu0 0.0
        %1762 = vmatprep.subr.mxu0 0.0
        %1763 = vmatpush1.msra.mxu0 0.0
        %1764 = vmatprep.subr.mxu0 0.0
        %1765 = vmatpush1.msra.mxu0 0.0
        %1766 = vmatprep.subr.mxu0 0.0
        %1767 = vmatpush1.msra.mxu0 0.0
        %1768 = vmatprep.subr.mxu0 0.0
        %1769 = vmatpush1.msra.mxu0 0.0
        %1770 = vmatprep.mubr.f32.mxu0 0.0
        %1771 = vmatmul.mubr.f32.gmra.mrb[0].mxu0 %v1704
        %v1772 = vpop.f32.mrb[0].mxu0
        %v1773 = vadd.f32 0.0, %v1772
        %v1774 = vpop.f32.mrb[0].mxu0
        %1775 = vdwg.mxu0
        %v1776 = vadd.f32 %v1703, %v1773
        %v1777 = vxor.u32 %v1776, 2147483648
        %v1778 = vmul.f32 %v1777, 1.442695
        %v1779 = vpow.pop %v1778
        %v1780 = vadd.f32 %v1779, 1.0
        %v1781 = vrcp.pop %v1780
        %v1782 = vmul.f32 1.0, %v1781
        %v1783 = vtanh.pop %v1776
        %v1784 = vmul.f32 %v1782, %v1690
        %1786 = vrot.lane.b32.xlu0 %v1783, 64
        %v1787 = vpop.permute.xlu0 %1786
        %v1789 = vmul.f32 %v1782, %v1787
        %1791 = vrot.lane.b32.xlu0 %v1789, 32
        %v1792 = vpop.permute.xlu0 %1791
        %v1794 = vadd.f32 %v1784, %v1792
        %v1795 = vtanh.pop %v1794
        %1797 = vrot.lane.b32.xlu0 %v1795, 64
        %v1798 = vpop.permute.xlu0 %1797
        %v1800 = vmul.f32 %v1782, %v1798
        %1802 = vrot.lane.b32.xlu0 %v1800, 32
        %v1803 = vpop.permute.xlu0 %1802
        %1805 = vst.msk [vmem:[#allocation3 + $0x30] sm:$0xff] %vm1179, %v1803
        %1806 = vst.msk [vmem:[#allocation3 + $0x8] sm:$0xff] %vm1181, %v1803
        %v1807 = vld [vmem:[#allocation2 + $0x38] sm:$0xff]
        %v1808 = vsel %vm1072, %v1803, 0
        %1810 = vmatprep.subr.mxu0 0.0
        %1811 = vmatpush1.msra.mxu0 %v1065
        %1812 = vmatprep.subr.mxu0 0.0
        %1813 = vmatpush1.msra.mxu0 %v1066
        %1814 = vmatprep.subr.mxu0 0.0
        %1815 = vmatpush1.msra.mxu0 %v1067
        %1816 = vmatprep.subr.mxu0 0.0
        %1817 = vmatpush1.msra.mxu0 %v1068
        %1818 = vmatprep.subr.mxu0 0.0
        %1819 = vmatpush1.msra.mxu0 0.0
        %1820 = vmatprep.subr.mxu0 0.0
        %1821 = vmatpush1.msra.mxu0 0.0
        %1822 = vmatprep.subr.mxu0 0.0
        %1823 = vmatpush1.msra.mxu0 0.0
        %1824 = vmatprep.subr.mxu0 0.0
        %1825 = vmatpush1.msra.mxu0 0.0
        %1826 = vmatprep.subr.mxu0 0.0
        %1827 = vmatpush1.msra.mxu0 0.0
        %1828 = vmatprep.subr.mxu0 0.0
        %1829 = vmatpush1.msra.mxu0 0.0
        %1830 = vmatprep.subr.mxu0 0.0
        %1831 = vmatpush1.msra.mxu0 0.0
        %1832 = vmatprep.subr.mxu0 0.0
        %1833 = vmatpush1.msra.mxu0 0.0
        %1834 = vmatprep.subr.mxu0 0.0
        %1835 = vmatpush1.msra.mxu0 0.0
        %1836 = vmatprep.subr.mxu0 0.0
        %1837 = vmatpush1.msra.mxu0 0.0
        %1838 = vmatprep.subr.mxu0 0.0
        %1839 = vmatpush1.msra.mxu0 0.0
        %1840 = vmatprep.subr.mxu0 0.0
        %1841 = vmatpush1.msra.mxu0 0.0
        %1842 = vmatprep.subr.mxu0 0.0
        %1843 = vmatpush1.msra.mxu0 0.0
        %1844 = vmatprep.subr.mxu0 0.0
        %1845 = vmatpush1.msra.mxu0 0.0
        %1846 = vmatprep.subr.mxu0 0.0
        %1847 = vmatpush1.msra.mxu0 0.0
        %1848 = vmatprep.subr.mxu0 0.0
        %1849 = vmatpush1.msra.mxu0 0.0
        %1850 = vmatprep.subr.mxu0 0.0
        %1851 = vmatpush1.msra.mxu0 0.0
        %1852 = vmatprep.subr.mxu0 0.0
        %1853 = vmatpush1.msra.mxu0 0.0
        %1854 = vmatprep.subr.mxu0 0.0
        %1855 = vmatpush1.msra.mxu0 0.0
        %1856 = vmatprep.subr.mxu0 0.0
        %1857 = vmatpush1.msra.mxu0 0.0
        %1858 = vmatprep.subr.mxu0 0.0
        %1859 = vmatpush1.msra.mxu0 0.0
        %1860 = vmatprep.subr.mxu0 0.0
        %1861 = vmatpush1.msra.mxu0 0.0
        %1862 = vmatprep.subr.mxu0 0.0
        %1863 = vmatpush1.msra.mxu0 0.0
        %1864 = vmatprep.subr.mxu0 0.0
        %1865 = vmatpush1.msra.mxu0 0.0
        %1866 = vmatprep.subr.mxu0 0.0
        %1867 = vmatpush1.msra.mxu0 0.0
        %1868 = vmatprep.subr.mxu0 0.0
        %1869 = vmatpush1.msra.mxu0 0.0
        %1870 = vmatprep.subr.mxu0 0.0
        %1871 = vmatpush1.msra.mxu0 0.0
        %1872 = vmatprep.subr.mxu0 0.0
        %1873 = vmatpush1.msra.mxu0 0.0
        %1874 = vmatprep.mubr.f32.mxu0 0.0
        %1875 = vmatmul.mubr.f32.gmra.mrb[0].mxu0 %v1808
        %v1876 = vpop.f32.mrb[0].mxu0
        %v1877 = vadd.f32 0.0, %v1876
        %v1878 = vpop.f32.mrb[0].mxu0
        %1879 = vdwg.mxu0
        %v1880 = vadd.f32 %v1807, %v1877
        %v1881 = vxor.u32 %v1880, 2147483648
        %v1882 = vmul.f32 %v1881, 1.442695
        %v1883 = vpow.pop %v1882
        %v1884 = vadd.f32 %v1883, 1.0
        %v1885 = vrcp.pop %v1884
        %v1886 = vmul.f32 1.0, %v1885
        %v1887 = vtanh.pop %v1880
        %v1888 = vmul.f32 %v1886, %v1794
        %1890 = vrot.lane.b32.xlu0 %v1887, 64
        %v1891 = vpop.permute.xlu0 %1890
        %v1893 = vmul.f32 %v1886, %v1891
        %1895 = vrot.lane.b32.xlu0 %v1893, 32
        %v1896 = vpop.permute.xlu0 %1895
        %v1898 = vadd.f32 %v1888, %v1896
        %v1899 = vtanh.pop %v1898
        %1901 = vrot.lane.b32.xlu0 %v1899, 64
        %v1902 = vpop.permute.xlu0 %1901
        %v1904 = vmul.f32 %v1886, %v1902
        %1906 = vrot.lane.b32.xlu0 %v1904, 32
        %v1907 = vpop.permute.xlu0 %1906
        %1909 = vst.msk [vmem:[#allocation3 + $0x38] sm:$0xff] %vm1179, %v1907
        %1910 = vst.msk [vmem:[#allocation3] sm:$0xff] %vm1181, %v1907
        %v1911 = vld [vmem:[#allocation12] sm:$0xff]
        %v1912 = vld [vmem:[#allocation12 + $0x8] sm:$0xff]
        %v1913 = vld [vmem:[#allocation12 + $0x10] sm:$0xff]
        %v1914 = vld [vmem:[#allocation12 + $0x18] sm:$0xff]
        %v1915 = vld [vmem:[%s7] sm:$0x1]
        %v1917 = vlaneseq
        %v1918 = vshrl.u32 %v1917, 7
        %v1919 = vsub.s32 0, %v1918
        %v1920 = vrot.slane %v1915, %v1919
        %v1922 = vld [vmem:[%s8] sm:$0xff]
        %v1923 = vlaneseq
        %v1924 = vand.u32 %v1923, 127
        %v1925 = vcvt.s32.f32 %v1924
        %vm1926 = vcmp.eq.s32.totalorder %v1924, 0
        %vm1927 = vcmp.eq.s32.totalorder %v1924, 1
        %vm1928 = vcmp.eq.s32.totalorder %v1924, 2
        %vm1929 = vcmp.eq.s32.totalorder %v1924, 3
        %vm1930 = vcmp.eq.s32.totalorder %v1924, 4
        %v1931 = vld [vmem:[%s10] sm:$0xff]
        %v1932 = vld [vmem:[#allocation3] sm:$0xff]
        %v1934 = vsel %vm1072, %v1932, 0
        %1936 = vmatprep.subr.mxu0 0.0
        %1937 = vmatpush1.msra.mxu0 %v1911
        %1938 = vmatprep.subr.mxu0 0.0
        %1939 = vmatpush1.msra.mxu0 %v1912
        %1940 = vmatprep.subr.mxu0 0.0
        %1941 = vmatpush1.msra.mxu0 %v1913
        %1942 = vmatprep.subr.mxu0 0.0
        %1943 = vmatpush1.msra.mxu0 %v1914
        %1944 = vmatprep.subr.mxu0 0.0
        %1945 = vmatpush1.msra.mxu0 0.0
        %1946 = vmatprep.subr.mxu0 0.0
        %1947 = vmatpush1.msra.mxu0 0.0
        %1948 = vmatprep.subr.mxu0 0.0
        %1949 = vmatpush1.msra.mxu0 0.0
        %1950 = vmatprep.subr.mxu0 0.0
        %1951 = vmatpush1.msra.mxu0 0.0
        %1952 = vmatprep.subr.mxu0 0.0
        %1953 = vmatpush1.msra.mxu0 0.0
        %1954 = vmatprep.subr.mxu0 0.0
        %1955 = vmatpush1.msra.mxu0 0.0
        %1956 = vmatprep.subr.mxu0 0.0
        %1957 = vmatpush1.msra.mxu0 0.0
        %1958 = vmatprep.subr.mxu0 0.0
        %1959 = vmatpush1.msra.mxu0 0.0
        %1960 = vmatprep.subr.mxu0 0.0
        %1961 = vmatpush1.msra.mxu0 0.0
        %1962 = vmatprep.subr.mxu0 0.0
        %1963 = vmatpush1.msra.mxu0 0.0
        %1964 = vmatprep.subr.mxu0 0.0
        %1965 = vmatpush1.msra.mxu0 0.0
        %1966 = vmatprep.subr.mxu0 0.0
        %1967 = vmatpush1.msra.mxu0 0.0
        %1968 = vmatprep.subr.mxu0 0.0
        %1969 = vmatpush1.msra.mxu0 0.0
        %1970 = vmatprep.subr.mxu0 0.0
        %1971 = vmatpush1.msra.mxu0 0.0
        %1972 = vmatprep.subr.mxu0 0.0
        %1973 = vmatpush1.msra.mxu0 0.0
        %1974 = vmatprep.subr.mxu0 0.0
        %1975 = vmatpush1.msra.mxu0 0.0
        %1976 = vmatprep.subr.mxu0 0.0
        %1977 = vmatpush1.msra.mxu0 0.0
        %1978 = vmatprep.subr.mxu0 0.0
        %1979 = vmatpush1.msra.mxu0 0.0
        %1980 = vmatprep.subr.mxu0 0.0
        %1981 = vmatpush1.msra.mxu0 0.0
        %1982 = vmatprep.subr.mxu0 0.0
        %1983 = vmatpush1.msra.mxu0 0.0
        %1984 = vmatprep.subr.mxu0 0.0
        %1985 = vmatpush1.msra.mxu0 0.0
        %1986 = vmatprep.subr.mxu0 0.0
        %1987 = vmatpush1.msra.mxu0 0.0
        %1988 = vmatprep.subr.mxu0 0.0
        %1989 = vmatpush1.msra.mxu0 0.0
        %1990 = vmatprep.subr.mxu0 0.0
        %1991 = vmatpush1.msra.mxu0 0.0
        %1992 = vmatprep.subr.mxu0 0.0
        %1993 = vmatpush1.msra.mxu0 0.0
        %1994 = vmatprep.subr.mxu0 0.0
        %1995 = vmatpush1.msra.mxu0 0.0
        %1996 = vmatprep.subr.mxu0 0.0
        %1997 = vmatpush1.msra.mxu0 0.0
        %1998 = vmatprep.subr.mxu0 0.0
        %1999 = vmatpush1.msra.mxu0 0.0
        %2000 = vmatprep.mubr.f32.mxu0 0.0
        %2001 = vmatmul.mubr.f32.gmra.mrb[0].mxu0 %v1934
        %v2002 = vpop.f32.mrb[0].mxu0
        %v2003 = vadd.f32 %v1920, %v2002
        %v2004 = vpop.f32.mrb[0].mxu0
        %2005 = vdwg.mxu0
        %2006 = vst [vmem:[%s456] sm:$0xff] %v2003
        %v2007 = vlaneseq
        %v2008 = vshrl.u32 %v2007, 7
        %v2009 = vsub.s32 0, %v2008
        %v2010 = vrot.slane %v1922, %v2009
        %v2011 = vadd.f32 %v1931, %v2010
        %vm2012 = vcmask 64512
        %v2013 = vsel %vm2012, %v2011, -inf
        %2014 = vmax.xlane.f32.xlu0 %v2013
        %v2015 = vpop.xlane.xlu0 %2014
        %vm2016 = vcmp.eq.f32.partialorder %v2011, %v2015
        %v2017 = vsel %vm2016, %v1925, 8.0
        %v2018 = vsel %vm2012, %v2017, inf
        %2019 = vmin.xlane.f32.xlu0 %v2018
        %v2020 = vpop.xlane.xlu0 %2019
        %v2021 = vsel %vm1926, 1, 0
        %vm2022 = vcmp.eq.s32.totalorder %v2021, 1
        %v2023 = vsel %vm2022, %v2015, 0.0
        %v2024 = vadd.f32 %v2003, %v2023
        %v2025 = vsel %vm2022, %v2020, 0.0
        %v2026 = vlaneseq
        %v2027 = vshrl.u32 %v2026, 7
        %v2028 = vsub.s32 1, %v2027
        %v2029 = vrot.slane %v1922, %v2028
        %v2030 = vadd.f32 %v1931, %v2029
        %v2031 = vsel %vm2012, %v2030, -inf
        %2032 = vmax.xlane.f32.xlu0 %v2031
        %v2033 = vpop.xlane.xlu0 %2032
        %vm2034 = vcmp.eq.f32.partialorder %v2030, %v2033
        %v2035 = vsel %vm2034, %v1925, 8.0
        %v2036 = vsel %vm2012, %v2035, inf
        %2037 = vmin.xlane.f32.xlu0 %v2036
        %v2038 = vpop.xlane.xlu0 %2037
        %v2039 = vsel %vm1927, 1, 0
        %vm2040 = vcmp.eq.s32.totalorder %v2039, 1
        %v2041 = vsel %vm2040, %v2033, 0.0
        %v2042 = vadd.f32 %v2024, %v2041
        %v2043 = vsel %vm2040, %v2038, %v2025
        %v2044 = vlaneseq
        %v2045 = vshrl.u32 %v2044, 7
        %v2046 = vsub.s32 2, %v2045
        %v2047 = vrot.slane %v1922, %v2046
        %v2048 = vadd.f32 %v1931, %v2047
        %v2049 = vsel %vm2012, %v2048, -inf
        %2050 = vmax.xlane.f32.xlu0 %v2049
        %v2051 = vpop.xlane.xlu0 %2050
        %vm2052 = vcmp.eq.f32.partialorder %v2048, %v2051
        %v2053 = vsel %vm2052, %v1925, 8.0
        %v2054 = vsel %vm2012, %v2053, inf
        %2055 = vmin.xlane.f32.xlu0 %v2054
        %v2056 = vpop.xlane.xlu0 %2055
        %v2057 = vsel %vm1928, 1, 0
        %vm2058 = vcmp.eq.s32.totalorder %v2057, 1
        %v2059 = vsel %vm2058, %v2051, 0.0
        %v2060 = vadd.f32 %v2042, %v2059
        %v2061 = vsel %vm2058, %v2056, %v2043
        %v2062 = vlaneseq
        %v2063 = vshrl.u32 %v2062, 7
        %v2064 = vsub.s32 3, %v2063
        %v2065 = vrot.slane %v1922, %v2064
        %v2066 = vadd.f32 %v1931, %v2065
        %v2067 = vsel %vm2012, %v2066, -inf
        %2068 = vmax.xlane.f32.xlu0 %v2067
        %v2069 = vpop.xlane.xlu0 %2068
        %vm2070 = vcmp.eq.f32.partialorder %v2066, %v2069
        %v2071 = vsel %vm2070, %v1925, 8.0
        %v2072 = vsel %vm2012, %v2071, inf
        %2073 = vmin.xlane.f32.xlu0 %v2072
        %v2074 = vpop.xlane.xlu0 %2073
        %v2075 = vsel %vm1929, 1, 0
        %vm2076 = vcmp.eq.s32.totalorder %v2075, 1
        %v2077 = vsel %vm2076, %v2069, 0.0
        %v2078 = vadd.f32 %v2060, %v2077
        %v2079 = vsel %vm2076, %v2074, %v2061
        %v2080 = vlaneseq
        %v2081 = vshrl.u32 %v2080, 7
        %v2082 = vsub.s32 4, %v2081
        %v2083 = vrot.slane %v1922, %v2082
        %v2084 = vadd.f32 %v1931, %v2083
        %v2085 = vsel %vm2012, %v2084, -inf
        %2086 = vmax.xlane.f32.xlu0 %v2085
        %v2087 = vpop.xlane.xlu0 %2086
        %vm2088 = vcmp.eq.f32.partialorder %v2084, %v2087
        %v2089 = vsel %vm2088, %v1925, 8.0
        %v2090 = vsel %vm2012, %v2089, inf
        %2091 = vmin.xlane.f32.xlu0 %v2090
        %v2092 = vpop.xlane.xlu0 %2091
        %v2093 = vsel %vm1930, 1, 0
        %vm2094 = vcmp.eq.s32.totalorder %v2093, 1
        %v2095 = vsel %vm2094, %v2087, 0.0
        %v2096 = vadd.f32 %v2078, %v2095
        %v2097 = vsel %vm2094, %v2092, %v2079
        %v2098 = vld [vmem:[#allocation3 + $0x8] sm:$0xff]
        %v2100 = vsel %vm1072, %v2098, 0
        %2102 = vmatprep.subr.mxu0 0.0
        %2103 = vmatpush1.msra.mxu0 %v1911
        %2104 = vmatprep.subr.mxu0 0.0
        %2105 = vmatpush1.msra.mxu0 %v1912
        %2106 = vmatprep.subr.mxu0 0.0
        %2107 = vmatpush1.msra.mxu0 %v1913
        %2108 = vmatprep.subr.mxu0 0.0
        %2109 = vmatpush1.msra.mxu0 %v1914
        %2110 = vmatprep.subr.mxu0 0.0
        %2111 = vmatpush1.msra.mxu0 0.0
        %2112 = vmatprep.subr.mxu0 0.0
        %2113 = vmatpush1.msra.mxu0 0.0
        %2114 = vmatprep.subr.mxu0 0.0
        %2115 = vmatpush1.msra.mxu0 0.0
        %2116 = vmatprep.subr.mxu0 0.0
        %2117 = vmatpush1.msra.mxu0 0.0
        %2118 = vmatprep.subr.mxu0 0.0
        %2119 = vmatpush1.msra.mxu0 0.0
        %2120 = vmatprep.subr.mxu0 0.0
        %2121 = vmatpush1.msra.mxu0 0.0
        %2122 = vmatprep.subr.mxu0 0.0
        %2123 = vmatpush1.msra.mxu0 0.0
        %2124 = vmatprep.subr.mxu0 0.0
        %2125 = vmatpush1.msra.mxu0 0.0
        %2126 = vmatprep.subr.mxu0 0.0
        %2127 = vmatpush1.msra.mxu0 0.0
        %2128 = vmatprep.subr.mxu0 0.0
        %2129 = vmatpush1.msra.mxu0 0.0
        %2130 = vmatprep.subr.mxu0 0.0
        %2131 = vmatpush1.msra.mxu0 0.0
        %2132 = vmatprep.subr.mxu0 0.0
        %2133 = vmatpush1.msra.mxu0 0.0
        %2134 = vmatprep.subr.mxu0 0.0
        %2135 = vmatpush1.msra.mxu0 0.0
        %2136 = vmatprep.subr.mxu0 0.0
        %2137 = vmatpush1.msra.mxu0 0.0
        %2138 = vmatprep.subr.mxu0 0.0
        %2139 = vmatpush1.msra.mxu0 0.0
        %2140 = vmatprep.subr.mxu0 0.0
        %2141 = vmatpush1.msra.mxu0 0.0
        %2142 = vmatprep.subr.mxu0 0.0
        %2143 = vmatpush1.msra.mxu0 0.0
        %2144 = vmatprep.subr.mxu0 0.0
        %2145 = vmatpush1.msra.mxu0 0.0
        %2146 = vmatprep.subr.mxu0 0.0
        %2147 = vmatpush1.msra.mxu0 0.0
        %2148 = vmatprep.subr.mxu0 0.0
        %2149 = vmatpush1.msra.mxu0 0.0
        %2150 = vmatprep.subr.mxu0 0.0
        %2151 = vmatpush1.msra.mxu0 0.0
        %2152 = vmatprep.subr.mxu0 0.0
        %2153 = vmatpush1.msra.mxu0 0.0
        %2154 = vmatprep.subr.mxu0 0.0
        %2155 = vmatpush1.msra.mxu0 0.0
        %2156 = vmatprep.subr.mxu0 0.0
        %2157 = vmatpush1.msra.mxu0 0.0
        %2158 = vmatprep.subr.mxu0 0.0
        %2159 = vmatpush1.msra.mxu0 0.0
        %2160 = vmatprep.subr.mxu0 0.0
        %2161 = vmatpush1.msra.mxu0 0.0
        %2162 = vmatprep.subr.mxu0 0.0
        %2163 = vmatpush1.msra.mxu0 0.0
        %2164 = vmatprep.subr.mxu0 0.0
        %2165 = vmatpush1.msra.mxu0 0.0
        %2166 = vmatprep.mubr.f32.mxu0 0.0
        %2167 = vmatmul.mubr.f32.gmra.mrb[0].mxu0 %v2100
        %v2168 = vpop.f32.mrb[0].mxu0
        %v2169 = vadd.f32 %v1920, %v2168
        %v2170 = vpop.f32.mrb[0].mxu0
        %2171 = vdwg.mxu0
        %2172 = vst [vmem:[%s456 + $0x8] sm:$0xff] %v2169
        %v2173 = vadd.f32 %v2096, %v2010
        %v2174 = vsel %vm2012, %v2173, -inf
        %2175 = vmax.xlane.f32.xlu0 %v2174
        %v2176 = vpop.xlane.xlu0 %2175
        %vm2177 = vcmp.eq.f32.partialorder %v2173, %v2176
        %v2178 = vsel %vm2177, %v1925, 8.0
        %v2179 = vsel %vm2012, %v2178, inf
        %2180 = vmin.xlane.f32.xlu0 %v2179
        %v2181 = vpop.xlane.xlu0 %2180
        %v2182 = vsel %vm2022, %v2176, 0.0
        %v2183 = vadd.f32 %v2169, %v2182
        %v2184 = vsel %vm2022, %v2181, 0.0
        %v2185 = vadd.f32 %v2096, %v2029
        %v2186 = vsel %vm2012, %v2185, -inf
        %2187 = vmax.xlane.f32.xlu0 %v2186
        %v2188 = vpop.xlane.xlu0 %2187
        %vm2189 = vcmp.eq.f32.partialorder %v2185, %v2188
        %v2190 = vsel %vm2189, %v1925, 8.0
        %v2191 = vsel %vm2012, %v2190, inf
        %2192 = vmin.xlane.f32.xlu0 %v2191
        %v2193 = vpop.xlane.xlu0 %2192
        %v2194 = vsel %vm2040, %v2188, 0.0
        %v2195 = vadd.f32 %v2183, %v2194
        %v2196 = vsel %vm2040, %v2193, %v2184
        %v2197 = vadd.f32 %v2096, %v2047
        %v2198 = vsel %vm2012, %v2197, -inf
        %2199 = vmax.xlane.f32.xlu0 %v2198
        %v2200 = vpop.xlane.xlu0 %2199
        %vm2201 = vcmp.eq.f32.partialorder %v2197, %v2200
        %v2202 = vsel %vm2201, %v1925, 8.0
        %v2203 = vsel %vm2012, %v2202, inf
        %2204 = vmin.xlane.f32.xlu0 %v2203
        %v2205 = vpop.xlane.xlu0 %2204
        %v2206 = vsel %vm2058, %v2200, 0.0
        %v2207 = vadd.f32 %v2195, %v2206
        %v2208 = vsel %vm2058, %v2205, %v2196
        %v2209 = vadd.f32 %v2096, %v2065
        %v2210 = vsel %vm2012, %v2209, -inf
        %2211 = vmax.xlane.f32.xlu0 %v2210
        %v2212 = vpop.xlane.xlu0 %2211
        %vm2213 = vcmp.eq.f32.partialorder %v2209, %v2212
        %v2214 = vsel %vm2213, %v1925, 8.0
        %v2215 = vsel %vm2012, %v2214, inf
        %2216 = vmin.xlane.f32.xlu0 %v2215
        %v2217 = vpop.xlane.xlu0 %2216
        %v2218 = vsel %vm2076, %v2212, 0.0
        %v2219 = vadd.f32 %v2207, %v2218
        %v2220 = vsel %vm2076, %v2217, %v2208
        %v2221 = vadd.f32 %v2096, %v2083
        %v2222 = vsel %vm2012, %v2221, -inf
        %2223 = vmax.xlane.f32.xlu0 %v2222
        %v2224 = vpop.xlane.xlu0 %2223
        %vm2225 = vcmp.eq.f32.partialorder %v2221, %v2224
        %v2226 = vsel %vm2225, %v1925, 8.0
        %v2227 = vsel %vm2012, %v2226, inf
        %2228 = vmin.xlane.f32.xlu0 %v2227
        %v2229 = vpop.xlane.xlu0 %2228
        %v2230 = vsel %vm2094, %v2224, 0.0
        %v2231 = vadd.f32 %v2219, %v2230
        %v2232 = vsel %vm2094, %v2229, %v2220
        %v2233 = vld [vmem:[#allocation3 + $0x10] sm:$0xff]
        %v2235 = vsel %vm1072, %v2233, 0
        %2237 = vmatprep.subr.mxu0 0.0
        %2238 = vmatpush1.msra.mxu0 %v1911
        %2239 = vmatprep.subr.mxu0 0.0
        %2240 = vmatpush1.msra.mxu0 %v1912
        %2241 = vmatprep.subr.mxu0 0.0
        %2242 = vmatpush1.msra.mxu0 %v1913
        %2243 = vmatprep.subr.mxu0 0.0
        %2244 = vmatpush1.msra.mxu0 %v1914
        %2245 = vmatprep.subr.mxu0 0.0
        %2246 = vmatpush1.msra.mxu0 0.0
        %2247 = vmatprep.subr.mxu0 0.0
        %2248 = vmatpush1.msra.mxu0 0.0
        %2249 = vmatprep.subr.mxu0 0.0
        %2250 = vmatpush1.msra.mxu0 0.0
        %2251 = vmatprep.subr.mxu0 0.0
        %2252 = vmatpush1.msra.mxu0 0.0
        %2253 = vmatprep.subr.mxu0 0.0
        %2254 = vmatpush1.msra.mxu0 0.0
        %2255 = vmatprep.subr.mxu0 0.0
        %2256 = vmatpush1.msra.mxu0 0.0
        %2257 = vmatprep.subr.mxu0 0.0
        %2258 = vmatpush1.msra.mxu0 0.0
        %2259 = vmatprep.subr.mxu0 0.0
        %2260 = vmatpush1.msra.mxu0 0.0
        %2261 = vmatprep.subr.mxu0 0.0
        %2262 = vmatpush1.msra.mxu0 0.0
        %2263 = vmatprep.subr.mxu0 0.0
        %2264 = vmatpush1.msra.mxu0 0.0
        %2265 = vmatprep.subr.mxu0 0.0
        %2266 = vmatpush1.msra.mxu0 0.0
        %2267 = vmatprep.subr.mxu0 0.0
        %2268 = vmatpush1.msra.mxu0 0.0
        %2269 = vmatprep.subr.mxu0 0.0
        %2270 = vmatpush1.msra.mxu0 0.0
        %2271 = vmatprep.subr.mxu0 0.0
        %2272 = vmatpush1.msra.mxu0 0.0
        %2273 = vmatprep.subr.mxu0 0.0
        %2274 = vmatpush1.msra.mxu0 0.0
        %2275 = vmatprep.subr.mxu0 0.0
        %2276 = vmatpush1.msra.mxu0 0.0
        %2277 = vmatprep.subr.mxu0 0.0
        %2278 = vmatpush1.msra.mxu0 0.0
        %2279 = vmatprep.subr.mxu0 0.0
        %2280 = vmatpush1.msra.mxu0 0.0
        %2281 = vmatprep.subr.mxu0 0.0
        %2282 = vmatpush1.msra.mxu0 0.0
        %2283 = vmatprep.subr.mxu0 0.0
        %2284 = vmatpush1.msra.mxu0 0.0
        %2285 = vmatprep.subr.mxu0 0.0
        %2286 = vmatpush1.msra.mxu0 0.0
        %2287 = vmatprep.subr.mxu0 0.0
        %2288 = vmatpush1.msra.mxu0 0.0
        %2289 = vmatprep.subr.mxu0 0.0
        %2290 = vmatpush1.msra.mxu0 0.0
        %2291 = vmatprep.subr.mxu0 0.0
        %2292 = vmatpush1.msra.mxu0 0.0
        %2293 = vmatprep.subr.mxu0 0.0
        %2294 = vmatpush1.msra.mxu0 0.0
        %2295 = vmatprep.subr.mxu0 0.0
        %2296 = vmatpush1.msra.mxu0 0.0
        %2297 = vmatprep.subr.mxu0 0.0
        %2298 = vmatpush1.msra.mxu0 0.0
        %2299 = vmatprep.subr.mxu0 0.0
        %2300 = vmatpush1.msra.mxu0 0.0
        %2301 = vmatprep.mubr.f32.mxu0 0.0
        %2302 = vmatmul.mubr.f32.gmra.mrb[0].mxu0 %v2235
        %v2303 = vpop.f32.mrb[0].mxu0
        %v2304 = vadd.f32 %v1920, %v2303
        %v2305 = vpop.f32.mrb[0].mxu0
        %2306 = vdwg.mxu0
        %2307 = vst [vmem:[%s456 + $0x10] sm:$0xff] %v2304
        %v2308 = vadd.f32 %v2231, %v2010
        %v2309 = vsel %vm2012, %v2308, -inf
        %2310 = vmax.xlane.f32.xlu0 %v2309
        %v2311 = vpop.xlane.xlu0 %2310
        %vm2312 = vcmp.eq.f32.partialorder %v2308, %v2311
        %v2313 = vsel %vm2312, %v1925, 8.0
        %v2314 = vsel %vm2012, %v2313, inf
        %2315 = vmin.xlane.f32.xlu0 %v2314
        %v2316 = vpop.xlane.xlu0 %2315
        %v2317 = vsel %vm2022, %v2311, 0.0
        %v2318 = vadd.f32 %v2304, %v2317
        %v2319 = vsel %vm2022, %v2316, 0.0
        %v2320 = vadd.f32 %v2231, %v2029
        %v2321 = vsel %vm2012, %v2320, -inf
        %2322 = vmax.xlane.f32.xlu0 %v2321
        %v2323 = vpop.xlane.xlu0 %2322
        %vm2324 = vcmp.eq.f32.partialorder %v2320, %v2323
        %v2325 = vsel %vm2324, %v1925, 8.0
        %v2326 = vsel %vm2012, %v2325, inf
        %2327 = vmin.xlane.f32.xlu0 %v2326
        %v2328 = vpop.xlane.xlu0 %2327
        %v2329 = vsel %vm2040, %v2323, 0.0
        %v2330 = vadd.f32 %v2318, %v2329
        %v2331 = vsel %vm2040, %v2328, %v2319
        %v2332 = vadd.f32 %v2231, %v2047
        %v2333 = vsel %vm2012, %v2332, -inf
        %2334 = vmax.xlane.f32.xlu0 %v2333
        %v2335 = vpop.xlane.xlu0 %2334
        %vm2336 = vcmp.eq.f32.partialorder %v2332, %v2335
        %v2337 = vsel %vm2336, %v1925, 8.0
        %v2338 = vsel %vm2012, %v2337, inf
        %2339 = vmin.xlane.f32.xlu0 %v2338
        %v2340 = vpop.xlane.xlu0 %2339
        %v2341 = vsel %vm2058, %v2335, 0.0
        %v2342 = vadd.f32 %v2330, %v2341
        %v2343 = vsel %vm2058, %v2340, %v2331
        %v2344 = vadd.f32 %v2231, %v2065
        %v2345 = vsel %vm2012, %v2344, -inf
        %2346 = vmax.xlane.f32.xlu0 %v2345
        %v2347 = vpop.xlane.xlu0 %2346
        %vm2348 = vcmp.eq.f32.partialorder %v2344, %v2347
        %v2349 = vsel %vm2348, %v1925, 8.0
        %v2350 = vsel %vm2012, %v2349, inf
        %2351 = vmin.xlane.f32.xlu0 %v2350
        %v2352 = vpop.xlane.xlu0 %2351
        %v2353 = vsel %vm2076, %v2347, 0.0
        %v2354 = vadd.f32 %v2342, %v2353
        %v2355 = vsel %vm2076, %v2352, %v2343
        %v2356 = vadd.f32 %v2231, %v2083
        %v2357 = vsel %vm2012, %v2356, -inf
        %2358 = vmax.xlane.f32.xlu0 %v2357
        %v2359 = vpop.xlane.xlu0 %2358
        %vm2360 = vcmp.eq.f32.partialorder %v2356, %v2359
        %v2361 = vsel %vm2360, %v1925, 8.0
        %v2362 = vsel %vm2012, %v2361, inf
        %2363 = vmin.xlane.f32.xlu0 %v2362
        %v2364 = vpop.xlane.xlu0 %2363
        %v2365 = vsel %vm2094, %v2359, 0.0
        %v2366 = vadd.f32 %v2354, %v2365
        %v2367 = vsel %vm2094, %v2364, %v2355
        %v2368 = vld [vmem:[#allocation3 + $0x18] sm:$0xff]
        %v2370 = vsel %vm1072, %v2368, 0
        %2372 = vmatprep.subr.mxu0 0.0
        %2373 = vmatpush1.msra.mxu0 %v1911
        %2374 = vmatprep.subr.mxu0 0.0
        %2375 = vmatpush1.msra.mxu0 %v1912
        %2376 = vmatprep.subr.mxu0 0.0
        %2377 = vmatpush1.msra.mxu0 %v1913
        %2378 = vmatprep.subr.mxu0 0.0
        %2379 = vmatpush1.msra.mxu0 %v1914
        %2380 = vmatprep.subr.mxu0 0.0
        %2381 = vmatpush1.msra.mxu0 0.0
        %2382 = vmatprep.subr.mxu0 0.0
        %2383 = vmatpush1.msra.mxu0 0.0
        %2384 = vmatprep.subr.mxu0 0.0
        %2385 = vmatpush1.msra.mxu0 0.0
        %2386 = vmatprep.subr.mxu0 0.0
        %2387 = vmatpush1.msra.mxu0 0.0
        %2388 = vmatprep.subr.mxu0 0.0
        %2389 = vmatpush1.msra.mxu0 0.0
        %2390 = vmatprep.subr.mxu0 0.0
        %2391 = vmatpush1.msra.mxu0 0.0
        %2392 = vmatprep.subr.mxu0 0.0
        %2393 = vmatpush1.msra.mxu0 0.0
        %2394 = vmatprep.subr.mxu0 0.0
        %2395 = vmatpush1.msra.mxu0 0.0
        %2396 = vmatprep.subr.mxu0 0.0
        %2397 = vmatpush1.msra.mxu0 0.0
        %2398 = vmatprep.subr.mxu0 0.0
        %2399 = vmatpush1.msra.mxu0 0.0
        %2400 = vmatprep.subr.mxu0 0.0
        %2401 = vmatpush1.msra.mxu0 0.0
        %2402 = vmatprep.subr.mxu0 0.0
        %2403 = vmatpush1.msra.mxu0 0.0
        %2404 = vmatprep.subr.mxu0 0.0
        %2405 = vmatpush1.msra.mxu0 0.0
        %2406 = vmatprep.subr.mxu0 0.0
        %2407 = vmatpush1.msra.mxu0 0.0
        %2408 = vmatprep.subr.mxu0 0.0
        %2409 = vmatpush1.msra.mxu0 0.0
        %2410 = vmatprep.subr.mxu0 0.0
        %2411 = vmatpush1.msra.mxu0 0.0
        %2412 = vmatprep.subr.mxu0 0.0
        %2413 = vmatpush1.msra.mxu0 0.0
        %2414 = vmatprep.subr.mxu0 0.0
        %2415 = vmatpush1.msra.mxu0 0.0
        %2416 = vmatprep.subr.mxu0 0.0
        %2417 = vmatpush1.msra.mxu0 0.0
        %2418 = vmatprep.subr.mxu0 0.0
        %2419 = vmatpush1.msra.mxu0 0.0
        %2420 = vmatprep.subr.mxu0 0.0
        %2421 = vmatpush1.msra.mxu0 0.0
        %2422 = vmatprep.subr.mxu0 0.0
        %2423 = vmatpush1.msra.mxu0 0.0
        %2424 = vmatprep.subr.mxu0 0.0
        %2425 = vmatpush1.msra.mxu0 0.0
        %2426 = vmatprep.subr.mxu0 0.0
        %2427 = vmatpush1.msra.mxu0 0.0
        %2428 = vmatprep.subr.mxu0 0.0
        %2429 = vmatpush1.msra.mxu0 0.0
        %2430 = vmatprep.subr.mxu0 0.0
        %2431 = vmatpush1.msra.mxu0 0.0
        %2432 = vmatprep.subr.mxu0 0.0
        %2433 = vmatpush1.msra.mxu0 0.0
        %2434 = vmatprep.subr.mxu0 0.0
        %2435 = vmatpush1.msra.mxu0 0.0
        %2436 = vmatprep.mubr.f32.mxu0 0.0
        %2437 = vmatmul.mubr.f32.gmra.mrb[0].mxu0 %v2370
        %v2438 = vpop.f32.mrb[0].mxu0
        %v2439 = vadd.f32 %v1920, %v2438
        %v2440 = vpop.f32.mrb[0].mxu0
        %2441 = vdwg.mxu0
        %2442 = vst [vmem:[%s456 + $0x18] sm:$0xff] %v2439
        %v2443 = vadd.f32 %v2366, %v2010
        %v2444 = vsel %vm2012, %v2443, -inf
        %2445 = vmax.xlane.f32.xlu0 %v2444
        %v2446 = vpop.xlane.xlu0 %2445
        %vm2447 = vcmp.eq.f32.partialorder %v2443, %v2446
        %v2448 = vsel %vm2447, %v1925, 8.0
        %v2449 = vsel %vm2012, %v2448, inf
        %2450 = vmin.xlane.f32.xlu0 %v2449
        %v2451 = vpop.xlane.xlu0 %2450
        %v2452 = vsel %vm2022, %v2446, 0.0
        %v2453 = vadd.f32 %v2439, %v2452
        %v2454 = vsel %vm2022, %v2451, 0.0
        %v2455 = vadd.f32 %v2366, %v2029
        %v2456 = vsel %vm2012, %v2455, -inf
        %2457 = vmax.xlane.f32.xlu0 %v2456
        %v2458 = vpop.xlane.xlu0 %2457
        %vm2459 = vcmp.eq.f32.partialorder %v2455, %v2458
        %v2460 = vsel %vm2459, %v1925, 8.0
        %v2461 = vsel %vm2012, %v2460, inf
        %2462 = vmin.xlane.f32.xlu0 %v2461
        %v2463 = vpop.xlane.xlu0 %2462
        %v2464 = vsel %vm2040, %v2458, 0.0
        %v2465 = vadd.f32 %v2453, %v2464
        %v2466 = vsel %vm2040, %v2463, %v2454
        %v2467 = vadd.f32 %v2366, %v2047
        %v2468 = vsel %vm2012, %v2467, -inf
        %2469 = vmax.xlane.f32.xlu0 %v2468
        %v2470 = vpop.xlane.xlu0 %2469
        %vm2471 = vcmp.eq.f32.partialorder %v2467, %v2470
        %v2472 = vsel %vm2471, %v1925, 8.0
        %v2473 = vsel %vm2012, %v2472, inf
        %2474 = vmin.xlane.f32.xlu0 %v2473
        %v2475 = vpop.xlane.xlu0 %2474
        %v2476 = vsel %vm2058, %v2470, 0.0
        %v2477 = vadd.f32 %v2465, %v2476
        %v2478 = vsel %vm2058, %v2475, %v2466
        %v2479 = vadd.f32 %v2366, %v2065
        %v2480 = vsel %vm2012, %v2479, -inf
        %2481 = vmax.xlane.f32.xlu0 %v2480
        %v2482 = vpop.xlane.xlu0 %2481
        %vm2483 = vcmp.eq.f32.partialorder %v2479, %v2482
        %v2484 = vsel %vm2483, %v1925, 8.0
        %v2485 = vsel %vm2012, %v2484, inf
        %2486 = vmin.xlane.f32.xlu0 %v2485
        %v2487 = vpop.xlane.xlu0 %2486
        %v2488 = vsel %vm2076, %v2482, 0.0
        %v2489 = vadd.f32 %v2477, %v2488
        %v2490 = vsel %vm2076, %v2487, %v2478
        %v2491 = vadd.f32 %v2366, %v2083
        %v2492 = vsel %vm2012, %v2491, -inf
        %2493 = vmax.xlane.f32.xlu0 %v2492
        %v2494 = vpop.xlane.xlu0 %2493
        %vm2495 = vcmp.eq.f32.partialorder %v2491, %v2494
        %v2496 = vsel %vm2495, %v1925, 8.0
        %v2497 = vsel %vm2012, %v2496, inf
        %2498 = vmin.xlane.f32.xlu0 %v2497
        %v2499 = vpop.xlane.xlu0 %2498
        %v2500 = vsel %vm2094, %v2494, 0.0
        %v2501 = vadd.f32 %v2489, %v2500
        %v2502 = vsel %vm2094, %v2499, %v2490
        %v2503 = vld [vmem:[#allocation3 + $0x20] sm:$0xff]
        %v2505 = vsel %vm1072, %v2503, 0
        %2507 = vmatprep.subr.mxu0 0.0
        %2508 = vmatpush1.msra.mxu0 %v1911
        %2509 = vmatprep.subr.mxu0 0.0
        %2510 = vmatpush1.msra.mxu0 %v1912
        %2511 = vmatprep.subr.mxu0 0.0
        %2512 = vmatpush1.msra.mxu0 %v1913
        %2513 = vmatprep.subr.mxu0 0.0
        %2514 = vmatpush1.msra.mxu0 %v1914
        %2515 = vmatprep.subr.mxu0 0.0
        %2516 = vmatpush1.msra.mxu0 0.0
        %2517 = vmatprep.subr.mxu0 0.0
        %2518 = vmatpush1.msra.mxu0 0.0
        %2519 = vmatprep.subr.mxu0 0.0
        %2520 = vmatpush1.msra.mxu0 0.0
        %2521 = vmatprep.subr.mxu0 0.0
        %2522 = vmatpush1.msra.mxu0 0.0
        %2523 = vmatprep.subr.mxu0 0.0
        %2524 = vmatpush1.msra.mxu0 0.0
        %2525 = vmatprep.subr.mxu0 0.0
        %2526 = vmatpush1.msra.mxu0 0.0
        %2527 = vmatprep.subr.mxu0 0.0
        %2528 = vmatpush1.msra.mxu0 0.0
        %2529 = vmatprep.subr.mxu0 0.0
        %2530 = vmatpush1.msra.mxu0 0.0
        %2531 = vmatprep.subr.mxu0 0.0
        %2532 = vmatpush1.msra.mxu0 0.0
        %2533 = vmatprep.subr.mxu0 0.0
        %2534 = vmatpush1.msra.mxu0 0.0
        %2535 = vmatprep.subr.mxu0 0.0
        %2536 = vmatpush1.msra.mxu0 0.0
        %2537 = vmatprep.subr.mxu0 0.0
        %2538 = vmatpush1.msra.mxu0 0.0
        %2539 = vmatprep.subr.mxu0 0.0
        %2540 = vmatpush1.msra.mxu0 0.0
        %2541 = vmatprep.subr.mxu0 0.0
        %2542 = vmatpush1.msra.mxu0 0.0
        %2543 = vmatprep.subr.mxu0 0.0
        %2544 = vmatpush1.msra.mxu0 0.0
        %2545 = vmatprep.subr.mxu0 0.0
        %2546 = vmatpush1.msra.mxu0 0.0
        %2547 = vmatprep.subr.mxu0 0.0
        %2548 = vmatpush1.msra.mxu0 0.0
        %2549 = vmatprep.subr.mxu0 0.0
        %2550 = vmatpush1.msra.mxu0 0.0
        %2551 = vmatprep.subr.mxu0 0.0
        %2552 = vmatpush1.msra.mxu0 0.0
        %2553 = vmatprep.subr.mxu0 0.0
        %2554 = vmatpush1.msra.mxu0 0.0
        %2555 = vmatprep.subr.mxu0 0.0
        %2556 = vmatpush1.msra.mxu0 0.0
        %2557 = vmatprep.subr.mxu0 0.0
        %2558 = vmatpush1.msra.mxu0 0.0
        %2559 = vmatprep.subr.mxu0 0.0
        %2560 = vmatpush1.msra.mxu0 0.0
        %2561 = vmatprep.subr.mxu0 0.0
        %2562 = vmatpush1.msra.mxu0 0.0
        %2563 = vmatprep.subr.mxu0 0.0
        %2564 = vmatpush1.msra.mxu0 0.0
        %2565 = vmatprep.subr.mxu0 0.0
        %2566 = vmatpush1.msra.mxu0 0.0
        %2567 = vmatprep.subr.mxu0 0.0
        %2568 = vmatpush1.msra.mxu0 0.0
        %2569 = vmatprep.subr.mxu0 0.0
        %2570 = vmatpush1.msra.mxu0 0.0
        %2571 = vmatprep.mubr.f32.mxu0 0.0
        %2572 = vmatmul.mubr.f32.gmra.mrb[0].mxu0 %v2505
        %v2573 = vpop.f32.mrb[0].mxu0
        %v2574 = vadd.f32 %v1920, %v2573
        %v2575 = vpop.f32.mrb[0].mxu0
        %2576 = vdwg.mxu0
        %2577 = vst [vmem:[%s456 + $0x20] sm:$0xff] %v2574
        %v2578 = vadd.f32 %v2501, %v2010
        %v2579 = vsel %vm2012, %v2578, -inf
        %2580 = vmax.xlane.f32.xlu0 %v2579
        %v2581 = vpop.xlane.xlu0 %2580
        %vm2582 = vcmp.eq.f32.partialorder %v2578, %v2581
        %v2583 = vsel %vm2582, %v1925, 8.0
        %v2584 = vsel %vm2012, %v2583, inf
        %2585 = vmin.xlane.f32.xlu0 %v2584
        %v2586 = vpop.xlane.xlu0 %2585
        %v2587 = vsel %vm2022, %v2581, 0.0
        %v2588 = vadd.f32 %v2574, %v2587
        %v2589 = vsel %vm2022, %v2586, 0.0
        %v2590 = vadd.f32 %v2501, %v2029
        %v2591 = vsel %vm2012, %v2590, -inf
        %2592 = vmax.xlane.f32.xlu0 %v2591
        %v2593 = vpop.xlane.xlu0 %2592
        %vm2594 = vcmp.eq.f32.partialorder %v2590, %v2593
        %v2595 = vsel %vm2594, %v1925, 8.0
        %v2596 = vsel %vm2012, %v2595, inf
        %2597 = vmin.xlane.f32.xlu0 %v2596
        %v2598 = vpop.xlane.xlu0 %2597
        %v2599 = vsel %vm2040, %v2593, 0.0
        %v2600 = vadd.f32 %v2588, %v2599
        %v2601 = vsel %vm2040, %v2598, %v2589
        %v2602 = vadd.f32 %v2501, %v2047
        %v2603 = vsel %vm2012, %v2602, -inf
        %2604 = vmax.xlane.f32.xlu0 %v2603
        %v2605 = vpop.xlane.xlu0 %2604
        %vm2606 = vcmp.eq.f32.partialorder %v2602, %v2605
        %v2607 = vsel %vm2606, %v1925, 8.0
        %v2608 = vsel %vm2012, %v2607, inf
        %2609 = vmin.xlane.f32.xlu0 %v2608
        %v2610 = vpop.xlane.xlu0 %2609
        %v2611 = vsel %vm2058, %v2605, 0.0
        %v2612 = vadd.f32 %v2600, %v2611
        %v2613 = vsel %vm2058, %v2610, %v2601
        %v2614 = vadd.f32 %v2501, %v2065
        %v2615 = vsel %vm2012, %v2614, -inf
        %2616 = vmax.xlane.f32.xlu0 %v2615
        %v2617 = vpop.xlane.xlu0 %2616
        %vm2618 = vcmp.eq.f32.partialorder %v2614, %v2617
        %v2619 = vsel %vm2618, %v1925, 8.0
        %v2620 = vsel %vm2012, %v2619, inf
        %2621 = vmin.xlane.f32.xlu0 %v2620
        %v2622 = vpop.xlane.xlu0 %2621
        %v2623 = vsel %vm2076, %v2617, 0.0
        %v2624 = vadd.f32 %v2612, %v2623
        %v2625 = vsel %vm2076, %v2622, %v2613
        %v2626 = vadd.f32 %v2501, %v2083
        %v2627 = vsel %vm2012, %v2626, -inf
        %2628 = vmax.xlane.f32.xlu0 %v2627
        %v2629 = vpop.xlane.xlu0 %2628
        %vm2630 = vcmp.eq.f32.partialorder %v2626, %v2629
        %v2631 = vsel %vm2630, %v1925, 8.0
        %v2632 = vsel %vm2012, %v2631, inf
        %2633 = vmin.xlane.f32.xlu0 %v2632
        %v2634 = vpop.xlane.xlu0 %2633
        %v2635 = vsel %vm2094, %v2629, 0.0
        %v2636 = vadd.f32 %v2624, %v2635
        %v2637 = vsel %vm2094, %v2634, %v2625
        %v2638 = vld [vmem:[#allocation3 + $0x28] sm:$0xff]
        %v2640 = vsel %vm1072, %v2638, 0
        %2642 = vmatprep.subr.mxu0 0.0
        %2643 = vmatpush1.msra.mxu0 %v1911
        %2644 = vmatprep.subr.mxu0 0.0
        %2645 = vmatpush1.msra.mxu0 %v1912
        %2646 = vmatprep.subr.mxu0 0.0
        %2647 = vmatpush1.msra.mxu0 %v1913
        %2648 = vmatprep.subr.mxu0 0.0
        %2649 = vmatpush1.msra.mxu0 %v1914
        %2650 = vmatprep.subr.mxu0 0.0
        %2651 = vmatpush1.msra.mxu0 0.0
        %2652 = vmatprep.subr.mxu0 0.0
        %2653 = vmatpush1.msra.mxu0 0.0
        %2654 = vmatprep.subr.mxu0 0.0
        %2655 = vmatpush1.msra.mxu0 0.0
        %2656 = vmatprep.subr.mxu0 0.0
        %2657 = vmatpush1.msra.mxu0 0.0
        %2658 = vmatprep.subr.mxu0 0.0
        %2659 = vmatpush1.msra.mxu0 0.0
        %2660 = vmatprep.subr.mxu0 0.0
        %2661 = vmatpush1.msra.mxu0 0.0
        %2662 = vmatprep.subr.mxu0 0.0
        %2663 = vmatpush1.msra.mxu0 0.0
        %2664 = vmatprep.subr.mxu0 0.0
        %2665 = vmatpush1.msra.mxu0 0.0
        %2666 = vmatprep.subr.mxu0 0.0
        %2667 = vmatpush1.msra.mxu0 0.0
        %2668 = vmatprep.subr.mxu0 0.0
        %2669 = vmatpush1.msra.mxu0 0.0
        %2670 = vmatprep.subr.mxu0 0.0
        %2671 = vmatpush1.msra.mxu0 0.0
        %2672 = vmatprep.subr.mxu0 0.0
        %2673 = vmatpush1.msra.mxu0 0.0
        %2674 = vmatprep.subr.mxu0 0.0
        %2675 = vmatpush1.msra.mxu0 0.0
        %2676 = vmatprep.subr.mxu0 0.0
        %2677 = vmatpush1.msra.mxu0 0.0
        %2678 = vmatprep.subr.mxu0 0.0
        %2679 = vmatpush1.msra.mxu0 0.0
        %2680 = vmatprep.subr.mxu0 0.0
        %2681 = vmatpush1.msra.mxu0 0.0
        %2682 = vmatprep.subr.mxu0 0.0
        %2683 = vmatpush1.msra.mxu0 0.0
        %2684 = vmatprep.subr.mxu0 0.0
        %2685 = vmatpush1.msra.mxu0 0.0
        %2686 = vmatprep.subr.mxu0 0.0
        %2687 = vmatpush1.msra.mxu0 0.0
        %2688 = vmatprep.subr.mxu0 0.0
        %2689 = vmatpush1.msra.mxu0 0.0
        %2690 = vmatprep.subr.mxu0 0.0
        %2691 = vmatpush1.msra.mxu0 0.0
        %2692 = vmatprep.subr.mxu0 0.0
        %2693 = vmatpush1.msra.mxu0 0.0
        %2694 = vmatprep.subr.mxu0 0.0
        %2695 = vmatpush1.msra.mxu0 0.0
        %2696 = vmatprep.subr.mxu0 0.0
        %2697 = vmatpush1.msra.mxu0 0.0
        %2698 = vmatprep.subr.mxu0 0.0
        %2699 = vmatpush1.msra.mxu0 0.0
        %2700 = vmatprep.subr.mxu0 0.0
        %2701 = vmatpush1.msra.mxu0 0.0
        %2702 = vmatprep.subr.mxu0 0.0
        %2703 = vmatpush1.msra.mxu0 0.0
        %2704 = vmatprep.subr.mxu0 0.0
        %2705 = vmatpush1.msra.mxu0 0.0
        %2706 = vmatprep.mubr.f32.mxu0 0.0
        %2707 = vmatmul.mubr.f32.gmra.mrb[0].mxu0 %v2640
        %v2708 = vpop.f32.mrb[0].mxu0
        %v2709 = vadd.f32 %v1920, %v2708
        %v2710 = vpop.f32.mrb[0].mxu0
        %2711 = vdwg.mxu0
        %2712 = vst [vmem:[%s456 + $0x28] sm:$0xff] %v2709
        %v2713 = vadd.f32 %v2636, %v2010
        %v2714 = vsel %vm2012, %v2713, -inf
        %2715 = vmax.xlane.f32.xlu0 %v2714
        %v2716 = vpop.xlane.xlu0 %2715
        %vm2717 = vcmp.eq.f32.partialorder %v2713, %v2716
        %v2718 = vsel %vm2717, %v1925, 8.0
        %v2719 = vsel %vm2012, %v2718, inf
        %2720 = vmin.xlane.f32.xlu0 %v2719
        %v2721 = vpop.xlane.xlu0 %2720
        %v2722 = vsel %vm2022, %v2716, 0.0
        %v2723 = vadd.f32 %v2709, %v2722
        %v2724 = vsel %vm2022, %v2721, 0.0
        %v2725 = vadd.f32 %v2636, %v2029
        %v2726 = vsel %vm2012, %v2725, -inf
        %2727 = vmax.xlane.f32.xlu0 %v2726
        %v2728 = vpop.xlane.xlu0 %2727
        %vm2729 = vcmp.eq.f32.partialorder %v2725, %v2728
        %v2730 = vsel %vm2729, %v1925, 8.0
        %v2731 = vsel %vm2012, %v2730, inf
        %2732 = vmin.xlane.f32.xlu0 %v2731
        %v2733 = vpop.xlane.xlu0 %2732
        %v2734 = vsel %vm2040, %v2728, 0.0
        %v2735 = vadd.f32 %v2723, %v2734
        %v2736 = vsel %vm2040, %v2733, %v2724
        %v2737 = vadd.f32 %v2636, %v2047
        %v2738 = vsel %vm2012, %v2737, -inf
        %2739 = vmax.xlane.f32.xlu0 %v2738
        %v2740 = vpop.xlane.xlu0 %2739
        %vm2741 = vcmp.eq.f32.partialorder %v2737, %v2740
        %v2742 = vsel %vm2741, %v1925, 8.0
        %v2743 = vsel %vm2012, %v2742, inf
        %2744 = vmin.xlane.f32.xlu0 %v2743
        %v2745 = vpop.xlane.xlu0 %2744
        %v2746 = vsel %vm2058, %v2740, 0.0
        %v2747 = vadd.f32 %v2735, %v2746
        %v2748 = vsel %vm2058, %v2745, %v2736
        %v2749 = vadd.f32 %v2636, %v2065
        %v2750 = vsel %vm2012, %v2749, -inf
        %2751 = vmax.xlane.f32.xlu0 %v2750
        %v2752 = vpop.xlane.xlu0 %2751
        %vm2753 = vcmp.eq.f32.partialorder %v2749, %v2752
        %v2754 = vsel %vm2753, %v1925, 8.0
        %v2755 = vsel %vm2012, %v2754, inf
        %2756 = vmin.xlane.f32.xlu0 %v2755
        %v2757 = vpop.xlane.xlu0 %2756
        %v2758 = vsel %vm2076, %v2752, 0.0
        %v2759 = vadd.f32 %v2747, %v2758
        %v2760 = vsel %vm2076, %v2757, %v2748
        %v2761 = vadd.f32 %v2636, %v2083
        %v2762 = vsel %vm2012, %v2761, -inf
        %2763 = vmax.xlane.f32.xlu0 %v2762
        %v2764 = vpop.xlane.xlu0 %2763
        %vm2765 = vcmp.eq.f32.partialorder %v2761, %v2764
        %v2766 = vsel %vm2765, %v1925, 8.0
        %v2767 = vsel %vm2012, %v2766, inf
        %2768 = vmin.xlane.f32.xlu0 %v2767
        %v2769 = vpop.xlane.xlu0 %2768
        %v2770 = vsel %vm2094, %v2764, 0.0
        %v2771 = vadd.f32 %v2759, %v2770
        %v2772 = vsel %vm2094, %v2769, %v2760
        %v2773 = vld [vmem:[#allocation3 + $0x30] sm:$0xff]
        %v2775 = vsel %vm1072, %v2773, 0
        %2777 = vmatprep.subr.mxu0 0.0
        %2778 = vmatpush1.msra.mxu0 %v1911
        %2779 = vmatprep.subr.mxu0 0.0
        %2780 = vmatpush1.msra.mxu0 %v1912
        %2781 = vmatprep.subr.mxu0 0.0
        %2782 = vmatpush1.msra.mxu0 %v1913
        %2783 = vmatprep.subr.mxu0 0.0
        %2784 = vmatpush1.msra.mxu0 %v1914
        %2785 = vmatprep.subr.mxu0 0.0
        %2786 = vmatpush1.msra.mxu0 0.0
        %2787 = vmatprep.subr.mxu0 0.0
        %2788 = vmatpush1.msra.mxu0 0.0
        %2789 = vmatprep.subr.mxu0 0.0
        %2790 = vmatpush1.msra.mxu0 0.0
        %2791 = vmatprep.subr.mxu0 0.0
        %2792 = vmatpush1.msra.mxu0 0.0
        %2793 = vmatprep.subr.mxu0 0.0
        %2794 = vmatpush1.msra.mxu0 0.0
        %2795 = vmatprep.subr.mxu0 0.0
        %2796 = vmatpush1.msra.mxu0 0.0
        %2797 = vmatprep.subr.mxu0 0.0
        %2798 = vmatpush1.msra.mxu0 0.0
        %2799 = vmatprep.subr.mxu0 0.0
        %2800 = vmatpush1.msra.mxu0 0.0
        %2801 = vmatprep.subr.mxu0 0.0
        %2802 = vmatpush1.msra.mxu0 0.0
        %2803 = vmatprep.subr.mxu0 0.0
        %2804 = vmatpush1.msra.mxu0 0.0
        %2805 = vmatprep.subr.mxu0 0.0
        %2806 = vmatpush1.msra.mxu0 0.0
        %2807 = vmatprep.subr.mxu0 0.0
        %2808 = vmatpush1.msra.mxu0 0.0
        %2809 = vmatprep.subr.mxu0 0.0
        %2810 = vmatpush1.msra.mxu0 0.0
        %2811 = vmatprep.subr.mxu0 0.0
        %2812 = vmatpush1.msra.mxu0 0.0
        %2813 = vmatprep.subr.mxu0 0.0
        %2814 = vmatpush1.msra.mxu0 0.0
        %2815 = vmatprep.subr.mxu0 0.0
        %2816 = vmatpush1.msra.mxu0 0.0
        %2817 = vmatprep.subr.mxu0 0.0
        %2818 = vmatpush1.msra.mxu0 0.0
        %2819 = vmatprep.subr.mxu0 0.0
        %2820 = vmatpush1.msra.mxu0 0.0
        %2821 = vmatprep.subr.mxu0 0.0
        %2822 = vmatpush1.msra.mxu0 0.0
        %2823 = vmatprep.subr.mxu0 0.0
        %2824 = vmatpush1.msra.mxu0 0.0
        %2825 = vmatprep.subr.mxu0 0.0
        %2826 = vmatpush1.msra.mxu0 0.0
        %2827 = vmatprep.subr.mxu0 0.0
        %2828 = vmatpush1.msra.mxu0 0.0
        %2829 = vmatprep.subr.mxu0 0.0
        %2830 = vmatpush1.msra.mxu0 0.0
        %2831 = vmatprep.subr.mxu0 0.0
        %2832 = vmatpush1.msra.mxu0 0.0
        %2833 = vmatprep.subr.mxu0 0.0
        %2834 = vmatpush1.msra.mxu0 0.0
        %2835 = vmatprep.subr.mxu0 0.0
        %2836 = vmatpush1.msra.mxu0 0.0
        %2837 = vmatprep.subr.mxu0 0.0
        %2838 = vmatpush1.msra.mxu0 0.0
        %2839 = vmatprep.subr.mxu0 0.0
        %2840 = vmatpush1.msra.mxu0 0.0
        %2841 = vmatprep.mubr.f32.mxu0 0.0
        %2842 = vmatmul.mubr.f32.gmra.mrb[0].mxu0 %v2775
        %v2843 = vpop.f32.mrb[0].mxu0
        %v2844 = vadd.f32 %v1920, %v2843
        %v2845 = vpop.f32.mrb[0].mxu0
        %2846 = vdwg.mxu0
        %2847 = vst [vmem:[%s456 + $0x30] sm:$0xff] %v2844
        %v2848 = vadd.f32 %v2771, %v2010
        %v2849 = vsel %vm2012, %v2848, -inf
        %2850 = vmax.xlane.f32.xlu0 %v2849
        %v2851 = vpop.xlane.xlu0 %2850
        %vm2852 = vcmp.eq.f32.partialorder %v2848, %v2851
        %v2853 = vsel %vm2852, %v1925, 8.0
        %v2854 = vsel %vm2012, %v2853, inf
        %2855 = vmin.xlane.f32.xlu0 %v2854
        %v2856 = vpop.xlane.xlu0 %2855
        %v2857 = vsel %vm2022, %v2851, 0.0
        %v2858 = vadd.f32 %v2844, %v2857
        %v2859 = vsel %vm2022, %v2856, 0.0
        %v2860 = vadd.f32 %v2771, %v2029
        %v2861 = vsel %vm2012, %v2860, -inf
        %2862 = vmax.xlane.f32.xlu0 %v2861
        %v2863 = vpop.xlane.xlu0 %2862
        %vm2864 = vcmp.eq.f32.partialorder %v2860, %v2863
        %v2865 = vsel %vm2864, %v1925, 8.0
        %v2866 = vsel %vm2012, %v2865, inf
        %2867 = vmin.xlane.f32.xlu0 %v2866
        %v2868 = vpop.xlane.xlu0 %2867
        %v2869 = vsel %vm2040, %v2863, 0.0
        %v2870 = vadd.f32 %v2858, %v2869
        %v2871 = vsel %vm2040, %v2868, %v2859
        %v2872 = vadd.f32 %v2771, %v2047
        %v2873 = vsel %vm2012, %v2872, -inf
        %2874 = vmax.xlane.f32.xlu0 %v2873
        %v2875 = vpop.xlane.xlu0 %2874
        %vm2876 = vcmp.eq.f32.partialorder %v2872, %v2875
        %v2877 = vsel %vm2876, %v1925, 8.0
        %v2878 = vsel %vm2012, %v2877, inf
        %2879 = vmin.xlane.f32.xlu0 %v2878
        %v2880 = vpop.xlane.xlu0 %2879
        %v2881 = vsel %vm2058, %v2875, 0.0
        %v2882 = vadd.f32 %v2870, %v2881
        %v2883 = vsel %vm2058, %v2880, %v2871
        %v2884 = vadd.f32 %v2771, %v2065
        %v2885 = vsel %vm2012, %v2884, -inf
        %2886 = vmax.xlane.f32.xlu0 %v2885
        %v2887 = vpop.xlane.xlu0 %2886
        %vm2888 = vcmp.eq.f32.partialorder %v2884, %v2887
        %v2889 = vsel %vm2888, %v1925, 8.0
        %v2890 = vsel %vm2012, %v2889, inf
        %2891 = vmin.xlane.f32.xlu0 %v2890
        %v2892 = vpop.xlane.xlu0 %2891
        %v2893 = vsel %vm2076, %v2887, 0.0
        %v2894 = vadd.f32 %v2882, %v2893
        %v2895 = vsel %vm2076, %v2892, %v2883
        %v2896 = vadd.f32 %v2771, %v2083
        %v2897 = vsel %vm2012, %v2896, -inf
        %2898 = vmax.xlane.f32.xlu0 %v2897
        %v2899 = vpop.xlane.xlu0 %2898
        %vm2900 = vcmp.eq.f32.partialorder %v2896, %v2899
        %v2901 = vsel %vm2900, %v1925, 8.0
        %v2902 = vsel %vm2012, %v2901, inf
        %2903 = vmin.xlane.f32.xlu0 %v2902
        %v2904 = vpop.xlane.xlu0 %2903
        %v2905 = vsel %vm2094, %v2899, 0.0
        %v2906 = vadd.f32 %v2894, %v2905
        %v2907 = vsel %vm2094, %v2904, %v2895
        %v2908 = vld [vmem:[#allocation3 + $0x38] sm:$0xff]
        %v2910 = vsel %vm1072, %v2908, 0
        %2912 = vmatprep.subr.mxu0 0.0
        %2913 = vmatpush1.msra.mxu0 %v1911
        %2914 = vmatprep.subr.mxu0 0.0
        %2915 = vmatpush1.msra.mxu0 %v1912
        %2916 = vmatprep.subr.mxu0 0.0
        %2917 = vmatpush1.msra.mxu0 %v1913
        %2918 = vmatprep.subr.mxu0 0.0
        %2919 = vmatpush1.msra.mxu0 %v1914
        %2920 = vmatprep.subr.mxu0 0.0
        %2921 = vmatpush1.msra.mxu0 0.0
        %2922 = vmatprep.subr.mxu0 0.0
        %2923 = vmatpush1.msra.mxu0 0.0
        %2924 = vmatprep.subr.mxu0 0.0
        %2925 = vmatpush1.msra.mxu0 0.0
        %2926 = vmatprep.subr.mxu0 0.0
        %2927 = vmatpush1.msra.mxu0 0.0
        %2928 = vmatprep.subr.mxu0 0.0
        %2929 = vmatpush1.msra.mxu0 0.0
        %2930 = vmatprep.subr.mxu0 0.0
        %2931 = vmatpush1.msra.mxu0 0.0
        %2932 = vmatprep.subr.mxu0 0.0
        %2933 = vmatpush1.msra.mxu0 0.0
        %2934 = vmatprep.subr.mxu0 0.0
        %2935 = vmatpush1.msra.mxu0 0.0
        %2936 = vmatprep.subr.mxu0 0.0
        %2937 = vmatpush1.msra.mxu0 0.0
        %2938 = vmatprep.subr.mxu0 0.0
        %2939 = vmatpush1.msra.mxu0 0.0
        %2940 = vmatprep.subr.mxu0 0.0
        %2941 = vmatpush1.msra.mxu0 0.0
        %2942 = vmatprep.subr.mxu0 0.0
        %2943 = vmatpush1.msra.mxu0 0.0
        %2944 = vmatprep.subr.mxu0 0.0
        %2945 = vmatpush1.msra.mxu0 0.0
        %2946 = vmatprep.subr.mxu0 0.0
        %2947 = vmatpush1.msra.mxu0 0.0
        %2948 = vmatprep.subr.mxu0 0.0
        %2949 = vmatpush1.msra.mxu0 0.0
        %2950 = vmatprep.subr.mxu0 0.0
        %2951 = vmatpush1.msra.mxu0 0.0
        %2952 = vmatprep.subr.mxu0 0.0
        %2953 = vmatpush1.msra.mxu0 0.0
        %2954 = vmatprep.subr.mxu0 0.0
        %2955 = vmatpush1.msra.mxu0 0.0
        %2956 = vmatprep.subr.mxu0 0.0
        %2957 = vmatpush1.msra.mxu0 0.0
        %2958 = vmatprep.subr.mxu0 0.0
        %2959 = vmatpush1.msra.mxu0 0.0
        %2960 = vmatprep.subr.mxu0 0.0
        %2961 = vmatpush1.msra.mxu0 0.0
        %2962 = vmatprep.subr.mxu0 0.0
        %2963 = vmatpush1.msra.mxu0 0.0
        %2964 = vmatprep.subr.mxu0 0.0
        %2965 = vmatpush1.msra.mxu0 0.0
        %2966 = vmatprep.subr.mxu0 0.0
        %2967 = vmatpush1.msra.mxu0 0.0
        %2968 = vmatprep.subr.mxu0 0.0
        %2969 = vmatpush1.msra.mxu0 0.0
        %2970 = vmatprep.subr.mxu0 0.0
        %2971 = vmatpush1.msra.mxu0 0.0
        %2972 = vmatprep.subr.mxu0 0.0
        %2973 = vmatpush1.msra.mxu0 0.0
        %2974 = vmatprep.subr.mxu0 0.0
        %2975 = vmatpush1.msra.mxu0 0.0
        %2976 = vmatprep.mubr.f32.mxu0 0.0
        %2977 = vmatmul.mubr.f32.gmra.mrb[0].mxu0 %v2910
        %v2978 = vpop.f32.mrb[0].mxu0
        %v2979 = vadd.f32 %v1920, %v2978
        %v2980 = vpop.f32.mrb[0].mxu0
        %2981 = vdwg.mxu0
        %2982 = vst [vmem:[%s456 + $0x38] sm:$0xff] %v2979
        %v2983 = vadd.f32 %v2906, %v2010
        %v2984 = vsel %vm2012, %v2983, -inf
        %2985 = vmax.xlane.f32.xlu0 %v2984
        %v2986 = vpop.xlane.xlu0 %2985
        %vm2987 = vcmp.eq.f32.partialorder %v2983, %v2986
        %v2988 = vsel %vm2987, %v1925, 8.0
        %v2989 = vsel %vm2012, %v2988, inf
        %2990 = vmin.xlane.f32.xlu0 %v2989
        %v2991 = vpop.xlane.xlu0 %2990
        %v2992 = vsel %vm2022, %v2986, 0.0
        %v2993 = vadd.f32 %v2979, %v2992
        %v2994 = vsel %vm2022, %v2991, 0.0
        %v2995 = vadd.f32 %v2906, %v2029
        %v2996 = vsel %vm2012, %v2995, -inf
        %2997 = vmax.xlane.f32.xlu0 %v2996
        %v2998 = vpop.xlane.xlu0 %2997
        %vm2999 = vcmp.eq.f32.partialorder %v2995, %v2998
        %v3000 = vsel %vm2999, %v1925, 8.0
        %v3001 = vsel %vm2012, %v3000, inf
        %3002 = vmin.xlane.f32.xlu0 %v3001
        %v3003 = vpop.xlane.xlu0 %3002
        %v3004 = vsel %vm2040, %v2998, 0.0
        %v3005 = vadd.f32 %v2993, %v3004
        %v3006 = vsel %vm2040, %v3003, %v2994
        %v3007 = vadd.f32 %v2906, %v2047
        %v3008 = vsel %vm2012, %v3007, -inf
        %3009 = vmax.xlane.f32.xlu0 %v3008
        %v3010 = vpop.xlane.xlu0 %3009
        %vm3011 = vcmp.eq.f32.partialorder %v3007, %v3010
        %v3012 = vsel %vm3011, %v1925, 8.0
        %v3013 = vsel %vm2012, %v3012, inf
        %3014 = vmin.xlane.f32.xlu0 %v3013
        %v3015 = vpop.xlane.xlu0 %3014
        %v3016 = vsel %vm2058, %v3010, 0.0
        %v3017 = vadd.f32 %v3005, %v3016
        %v3018 = vsel %vm2058, %v3015, %v3006
        %v3019 = vadd.f32 %v2906, %v2065
        %v3020 = vsel %vm2012, %v3019, -inf
        %3021 = vmax.xlane.f32.xlu0 %v3020
        %v3022 = vpop.xlane.xlu0 %3021
        %vm3023 = vcmp.eq.f32.partialorder %v3019, %v3022
        %v3024 = vsel %vm3023, %v1925, 8.0
        %v3025 = vsel %vm2012, %v3024, inf
        %3026 = vmin.xlane.f32.xlu0 %v3025
        %v3027 = vpop.xlane.xlu0 %3026
        %v3028 = vsel %vm2076, %v3022, 0.0
        %v3029 = vadd.f32 %v3017, %v3028
        %v3030 = vsel %vm2076, %v3027, %v3018
        %v3031 = vadd.f32 %v2906, %v2083
        %v3032 = vsel %vm2012, %v3031, -inf
        %3033 = vmax.xlane.f32.xlu0 %v3032
        %v3034 = vpop.xlane.xlu0 %3033
        %vm3035 = vcmp.eq.f32.partialorder %v3031, %v3034
        %v3036 = vsel %vm3035, %v1925, 8.0
        %v3037 = vsel %vm2012, %v3036, inf
        %3038 = vmin.xlane.f32.xlu0 %v3037
        %v3039 = vpop.xlane.xlu0 %3038
        %v3040 = vsel %vm2094, %v3034, 0.0
        %v3041 = vadd.f32 %v3029, %v3040
        %v3042 = vsel %vm2094, %v3039, %v3030
        %v3043 = vcvt.f32.s32.to.zero.pseudo %v2097
        %v3044 = vcvt.f32.s32.to.zero.pseudo %v2232
        %v3045 = vcvt.f32.s32.to.zero.pseudo %v2367
        %v3046 = vcvt.f32.s32.to.zero.pseudo %v2502
        %v3047 = vcvt.f32.s32.to.zero.pseudo %v2637
        %v3048 = vcvt.f32.s32.to.zero.pseudo %v2772
        %v3049 = vcvt.f32.s32.to.zero.pseudo %v2907
        %v3050 = vcvt.f32.s32.to.zero.pseudo %v3042
        %3051 = vst.msk [vmem:[%s475] sm:$0xff] %vm2012, %v3043
        %3052 = vst.msk [vmem:[%s475 + $0x8] sm:$0xff] %vm2012, %v3044
        %3053 = vst.msk [vmem:[%s475 + $0x10] sm:$0xff] %vm2012, %v3045
        %3054 = vst.msk [vmem:[%s475 + $0x18] sm:$0xff] %vm2012, %v3046
        %3055 = vst.msk [vmem:[%s475 + $0x20] sm:$0xff] %vm2012, %v3047
        %3056 = vst.msk [vmem:[%s475 + $0x28] sm:$0xff] %vm2012, %v3048
        %3057 = vst.msk [vmem:[%s475 + $0x30] sm:$0xff] %vm2012, %v3049
        %3058 = vst.msk [vmem:[%s475 + $0x38] sm:$0xff] %vm2012, %v3050
        %v3059 = vld [vmem:[%s9] sm:$0x1]
        %v3061 = vlaneseq
        %v3062 = vshrl.u32 %v3061, 7
        %v3063 = vsub.s32 0, %v3062
        %v3064 = vrot.slane %v3059, %v3063
        %v3066 = vadd.f32 %v3041, %v3064
        %3067 = vst.msk [vmem:[%s480] sm:$0xff] %vm2012, %v3066
        %s3068 = sand.u32 %s253, 1
        %s3069 = scalar_lea.sflag [#allocation8], %s3068
        %s3070 = sand.u32 %s253, 1
        %s3071 = smul.addr %s3070, 64
        %s3072 = scalar_lea.vmem [#allocation14], %s3071
        %s3073 = smul.u32 8, %s35
        %p3074 = scmp.lt.s32.totalorder %s3073, 15
        %s3075 = scalar_select %p3074, %s3073, 15
        %s3076 = smul.addr %s3075, 8
        %s3077 = scalar_lea.vmem %s12, %s3076
        %p3078 = scmp.lt.s32.totalorder %s35, 1
        %s3079 = scalar_select %p3078, %s35, 1
        %s3080 = smul.addr %s3079, 8
        %s3081 = scalar_lea.vmem %s13, %s3080
        // Predicated region
        $region77: #{tpu_custom_call.1} parent=59 // pred_check
          %p3082 = pneg %p263
        $region78: #{tpu_custom_call.1} parent=59 // pred_check_branch
          %3084 = sbr.rel (%p3082) target = $region80
        $region79: #{tpu_custom_call.1} parent=59 // pred_region
          %s3085 = smul.u32 8, %s35
          %s3087 = ssub.s32 1024, 1024
          %3088 = vsyncadd %s3069, %s3087
          %s3089 = smul.addr %s3085, 128
          %s3090 = scalar_lea.hbm %s11, %s3089
          %s3091 = sshll.u32 %s3072, 4
          %s3092 = int_to_ptr.vmem [resolvable:$true] %s3091
          %3097 = dma.vmem_to_hbm [thread:$0]  %s3092, 1024, %s3090, %s3069, 128, 128, 8
        $region80: #{tpu_custom_call.1} parent=59 // pred_fallthru
          _
        // Predicated region
        $region81: #{tpu_custom_call.1} parent=59 // pred_check
          %p3098 = pneg %p289
        $region82: #{tpu_custom_call.1} parent=59 // pred_check_branch
          %3100 = sbr.rel (%p3098) target = $region84
        $region83: #{tpu_custom_call.1} parent=59 // pred_region
          %s3101 = smul.u32 8, %s35
        $region84: #{tpu_custom_call.1} parent=59 // pred_fallthru
          _
        // Predicated region
        $region85: #{tpu_custom_call.1} parent=59 // pred_check
          %p3102 = pneg %p315
        $region86: #{tpu_custom_call.1} parent=59 // pred_check_branch
          %3104 = sbr.rel (%p3102) target = $region88
        $region87: #{tpu_custom_call.1} parent=59 // pred_region
          _
        $region88: #{tpu_custom_call.1} parent=59 // pred_fallthru
          _
      $region60: #{tpu_custom_call.1} parent=5 // pred_fallthru
        _
      %p3105 = scmp.le.s32.totalorder 2, %s30
      // Predicated region
      $region89: #{tpu_custom_call.1} parent=5 // pred_check
        %p3106 = pneg %p3105
      $region90: #{tpu_custom_call.1} parent=5 // pred_check_branch
        %3108 = sbr.rel (%p3106) target = $region92
      $region91: #{tpu_custom_call.1} parent=5 // pred_region
        %s3109 = ssub.s32 %s30, 2
        // Predicated region
        $region93: #{tpu_custom_call.1} parent=91 // pred_check
          %p3110 = pneg %p269
        $region94: #{tpu_custom_call.1} parent=91 // pred_check_branch
          %3112 = sbr.rel (%p3110) target = $region96
        $region95: #{tpu_custom_call.1} parent=91 // pred_region
          %s3113 = sand.u32 %s254, 1
          %s3114 = scalar_lea.sflag [#allocation8], %s3113
          %s3115 = sand.u32 %s254, 1
          %s3116 = smul.addr %s3115, 64
          %s3117 = scalar_lea.vmem [#allocation14], %s3116
          %3118 = dma.done %s3114, 1024
        $region96: #{tpu_custom_call.1} parent=91 // pred_fallthru
          _
        // Predicated region
        $region97: #{tpu_custom_call.1} parent=91 // pred_check
          %p3119 = pneg %p295
        $region98: #{tpu_custom_call.1} parent=91 // pred_check_branch
          %3121 = sbr.rel (%p3119) target = $region100
        $region99: #{tpu_custom_call.1} parent=91 // pred_region
          %s3122 = smul.u32 8, %s36
          %p3123 = scmp.lt.s32.totalorder %s3122, 15
          %s3124 = scalar_select %p3123, %s3122, 15
          %s3125 = smul.addr %s3124, 8
          %s3126 = scalar_lea.vmem %s12, %s3125
        $region100: #{tpu_custom_call.1} parent=91 // pred_fallthru
          _
        // Predicated region
        $region101: #{tpu_custom_call.1} parent=91 // pred_check
          %p3127 = pneg %p321
        $region102: #{tpu_custom_call.1} parent=91 // pred_check_branch
          %3129 = sbr.rel (%p3127) target = $region104
        $region103: #{tpu_custom_call.1} parent=91 // pred_region
          %p3130 = scmp.lt.s32.totalorder %s36, 1
          %s3131 = scalar_select %p3130, %s36, 1
          %s3132 = smul.addr %s3131, 8
          %s3133 = scalar_lea.vmem %s13, %s3132
        $region104: #{tpu_custom_call.1} parent=91 // pred_fallthru
          _
      $region92: #{tpu_custom_call.1} parent=5 // pred_fallthru
        _
    $region6: #{tpu_custom_call.1} parent=1 // loop_footer
      %s34 = sadd.s32 1, %s30
    $region7: #{tpu_custom_call.1} parent=1 // loop_footer_branch
      %29 = sbr.rel target = $region3
    $region8: #{tpu_custom_call.1} parent=1 // loop_exit
      _
    %3134 = vsyncpa [#allocation7], 1
    %s3135 = scalar_lea.sflag [#allocation7], 1
    %3136 = vsyncpa %s3135, 1
    %3137 = vsyncpa [#allocation10], 1
    %3138 = vsyncpa [#allocation13], 1
    %3139 = vsyncpa [#allocation8], 1
    %s3140 = scalar_lea.sflag [#allocation8], 1
    %3141 = vsyncpa %s3140, 1

</llo_original>
